<compile_context>
chip_gen: v7x
topology: tpu7x:2x2x1
jax: 0.10.0
libtpu: 0.0.40
codegen_flags: <defaults>
</compile_context>

<pallas_src>
import jax
import jax.numpy as jnp
from jax.experimental import pallas as pl
from jax.experimental.pallas import tpu as pltpu


# ----------------------------- Pallas kernel -------------------------------

def _fused_forward_kernel(x_ref,
                          w1, b1, w2, b2, w3, b3, w4, b4,
                          w5, b5, w6, b6, w7, b7, w8, b8,
                          out_ref):
    """Entire Conv_Model forward for one batch tile (all weights VMEM-resident).

    The tile is split into two half-tiles whose 8-layer chains are interleaved
    so one half's MXU matmul can overlap the other half's VPU/EUP epilogue.
    """
    half = x_ref.shape[0] // 2
    hidden = ((w1, b1), (w2, b2), (w3, b3), (w4, b4),
              (w5, b5), (w6, b6), (w7, b7))

    def mm(h, w_ref, b_ref):
        return jnp.dot(h.astype(w_ref.dtype), w_ref[...],
                       preferred_element_type=jnp.float32) + b_ref[...]

    x = x_ref[...]                         # (TB, 128) bf16, CHW-flattened board
    h0 = x[:half]
    h1 = x[half:]
    for w_ref, b_ref in hidden:            # conv1..4 + dense1..3 (+ReLU), interleaved
        h0 = jnp.maximum(mm(h0, w_ref, b_ref), 0.0)
        h1 = jnp.maximum(mm(h1, w_ref, b_ref), 0.0)

    def head(h):
        z = mm(h, w8, b8)                  # fused policy/value head -> (half, 128) f32
        lane = jax.lax.broadcasted_iota(jnp.int32, z.shape, 1)
        is_policy = lane < 7               # lanes 0..6 policy, lane 7 value, rest padding
        logits = jnp.where(is_policy, z, jnp.float32(-1e30))
        m = jnp.max(logits, axis=1, keepdims=True)
        e = jnp.where(is_policy, jnp.exp(logits - m), 0.0)
        denom = jnp.sum(e, axis=1, keepdims=True)
        probs = e * pl.reciprocal(denom, approx=True)
        return jnp.where(is_policy, probs, jnp.tanh(z))

    out_ref[pl.ds(0, half), :] = head(h0)
    out_ref[pl.ds(half, half), :] = head(h1)


# --------------------- one-time parameter preprocessing --------------------

def _round_up(x, m):
    return (x + m - 1) // m * m


def _conv_as_dense(w, b, hi, wi, pad):
    """Unroll a 3x3 stride-1 Conv2d into a dense matrix on CHW-flattened features.

    Rows of the identity batch are the CHW basis vectors, so the resulting
    matrix reproduces PyTorch Conv2d (cross-correlation) exactly, including
    zero padding, with both input and output features in NCHW-flatten order.
    """
    cout, cin, _, _ = w.shape
    f_in = cin * hi * wi
    eye = jnp.eye(f_in, dtype=jnp.float32).reshape(f_in, cin, hi, wi)
    y = jax.lax.conv_general_dilated(
        eye, w.astype(jnp.float32), window_strides=(1, 1),
        padding=[(pad, pad), (pad, pad)],
        dimension_numbers=("NCHW", "OIHW", "NCHW"))
    ho, wo = y.shape[2], y.shape[3]
    w_big = y.reshape(f_in, cout * ho * wo)                          # (F_in, F_out)
    b_big = jnp.broadcast_to(b[:, None, None], (cout, ho, wo)).reshape(1, -1)
    return w_big, b_big, ho, wo


def preprocess_params(params, matmul_dtype=jnp.bfloat16, align=128):
    """Convert PyTorch-layout params into the fused kernel's operand list."""
    layers = []
    hi, wi = 6, 7
    for name, pad in (("conv1", 1), ("conv2", 0), ("conv3", 1), ("conv4", 0)):
        w, b = params[name]
        w_big, b_big, hi, wi = _conv_as_dense(w, b, hi, wi, pad)
        layers.append((w_big, b_big))

    (w1, b1), (w2, b2), (w3, b3), (wp, bp), (wr, br) = params["dense"]
    layers += [(w1, b1), (w2, b2), (w3, b3)]

    # Fuse dense4p (30->7) and dense4r (30->1) into one head matmul (padded below).
    layers.append((jnp.concatenate([wp, wr], axis=1),
                   jnp.concatenate([bp, br], axis=1)))

    # Zero-pad every feature dim to a multiple of `align` (lane-dense activations,
    # full MXU K/N tiles).  Zero rows/cols + zero bias keep the math identical.
    out = []
    for w, b in layers:
        fi, fo = w.shape
        fi_p, fo_p = _round_up(fi, align), _round_up(fo, align)
        w = jnp.pad(w, ((0, fi_p - fi), (0, fo_p - fo)))
        b = jnp.pad(b, ((0, 0), (0, fo_p - fo)))
        # Weights stored bf16 (MXU operands); biases stay f32 (VPU epilogue).
        out.append((w.astype(matmul_dtype), b.astype(jnp.float32)))
    return tuple(out)


# ------------------------------ forward pass --------------------------------

@jax.jit
def conv_model_forward(board, prep):
    """board: (B, 2, 6, 7) NCHW -> (probs (B,7), v (B,1))."""
    B = board.shape[0]
    f_in = board.shape[1] * board.shape[2] * board.shape[3]
    f_in_pad = prep[0][0].shape[0]

    # NCHW flatten, zero-pad features to the kernel's padded width, pre-cast to
    # bf16 (board values exactly representable -> halves the input DMA).
    x0 = board.reshape(B, f_in).astype(jnp.bfloat16)
    x0 = jnp.pad(x0, ((0, 0), (0, f_in_pad - f_in)))

    # Batch tiling: split the batch over >= 2 grid steps (shards across both
    # v7x TensorCores), rows rounded to 32 (bf16 sublane packing x 2 halves),
    # capped at 512 rows (~15 MB VMEM resident -> fits every chip generation).
    tb = min(_round_up(max(-(-B // 2), 1), 32), 512)
    b_pad = _round_up(B, tb)
    if b_pad // tb < 2:
        b_pad = 2 * tb
    if b_pad != B:
        x0 = jnp.pad(x0, ((0, b_pad - B), (0, 0)))
    grid = (b_pad // tb,)

    in_specs = [pl.BlockSpec((tb, f_in_pad), lambda i: (i, 0))]
    flat_args = [x0]
    for w, b in prep:
        in_specs.append(pl.BlockSpec(w.shape, lambda i: (0, 0)))   # VMEM-resident
        in_specs.append(pl.BlockSpec(b.shape, lambda i: (0, 0)))
        flat_args += [w, b]

    out = pl.pallas_call(
        _fused_forward_kernel,
        out_shape=jax.ShapeDtypeStruct((b_pad, 128), jnp.float32),
        grid_spec=pltpu.PrefetchScalarGridSpec(
            num_scalar_prefetch=0,
            grid=grid,
            in_specs=in_specs,
            out_specs=pl.BlockSpec((tb, 128), lambda i: (i, 0)),
        ),
        compiler_params=pltpu.CompilerParams(
            dimension_semantics=("parallel",),
            vmem_limit_bytes=48 * 1024 * 1024,
        ),
    )(*flat_args)

    probs = out[:B, :7]
    v = out[:B, 7:8]
    return probs, v


# --------------------------- parameter init --------------------------------

def init_params(key):
    def dense_layer(k, fan_in, fan_out):
        k1, k2 = jax.random.split(k)
        bound = 1.0 / float(fan_in) ** 0.5
        w = jax.random.uniform(k1, (fan_in, fan_out), jnp.float32, -bound, bound)
        b = jax.random.uniform(k2, (1, fan_out), jnp.float32, -bound, bound)
        return w, b

    def conv_layer(k, cin, cout):
        k1, k2 = jax.random.split(k)
        bound = 1.0 / float(cin * 9) ** 0.5
        w = jax.random.uniform(k1, (cout, cin, 3, 3), jnp.float32, -bound, bound)
        b = jax.random.uniform(k2, (cout,), jnp.float32, -bound, bound)
        return w, b

    ks = jax.random.split(key, 9)
    return {
        "conv1": conv_layer(ks[0], 2, 16),
        "conv2": conv_layer(ks[1], 16, 32),
        "conv3": conv_layer(ks[2], 32, 64),
        "conv4": conv_layer(ks[3], 64, 64),
        "dense": (
            dense_layer(ks[4], 384, 200),
            dense_layer(ks[5], 200, 160),
            dense_layer(ks[6], 160, 30),
            dense_layer(ks[7], 30, 7),
            dense_layer(ks[8], 30, 1),
        ),
    }


# ------------------------- pure-JAX f32 reference ---------------------------

def reference_forward(board, params):
    def conv_relu(x, w, b, pad):
        y = jax.lax.conv_general_dilated(
            x, w, window_strides=(1, 1), padding=[(pad, pad), (pad, pad)],
            dimension_numbers=("NCHW", "OIHW", "NCHW"))
        return jnp.maximum(y + b[None, :, None, None], 0.0)

    x = conv_relu(board, *params["conv1"], 1)
    x = conv_relu(x, *params["conv2"], 0)
    x = conv_relu(x, *params["conv3"], 1)
    x = conv_relu(x, *params["conv4"], 0)
    x = x.reshape(x.shape[0], -1)
    (w1, b1), (w2, b2), (w3, b3), (wp, bp), (wr, br) = params["dense"]
    x = jnp.maximum(x @ w1 + b1, 0.0)
    x = jnp.maximum(x @ w2 + b2, 0.0)
    x = jnp.maximum(x @ w3 + b3, 0.0)
    probs = jax.nn.softmax(x @ wp + bp, axis=1)
    v = jnp.tanh(x @ wr + br)
    return probs, v


# NOTE: LambdaLayer / lambd and Sigmoid are defined in the PyTorch module but
# never used in forward(), so they are intentionally not implemented.
# TODO(synk): nothing else omitted.


if __name__ == "__main__":
    key = jax.random.PRNGKey(0)
    pkey, xkey = jax.random.split(key)
    params = init_params(pkey)
    prep = preprocess_params(params)          # one-time weight preprocessing

    # Connect-Four style board: batch=2, 2 input planes, 6x7 spatial.
    board = jax.random.normal(xkey, (2, 2, 6, 7), dtype=jnp.float32)

    probs, v = conv_model_forward(board, prep)
    probs, v = jax.block_until_ready((probs, v))

    assert probs.shape == (2, 7) and v.shape == (2, 1)
    assert jnp.allclose(jnp.sum(probs, axis=1), 1.0, atol=1e-3)
    assert bool(jnp.all(jnp.abs(v) <= 1.0))

    # Cross-check the fused bf16 Pallas kernel against the f32 JAX reference.
    ref_probs, ref_v = reference_forward(board, params)
    assert jnp.allclose(probs, ref_probs, atol=2e-2)
    assert jnp.allclose(v, ref_v, atol=2e-2)

    print("KERNEL_OK")
</pallas_src>

<mosaic_0001>
module attributes {stable_mosaic.version = 11 : i64} {
  func.func @_fused_forward_kernel(%arg0: i32, %arg1: memref<32x128xbf16, #tpu.memory_space<vmem>>, %arg2: memref<128x768xbf16, #tpu.memory_space<vmem>>, %arg3: memref<1x768xf32, #tpu.memory_space<vmem>>, %arg4: memref<768x640xbf16, #tpu.memory_space<vmem>>, %arg5: memref<1x640xf32, #tpu.memory_space<vmem>>, %arg6: memref<640x1280xbf16, #tpu.memory_space<vmem>>, %arg7: memref<1x1280xf32, #tpu.memory_space<vmem>>, %arg8: memref<1280x384xbf16, #tpu.memory_space<vmem>>, %arg9: memref<1x384xf32, #tpu.memory_space<vmem>>, %arg10: memref<384x256xbf16, #tpu.memory_space<vmem>>, %arg11: memref<1x256xf32, #tpu.memory_space<vmem>>, %arg12: memref<256x256xbf16, #tpu.memory_space<vmem>>, %arg13: memref<1x256xf32, #tpu.memory_space<vmem>>, %arg14: memref<256x128xbf16, #tpu.memory_space<vmem>>, %arg15: memref<1x128xf32, #tpu.memory_space<vmem>>, %arg16: memref<128x128xbf16, #tpu.memory_space<vmem>>, %arg17: memref<1x128xf32, #tpu.memory_space<vmem>>, %arg18: memref<32x128xf32, #tpu.memory_space<vmem>>) attributes {dimension_semantics = [#tpu.dimension_semantics<parallel>], iteration_bounds = array<i64: 2>, scalar_prefetch = 0 : i64, scratch_operands = 0 : i64, tpu.core_type = #tpu.core_type<tc>, window_params = [{transform_indices = @transform_0, window_bounds = array<i64: 32, 128>}, {pipeline_mode = #tpu.pipeline_mode<synchronous>, transform_indices = @transform_1, window_bounds = array<i64: 128, 768>}, {pipeline_mode = #tpu.pipeline_mode<synchronous>, transform_indices = @transform_2, window_bounds = array<i64: 1, 768>}, {pipeline_mode = #tpu.pipeline_mode<synchronous>, transform_indices = @transform_3, window_bounds = array<i64: 768, 640>}, {pipeline_mode = #tpu.pipeline_mode<synchronous>, transform_indices = @transform_4, window_bounds = array<i64: 1, 640>}, {pipeline_mode = #tpu.pipeline_mode<synchronous>, transform_indices = @transform_5, window_bounds = array<i64: 640, 1280>}, {pipeline_mode = #tpu.pipeline_mode<synchronous>, transform_indices = @transform_6, window_bounds = array<i64: 1, 1280>}, {pipeline_mode = #tpu.pipeline_mode<synchronous>, transform_indices = @transform_7, window_bounds = array<i64: 1280, 384>}, {pipeline_mode = #tpu.pipeline_mode<synchronous>, transform_indices = @transform_8, window_bounds = array<i64: 1, 384>}, {pipeline_mode = #tpu.pipeline_mode<synchronous>, transform_indices = @transform_9, window_bounds = array<i64: 384, 256>}, {pipeline_mode = #tpu.pipeline_mode<synchronous>, transform_indices = @transform_10, window_bounds = array<i64: 1, 256>}, {pipeline_mode = #tpu.pipeline_mode<synchronous>, transform_indices = @transform_11, window_bounds = array<i64: 256, 256>}, {pipeline_mode = #tpu.pipeline_mode<synchronous>, transform_indices = @transform_12, window_bounds = array<i64: 1, 256>}, {pipeline_mode = #tpu.pipeline_mode<synchronous>, transform_indices = @transform_13, window_bounds = array<i64: 256, 128>}, {pipeline_mode = #tpu.pipeline_mode<synchronous>, transform_indices = @transform_14, window_bounds = array<i64: 1, 128>}, {pipeline_mode = #tpu.pipeline_mode<synchronous>, transform_indices = @transform_15, window_bounds = array<i64: 128, 128>}, {pipeline_mode = #tpu.pipeline_mode<synchronous>, transform_indices = @transform_16, window_bounds = array<i64: 1, 128>}, {transform_indices = @transform_17, window_bounds = array<i64: 32, 128>}]} {
    %c0 = arith.constant 0 : index
    %c0_0 = arith.constant 0 : index
    %0 = vector.load %arg1[%c0, %c0_0] : memref<32x128xbf16, #tpu.memory_space<vmem>>, vector<32x128xbf16>
    %1 = vector.extract_strided_slice %0 {offsets = [0, 0], sizes = [16, 128], strides = [1, 1]} : vector<32x128xbf16> to vector<16x128xbf16>
    %2 = vector.extract_strided_slice %0 {offsets = [16, 0], sizes = [16, 128], strides = [1, 1]} : vector<32x128xbf16> to vector<16x128xbf16>
    %c0_1 = arith.constant 0 : index
    %c0_2 = arith.constant 0 : index
    %3 = vector.load %arg2[%c0_1, %c0_2] : memref<128x768xbf16, #tpu.memory_space<vmem>>, vector<128x768xbf16>
    %cst = arith.constant dense<0.000000e+00> : vector<16x768xf32>
    %4 = tpu.matmul %1, %3, %cst {dimension_numbers = #tpu.dot_dimension_numbers<[1], [0], [0], [1], [0, 0, 1, 1], [], []>} : vector<16x128xbf16>, vector<128x768xbf16>, vector<16x768xf32> -> vector<16x768xf32>
    %c0_3 = arith.constant 0 : index
    %c0_4 = arith.constant 0 : index
    %5 = vector.load %arg3[%c0_3, %c0_4] : memref<1x768xf32, #tpu.memory_space<vmem>>, vector<1x768xf32>
    %6 = vector.broadcast %5 : vector<1x768xf32> to vector<16x768xf32>
    %7 = arith.addf %4, %6 : vector<16x768xf32>
    %cst_5 = arith.constant 0.000000e+00 : f32
    %8 = vector.broadcast %cst_5 : f32 to vector<16x768xf32>
    %9 = arith.maximumf %7, %8 : vector<16x768xf32>
    %c0_6 = arith.constant 0 : index
    %c0_7 = arith.constant 0 : index
    %10 = vector.load %arg2[%c0_6, %c0_7] : memref<128x768xbf16, #tpu.memory_space<vmem>>, vector<128x768xbf16>
    %cst_8 = arith.constant dense<0.000000e+00> : vector<16x768xf32>
    %11 = tpu.matmul %2, %10, %cst_8 {dimension_numbers = #tpu.dot_dimension_numbers<[1], [0], [0], [1], [0, 0, 1, 1], [], []>} : vector<16x128xbf16>, vector<128x768xbf16>, vector<16x768xf32> -> vector<16x768xf32>
    %c0_9 = arith.constant 0 : index
    %c0_10 = arith.constant 0 : index
    %12 = vector.load %arg3[%c0_9, %c0_10] : memref<1x768xf32, #tpu.memory_space<vmem>>, vector<1x768xf32>
    %13 = vector.broadcast %12 : vector<1x768xf32> to vector<16x768xf32>
    %14 = arith.addf %11, %13 : vector<16x768xf32>
    %cst_11 = arith.constant 0.000000e+00 : f32
    %15 = vector.broadcast %cst_11 : f32 to vector<16x768xf32>
    %16 = arith.maximumf %14, %15 : vector<16x768xf32>
    %17 = arith.truncf %9 : vector<16x768xf32> to vector<16x768xbf16>
    %c0_12 = arith.constant 0 : index
    %c0_13 = arith.constant 0 : index
    %18 = vector.load %arg4[%c0_12, %c0_13] : memref<768x640xbf16, #tpu.memory_space<vmem>>, vector<768x640xbf16>
    %cst_14 = arith.constant dense<0.000000e+00> : vector<16x640xf32>
    %19 = tpu.matmul %17, %18, %cst_14 {dimension_numbers = #tpu.dot_dimension_numbers<[1], [0], [0], [1], [0, 0, 1, 1], [], []>} : vector<16x768xbf16>, vector<768x640xbf16>, vector<16x640xf32> -> vector<16x640xf32>
    %c0_15 = arith.constant 0 : index
    %c0_16 = arith.constant 0 : index
    %20 = vector.load %arg5[%c0_15, %c0_16] : memref<1x640xf32, #tpu.memory_space<vmem>>, vector<1x640xf32>
    %21 = vector.broadcast %20 : vector<1x640xf32> to vector<16x640xf32>
    %22 = arith.addf %19, %21 : vector<16x640xf32>
    %cst_17 = arith.constant 0.000000e+00 : f32
    %23 = vector.broadcast %cst_17 : f32 to vector<16x640xf32>
    %24 = arith.maximumf %22, %23 : vector<16x640xf32>
    %25 = arith.truncf %16 : vector<16x768xf32> to vector<16x768xbf16>
    %c0_18 = arith.constant 0 : index
    %c0_19 = arith.constant 0 : index
    %26 = vector.load %arg4[%c0_18, %c0_19] : memref<768x640xbf16, #tpu.memory_space<vmem>>, vector<768x640xbf16>
    %cst_20 = arith.constant dense<0.000000e+00> : vector<16x640xf32>
    %27 = tpu.matmul %25, %26, %cst_20 {dimension_numbers = #tpu.dot_dimension_numbers<[1], [0], [0], [1], [0, 0, 1, 1], [], []>} : vector<16x768xbf16>, vector<768x640xbf16>, vector<16x640xf32> -> vector<16x640xf32>
    %c0_21 = arith.constant 0 : index
    %c0_22 = arith.constant 0 : index
    %28 = vector.load %arg5[%c0_21, %c0_22] : memref<1x640xf32, #tpu.memory_space<vmem>>, vector<1x640xf32>
    %29 = vector.broadcast %28 : vector<1x640xf32> to vector<16x640xf32>
    %30 = arith.addf %27, %29 : vector<16x640xf32>
    %cst_23 = arith.constant 0.000000e+00 : f32
    %31 = vector.broadcast %cst_23 : f32 to vector<16x640xf32>
    %32 = arith.maximumf %30, %31 : vector<16x640xf32>
    %33 = arith.truncf %24 : vector<16x640xf32> to vector<16x640xbf16>
    %c0_24 = arith.constant 0 : index
    %c0_25 = arith.constant 0 : index
    %34 = vector.load %arg6[%c0_24, %c0_25] : memref<640x1280xbf16, #tpu.memory_space<vmem>>, vector<640x1280xbf16>
    %cst_26 = arith.constant dense<0.000000e+00> : vector<16x1280xf32>
    %35 = tpu.matmul %33, %34, %cst_26 {dimension_numbers = #tpu.dot_dimension_numbers<[1], [0], [0], [1], [0, 0, 1, 1], [], []>} : vector<16x640xbf16>, vector<640x1280xbf16>, vector<16x1280xf32> -> vector<16x1280xf32>
    %c0_27 = arith.constant 0 : index
    %c0_28 = arith.constant 0 : index
    %36 = vector.load %arg7[%c0_27, %c0_28] : memref<1x1280xf32, #tpu.memory_space<vmem>>, vector<1x1280xf32>
    %37 = vector.broadcast %36 : vector<1x1280xf32> to vector<16x1280xf32>
    %38 = arith.addf %35, %37 : vector<16x1280xf32>
    %cst_29 = arith.constant 0.000000e+00 : f32
    %39 = vector.broadcast %cst_29 : f32 to vector<16x1280xf32>
    %40 = arith.maximumf %38, %39 : vector<16x1280xf32>
    %41 = arith.truncf %32 : vector<16x640xf32> to vector<16x640xbf16>
    %c0_30 = arith.constant 0 : index
    %c0_31 = arith.constant 0 : index
    %42 = vector.load %arg6[%c0_30, %c0_31] : memref<640x1280xbf16, #tpu.memory_space<vmem>>, vector<640x1280xbf16>
    %cst_32 = arith.constant dense<0.000000e+00> : vector<16x1280xf32>
    %43 = tpu.matmul %41, %42, %cst_32 {dimension_numbers = #tpu.dot_dimension_numbers<[1], [0], [0], [1], [0, 0, 1, 1], [], []>} : vector<16x640xbf16>, vector<640x1280xbf16>, vector<16x1280xf32> -> vector<16x1280xf32>
    %c0_33 = arith.constant 0 : index
    %c0_34 = arith.constant 0 : index
    %44 = vector.load %arg7[%c0_33, %c0_34] : memref<1x1280xf32, #tpu.memory_space<vmem>>, vector<1x1280xf32>
    %45 = vector.broadcast %44 : vector<1x1280xf32> to vector<16x1280xf32>
    %46 = arith.addf %43, %45 : vector<16x1280xf32>
    %cst_35 = arith.constant 0.000000e+00 : f32
    %47 = vector.broadcast %cst_35 : f32 to vector<16x1280xf32>
    %48 = arith.maximumf %46, %47 : vector<16x1280xf32>
    %49 = arith.truncf %40 : vector<16x1280xf32> to vector<16x1280xbf16>
    %c0_36 = arith.constant 0 : index
    %c0_37 = arith.constant 0 : index
    %50 = vector.load %arg8[%c0_36, %c0_37] : memref<1280x384xbf16, #tpu.memory_space<vmem>>, vector<1280x384xbf16>
    %cst_38 = arith.constant dense<0.000000e+00> : vector<16x384xf32>
    %51 = tpu.matmul %49, %50, %cst_38 {dimension_numbers = #tpu.dot_dimension_numbers<[1], [0], [0], [1], [0, 0, 1, 1], [], []>} : vector<16x1280xbf16>, vector<1280x384xbf16>, vector<16x384xf32> -> vector<16x384xf32>
    %c0_39 = arith.constant 0 : index
    %c0_40 = arith.constant 0 : index
    %52 = vector.load %arg9[%c0_39, %c0_40] : memref<1x384xf32, #tpu.memory_space<vmem>>, vector<1x384xf32>
    %53 = vector.broadcast %52 : vector<1x384xf32> to vector<16x384xf32>
    %54 = arith.addf %51, %53 : vector<16x384xf32>
    %cst_41 = arith.constant 0.000000e+00 : f32
    %55 = vector.broadcast %cst_41 : f32 to vector<16x384xf32>
    %56 = arith.maximumf %54, %55 : vector<16x384xf32>
    %57 = arith.truncf %48 : vector<16x1280xf32> to vector<16x1280xbf16>
    %c0_42 = arith.constant 0 : index
    %c0_43 = arith.constant 0 : index
    %58 = vector.load %arg8[%c0_42, %c0_43] : memref<1280x384xbf16, #tpu.memory_space<vmem>>, vector<1280x384xbf16>
    %cst_44 = arith.constant dense<0.000000e+00> : vector<16x384xf32>
    %59 = tpu.matmul %57, %58, %cst_44 {dimension_numbers = #tpu.dot_dimension_numbers<[1], [0], [0], [1], [0, 0, 1, 1], [], []>} : vector<16x1280xbf16>, vector<1280x384xbf16>, vector<16x384xf32> -> vector<16x384xf32>
    %c0_45 = arith.constant 0 : index
    %c0_46 = arith.constant 0 : index
    %60 = vector.load %arg9[%c0_45, %c0_46] : memref<1x384xf32, #tpu.memory_space<vmem>>, vector<1x384xf32>
    %61 = vector.broadcast %60 : vector<1x384xf32> to vector<16x384xf32>
    %62 = arith.addf %59, %61 : vector<16x384xf32>
    %cst_47 = arith.constant 0.000000e+00 : f32
    %63 = vector.broadcast %cst_47 : f32 to vector<16x384xf32>
    %64 = arith.maximumf %62, %63 : vector<16x384xf32>
    %65 = arith.truncf %56 : vector<16x384xf32> to vector<16x384xbf16>
    %c0_48 = arith.constant 0 : index
    %c0_49 = arith.constant 0 : index
    %66 = vector.load %arg10[%c0_48, %c0_49] : memref<384x256xbf16, #tpu.memory_space<vmem>>, vector<384x256xbf16>
    %cst_50 = arith.constant dense<0.000000e+00> : vector<16x256xf32>
    %67 = tpu.matmul %65, %66, %cst_50 {dimension_numbers = #tpu.dot_dimension_numbers<[1], [0], [0], [1], [0, 0, 1, 1], [], []>} : vector<16x384xbf16>, vector<384x256xbf16>, vector<16x256xf32> -> vector<16x256xf32>
    %c0_51 = arith.constant 0 : index
    %c0_52 = arith.constant 0 : index
    %68 = vector.load %arg11[%c0_51, %c0_52] : memref<1x256xf32, #tpu.memory_space<vmem>>, vector<1x256xf32>
    %69 = vector.broadcast %68 : vector<1x256xf32> to vector<16x256xf32>
    %70 = arith.addf %67, %69 : vector<16x256xf32>
    %cst_53 = arith.constant 0.000000e+00 : f32
    %71 = vector.broadcast %cst_53 : f32 to vector<16x256xf32>
    %72 = arith.maximumf %70, %71 : vector<16x256xf32>
    %73 = arith.truncf %64 : vector<16x384xf32> to vector<16x384xbf16>
    %c0_54 = arith.constant 0 : index
    %c0_55 = arith.constant 0 : index
    %74 = vector.load %arg10[%c0_54, %c0_55] : memref<384x256xbf16, #tpu.memory_space<vmem>>, vector<384x256xbf16>
    %cst_56 = arith.constant dense<0.000000e+00> : vector<16x256xf32>
    %75 = tpu.matmul %73, %74, %cst_56 {dimension_numbers = #tpu.dot_dimension_numbers<[1], [0], [0], [1], [0, 0, 1, 1], [], []>} : vector<16x384xbf16>, vector<384x256xbf16>, vector<16x256xf32> -> vector<16x256xf32>
    %c0_57 = arith.constant 0 : index
    %c0_58 = arith.constant 0 : index
    %76 = vector.load %arg11[%c0_57, %c0_58] : memref<1x256xf32, #tpu.memory_space<vmem>>, vector<1x256xf32>
    %77 = vector.broadcast %76 : vector<1x256xf32> to vector<16x256xf32>
    %78 = arith.addf %75, %77 : vector<16x256xf32>
    %cst_59 = arith.constant 0.000000e+00 : f32
    %79 = vector.broadcast %cst_59 : f32 to vector<16x256xf32>
    %80 = arith.maximumf %78, %79 : vector<16x256xf32>
    %81 = arith.truncf %72 : vector<16x256xf32> to vector<16x256xbf16>
    %c0_60 = arith.constant 0 : index
    %c0_61 = arith.constant 0 : index
    %82 = vector.load %arg12[%c0_60, %c0_61] : memref<256x256xbf16, #tpu.memory_space<vmem>>, vector<256x256xbf16>
    %cst_62 = arith.constant dense<0.000000e+00> : vector<16x256xf32>
    %83 = tpu.matmul %81, %82, %cst_62 {dimension_numbers = #tpu.dot_dimension_numbers<[1], [0], [0], [1], [0, 0, 1, 1], [], []>} : vector<16x256xbf16>, vector<256x256xbf16>, vector<16x256xf32> -> vector<16x256xf32>
    %c0_63 = arith.constant 0 : index
    %c0_64 = arith.constant 0 : index
    %84 = vector.load %arg13[%c0_63, %c0_64] : memref<1x256xf32, #tpu.memory_space<vmem>>, vector<1x256xf32>
    %85 = vector.broadcast %84 : vector<1x256xf32> to vector<16x256xf32>
    %86 = arith.addf %83, %85 : vector<16x256xf32>
    %cst_65 = arith.constant 0.000000e+00 : f32
    %87 = vector.broadcast %cst_65 : f32 to vector<16x256xf32>
    %88 = arith.maximumf %86, %87 : vector<16x256xf32>
    %89 = arith.truncf %80 : vector<16x256xf32> to vector<16x256xbf16>
    %c0_66 = arith.constant 0 : index
    %c0_67 = arith.constant 0 : index
    %90 = vector.load %arg12[%c0_66, %c0_67] : memref<256x256xbf16, #tpu.memory_space<vmem>>, vector<256x256xbf16>
    %cst_68 = arith.constant dense<0.000000e+00> : vector<16x256xf32>
    %91 = tpu.matmul %89, %90, %cst_68 {dimension_numbers = #tpu.dot_dimension_numbers<[1], [0], [0], [1], [0, 0, 1, 1], [], []>} : vector<16x256xbf16>, vector<256x256xbf16>, vector<16x256xf32> -> vector<16x256xf32>
    %c0_69 = arith.constant 0 : index
    %c0_70 = arith.constant 0 : index
    %92 = vector.load %arg13[%c0_69, %c0_70] : memref<1x256xf32, #tpu.memory_space<vmem>>, vector<1x256xf32>
    %93 = vector.broadcast %92 : vector<1x256xf32> to vector<16x256xf32>
    %94 = arith.addf %91, %93 : vector<16x256xf32>
    %cst_71 = arith.constant 0.000000e+00 : f32
    %95 = vector.broadcast %cst_71 : f32 to vector<16x256xf32>
    %96 = arith.maximumf %94, %95 : vector<16x256xf32>
    %97 = arith.truncf %88 : vector<16x256xf32> to vector<16x256xbf16>
    %c0_72 = arith.constant 0 : index
    %c0_73 = arith.constant 0 : index
    %98 = vector.load %arg14[%c0_72, %c0_73] : memref<256x128xbf16, #tpu.memory_space<vmem>>, vector<256x128xbf16>
    %cst_74 = arith.constant dense<0.000000e+00> : vector<16x128xf32>
    %99 = tpu.matmul %97, %98, %cst_74 {dimension_numbers = #tpu.dot_dimension_numbers<[1], [0], [0], [1], [0, 0, 1, 1], [], []>} : vector<16x256xbf16>, vector<256x128xbf16>, vector<16x128xf32> -> vector<16x128xf32>
    %c0_75 = arith.constant 0 : index
    %c0_76 = arith.constant 0 : index
    %100 = vector.load %arg15[%c0_75, %c0_76] : memref<1x128xf32, #tpu.memory_space<vmem>>, vector<1x128xf32>
    %101 = vector.broadcast %100 : vector<1x128xf32> to vector<16x128xf32>
    %102 = arith.addf %99, %101 : vector<16x128xf32>
    %cst_77 = arith.constant 0.000000e+00 : f32
    %103 = vector.broadcast %cst_77 : f32 to vector<16x128xf32>
    %104 = arith.maximumf %102, %103 : vector<16x128xf32>
    %105 = arith.truncf %96 : vector<16x256xf32> to vector<16x256xbf16>
    %c0_78 = arith.constant 0 : index
    %c0_79 = arith.constant 0 : index
    %106 = vector.load %arg14[%c0_78, %c0_79] : memref<256x128xbf16, #tpu.memory_space<vmem>>, vector<256x128xbf16>
    %cst_80 = arith.constant dense<0.000000e+00> : vector<16x128xf32>
    %107 = tpu.matmul %105, %106, %cst_80 {dimension_numbers = #tpu.dot_dimension_numbers<[1], [0], [0], [1], [0, 0, 1, 1], [], []>} : vector<16x256xbf16>, vector<256x128xbf16>, vector<16x128xf32> -> vector<16x128xf32>
    %c0_81 = arith.constant 0 : index
    %c0_82 = arith.constant 0 : index
    %108 = vector.load %arg15[%c0_81, %c0_82] : memref<1x128xf32, #tpu.memory_space<vmem>>, vector<1x128xf32>
    %109 = vector.broadcast %108 : vector<1x128xf32> to vector<16x128xf32>
    %110 = arith.addf %107, %109 : vector<16x128xf32>
    %cst_83 = arith.constant 0.000000e+00 : f32
    %111 = vector.broadcast %cst_83 : f32 to vector<16x128xf32>
    %112 = arith.maximumf %110, %111 : vector<16x128xf32>
    %113 = arith.truncf %104 : vector<16x128xf32> to vector<16x128xbf16>
    %c0_84 = arith.constant 0 : index
    %c0_85 = arith.constant 0 : index
    %114 = vector.load %arg16[%c0_84, %c0_85] : memref<128x128xbf16, #tpu.memory_space<vmem>>, vector<128x128xbf16>
    %cst_86 = arith.constant dense<0.000000e+00> : vector<16x128xf32>
    %115 = tpu.matmul %113, %114, %cst_86 {dimension_numbers = #tpu.dot_dimension_numbers<[1], [0], [0], [1], [0, 0, 1, 1], [], []>} : vector<16x128xbf16>, vector<128x128xbf16>, vector<16x128xf32> -> vector<16x128xf32>
    %c0_87 = arith.constant 0 : index
    %c0_88 = arith.constant 0 : index
    %116 = vector.load %arg17[%c0_87, %c0_88] : memref<1x128xf32, #tpu.memory_space<vmem>>, vector<1x128xf32>
    %117 = vector.broadcast %116 : vector<1x128xf32> to vector<16x128xf32>
    %118 = arith.addf %115, %117 : vector<16x128xf32>
    %119 = tpu.iota {dimensions = array<i32: 1>} : vector<16x128xi32>
    %c7_i32 = arith.constant 7 : i32
    %120 = vector.broadcast %c7_i32 : i32 to vector<16x128xi32>
    %121 = arith.cmpi slt, %119, %120 : vector<16x128xi32>
    %cst_89 = arith.constant -1.000000e+30 : f32
    %122 = vector.broadcast %cst_89 : f32 to vector<16x128xf32>
    %123 = arith.select %121, %118, %122 : vector<16x128xi1>, vector<16x128xf32>
    %cst_90 = arith.constant dense<0xFF800000> : vector<16xf32>
    %124 = vector.multi_reduction <maximumf>, %123, %cst_90 [1] : vector<16x128xf32> to vector<16xf32>
    %125 = vector.shape_cast %124 : vector<16xf32> to vector<16x1xf32>
    %126 = vector.broadcast %125 : vector<16x1xf32> to vector<16x128xf32>
    %127 = arith.subf %123, %126 : vector<16x128xf32>
    %128 = math.exp %127 : vector<16x128xf32>
    %cst_91 = arith.constant 0.000000e+00 : f32
    %129 = vector.broadcast %cst_91 : f32 to vector<16x128xf32>
    %130 = arith.select %121, %128, %129 : vector<16x128xi1>, vector<16x128xf32>
    %cst_92 = arith.constant dense<0.000000e+00> : vector<16xf32>
    %131 = vector.multi_reduction <add>, %130, %cst_92 [1] : vector<16x128xf32> to vector<16xf32>
    %132 = vector.shape_cast %131 : vector<16xf32> to vector<16x1xf32>
    %133 = tpu.reciprocal %132 {approx = true} : vector<16x1xf32> -> vector<16x1xf32>
    %134 = vector.broadcast %133 : vector<16x1xf32> to vector<16x128xf32>
    %135 = arith.mulf %130, %134 : vector<16x128xf32>
    %136 = math.tanh %118 : vector<16x128xf32>
    %137 = arith.select %121, %135, %136 : vector<16x128xi1>, vector<16x128xf32>
    %c0_93 = arith.constant 0 : index
    %c0_94 = arith.constant 0 : index
    %138 = vector.load %arg18[%c0_93, %c0_94] : memref<32x128xf32, #tpu.memory_space<vmem>>, vector<16x128xf32>
    tpu.vector_store %arg18[%c0_93, %c0_94], %137 {strides = array<i32>} : memref<32x128xf32, #tpu.memory_space<vmem>>, vector<16x128xf32>,
    %139 = arith.truncf %112 : vector<16x128xf32> to vector<16x128xbf16>
    %c0_95 = arith.constant 0 : index
    %c0_96 = arith.constant 0 : index
    %140 = vector.load %arg16[%c0_95, %c0_96] : memref<128x128xbf16, #tpu.memory_space<vmem>>, vector<128x128xbf16>
    %cst_97 = arith.constant dense<0.000000e+00> : vector<16x128xf32>
    %141 = tpu.matmul %139, %140, %cst_97 {dimension_numbers = #tpu.dot_dimension_numbers<[1], [0], [0], [1], [0, 0, 1, 1], [], []>} : vector<16x128xbf16>, vector<128x128xbf16>, vector<16x128xf32> -> vector<16x128xf32>
    %c0_98 = arith.constant 0 : index
    %c0_99 = arith.constant 0 : index
    %142 = vector.load %arg17[%c0_98, %c0_99] : memref<1x128xf32, #tpu.memory_space<vmem>>, vector<1x128xf32>
    %143 = vector.broadcast %142 : vector<1x128xf32> to vector<16x128xf32>
    %144 = arith.addf %141, %143 : vector<16x128xf32>
    %145 = tpu.iota {dimensions = array<i32: 1>} : vector<16x128xi32>
    %c7_i32_100 = arith.constant 7 : i32
    %146 = vector.broadcast %c7_i32_100 : i32 to vector<16x128xi32>
    %147 = arith.cmpi slt, %145, %146 : vector<16x128xi32>
    %cst_101 = arith.constant -1.000000e+30 : f32
    %148 = vector.broadcast %cst_101 : f32 to vector<16x128xf32>
    %149 = arith.select %147, %144, %148 : vector<16x128xi1>, vector<16x128xf32>
    %cst_102 = arith.constant dense<0xFF800000> : vector<16xf32>
    %150 = vector.multi_reduction <maximumf>, %149, %cst_102 [1] : vector<16x128xf32> to vector<16xf32>
    %151 = vector.shape_cast %150 : vector<16xf32> to vector<16x1xf32>
    %152 = vector.broadcast %151 : vector<16x1xf32> to vector<16x128xf32>
    %153 = arith.subf %149, %152 : vector<16x128xf32>
    %154 = math.exp %153 : vector<16x128xf32>
    %cst_103 = arith.constant 0.000000e+00 : f32
    %155 = vector.broadcast %cst_103 : f32 to vector<16x128xf32>
    %156 = arith.select %147, %154, %155 : vector<16x128xi1>, vector<16x128xf32>
    %cst_104 = arith.constant dense<0.000000e+00> : vector<16xf32>
    %157 = vector.multi_reduction <add>, %156, %cst_104 [1] : vector<16x128xf32> to vector<16xf32>
    %158 = vector.shape_cast %157 : vector<16xf32> to vector<16x1xf32>
    %159 = tpu.reciprocal %158 {approx = true} : vector<16x1xf32> -> vector<16x1xf32>
    %160 = vector.broadcast %159 : vector<16x1xf32> to vector<16x128xf32>
    %161 = arith.mulf %156, %160 : vector<16x128xf32>
    %162 = math.tanh %144 : vector<16x128xf32>
    %163 = arith.select %147, %161, %162 : vector<16x128xi1>, vector<16x128xf32>
    %c16 = arith.constant 16 : index
    %c0_105 = arith.constant 0 : index
    %164 = vector.load %arg18[%c16, %c0_105] : memref<32x128xf32, #tpu.memory_space<vmem>>, vector<16x128xf32>
    tpu.vector_store %arg18[%c16, %c0_105], %163 {strides = array<i32>} : memref<32x128xf32, #tpu.memory_space<vmem>>, vector<16x128xf32>,
    return
  }
  func.func @transform_0(%arg0: i32) -> (i32, i32) {
    %c0_i32 = arith.constant 0 : i32
    %c0_i32_0 = arith.constant 0 : i32
    return %arg0, %c0_i32 : i32, i32
  }
  func.func @transform_1(%arg0: i32) -> (i32, i32) {
    %c0_i32 = arith.constant 0 : i32
    %c0_i32_0 = arith.constant 0 : i32
    %c0_i32_1 = arith.constant 0 : i32
    return %c0_i32, %c0_i32_0 : i32, i32
  }
  func.func @transform_2(%arg0: i32) -> (i32, i32) {
    %c0_i32 = arith.constant 0 : i32
    %c0_i32_0 = arith.constant 0 : i32
    %c0_i32_1 = arith.constant 0 : i32
    return %c0_i32, %c0_i32_0 : i32, i32
  }
  func.func @transform_3(%arg0: i32) -> (i32, i32) {
    %c0_i32 = arith.constant 0 : i32
    %c0_i32_0 = arith.constant 0 : i32
    %c0_i32_1 = arith.constant 0 : i32
    return %c0_i32, %c0_i32_0 : i32, i32
  }
  func.func @transform_4(%arg0: i32) -> (i32, i32) {
    %c0_i32 = arith.constant 0 : i32
    %c0_i32_0 = arith.constant 0 : i32
    %c0_i32_1 = arith.constant 0 : i32
    return %c0_i32, %c0_i32_0 : i32, i32
  }
  func.func @transform_5(%arg0: i32) -> (i32, i32) {
    %c0_i32 = arith.constant 0 : i32
    %c0_i32_0 = arith.constant 0 : i32
    %c0_i32_1 = arith.constant 0 : i32
    return %c0_i32, %c0_i32_0 : i32, i32
  }
  func.func @transform_6(%arg0: i32) -> (i32, i32) {
    %c0_i32 = arith.constant 0 : i32
    %c0_i32_0 = arith.constant 0 : i32
    %c0_i32_1 = arith.constant 0 : i32
    return %c0_i32, %c0_i32_0 : i32, i32
  }
  func.func @transform_7(%arg0: i32) -> (i32, i32) {
    %c0_i32 = arith.constant 0 : i32
    %c0_i32_0 = arith.constant 0 : i32
    %c0_i32_1 = arith.constant 0 : i32
    return %c0_i32, %c0_i32_0 : i32, i32
  }
  func.func @transform_8(%arg0: i32) -> (i32, i32) {
    %c0_i32 = arith.constant 0 : i32
    %c0_i32_0 = arith.constant 0 : i32
    %c0_i32_1 = arith.constant 0 : i32
    return %c0_i32, %c0_i32_0 : i32, i32
  }
  func.func @transform_9(%arg0: i32) -> (i32, i32) {
    %c0_i32 = arith.constant 0 : i32
    %c0_i32_0 = arith.constant 0 : i32
    %c0_i32_1 = arith.constant 0 : i32
    return %c0_i32, %c0_i32_0 : i32, i32
  }
  func.func @transform_10(%arg0: i32) -> (i32, i32) {
    %c0_i32 = arith.constant 0 : i32
    %c0_i32_0 = arith.constant 0 : i32
    %c0_i32_1 = arith.constant 0 : i32
    return %c0_i32, %c0_i32_0 : i32, i32
  }
  func.func @transform_11(%arg0: i32) -> (i32, i32) {
    %c0_i32 = arith.constant 0 : i32
    %c0_i32_0 = arith.constant 0 : i32
    %c0_i32_1 = arith.constant 0 : i32
    return %c0_i32, %c0_i32_0 : i32, i32
  }
  func.func @transform_12(%arg0: i32) -> (i32, i32) {
    %c0_i32 = arith.constant 0 : i32
    %c0_i32_0 = arith.constant 0 : i32
    %c0_i32_1 = arith.constant 0 : i32
    return %c0_i32, %c0_i32_0 : i32, i32
  }
  func.func @transform_13(%arg0: i32) -> (i32, i32) {
    %c0_i32 = arith.constant 0 : i32
    %c0_i32_0 = arith.constant 0 : i32
    %c0_i32_1 = arith.constant 0 : i32
    return %c0_i32, %c0_i32_0 : i32, i32
  }
  func.func @transform_14(%arg0: i32) -> (i32, i32) {
    %c0_i32 = arith.constant 0 : i32
    %c0_i32_0 = arith.constant 0 : i32
    %c0_i32_1 = arith.constant 0 : i32
    return %c0_i32, %c0_i32_0 : i32, i32
  }
  func.func @transform_15(%arg0: i32) -> (i32, i32) {
    %c0_i32 = arith.constant 0 : i32
    %c0_i32_0 = arith.constant 0 : i32
    %c0_i32_1 = arith.constant 0 : i32
    return %c0_i32, %c0_i32_0 : i32, i32
  }
  func.func @transform_16(%arg0: i32) -> (i32, i32) {
    %c0_i32 = arith.constant 0 : i32
    %c0_i32_0 = arith.constant 0 : i32
    %c0_i32_1 = arith.constant 0 : i32
    return %c0_i32, %c0_i32_0 : i32, i32
  }
  func.func @transform_17(%arg0: i32) -> (i32, i32) {
    %c0_i32 = arith.constant 0 : i32
    %c0_i32_0 = arith.constant 0 : i32
    return %arg0, %c0_i32 : i32, i32
  }
}

</mosaic_0001>

<llo_original>
// kernel: conv_model_forward.1
$region0: #{conv_model_forward.1}
  #allocation0 [shape = 'u32[]', space=smem, size = 0x4, offset = 0x4, fixed_abs, tag = 'smem constant byte address 0x4 - core index']
  #allocation1 [shape = 'u32[144,128]{1,0:T(1,128)}', space=vmem, size = 0x12000, scoped, tag = 'internal scratch']
  %s0 = inlined_call_operand.vmem [shape: bf16[64,128], index: 0, kind: input, shape index: {}]
  %s1 = inlined_call_operand.hbm [shape: bf16[128,768], index: 1, kind: input, shape index: {}]
  %s2 = inlined_call_operand.hbm [shape: f32[1,768], index: 2, kind: input, shape index: {}]
  %s3 = inlined_call_operand.hbm [shape: bf16[768,640], index: 3, kind: input, shape index: {}]
  %s4 = inlined_call_operand.hbm [shape: f32[1,640], index: 4, kind: input, shape index: {}]
  %s5 = inlined_call_operand.hbm [shape: bf16[640,1280], index: 5, kind: input, shape index: {}]
  %s6 = inlined_call_operand.hbm [shape: f32[1,1280], index: 6, kind: input, shape index: {}]
  %s7 = inlined_call_operand.hbm [shape: bf16[1280,384], index: 7, kind: input, shape index: {}]
  %s8 = inlined_call_operand.hbm [shape: f32[1,384], index: 8, kind: input, shape index: {}]
  %s9 = inlined_call_operand.hbm [shape: bf16[384,256], index: 9, kind: input, shape index: {}]
  %s10 = inlined_call_operand.hbm [shape: f32[1,256], index: 10, kind: input, shape index: {}]
  %s11 = inlined_call_operand.hbm [shape: bf16[256,256], index: 11, kind: input, shape index: {}]
  %s12 = inlined_call_operand.hbm [shape: f32[1,256], index: 12, kind: input, shape index: {}]
  %s13 = inlined_call_operand.hbm [shape: bf16[256,128], index: 13, kind: input, shape index: {}]
  %s14 = inlined_call_operand.hbm [shape: f32[1,128], index: 14, kind: input, shape index: {}]
  %s15 = inlined_call_operand.hbm [shape: bf16[128,128], index: 15, kind: input, shape index: {}]
  %s16 = inlined_call_operand.hbm [shape: f32[1,128], index: 16, kind: input, shape index: {}]
  %s17 = inlined_call_operand.vmem [shape: f32[64,128], index: 17, kind: output, shape index: {}]
  %s18 = sld [smem:[#allocation0]]
  $region165: #{conv_model_forward.1} parent=0
    _
  %s20 = ssub.s32 1, %s18
  %s21 = scalar_select 0, %s20, %s18
  $region1: #{conv_model_forward.1} parent=0
    #allocation2 [shape = 'u8[196608]{0}', space=vmem, size = 0x30000, scoped, tag = 'input window, operand 1, single buffered']
    #allocation3 [shape = 's32[2]{0}', space=sflag, size = 0x8, scoped, tag = 'scoped memory for conv_model_forward.1']
    #allocation4 [shape = 'u8[3072]{0}', space=vmem, size = 0xc00, scoped, tag = 'input window, operand 2, single buffered']
    #allocation5 [shape = 's32[1]{0}', space=sflag, size = 0x4, scoped, tag = 'scoped memory for conv_model_forward.1']
    #allocation6 [shape = 'u8[983040]{0}', space=vmem, size = 0xf0000, scoped, tag = 'input window, operand 3, single buffered']
    #allocation7 [shape = 'u8[2560]{0}', space=vmem, size = 0xc00, scoped, tag = 'input window, operand 4, single buffered']
    #allocation8 [shape = 's32[1]{0}', space=sflag, size = 0x4, scoped, tag = 'scoped memory for conv_model_forward.1']
    #allocation9 [shape = 'u8[1638400]{0}', space=vmem, size = 0x190000, scoped, tag = 'input window, operand 5, single buffered']
    #allocation10 [shape = 'u8[5120]{0}', space=vmem, size = 0x1400, scoped, tag = 'input window, operand 6, single buffered']
    #allocation11 [shape = 's32[1]{0}', space=sflag, size = 0x4, scoped, tag = 'scoped memory for conv_model_forward.1']
    #allocation12 [shape = 'u8[983040]{0}', space=vmem, size = 0xf0000, scoped, tag = 'input window, operand 7, single buffered']
    #allocation13 [shape = 'u8[1536]{0}', space=vmem, size = 0x800, scoped, tag = 'input window, operand 8, single buffered']
    #allocation14 [shape = 's32[1]{0}', space=sflag, size = 0x4, scoped, tag = 'scoped memory for conv_model_forward.1']
    #allocation15 [shape = 'u8[196608]{0}', space=vmem, size = 0x30000, scoped, tag = 'input window, operand 9, single buffered']
    #allocation16 [shape = 'u8[1024]{0}', space=vmem, size = 0x400, scoped, tag = 'input window, operand 10, single buffered']
    #allocation17 [shape = 's32[1]{0}', space=sflag, size = 0x4, scoped, tag = 'scoped memory for conv_model_forward.1']
    #allocation18 [shape = 'u8[131072]{0}', space=vmem, size = 0x20000, scoped, tag = 'input window, operand 11, single buffered']
    #allocation19 [shape = 'u8[1024]{0}', space=vmem, size = 0x400, scoped, tag = 'input window, operand 12, single buffered']
    #allocation20 [shape = 's32[1]{0}', space=sflag, size = 0x4, scoped, tag = 'scoped memory for conv_model_forward.1']
    #allocation21 [shape = 'u8[65536]{0}', space=vmem, size = 0x10000, scoped, tag = 'input window, operand 13, single buffered']
    #allocation22 [shape = 'u8[512]{0}', space=vmem, size = 0x400, scoped, tag = 'input window, operand 14, single buffered']
    #allocation23 [shape = 's32[1]{0}', space=sflag, size = 0x4, scoped, tag = 'scoped memory for conv_model_forward.1']
    #allocation24 [shape = 'u8[32768]{0}', space=vmem, size = 0x8000, scoped, tag = 'input window, operand 15, single buffered']
    #allocation25 [shape = 'u8[512]{0}', space=vmem, size = 0x400, scoped, tag = 'input window, operand 16, single buffered']
    #allocation26 [shape = 's32[1]{0}', space=sflag, size = 0x4, scoped, tag = 'scoped memory for conv_model_forward.1']
    %22 = vsyncpa [#allocation3], 0
    %23 = vsyncpa [#allocation5], 0
    %24 = vsyncpa [#allocation8], 0
    %25 = vsyncpa [#allocation11], 0
    %26 = vsyncpa [#allocation14], 0
    %27 = vsyncpa [#allocation17], 0
    %28 = vsyncpa [#allocation20], 0
    %29 = vsyncpa [#allocation23], 0
    %30 = vsyncpa [#allocation26], 0
    loop: start=0, step=1, limit=4
    $region2: #{conv_model_forward.1} parent=1 // loop_pre_header
      _
    $region3: #{conv_model_forward.1} parent=1 // loop_header
      %s32 = sphi 0, %s36
      %p33 = scmp.ge.s32.totalorder %s32, 4
      %s42 = sphi 0, %s44
      %s45 = sphi 0, %s42
      %s46 = sphi 0, %s45
      %s62 = sphi 0, %s46
      %s66 = sphi 0, %s66
      %s68 = sphi 0, %s66
      %s69 = sphi 0, %s68
      %s83 = sphi 0, %s69
      %s87 = sphi 0, %s87
      %s89 = sphi 0, %s87
      %s90 = sphi 0, %s89
      %s104 = sphi 0, %s90
      %s108 = sphi 0, %s108
      %s110 = sphi 0, %s108
      %s111 = sphi 0, %s110
      %s125 = sphi 0, %s111
      %s129 = sphi 0, %s129
      %s131 = sphi 0, %s129
      %s132 = sphi 0, %s131
      %s146 = sphi 0, %s132
      %s150 = sphi 0, %s150
      %s152 = sphi 0, %s150
      %s153 = sphi 0, %s152
      %s167 = sphi 0, %s153
      %s171 = sphi 0, %s171
      %s173 = sphi 0, %s171
      %s174 = sphi 0, %s173
      %s188 = sphi 0, %s174
      %s192 = sphi 0, %s192
      %s194 = sphi 0, %s192
      %s195 = sphi 0, %s194
      %s209 = sphi 0, %s195
      %s213 = sphi 0, %s213
      %s215 = sphi 0, %s213
      %s216 = sphi 0, %s215
      %s230 = sphi 0, %s216
      %s234 = sphi 0, %s234
      %s236 = sphi 0, %s234
      %s237 = sphi 0, %s236
      %s251 = sphi 0, %s237
      %s255 = sphi 0, %s255
      %s257 = sphi 0, %s255
      %s258 = sphi 0, %s257
      %s272 = sphi 0, %s258
      %s276 = sphi 0, %s276
      %s278 = sphi 0, %s276
      %s279 = sphi 0, %s278
      %s293 = sphi 0, %s279
      %s297 = sphi 0, %s297
      %s299 = sphi 0, %s297
      %s300 = sphi 0, %s299
      %s314 = sphi 0, %s300
      %s318 = sphi 0, %s318
      %s320 = sphi 0, %s318
      %s321 = sphi 0, %s320
      %s335 = sphi 0, %s321
      %s339 = sphi 0, %s339
      %s341 = sphi 0, %s339
      %s342 = sphi 0, %s341
      %s356 = sphi 0, %s342
      %s360 = sphi 0, %s360
      %s362 = sphi 0, %s360
      %s363 = sphi 0, %s362
      %s377 = sphi 0, %s363
      %s381 = sphi 0, %s381
      %s383 = sphi 0, %s381
      %s384 = sphi 0, %s383
      %s398 = sphi 0, %s384
      %s404 = sphi 0, %s406
      %s407 = sphi 0, %s404
      %s408 = sphi 0, %s407
      %s424 = sphi 0, %s408
    $region4: #{conv_model_forward.1} parent=1 // loop_header_branch
      %35 = sbr.rel (%p33) target = $region8
    $region5: #{conv_model_forward.1} parent=1 // loop_body
      %s37 = ssub.s32 %s32, 1
      %s38 = ssub.s32 %s32, 2
      %s39 = sadd.s32 %s32, 1
      %s40 = ssub.s32 %s32, %s39
      %p41 = scmp.eq.s32.totalorder %s40, 0
      %s43 = sadd.s32 %s42, 1
      %s44 = scalar_select %p41, %s42, %s43
      %p47 = pneg %p41
      %p48 = scmp.eq.s32.totalorder %s32, 1
      %p49 = por %p47, %p48
      %p50 = scmp.ne.s32.totalorder %s42, %s45
      %p51 = scmp.eq.s32.totalorder %s32, 0
      %p52 = por %p50, %p51
      %p53 = scmp.ne.s32.totalorder %s42, %s45
      %p54 = scmp.eq.s32.totalorder %s37, 1
      %p55 = por %p53, %p54
      %p56 = scmp.ne.s32.totalorder %s45, %s46
      %p57 = scmp.eq.s32.totalorder %s37, 0
      %p58 = por %p56, %p57
      %p59 = scmp.ne.s32.totalorder %s45, %s46
      %p60 = scmp.eq.s32.totalorder %s38, 1
      %p61 = por %p59, %p60
      %p63 = scmp.ne.s32.totalorder %s46, %s62
      %p64 = scmp.eq.s32.totalorder %s38, 0
      %p65 = por %p63, %p64
      %s67 = sadd.s32 %s66, 1
      %p70 = scmp.eq.s32.totalorder %s32, 1
      %p71 = scmp.ne.s32.totalorder %s66, %s68
      %p72 = scmp.eq.s32.totalorder %s32, 0
      %p73 = por %p71, %p72
      %p74 = scmp.ne.s32.totalorder %s66, %s68
      %p75 = scmp.eq.s32.totalorder %s37, 1
      %p76 = por %p74, %p75
      %p77 = scmp.ne.s32.totalorder %s68, %s69
      %p78 = scmp.eq.s32.totalorder %s37, 0
      %p79 = por %p77, %p78
      %p80 = scmp.ne.s32.totalorder %s68, %s69
      %p81 = scmp.eq.s32.totalorder %s38, 1
      %p82 = por %p80, %p81
      %p84 = scmp.ne.s32.totalorder %s69, %s83
      %p85 = scmp.eq.s32.totalorder %s38, 0
      %p86 = por %p84, %p85
      %s88 = sadd.s32 %s87, 1
      %p91 = scmp.eq.s32.totalorder %s32, 1
      %p92 = scmp.ne.s32.totalorder %s87, %s89
      %p93 = scmp.eq.s32.totalorder %s32, 0
      %p94 = por %p92, %p93
      %p95 = scmp.ne.s32.totalorder %s87, %s89
      %p96 = scmp.eq.s32.totalorder %s37, 1
      %p97 = por %p95, %p96
      %p98 = scmp.ne.s32.totalorder %s89, %s90
      %p99 = scmp.eq.s32.totalorder %s37, 0
      %p100 = por %p98, %p99
      %p101 = scmp.ne.s32.totalorder %s89, %s90
      %p102 = scmp.eq.s32.totalorder %s38, 1
      %p103 = por %p101, %p102
      %p105 = scmp.ne.s32.totalorder %s90, %s104
      %p106 = scmp.eq.s32.totalorder %s38, 0
      %p107 = por %p105, %p106
      %s109 = sadd.s32 %s108, 1
      %p112 = scmp.eq.s32.totalorder %s32, 1
      %p113 = scmp.ne.s32.totalorder %s108, %s110
      %p114 = scmp.eq.s32.totalorder %s32, 0
      %p115 = por %p113, %p114
      %p116 = scmp.ne.s32.totalorder %s108, %s110
      %p117 = scmp.eq.s32.totalorder %s37, 1
      %p118 = por %p116, %p117
      %p119 = scmp.ne.s32.totalorder %s110, %s111
      %p120 = scmp.eq.s32.totalorder %s37, 0
      %p121 = por %p119, %p120
      %p122 = scmp.ne.s32.totalorder %s110, %s111
      %p123 = scmp.eq.s32.totalorder %s38, 1
      %p124 = por %p122, %p123
      %p126 = scmp.ne.s32.totalorder %s111, %s125
      %p127 = scmp.eq.s32.totalorder %s38, 0
      %p128 = por %p126, %p127
      %s130 = sadd.s32 %s129, 1
      %p133 = scmp.eq.s32.totalorder %s32, 1
      %p134 = scmp.ne.s32.totalorder %s129, %s131
      %p135 = scmp.eq.s32.totalorder %s32, 0
      %p136 = por %p134, %p135
      %p137 = scmp.ne.s32.totalorder %s129, %s131
      %p138 = scmp.eq.s32.totalorder %s37, 1
      %p139 = por %p137, %p138
      %p140 = scmp.ne.s32.totalorder %s131, %s132
      %p141 = scmp.eq.s32.totalorder %s37, 0
      %p142 = por %p140, %p141
      %p143 = scmp.ne.s32.totalorder %s131, %s132
      %p144 = scmp.eq.s32.totalorder %s38, 1
      %p145 = por %p143, %p144
      %p147 = scmp.ne.s32.totalorder %s132, %s146
      %p148 = scmp.eq.s32.totalorder %s38, 0
      %p149 = por %p147, %p148
      %s151 = sadd.s32 %s150, 1
      %p154 = scmp.eq.s32.totalorder %s32, 1
      %p155 = scmp.ne.s32.totalorder %s150, %s152
      %p156 = scmp.eq.s32.totalorder %s32, 0
      %p157 = por %p155, %p156
      %p158 = scmp.ne.s32.totalorder %s150, %s152
      %p159 = scmp.eq.s32.totalorder %s37, 1
      %p160 = por %p158, %p159
      %p161 = scmp.ne.s32.totalorder %s152, %s153
      %p162 = scmp.eq.s32.totalorder %s37, 0
      %p163 = por %p161, %p162
      %p164 = scmp.ne.s32.totalorder %s152, %s153
      %p165 = scmp.eq.s32.totalorder %s38, 1
      %p166 = por %p164, %p165
      %p168 = scmp.ne.s32.totalorder %s153, %s167
      %p169 = scmp.eq.s32.totalorder %s38, 0
      %p170 = por %p168, %p169
      %s172 = sadd.s32 %s171, 1
      %p175 = scmp.eq.s32.totalorder %s32, 1
      %p176 = scmp.ne.s32.totalorder %s171, %s173
      %p177 = scmp.eq.s32.totalorder %s32, 0
      %p178 = por %p176, %p177
      %p179 = scmp.ne.s32.totalorder %s171, %s173
      %p180 = scmp.eq.s32.totalorder %s37, 1
      %p181 = por %p179, %p180
      %p182 = scmp.ne.s32.totalorder %s173, %s174
      %p183 = scmp.eq.s32.totalorder %s37, 0
      %p184 = por %p182, %p183
      %p185 = scmp.ne.s32.totalorder %s173, %s174
      %p186 = scmp.eq.s32.totalorder %s38, 1
      %p187 = por %p185, %p186
      %p189 = scmp.ne.s32.totalorder %s174, %s188
      %p190 = scmp.eq.s32.totalorder %s38, 0
      %p191 = por %p189, %p190
      %s193 = sadd.s32 %s192, 1
      %p196 = scmp.eq.s32.totalorder %s32, 1
      %p197 = scmp.ne.s32.totalorder %s192, %s194
      %p198 = scmp.eq.s32.totalorder %s32, 0
      %p199 = por %p197, %p198
      %p200 = scmp.ne.s32.totalorder %s192, %s194
      %p201 = scmp.eq.s32.totalorder %s37, 1
      %p202 = por %p200, %p201
      %p203 = scmp.ne.s32.totalorder %s194, %s195
      %p204 = scmp.eq.s32.totalorder %s37, 0
      %p205 = por %p203, %p204
      %p206 = scmp.ne.s32.totalorder %s194, %s195
      %p207 = scmp.eq.s32.totalorder %s38, 1
      %p208 = por %p206, %p207
      %p210 = scmp.ne.s32.totalorder %s195, %s209
      %p211 = scmp.eq.s32.totalorder %s38, 0
      %p212 = por %p210, %p211
      %s214 = sadd.s32 %s213, 1
      %p217 = scmp.eq.s32.totalorder %s32, 1
      %p218 = scmp.ne.s32.totalorder %s213, %s215
      %p219 = scmp.eq.s32.totalorder %s32, 0
      %p220 = por %p218, %p219
      %p221 = scmp.ne.s32.totalorder %s213, %s215
      %p222 = scmp.eq.s32.totalorder %s37, 1
      %p223 = por %p221, %p222
      %p224 = scmp.ne.s32.totalorder %s215, %s216
      %p225 = scmp.eq.s32.totalorder %s37, 0
      %p226 = por %p224, %p225
      %p227 = scmp.ne.s32.totalorder %s215, %s216
      %p228 = scmp.eq.s32.totalorder %s38, 1
      %p229 = por %p227, %p228
      %p231 = scmp.ne.s32.totalorder %s216, %s230
      %p232 = scmp.eq.s32.totalorder %s38, 0
      %p233 = por %p231, %p232
      %s235 = sadd.s32 %s234, 1
      %p238 = scmp.eq.s32.totalorder %s32, 1
      %p239 = scmp.ne.s32.totalorder %s234, %s236
      %p240 = scmp.eq.s32.totalorder %s32, 0
      %p241 = por %p239, %p240
      %p242 = scmp.ne.s32.totalorder %s234, %s236
      %p243 = scmp.eq.s32.totalorder %s37, 1
      %p244 = por %p242, %p243
      %p245 = scmp.ne.s32.totalorder %s236, %s237
      %p246 = scmp.eq.s32.totalorder %s37, 0
      %p247 = por %p245, %p246
      %p248 = scmp.ne.s32.totalorder %s236, %s237
      %p249 = scmp.eq.s32.totalorder %s38, 1
      %p250 = por %p248, %p249
      %p252 = scmp.ne.s32.totalorder %s237, %s251
      %p253 = scmp.eq.s32.totalorder %s38, 0
      %p254 = por %p252, %p253
      %s256 = sadd.s32 %s255, 1
      %p259 = scmp.eq.s32.totalorder %s32, 1
      %p260 = scmp.ne.s32.totalorder %s255, %s257
      %p261 = scmp.eq.s32.totalorder %s32, 0
      %p262 = por %p260, %p261
      %p263 = scmp.ne.s32.totalorder %s255, %s257
      %p264 = scmp.eq.s32.totalorder %s37, 1
      %p265 = por %p263, %p264
      %p266 = scmp.ne.s32.totalorder %s257, %s258
      %p267 = scmp.eq.s32.totalorder %s37, 0
      %p268 = por %p266, %p267
      %p269 = scmp.ne.s32.totalorder %s257, %s258
      %p270 = scmp.eq.s32.totalorder %s38, 1
      %p271 = por %p269, %p270
      %p273 = scmp.ne.s32.totalorder %s258, %s272
      %p274 = scmp.eq.s32.totalorder %s38, 0
      %p275 = por %p273, %p274
      %s277 = sadd.s32 %s276, 1
      %p280 = scmp.eq.s32.totalorder %s32, 1
      %p281 = scmp.ne.s32.totalorder %s276, %s278
      %p282 = scmp.eq.s32.totalorder %s32, 0
      %p283 = por %p281, %p282
      %p284 = scmp.ne.s32.totalorder %s276, %s278
      %p285 = scmp.eq.s32.totalorder %s37, 1
      %p286 = por %p284, %p285
      %p287 = scmp.ne.s32.totalorder %s278, %s279
      %p288 = scmp.eq.s32.totalorder %s37, 0
      %p289 = por %p287, %p288
      %p290 = scmp.ne.s32.totalorder %s278, %s279
      %p291 = scmp.eq.s32.totalorder %s38, 1
      %p292 = por %p290, %p291
      %p294 = scmp.ne.s32.totalorder %s279, %s293
      %p295 = scmp.eq.s32.totalorder %s38, 0
      %p296 = por %p294, %p295
      %s298 = sadd.s32 %s297, 1
      %p301 = scmp.eq.s32.totalorder %s32, 1
      %p302 = scmp.ne.s32.totalorder %s297, %s299
      %p303 = scmp.eq.s32.totalorder %s32, 0
      %p304 = por %p302, %p303
      %p305 = scmp.ne.s32.totalorder %s297, %s299
      %p306 = scmp.eq.s32.totalorder %s37, 1
      %p307 = por %p305, %p306
      %p308 = scmp.ne.s32.totalorder %s299, %s300
      %p309 = scmp.eq.s32.totalorder %s37, 0
      %p310 = por %p308, %p309
      %p311 = scmp.ne.s32.totalorder %s299, %s300
      %p312 = scmp.eq.s32.totalorder %s38, 1
      %p313 = por %p311, %p312
      %p315 = scmp.ne.s32.totalorder %s300, %s314
      %p316 = scmp.eq.s32.totalorder %s38, 0
      %p317 = por %p315, %p316
      %s319 = sadd.s32 %s318, 1
      %p322 = scmp.eq.s32.totalorder %s32, 1
      %p323 = scmp.ne.s32.totalorder %s318, %s320
      %p324 = scmp.eq.s32.totalorder %s32, 0
      %p325 = por %p323, %p324
      %p326 = scmp.ne.s32.totalorder %s318, %s320
      %p327 = scmp.eq.s32.totalorder %s37, 1
      %p328 = por %p326, %p327
      %p329 = scmp.ne.s32.totalorder %s320, %s321
      %p330 = scmp.eq.s32.totalorder %s37, 0
      %p331 = por %p329, %p330
      %p332 = scmp.ne.s32.totalorder %s320, %s321
      %p333 = scmp.eq.s32.totalorder %s38, 1
      %p334 = por %p332, %p333
      %p336 = scmp.ne.s32.totalorder %s321, %s335
      %p337 = scmp.eq.s32.totalorder %s38, 0
      %p338 = por %p336, %p337
      %s340 = sadd.s32 %s339, 1
      %p343 = scmp.eq.s32.totalorder %s32, 1
      %p344 = scmp.ne.s32.totalorder %s339, %s341
      %p345 = scmp.eq.s32.totalorder %s32, 0
      %p346 = por %p344, %p345
      %p347 = scmp.ne.s32.totalorder %s339, %s341
      %p348 = scmp.eq.s32.totalorder %s37, 1
      %p349 = por %p347, %p348
      %p350 = scmp.ne.s32.totalorder %s341, %s342
      %p351 = scmp.eq.s32.totalorder %s37, 0
      %p352 = por %p350, %p351
      %p353 = scmp.ne.s32.totalorder %s341, %s342
      %p354 = scmp.eq.s32.totalorder %s38, 1
      %p355 = por %p353, %p354
      %p357 = scmp.ne.s32.totalorder %s342, %s356
      %p358 = scmp.eq.s32.totalorder %s38, 0
      %p359 = por %p357, %p358
      %s361 = sadd.s32 %s360, 1
      %p364 = scmp.eq.s32.totalorder %s32, 1
      %p365 = scmp.ne.s32.totalorder %s360, %s362
      %p366 = scmp.eq.s32.totalorder %s32, 0
      %p367 = por %p365, %p366
      %p368 = scmp.ne.s32.totalorder %s360, %s362
      %p369 = scmp.eq.s32.totalorder %s37, 1
      %p370 = por %p368, %p369
      %p371 = scmp.ne.s32.totalorder %s362, %s363
      %p372 = scmp.eq.s32.totalorder %s37, 0
      %p373 = por %p371, %p372
      %p374 = scmp.ne.s32.totalorder %s362, %s363
      %p375 = scmp.eq.s32.totalorder %s38, 1
      %p376 = por %p374, %p375
      %p378 = scmp.ne.s32.totalorder %s363, %s377
      %p379 = scmp.eq.s32.totalorder %s38, 0
      %p380 = por %p378, %p379
      %s382 = sadd.s32 %s381, 1
      %p385 = scmp.eq.s32.totalorder %s32, 1
      %p386 = scmp.ne.s32.totalorder %s381, %s383
      %p387 = scmp.eq.s32.totalorder %s32, 0
      %p388 = por %p386, %p387
      %p389 = scmp.ne.s32.totalorder %s381, %s383
      %p390 = scmp.eq.s32.totalorder %s37, 1
      %p391 = por %p389, %p390
      %p392 = scmp.ne.s32.totalorder %s383, %s384
      %p393 = scmp.eq.s32.totalorder %s37, 0
      %p394 = por %p392, %p393
      %p395 = scmp.ne.s32.totalorder %s383, %s384
      %p396 = scmp.eq.s32.totalorder %s38, 1
      %p397 = por %p395, %p396
      %p399 = scmp.ne.s32.totalorder %s384, %s398
      %p400 = scmp.eq.s32.totalorder %s38, 0
      %p401 = por %p399, %p400
      %s402 = ssub.s32 %s32, %s39
      %p403 = scmp.eq.s32.totalorder %s402, 0
      %s405 = sadd.s32 %s404, 1
      %s406 = scalar_select %p403, %s404, %s405
      %p409 = pneg %p403
      %p410 = scmp.eq.s32.totalorder %s32, 1
      %p411 = por %p409, %p410
      %p412 = scmp.ne.s32.totalorder %s404, %s407
      %p413 = scmp.eq.s32.totalorder %s32, 0
      %p414 = por %p412, %p413
      %p415 = scmp.ne.s32.totalorder %s404, %s407
      %p416 = scmp.eq.s32.totalorder %s37, 1
      %p417 = por %p415, %p416
      %p418 = scmp.ne.s32.totalorder %s407, %s408
      %p419 = scmp.eq.s32.totalorder %s37, 0
      %p420 = por %p418, %p419
      %p421 = scmp.ne.s32.totalorder %s407, %s408
      %p422 = scmp.eq.s32.totalorder %s38, 1
      %p423 = por %p421, %p422
      %p425 = scmp.ne.s32.totalorder %s408, %s424
      %p426 = scmp.eq.s32.totalorder %s38, 0
      %p427 = por %p425, %p426
      %p428 = scmp.le.s32.totalorder 1, %s32
      %p429 = scmp.lt.s32.totalorder %s32, 3
      %p430 = pnand %p428, %p429
      %p431 = pneg %p430
      // Predicated region
      $region9: #{conv_model_forward.1} parent=5 // pred_check
        _
      $region10: #{conv_model_forward.1} parent=5 // pred_check_branch
        %433 = sbr.rel (%p430) target = $region12
      $region11: #{conv_model_forward.1} parent=5 // pred_region
        %s434 = ssub.s32 %s32, 1
        // Predicated region
        $region13: #{conv_model_forward.1} parent=11 // pred_check
          %p435 = pneg %p79
        $region14: #{conv_model_forward.1} parent=11 // pred_check_branch
          %437 = sbr.rel (%p435) target = $region16
        $region15: #{conv_model_forward.1} parent=11 // pred_region
          %s439 = ssub.s32 6144, 6144
          %440 = vsyncadd [#allocation3], %s439
          %s441 = sshll.u32 [#allocation2], 4
          %s442 = int_to_ptr.vmem [resolvable:$true] %s441
          %447 = dma.hbm_to_vmem [thread:$0]  %s1, 6144, %s442, [#allocation3], 384, 384, 24
        $region16: #{conv_model_forward.1} parent=11 // pred_fallthru
          _
        // Predicated region
        $region17: #{conv_model_forward.1} parent=11 // pred_check
          %p448 = pneg %p100
        $region18: #{conv_model_forward.1} parent=11 // pred_check_branch
          %450 = sbr.rel (%p448) target = $region20
        $region19: #{conv_model_forward.1} parent=11 // pred_region
          %s452 = ssub.s32 96, 96
          %453 = vsyncadd [#allocation5], %s452
          %s455 = sshll.u32 [#allocation4], 4
          %s456 = int_to_ptr.vmem [resolvable:$true] %s455
          %458 = dma.hbm_to_vmem [thread:$0]  %s2, 96, %s456, [#allocation5]
        $region20: #{conv_model_forward.1} parent=11 // pred_fallthru
          _
        // Predicated region
        $region21: #{conv_model_forward.1} parent=11 // pred_check
          %p459 = pneg %p121
        $region22: #{conv_model_forward.1} parent=11 // pred_check_branch
          %461 = sbr.rel (%p459) target = $region24
        $region23: #{conv_model_forward.1} parent=11 // pred_region
          %s463 = ssub.s32 30720, 30720
          %464 = vsyncadd [#allocation5], %s463
          %s465 = sshll.u32 [#allocation6], 4
          %s466 = int_to_ptr.vmem [resolvable:$true] %s465
          %471 = dma.hbm_to_vmem [thread:$0]  %s3, 30720, %s466, [#allocation5], 320, 320, 20
        $region24: #{conv_model_forward.1} parent=11 // pred_fallthru
          _
        // Predicated region
        $region25: #{conv_model_forward.1} parent=11 // pred_check
          %p472 = pneg %p142
        $region26: #{conv_model_forward.1} parent=11 // pred_check_branch
          %474 = sbr.rel (%p472) target = $region28
        $region27: #{conv_model_forward.1} parent=11 // pred_region
          %s476 = ssub.s32 80, 80
          %477 = vsyncadd [#allocation8], %s476
          %s479 = sshll.u32 [#allocation7], 4
          %s480 = int_to_ptr.vmem [resolvable:$true] %s479
          %482 = dma.hbm_to_vmem [thread:$0]  %s4, 80, %s480, [#allocation8]
        $region28: #{conv_model_forward.1} parent=11 // pred_fallthru
          _
        // Predicated region
        $region29: #{conv_model_forward.1} parent=11 // pred_check
          %p483 = pneg %p163
        $region30: #{conv_model_forward.1} parent=11 // pred_check_branch
          %485 = sbr.rel (%p483) target = $region32
        $region31: #{conv_model_forward.1} parent=11 // pred_region
          %s487 = ssub.s32 51200, 51200
          %488 = vsyncadd [#allocation8], %s487
          %s489 = sshll.u32 [#allocation9], 4
          %s490 = int_to_ptr.vmem [resolvable:$true] %s489
          %495 = dma.hbm_to_vmem [thread:$0]  %s5, 51200, %s490, [#allocation8], 640, 640, 40
        $region32: #{conv_model_forward.1} parent=11 // pred_fallthru
          _
        // Predicated region
        $region33: #{conv_model_forward.1} parent=11 // pred_check
          %p496 = pneg %p184
        $region34: #{conv_model_forward.1} parent=11 // pred_check_branch
          %498 = sbr.rel (%p496) target = $region36
        $region35: #{conv_model_forward.1} parent=11 // pred_region
          %s500 = ssub.s32 160, 160
          %501 = vsyncadd [#allocation11], %s500
          %s503 = sshll.u32 [#allocation10], 4
          %s504 = int_to_ptr.vmem [resolvable:$true] %s503
          %506 = dma.hbm_to_vmem [thread:$0]  %s6, 160, %s504, [#allocation11]
        $region36: #{conv_model_forward.1} parent=11 // pred_fallthru
          _
        // Predicated region
        $region37: #{conv_model_forward.1} parent=11 // pred_check
          %p507 = pneg %p205
        $region38: #{conv_model_forward.1} parent=11 // pred_check_branch
          %509 = sbr.rel (%p507) target = $region40
        $region39: #{conv_model_forward.1} parent=11 // pred_region
          %s511 = ssub.s32 30720, 30720
          %512 = vsyncadd [#allocation11], %s511
          %s513 = sshll.u32 [#allocation12], 4
          %s514 = int_to_ptr.vmem [resolvable:$true] %s513
          %519 = dma.hbm_to_vmem [thread:$0]  %s7, 30720, %s514, [#allocation11], 192, 192, 12
        $region40: #{conv_model_forward.1} parent=11 // pred_fallthru
          _
        // Predicated region
        $region41: #{conv_model_forward.1} parent=11 // pred_check
          %p520 = pneg %p226
        $region42: #{conv_model_forward.1} parent=11 // pred_check_branch
          %522 = sbr.rel (%p520) target = $region44
        $region43: #{conv_model_forward.1} parent=11 // pred_region
          %s524 = ssub.s32 48, 48
          %525 = vsyncadd [#allocation14], %s524
          %s527 = sshll.u32 [#allocation13], 4
          %s528 = int_to_ptr.vmem [resolvable:$true] %s527
          %530 = dma.hbm_to_vmem [thread:$0]  %s8, 48, %s528, [#allocation14]
        $region44: #{conv_model_forward.1} parent=11 // pred_fallthru
          _
        // Predicated region
        $region45: #{conv_model_forward.1} parent=11 // pred_check
          %p531 = pneg %p247
        $region46: #{conv_model_forward.1} parent=11 // pred_check_branch
          %533 = sbr.rel (%p531) target = $region48
        $region47: #{conv_model_forward.1} parent=11 // pred_region
          %s535 = ssub.s32 6144, 6144
          %536 = vsyncadd [#allocation14], %s535
          %s537 = sshll.u32 [#allocation15], 4
          %s538 = int_to_ptr.vmem [resolvable:$true] %s537
          %543 = dma.hbm_to_vmem [thread:$0]  %s9, 6144, %s538, [#allocation14], 128, 128, 8
        $region48: #{conv_model_forward.1} parent=11 // pred_fallthru
          _
        // Predicated region
        $region49: #{conv_model_forward.1} parent=11 // pred_check
          %p544 = pneg %p268
        $region50: #{conv_model_forward.1} parent=11 // pred_check_branch
          %546 = sbr.rel (%p544) target = $region52
        $region51: #{conv_model_forward.1} parent=11 // pred_region
          %s548 = ssub.s32 32, 32
          %549 = vsyncadd [#allocation17], %s548
          %s551 = sshll.u32 [#allocation16], 4
          %s552 = int_to_ptr.vmem [resolvable:$true] %s551
          %554 = dma.hbm_to_vmem [thread:$0]  %s10, 32, %s552, [#allocation17]
        $region52: #{conv_model_forward.1} parent=11 // pred_fallthru
          _
        // Predicated region
        $region53: #{conv_model_forward.1} parent=11 // pred_check
          %p555 = pneg %p289
        $region54: #{conv_model_forward.1} parent=11 // pred_check_branch
          %557 = sbr.rel (%p555) target = $region56
        $region55: #{conv_model_forward.1} parent=11 // pred_region
          %s559 = ssub.s32 4096, 4096
          %560 = vsyncadd [#allocation17], %s559
          %s561 = sshll.u32 [#allocation18], 4
          %s562 = int_to_ptr.vmem [resolvable:$true] %s561
          %567 = dma.hbm_to_vmem [thread:$0]  %s11, 4096, %s562, [#allocation17], 128, 128, 8
        $region56: #{conv_model_forward.1} parent=11 // pred_fallthru
          _
        // Predicated region
        $region57: #{conv_model_forward.1} parent=11 // pred_check
          %p568 = pneg %p310
        $region58: #{conv_model_forward.1} parent=11 // pred_check_branch
          %570 = sbr.rel (%p568) target = $region60
        $region59: #{conv_model_forward.1} parent=11 // pred_region
          %s572 = ssub.s32 32, 32
          %573 = vsyncadd [#allocation20], %s572
          %s575 = sshll.u32 [#allocation19], 4
          %s576 = int_to_ptr.vmem [resolvable:$true] %s575
          %578 = dma.hbm_to_vmem [thread:$0]  %s12, 32, %s576, [#allocation20]
        $region60: #{conv_model_forward.1} parent=11 // pred_fallthru
          _
        // Predicated region
        $region61: #{conv_model_forward.1} parent=11 // pred_check
          %p579 = pneg %p331
        $region62: #{conv_model_forward.1} parent=11 // pred_check_branch
          %581 = sbr.rel (%p579) target = $region64
        $region63: #{conv_model_forward.1} parent=11 // pred_region
          %s583 = ssub.s32 2048, 2048
          %584 = vsyncadd [#allocation20], %s583
          %s585 = sshll.u32 [#allocation21], 4
          %s586 = int_to_ptr.vmem [resolvable:$true] %s585
          %591 = dma.hbm_to_vmem [thread:$0]  %s13, 2048, %s586, [#allocation20], 64, 64, 4
        $region64: #{conv_model_forward.1} parent=11 // pred_fallthru
          _
        // Predicated region
        $region65: #{conv_model_forward.1} parent=11 // pred_check
          %p592 = pneg %p352
        $region66: #{conv_model_forward.1} parent=11 // pred_check_branch
          %594 = sbr.rel (%p592) target = $region68
        $region67: #{conv_model_forward.1} parent=11 // pred_region
          %s596 = ssub.s32 16, 16
          %597 = vsyncadd [#allocation23], %s596
          %s599 = sshll.u32 [#allocation22], 4
          %s600 = int_to_ptr.vmem [resolvable:$true] %s599
          %602 = dma.hbm_to_vmem [thread:$0]  %s14, 16, %s600, [#allocation23]
        $region68: #{conv_model_forward.1} parent=11 // pred_fallthru
          _
        // Predicated region
        $region69: #{conv_model_forward.1} parent=11 // pred_check
          %p603 = pneg %p373
        $region70: #{conv_model_forward.1} parent=11 // pred_check_branch
          %605 = sbr.rel (%p603) target = $region72
        $region71: #{conv_model_forward.1} parent=11 // pred_region
          %s607 = ssub.s32 1024, 1024
          %608 = vsyncadd [#allocation23], %s607
          %s609 = sshll.u32 [#allocation24], 4
          %s610 = int_to_ptr.vmem [resolvable:$true] %s609
          %615 = dma.hbm_to_vmem [thread:$0]  %s15, 1024, %s610, [#allocation23], 64, 64, 4
        $region72: #{conv_model_forward.1} parent=11 // pred_fallthru
          _
        // Predicated region
        $region73: #{conv_model_forward.1} parent=11 // pred_check
          %p616 = pneg %p394
        $region74: #{conv_model_forward.1} parent=11 // pred_check_branch
          %618 = sbr.rel (%p616) target = $region76
        $region75: #{conv_model_forward.1} parent=11 // pred_region
          %s620 = ssub.s32 16, 16
          %621 = vsyncadd [#allocation26], %s620
          %s623 = sshll.u32 [#allocation25], 4
          %s624 = int_to_ptr.vmem [resolvable:$true] %s623
          %626 = dma.hbm_to_vmem [thread:$0]  %s16, 16, %s624, [#allocation26]
        $region76: #{conv_model_forward.1} parent=11 // pred_fallthru
          _
      $region12: #{conv_model_forward.1} parent=5 // pred_fallthru
        _
      %p627 = scmp.lt.s32.totalorder %s32, 2
      // Predicated region
      $region77: #{conv_model_forward.1} parent=5 // pred_check
        %p628 = pneg %p627
      $region78: #{conv_model_forward.1} parent=5 // pred_check_branch
        %630 = sbr.rel (%p628) target = $region80
      $region79: #{conv_model_forward.1} parent=5 // pred_region
        // Predicated region
        $region81: #{conv_model_forward.1} parent=79 // pred_check
          %p631 = pneg %p52
        $region82: #{conv_model_forward.1} parent=79 // pred_check_branch
          %633 = sbr.rel (%p631) target = $region84
        $region83: #{conv_model_forward.1} parent=79 // pred_region
          %s634 = smul.u32 4, %s32
          %p635 = scmp.lt.s32.totalorder %s634, 7
          %s636 = scalar_select %p635, %s634, 7
          %s637 = smul.addr %s636, 4
          %s638 = scalar_lea.vmem %s0, %s637
          %s639 = smul.u32 4, %s32
        $region84: #{conv_model_forward.1} parent=79 // pred_fallthru
          _
      $region80: #{conv_model_forward.1} parent=5 // pred_fallthru
        _
      %p640 = scmp.le.s32.totalorder 1, %s32
      %p641 = scmp.lt.s32.totalorder %s32, 3
      %p642 = pnand %p640, %p641
      %p643 = pneg %p642
      // Predicated region
      $region85: #{conv_model_forward.1} parent=5 // pred_check
        _
      $region86: #{conv_model_forward.1} parent=5 // pred_check_branch
        %645 = sbr.rel (%p642) target = $region88
      $region87: #{conv_model_forward.1} parent=5 // pred_region
        %s646 = ssub.s32 %s32, 1
        // Predicated region
        $region89: #{conv_model_forward.1} parent=87 // pred_check
          %p647 = pneg %p79
        $region90: #{conv_model_forward.1} parent=87 // pred_check_branch
          %649 = sbr.rel (%p647) target = $region92
        $region91: #{conv_model_forward.1} parent=87 // pred_region
          %650 = dma.done [#allocation3], 6144
        $region92: #{conv_model_forward.1} parent=87 // pred_fallthru
          _
        // Predicated region
        $region93: #{conv_model_forward.1} parent=87 // pred_check
          %p651 = pneg %p100
        $region94: #{conv_model_forward.1} parent=87 // pred_check_branch
          %653 = sbr.rel (%p651) target = $region96
        $region95: #{conv_model_forward.1} parent=87 // pred_region
          %654 = dma.done [#allocation5], 96
        $region96: #{conv_model_forward.1} parent=87 // pred_fallthru
          _
        // Predicated region
        $region97: #{conv_model_forward.1} parent=87 // pred_check
          %p655 = pneg %p121
        $region98: #{conv_model_forward.1} parent=87 // pred_check_branch
          %657 = sbr.rel (%p655) target = $region100
        $region99: #{conv_model_forward.1} parent=87 // pred_region
          %658 = dma.done [#allocation5], 30720
        $region100: #{conv_model_forward.1} parent=87 // pred_fallthru
          _
        // Predicated region
        $region101: #{conv_model_forward.1} parent=87 // pred_check
          %p659 = pneg %p142
        $region102: #{conv_model_forward.1} parent=87 // pred_check_branch
          %661 = sbr.rel (%p659) target = $region104
        $region103: #{conv_model_forward.1} parent=87 // pred_region
          %662 = dma.done [#allocation8], 80
        $region104: #{conv_model_forward.1} parent=87 // pred_fallthru
          _
        // Predicated region
        $region105: #{conv_model_forward.1} parent=87 // pred_check
          %p663 = pneg %p163
        $region106: #{conv_model_forward.1} parent=87 // pred_check_branch
          %665 = sbr.rel (%p663) target = $region108
        $region107: #{conv_model_forward.1} parent=87 // pred_region
          %666 = dma.done [#allocation8], 51200
        $region108: #{conv_model_forward.1} parent=87 // pred_fallthru
          _
        // Predicated region
        $region109: #{conv_model_forward.1} parent=87 // pred_check
          %p667 = pneg %p184
        $region110: #{conv_model_forward.1} parent=87 // pred_check_branch
          %669 = sbr.rel (%p667) target = $region112
        $region111: #{conv_model_forward.1} parent=87 // pred_region
          %670 = dma.done [#allocation11], 160
        $region112: #{conv_model_forward.1} parent=87 // pred_fallthru
          _
        // Predicated region
        $region113: #{conv_model_forward.1} parent=87 // pred_check
          %p671 = pneg %p205
        $region114: #{conv_model_forward.1} parent=87 // pred_check_branch
          %673 = sbr.rel (%p671) target = $region116
        $region115: #{conv_model_forward.1} parent=87 // pred_region
          %674 = dma.done [#allocation11], 30720
        $region116: #{conv_model_forward.1} parent=87 // pred_fallthru
          _
        // Predicated region
        $region117: #{conv_model_forward.1} parent=87 // pred_check
          %p675 = pneg %p226
        $region118: #{conv_model_forward.1} parent=87 // pred_check_branch
          %677 = sbr.rel (%p675) target = $region120
        $region119: #{conv_model_forward.1} parent=87 // pred_region
          %678 = dma.done [#allocation14], 48
        $region120: #{conv_model_forward.1} parent=87 // pred_fallthru
          _
        // Predicated region
        $region121: #{conv_model_forward.1} parent=87 // pred_check
          %p679 = pneg %p247
        $region122: #{conv_model_forward.1} parent=87 // pred_check_branch
          %681 = sbr.rel (%p679) target = $region124
        $region123: #{conv_model_forward.1} parent=87 // pred_region
          %682 = dma.done [#allocation14], 6144
        $region124: #{conv_model_forward.1} parent=87 // pred_fallthru
          _
        // Predicated region
        $region125: #{conv_model_forward.1} parent=87 // pred_check
          %p683 = pneg %p268
        $region126: #{conv_model_forward.1} parent=87 // pred_check_branch
          %685 = sbr.rel (%p683) target = $region128
        $region127: #{conv_model_forward.1} parent=87 // pred_region
          %686 = dma.done [#allocation17], 32
        $region128: #{conv_model_forward.1} parent=87 // pred_fallthru
          _
        // Predicated region
        $region129: #{conv_model_forward.1} parent=87 // pred_check
          %p687 = pneg %p289
        $region130: #{conv_model_forward.1} parent=87 // pred_check_branch
          %689 = sbr.rel (%p687) target = $region132
        $region131: #{conv_model_forward.1} parent=87 // pred_region
          %690 = dma.done [#allocation17], 4096
        $region132: #{conv_model_forward.1} parent=87 // pred_fallthru
          _
        // Predicated region
        $region133: #{conv_model_forward.1} parent=87 // pred_check
          %p691 = pneg %p310
        $region134: #{conv_model_forward.1} parent=87 // pred_check_branch
          %693 = sbr.rel (%p691) target = $region136
        $region135: #{conv_model_forward.1} parent=87 // pred_region
          %694 = dma.done [#allocation20], 32
        $region136: #{conv_model_forward.1} parent=87 // pred_fallthru
          _
        // Predicated region
        $region137: #{conv_model_forward.1} parent=87 // pred_check
          %p695 = pneg %p331
        $region138: #{conv_model_forward.1} parent=87 // pred_check_branch
          %697 = sbr.rel (%p695) target = $region140
        $region139: #{conv_model_forward.1} parent=87 // pred_region
          %698 = dma.done [#allocation20], 2048
        $region140: #{conv_model_forward.1} parent=87 // pred_fallthru
          _
        // Predicated region
        $region141: #{conv_model_forward.1} parent=87 // pred_check
          %p699 = pneg %p352
        $region142: #{conv_model_forward.1} parent=87 // pred_check_branch
          %701 = sbr.rel (%p699) target = $region144
        $region143: #{conv_model_forward.1} parent=87 // pred_region
          %702 = dma.done [#allocation23], 16
        $region144: #{conv_model_forward.1} parent=87 // pred_fallthru
          _
        // Predicated region
        $region145: #{conv_model_forward.1} parent=87 // pred_check
          %p703 = pneg %p373
        $region146: #{conv_model_forward.1} parent=87 // pred_check_branch
          %705 = sbr.rel (%p703) target = $region148
        $region147: #{conv_model_forward.1} parent=87 // pred_region
          %706 = dma.done [#allocation23], 1024
        $region148: #{conv_model_forward.1} parent=87 // pred_fallthru
          _
        // Predicated region
        $region149: #{conv_model_forward.1} parent=87 // pred_check
          %p707 = pneg %p394
        $region150: #{conv_model_forward.1} parent=87 // pred_check_branch
          %709 = sbr.rel (%p707) target = $region152
        $region151: #{conv_model_forward.1} parent=87 // pred_region
          %710 = dma.done [#allocation26], 16
        $region152: #{conv_model_forward.1} parent=87 // pred_fallthru
          _
        %s711 = smul.u32 4, %s37
        %p712 = scmp.lt.s32.totalorder %s711, 7
        %s713 = scalar_select %p712, %s711, 7
        %s714 = smul.addr %s713, 4
        %s715 = scalar_lea.vmem %s0, %s714
        %p716 = pneg %p58
        %p717 = pneg %p55
        %p718 = pneg %p79
        %p719 = pneg %p76
        %p720 = pneg %p100
        %p721 = pneg %p97
        %p722 = pneg %p121
        %p723 = pneg %p118
        %p724 = pneg %p142
        %p725 = pneg %p139
        %p726 = pneg %p163
        %p727 = pneg %p160
        %p728 = pneg %p184
        %p729 = pneg %p181
        %p730 = pneg %p205
        %p731 = pneg %p202
        %p732 = pneg %p226
        %p733 = pneg %p223
        %p734 = pneg %p247
        %p735 = pneg %p244
        %p736 = pneg %p268
        %p737 = pneg %p265
        %p738 = pneg %p289
        %p739 = pneg %p286
        %p740 = pneg %p310
        %p741 = pneg %p307
        %p742 = pneg %p331
        %p743 = pneg %p328
        %p744 = pneg %p352
        %p745 = pneg %p349
        %p746 = pneg %p373
        %p747 = pneg %p370
        %p748 = pneg %p394
        %p749 = pneg %p391
        %p750 = pneg %p420
        %p751 = pneg %p417
        %s752 = smul.u32 4, %s37
        %p753 = scmp.lt.s32.totalorder %s752, 7
        %s754 = scalar_select %p753, %s752, 7
        %s755 = smul.addr %s754, 8
        %s756 = scalar_lea.vmem %s17, %s755
        %s757 = smul.u32 4, %s37
        %p758 = scmp.lt.s32.totalorder %s757, 7
        %s759 = scalar_select %p758, %s757, 7
        %s760 = smul.addr %s759, 4
        %s761 = scalar_lea.vmem %s0, %s760
        %s762 = smul.u32 4, %s37
        %s763 = smul.u32 4, %s37
        %p764 = scmp.lt.s32.totalorder %s763, 7
        %s765 = scalar_select %p764, %s763, 7
        %s766 = smul.addr %s765, 8
        %s767 = scalar_lea.vmem %s17, %s766
        %s768 = smul.u32 4, %s37
        %v770 = vld [vmem:[%s761] sm:$0xf]
        %v771 = vld [vmem:[%s761 + $0x4] sm:$0xf]
        %v772 = vld [vmem:[%s761 + $0x8] sm:$0xf]
        %v773 = vld [vmem:[%s761 + $0xc] sm:$0xf]
        %v774 = vld [vmem:[#allocation2] sm:$0xff]
        %v775 = vld [vmem:[#allocation2 + $0x8] sm:$0xff]
        %v776 = vld [vmem:[#allocation2 + $0x10] sm:$0xff]
        %v777 = vld [vmem:[#allocation2 + $0x18] sm:$0xff]
        %v778 = vld [vmem:[#allocation2 + $0x20] sm:$0xff]
        %v779 = vld [vmem:[#allocation2 + $0x28] sm:$0xff]
        %v780 = vld [vmem:[#allocation2 + $0x30] sm:$0xff]
        %v781 = vld [vmem:[#allocation2 + $0x38] sm:$0xff]
        %v782 = vld [vmem:[#allocation2 + $0x40] sm:$0xff]
        %v783 = vld [vmem:[#allocation2 + $0x48] sm:$0xff]
        %v784 = vld [vmem:[#allocation2 + $0x50] sm:$0xff]
        %v785 = vld [vmem:[#allocation2 + $0x58] sm:$0xff]
        %v786 = vld [vmem:[#allocation2 + $0x60] sm:$0xff]
        %v787 = vld [vmem:[#allocation2 + $0x68] sm:$0xff]
        %v788 = vld [vmem:[#allocation2 + $0x70] sm:$0xff]
        %v789 = vld [vmem:[#allocation2 + $0x78] sm:$0xff]
        %v790 = vld [vmem:[#allocation2 + $0x80] sm:$0xff]
        %v791 = vld [vmem:[#allocation2 + $0x88] sm:$0xff]
        %v792 = vld [vmem:[#allocation2 + $0x90] sm:$0xff]
        %v793 = vld [vmem:[#allocation2 + $0x98] sm:$0xff]
        %v794 = vld [vmem:[#allocation2 + $0xa0] sm:$0xff]
        %v795 = vld [vmem:[#allocation2 + $0xa8] sm:$0xff]
        %v796 = vld [vmem:[#allocation2 + $0xb0] sm:$0xff]
        %v797 = vld [vmem:[#allocation2 + $0xb8] sm:$0xff]
        %v798 = vld [vmem:[#allocation2 + $0xc0] sm:$0xff]
        %v799 = vld [vmem:[#allocation2 + $0xc8] sm:$0xff]
        %v800 = vld [vmem:[#allocation2 + $0xd0] sm:$0xff]
        %v801 = vld [vmem:[#allocation2 + $0xd8] sm:$0xff]
        %v802 = vld [vmem:[#allocation2 + $0xe0] sm:$0xff]
        %v803 = vld [vmem:[#allocation2 + $0xe8] sm:$0xff]
        %v804 = vld [vmem:[#allocation2 + $0xf0] sm:$0xff]
        %v805 = vld [vmem:[#allocation2 + $0xf8] sm:$0xff]
        %v806 = vld [vmem:[#allocation2 + $0x100] sm:$0xff]
        %v807 = vld [vmem:[#allocation2 + $0x108] sm:$0xff]
        %v808 = vld [vmem:[#allocation2 + $0x110] sm:$0xff]
        %v809 = vld [vmem:[#allocation2 + $0x118] sm:$0xff]
        %v810 = vld [vmem:[#allocation2 + $0x120] sm:$0xff]
        %v811 = vld [vmem:[#allocation2 + $0x128] sm:$0xff]
        %v812 = vld [vmem:[#allocation2 + $0x130] sm:$0xff]
        %v813 = vld [vmem:[#allocation2 + $0x138] sm:$0xff]
        %v814 = vld [vmem:[#allocation2 + $0x140] sm:$0xff]
        %v815 = vld [vmem:[#allocation2 + $0x148] sm:$0xff]
        %v816 = vld [vmem:[#allocation2 + $0x150] sm:$0xff]
        %v817 = vld [vmem:[#allocation2 + $0x158] sm:$0xff]
        %v818 = vld [vmem:[#allocation2 + $0x160] sm:$0xff]
        %v819 = vld [vmem:[#allocation2 + $0x168] sm:$0xff]
        %v820 = vld [vmem:[#allocation2 + $0x170] sm:$0xff]
        %v821 = vld [vmem:[#allocation2 + $0x178] sm:$0xff]
        %v822 = vld [vmem:[#allocation4] sm:$0x3f]
        %v824 = vlaneseq
        %v825 = vshrl.u32 %v824, 7
        %v826 = vsub.s32 0, %v825
        %v827 = vrot.slane %v822, %v826
        %v828 = vlaneseq
        %v829 = vshrl.u32 %v828, 7
        %v830 = vsub.s32 1, %v829
        %v831 = vrot.slane %v822, %v830
        %v832 = vlaneseq
        %v833 = vshrl.u32 %v832, 7
        %v834 = vsub.s32 2, %v833
        %v835 = vrot.slane %v822, %v834
        %v836 = vlaneseq
        %v837 = vshrl.u32 %v836, 7
        %v838 = vsub.s32 3, %v837
        %v839 = vrot.slane %v822, %v838
        %v840 = vlaneseq
        %v841 = vshrl.u32 %v840, 7
        %v842 = vsub.s32 4, %v841
        %v843 = vrot.slane %v822, %v842
        %v844 = vlaneseq
        %v845 = vshrl.u32 %v844, 7
        %v846 = vsub.s32 5, %v845
        %v847 = vrot.slane %v822, %v846
        %v856 = vunpack.c.l.b16 %v770
        %v857 = vunpack.c.l.b16 %v771
        %v858 = vpack.c.b16 %v857, %v856
        %v908 = vunpack.c.l.b16 %v774
        %v909 = vunpack.c.h.b16 %v774
        %v910 = vunpack.c.l.b16 %v775
        %v911 = vunpack.c.h.b16 %v775
        %v912 = vunpack.c.l.b16 %v776
        %v913 = vunpack.c.h.b16 %v776
        %v914 = vunpack.c.l.b16 %v777
        %v915 = vunpack.c.h.b16 %v777
        %v916 = vunpack.c.l.b16 %v778
        %v917 = vunpack.c.h.b16 %v778
        %v918 = vunpack.c.l.b16 %v779
        %v919 = vunpack.c.h.b16 %v779
        %v920 = vunpack.c.l.b16 %v780
        %v921 = vunpack.c.h.b16 %v780
        %v922 = vunpack.c.l.b16 %v781
        %v923 = vunpack.c.h.b16 %v781
        %v924 = vunpack.c.l.b16 %v782
        %v925 = vunpack.c.h.b16 %v782
        %v926 = vunpack.c.l.b16 %v783
        %v927 = vunpack.c.h.b16 %v783
        %v928 = vunpack.c.l.b16 %v784
        %v929 = vunpack.c.h.b16 %v784
        %v930 = vunpack.c.l.b16 %v785
        %v931 = vunpack.c.h.b16 %v785
        %v932 = vunpack.c.l.b16 %v786
        %v933 = vunpack.c.h.b16 %v786
        %v934 = vunpack.c.l.b16 %v787
        %v935 = vunpack.c.h.b16 %v787
        %v936 = vunpack.c.l.b16 %v788
        %v937 = vunpack.c.h.b16 %v788
        %v938 = vunpack.c.l.b16 %v789
        %v939 = vunpack.c.h.b16 %v789
        %v940 = vunpack.c.l.b16 %v790
        %v941 = vunpack.c.h.b16 %v790
        %v942 = vunpack.c.l.b16 %v791
        %v943 = vunpack.c.h.b16 %v791
        %v944 = vunpack.c.l.b16 %v792
        %v945 = vunpack.c.h.b16 %v792
        %v946 = vunpack.c.l.b16 %v793
        %v947 = vunpack.c.h.b16 %v793
        %v948 = vunpack.c.l.b16 %v794
        %v949 = vunpack.c.h.b16 %v794
        %v950 = vunpack.c.l.b16 %v795
        %v951 = vunpack.c.h.b16 %v795
        %v952 = vunpack.c.l.b16 %v796
        %v953 = vunpack.c.h.b16 %v796
        %v954 = vunpack.c.l.b16 %v797
        %v955 = vunpack.c.h.b16 %v797
        %v956 = vunpack.c.l.b16 %v798
        %v957 = vunpack.c.h.b16 %v798
        %v958 = vunpack.c.l.b16 %v799
        %v959 = vunpack.c.h.b16 %v799
        %v960 = vunpack.c.l.b16 %v800
        %v961 = vunpack.c.h.b16 %v800
        %v962 = vunpack.c.l.b16 %v801
        %v963 = vunpack.c.h.b16 %v801
        %v964 = vunpack.c.l.b16 %v802
        %v965 = vunpack.c.h.b16 %v802
        %v966 = vunpack.c.l.b16 %v803
        %v967 = vunpack.c.h.b16 %v803
        %v968 = vunpack.c.l.b16 %v804
        %v969 = vunpack.c.h.b16 %v804
        %v970 = vunpack.c.l.b16 %v805
        %v971 = vunpack.c.h.b16 %v805
        %v972 = vunpack.c.l.b16 %v806
        %v973 = vunpack.c.h.b16 %v806
        %v974 = vunpack.c.l.b16 %v807
        %v975 = vunpack.c.h.b16 %v807
        %v976 = vunpack.c.l.b16 %v808
        %v977 = vunpack.c.h.b16 %v808
        %v978 = vunpack.c.l.b16 %v809
        %v979 = vunpack.c.h.b16 %v809
        %v980 = vunpack.c.l.b16 %v810
        %v981 = vunpack.c.h.b16 %v810
        %v982 = vunpack.c.l.b16 %v811
        %v983 = vunpack.c.h.b16 %v811
        %v984 = vunpack.c.l.b16 %v812
        %v985 = vunpack.c.h.b16 %v812
        %v986 = vunpack.c.l.b16 %v813
        %v987 = vunpack.c.h.b16 %v813
        %v988 = vunpack.c.l.b16 %v814
        %v989 = vunpack.c.h.b16 %v814
        %v990 = vunpack.c.l.b16 %v815
        %v991 = vunpack.c.h.b16 %v815
        %v992 = vunpack.c.l.b16 %v816
        %v993 = vunpack.c.h.b16 %v816
        %v994 = vunpack.c.l.b16 %v817
        %v995 = vunpack.c.h.b16 %v817
        %v996 = vunpack.c.l.b16 %v818
        %v997 = vunpack.c.h.b16 %v818
        %v998 = vunpack.c.l.b16 %v819
        %v999 = vunpack.c.h.b16 %v819
        %v1000 = vunpack.c.l.b16 %v820
        %v1001 = vunpack.c.h.b16 %v820
        %v1002 = vunpack.c.l.b16 %v821
        %v1003 = vunpack.c.h.b16 %v821
        %v1004 = vpack.c.b16 %v914, %v908
        %v1005 = vpack.c.b16 %v915, %v909
        %v1006 = vpack.c.b16 %v916, %v910
        %v1007 = vpack.c.b16 %v917, %v911
        %v1008 = vpack.c.b16 %v918, %v912
        %v1009 = vpack.c.b16 %v919, %v913
        %v1010 = vpack.c.b16 %v926, %v920
        %v1011 = vpack.c.b16 %v927, %v921
        %v1012 = vpack.c.b16 %v928, %v922
        %v1013 = vpack.c.b16 %v929, %v923
        %v1014 = vpack.c.b16 %v930, %v924
        %v1015 = vpack.c.b16 %v931, %v925
        %v1016 = vpack.c.b16 %v938, %v932
        %v1017 = vpack.c.b16 %v939, %v933
        %v1018 = vpack.c.b16 %v940, %v934
        %v1019 = vpack.c.b16 %v941, %v935
        %v1020 = vpack.c.b16 %v942, %v936
        %v1021 = vpack.c.b16 %v943, %v937
        %v1022 = vpack.c.b16 %v950, %v944
        %v1023 = vpack.c.b16 %v951, %v945
        %v1024 = vpack.c.b16 %v952, %v946
        %v1025 = vpack.c.b16 %v953, %v947
        %v1026 = vpack.c.b16 %v954, %v948
        %v1027 = vpack.c.b16 %v955, %v949
        %v1028 = vpack.c.b16 %v962, %v956
        %v1029 = vpack.c.b16 %v963, %v957
        %v1030 = vpack.c.b16 %v964, %v958
        %v1031 = vpack.c.b16 %v965, %v959
        %v1032 = vpack.c.b16 %v966, %v960
        %v1033 = vpack.c.b16 %v967, %v961
        %v1034 = vpack.c.b16 %v974, %v968
        %v1035 = vpack.c.b16 %v975, %v969
        %v1036 = vpack.c.b16 %v976, %v970
        %v1037 = vpack.c.b16 %v977, %v971
        %v1038 = vpack.c.b16 %v978, %v972
        %v1039 = vpack.c.b16 %v979, %v973
        %v1040 = vpack.c.b16 %v986, %v980
        %v1041 = vpack.c.b16 %v987, %v981
        %v1042 = vpack.c.b16 %v988, %v982
        %v1043 = vpack.c.b16 %v989, %v983
        %v1044 = vpack.c.b16 %v990, %v984
        %v1045 = vpack.c.b16 %v991, %v985
        %v1046 = vpack.c.b16 %v998, %v992
        %v1047 = vpack.c.b16 %v999, %v993
        %v1048 = vpack.c.b16 %v1000, %v994
        %v1049 = vpack.c.b16 %v1001, %v995
        %v1050 = vpack.c.b16 %v1002, %v996
        %v1051 = vpack.c.b16 %v1003, %v997
        %1100 = vmatprep.subr.bf16.mxu0 %v1005
        %1101 = vmatpush1.bf16.msra.mxu0 %v1004
        %1102 = vmatprep.subr.bf16.mxu0 %v1011
        %1103 = vmatpush1.bf16.msra.mxu0 %v1010
        %1104 = vmatprep.subr.bf16.mxu0 %v1017
        %1105 = vmatpush1.bf16.msra.mxu0 %v1016
        %1106 = vmatprep.subr.bf16.mxu0 %v1023
        %1107 = vmatpush1.bf16.msra.mxu0 %v1022
        %1108 = vmatprep.subr.bf16.mxu0 %v1029
        %1109 = vmatpush1.bf16.msra.mxu0 %v1028
        %1110 = vmatprep.subr.bf16.mxu0 %v1035
        %1111 = vmatpush1.bf16.msra.mxu0 %v1034
        %1112 = vmatprep.subr.bf16.mxu0 %v1041
        %1113 = vmatpush1.bf16.msra.mxu0 %v1040
        %1114 = vmatprep.subr.bf16.mxu0 %v1047
        %1115 = vmatpush1.bf16.msra.mxu0 %v1046
        %1116 = vmatprep.subr.bf16.mxu0 0
        %1117 = vmatpush1.bf16.msra.mxu0 0
        %1118 = vmatprep.subr.bf16.mxu0 0
        %1119 = vmatpush1.bf16.msra.mxu0 0
        %1120 = vmatprep.subr.bf16.mxu0 0
        %1121 = vmatpush1.bf16.msra.mxu0 0
        %1122 = vmatprep.subr.bf16.mxu0 0
        %1123 = vmatpush1.bf16.msra.mxu0 0
        %1124 = vmatprep.subr.bf16.mxu0 0
        %1125 = vmatpush1.bf16.msra.mxu0 0
        %1126 = vmatprep.subr.bf16.mxu0 0
        %1127 = vmatpush1.bf16.msra.mxu0 0
        %1128 = vmatprep.subr.bf16.mxu0 0
        %1129 = vmatpush1.bf16.msra.mxu0 0
        %1130 = vmatprep.subr.bf16.mxu0 0
        %1131 = vmatpush1.bf16.msra.mxu0 0
        %1132 = vmatprep.mubr.bf16.mxu0 0
        %1133 = vmatmul.mubr.bf16.gmra.mrb[0].mxu0 %v858
        %v1134 = vpop.f32.mrb[0].mxu0
        %v1135 = vadd.f32 %v827, %v1134
        %v1136 = vpop.f32.mrb[0].mxu0
        %v1137 = vadd.f32 %v831, %v1136
        %v1138 = vpop.f32.mrb[0].mxu0
        %v1139 = vadd.f32 %v827, %v1138
        %v1140 = vpop.f32.mrb[0].mxu0
        %v1141 = vadd.f32 %v831, %v1140
        %1142 = vdwg.mxu0
        %1143 = vmatprep.subr.bf16.mxu0 %v1007
        %1144 = vmatpush1.bf16.msra.mxu0 %v1006
        %1145 = vmatprep.subr.bf16.mxu0 %v1013
        %1146 = vmatpush1.bf16.msra.mxu0 %v1012
        %1147 = vmatprep.subr.bf16.mxu0 %v1019
        %1148 = vmatpush1.bf16.msra.mxu0 %v1018
        %1149 = vmatprep.subr.bf16.mxu0 %v1025
        %1150 = vmatpush1.bf16.msra.mxu0 %v1024
        %1151 = vmatprep.subr.bf16.mxu0 %v1031
        %1152 = vmatpush1.bf16.msra.mxu0 %v1030
        %1153 = vmatprep.subr.bf16.mxu0 %v1037
        %1154 = vmatpush1.bf16.msra.mxu0 %v1036
        %1155 = vmatprep.subr.bf16.mxu0 %v1043
        %1156 = vmatpush1.bf16.msra.mxu0 %v1042
        %1157 = vmatprep.subr.bf16.mxu0 %v1049
        %1158 = vmatpush1.bf16.msra.mxu0 %v1048
        %1159 = vmatprep.subr.bf16.mxu0 0
        %1160 = vmatpush1.bf16.msra.mxu0 0
        %1161 = vmatprep.subr.bf16.mxu0 0
        %1162 = vmatpush1.bf16.msra.mxu0 0
        %1163 = vmatprep.subr.bf16.mxu0 0
        %1164 = vmatpush1.bf16.msra.mxu0 0
        %1165 = vmatprep.subr.bf16.mxu0 0
        %1166 = vmatpush1.bf16.msra.mxu0 0
        %1167 = vmatprep.subr.bf16.mxu0 0
        %1168 = vmatpush1.bf16.msra.mxu0 0
        %1169 = vmatprep.subr.bf16.mxu0 0
        %1170 = vmatpush1.bf16.msra.mxu0 0
        %1171 = vmatprep.subr.bf16.mxu0 0
        %1172 = vmatpush1.bf16.msra.mxu0 0
        %1173 = vmatprep.subr.bf16.mxu0 0
        %1174 = vmatpush1.bf16.msra.mxu0 0
        %1175 = vmatprep.mubr.bf16.mxu0 0
        %1176 = vmatmul.mubr.bf16.gmra.mrb[0].mxu0 %v858
        %v1177 = vpop.f32.mrb[0].mxu0
        %v1178 = vadd.f32 %v835, %v1177
        %v1179 = vpop.f32.mrb[0].mxu0
        %v1180 = vadd.f32 %v839, %v1179
        %v1181 = vpop.f32.mrb[0].mxu0
        %v1182 = vadd.f32 %v835, %v1181
        %v1183 = vpop.f32.mrb[0].mxu0
        %v1184 = vadd.f32 %v839, %v1183
        %1185 = vdwg.mxu0
        %1186 = vmatprep.subr.bf16.mxu0 %v1009
        %1187 = vmatpush1.bf16.msra.mxu0 %v1008
        %1188 = vmatprep.subr.bf16.mxu0 %v1015
        %1189 = vmatpush1.bf16.msra.mxu0 %v1014
        %1190 = vmatprep.subr.bf16.mxu0 %v1021
        %1191 = vmatpush1.bf16.msra.mxu0 %v1020
        %1192 = vmatprep.subr.bf16.mxu0 %v1027
        %1193 = vmatpush1.bf16.msra.mxu0 %v1026
        %1194 = vmatprep.subr.bf16.mxu0 %v1033
        %1195 = vmatpush1.bf16.msra.mxu0 %v1032
        %1196 = vmatprep.subr.bf16.mxu0 %v1039
        %1197 = vmatpush1.bf16.msra.mxu0 %v1038
        %1198 = vmatprep.subr.bf16.mxu0 %v1045
        %1199 = vmatpush1.bf16.msra.mxu0 %v1044
        %1200 = vmatprep.subr.bf16.mxu0 %v1051
        %1201 = vmatpush1.bf16.msra.mxu0 %v1050
        %1202 = vmatprep.subr.bf16.mxu0 0
        %1203 = vmatpush1.bf16.msra.mxu0 0
        %1204 = vmatprep.subr.bf16.mxu0 0
        %1205 = vmatpush1.bf16.msra.mxu0 0
        %1206 = vmatprep.subr.bf16.mxu0 0
        %1207 = vmatpush1.bf16.msra.mxu0 0
        %1208 = vmatprep.subr.bf16.mxu0 0
        %1209 = vmatpush1.bf16.msra.mxu0 0
        %1210 = vmatprep.subr.bf16.mxu0 0
        %1211 = vmatpush1.bf16.msra.mxu0 0
        %1212 = vmatprep.subr.bf16.mxu0 0
        %1213 = vmatpush1.bf16.msra.mxu0 0
        %1214 = vmatprep.subr.bf16.mxu0 0
        %1215 = vmatpush1.bf16.msra.mxu0 0
        %1216 = vmatprep.subr.bf16.mxu0 0
        %1217 = vmatpush1.bf16.msra.mxu0 0
        %1218 = vmatprep.mubr.bf16.mxu0 0
        %1219 = vmatmul.mubr.bf16.gmra.mrb[0].mxu0 %v858
        %v1220 = vpop.f32.mrb[0].mxu0
        %v1221 = vadd.f32 %v843, %v1220
        %v1222 = vpop.f32.mrb[0].mxu0
        %v1223 = vadd.f32 %v847, %v1222
        %v1224 = vpop.f32.mrb[0].mxu0
        %v1225 = vadd.f32 %v843, %v1224
        %v1226 = vpop.f32.mrb[0].mxu0
        %v1227 = vadd.f32 %v847, %v1226
        %1228 = vdwg.mxu0
        %v1229 = vmax.f32 %v1135, 0.0
        %v1230 = vmax.f32 %v1137, 0.0
        %v1231 = vmax.f32 %v1178, 0.0
        %v1232 = vmax.f32 %v1180, 0.0
        %v1233 = vmax.f32 %v1221, 0.0
        %v1234 = vmax.f32 %v1223, 0.0
        %v1235 = vmax.f32 %v1139, 0.0
        %v1236 = vmax.f32 %v1141, 0.0
        %v1237 = vmax.f32 %v1182, 0.0
        %v1238 = vmax.f32 %v1184, 0.0
        %v1239 = vmax.f32 %v1225, 0.0
        %v1240 = vmax.f32 %v1227, 0.0
        %v1243 = vunpack.c.l.b16 %v772
        %v1244 = vunpack.c.l.b16 %v773
        %v1245 = vpack.c.b16 %v1244, %v1243
        %1247 = vmatprep.subr.bf16.mxu0 %v1005
        %1248 = vmatpush1.bf16.msra.mxu0 %v1004
        %1249 = vmatprep.subr.bf16.mxu0 %v1011
        %1250 = vmatpush1.bf16.msra.mxu0 %v1010
        %1251 = vmatprep.subr.bf16.mxu0 %v1017
        %1252 = vmatpush1.bf16.msra.mxu0 %v1016
        %1253 = vmatprep.subr.bf16.mxu0 %v1023
        %1254 = vmatpush1.bf16.msra.mxu0 %v1022
        %1255 = vmatprep.subr.bf16.mxu0 %v1029
        %1256 = vmatpush1.bf16.msra.mxu0 %v1028
        %1257 = vmatprep.subr.bf16.mxu0 %v1035
        %1258 = vmatpush1.bf16.msra.mxu0 %v1034
        %1259 = vmatprep.subr.bf16.mxu0 %v1041
        %1260 = vmatpush1.bf16.msra.mxu0 %v1040
        %1261 = vmatprep.subr.bf16.mxu0 %v1047
        %1262 = vmatpush1.bf16.msra.mxu0 %v1046
        %1263 = vmatprep.subr.bf16.mxu0 0
        %1264 = vmatpush1.bf16.msra.mxu0 0
        %1265 = vmatprep.subr.bf16.mxu0 0
        %1266 = vmatpush1.bf16.msra.mxu0 0
        %1267 = vmatprep.subr.bf16.mxu0 0
        %1268 = vmatpush1.bf16.msra.mxu0 0
        %1269 = vmatprep.subr.bf16.mxu0 0
        %1270 = vmatpush1.bf16.msra.mxu0 0
        %1271 = vmatprep.subr.bf16.mxu0 0
        %1272 = vmatpush1.bf16.msra.mxu0 0
        %1273 = vmatprep.subr.bf16.mxu0 0
        %1274 = vmatpush1.bf16.msra.mxu0 0
        %1275 = vmatprep.subr.bf16.mxu0 0
        %1276 = vmatpush1.bf16.msra.mxu0 0
        %1277 = vmatprep.subr.bf16.mxu0 0
        %1278 = vmatpush1.bf16.msra.mxu0 0
        %1279 = vmatprep.mubr.bf16.mxu0 0
        %1280 = vmatmul.mubr.bf16.gmra.mrb[0].mxu0 %v1245
        %v1281 = vpop.f32.mrb[0].mxu0
        %v1282 = vadd.f32 %v827, %v1281
        %v1283 = vpop.f32.mrb[0].mxu0
        %v1284 = vadd.f32 %v831, %v1283
        %v1285 = vpop.f32.mrb[0].mxu0
        %v1286 = vadd.f32 %v827, %v1285
        %v1287 = vpop.f32.mrb[0].mxu0
        %v1288 = vadd.f32 %v831, %v1287
        %1289 = vdwg.mxu0
        %1290 = vmatprep.subr.bf16.mxu0 %v1007
        %1291 = vmatpush1.bf16.msra.mxu0 %v1006
        %1292 = vmatprep.subr.bf16.mxu0 %v1013
        %1293 = vmatpush1.bf16.msra.mxu0 %v1012
        %1294 = vmatprep.subr.bf16.mxu0 %v1019
        %1295 = vmatpush1.bf16.msra.mxu0 %v1018
        %1296 = vmatprep.subr.bf16.mxu0 %v1025
        %1297 = vmatpush1.bf16.msra.mxu0 %v1024
        %1298 = vmatprep.subr.bf16.mxu0 %v1031
        %1299 = vmatpush1.bf16.msra.mxu0 %v1030
        %1300 = vmatprep.subr.bf16.mxu0 %v1037
        %1301 = vmatpush1.bf16.msra.mxu0 %v1036
        %1302 = vmatprep.subr.bf16.mxu0 %v1043
        %1303 = vmatpush1.bf16.msra.mxu0 %v1042
        %1304 = vmatprep.subr.bf16.mxu0 %v1049
        %1305 = vmatpush1.bf16.msra.mxu0 %v1048
        %1306 = vmatprep.subr.bf16.mxu0 0
        %1307 = vmatpush1.bf16.msra.mxu0 0
        %1308 = vmatprep.subr.bf16.mxu0 0
        %1309 = vmatpush1.bf16.msra.mxu0 0
        %1310 = vmatprep.subr.bf16.mxu0 0
        %1311 = vmatpush1.bf16.msra.mxu0 0
        %1312 = vmatprep.subr.bf16.mxu0 0
        %1313 = vmatpush1.bf16.msra.mxu0 0
        %1314 = vmatprep.subr.bf16.mxu0 0
        %1315 = vmatpush1.bf16.msra.mxu0 0
        %1316 = vmatprep.subr.bf16.mxu0 0
        %1317 = vmatpush1.bf16.msra.mxu0 0
        %1318 = vmatprep.subr.bf16.mxu0 0
        %1319 = vmatpush1.bf16.msra.mxu0 0
        %1320 = vmatprep.subr.bf16.mxu0 0
        %1321 = vmatpush1.bf16.msra.mxu0 0
        %1322 = vmatprep.mubr.bf16.mxu0 0
        %1323 = vmatmul.mubr.bf16.gmra.mrb[0].mxu0 %v1245
        %v1324 = vpop.f32.mrb[0].mxu0
        %v1325 = vadd.f32 %v835, %v1324
        %v1326 = vpop.f32.mrb[0].mxu0
        %v1327 = vadd.f32 %v839, %v1326
        %v1328 = vpop.f32.mrb[0].mxu0
        %v1329 = vadd.f32 %v835, %v1328
        %v1330 = vpop.f32.mrb[0].mxu0
        %v1331 = vadd.f32 %v839, %v1330
        %1332 = vdwg.mxu0
        %1333 = vmatprep.subr.bf16.mxu0 %v1009
        %1334 = vmatpush1.bf16.msra.mxu0 %v1008
        %1335 = vmatprep.subr.bf16.mxu0 %v1015
        %1336 = vmatpush1.bf16.msra.mxu0 %v1014
        %1337 = vmatprep.subr.bf16.mxu0 %v1021
        %1338 = vmatpush1.bf16.msra.mxu0 %v1020
        %1339 = vmatprep.subr.bf16.mxu0 %v1027
        %1340 = vmatpush1.bf16.msra.mxu0 %v1026
        %1341 = vmatprep.subr.bf16.mxu0 %v1033
        %1342 = vmatpush1.bf16.msra.mxu0 %v1032
        %1343 = vmatprep.subr.bf16.mxu0 %v1039
        %1344 = vmatpush1.bf16.msra.mxu0 %v1038
        %1345 = vmatprep.subr.bf16.mxu0 %v1045
        %1346 = vmatpush1.bf16.msra.mxu0 %v1044
        %1347 = vmatprep.subr.bf16.mxu0 %v1051
        %1348 = vmatpush1.bf16.msra.mxu0 %v1050
        %1349 = vmatprep.subr.bf16.mxu0 0
        %1350 = vmatpush1.bf16.msra.mxu0 0
        %1351 = vmatprep.subr.bf16.mxu0 0
        %1352 = vmatpush1.bf16.msra.mxu0 0
        %1353 = vmatprep.subr.bf16.mxu0 0
        %1354 = vmatpush1.bf16.msra.mxu0 0
        %1355 = vmatprep.subr.bf16.mxu0 0
        %1356 = vmatpush1.bf16.msra.mxu0 0
        %1357 = vmatprep.subr.bf16.mxu0 0
        %1358 = vmatpush1.bf16.msra.mxu0 0
        %1359 = vmatprep.subr.bf16.mxu0 0
        %1360 = vmatpush1.bf16.msra.mxu0 0
        %1361 = vmatprep.subr.bf16.mxu0 0
        %1362 = vmatpush1.bf16.msra.mxu0 0
        %1363 = vmatprep.subr.bf16.mxu0 0
        %1364 = vmatpush1.bf16.msra.mxu0 0
        %1365 = vmatprep.mubr.bf16.mxu0 0
        %1366 = vmatmul.mubr.bf16.gmra.mrb[0].mxu0 %v1245
        %v1367 = vpop.f32.mrb[0].mxu0
        %v1368 = vadd.f32 %v843, %v1367
        %v1369 = vpop.f32.mrb[0].mxu0
        %v1370 = vadd.f32 %v847, %v1369
        %v1371 = vpop.f32.mrb[0].mxu0
        %v1372 = vadd.f32 %v843, %v1371
        %v1373 = vpop.f32.mrb[0].mxu0
        %v1374 = vadd.f32 %v847, %v1373
        %1375 = vdwg.mxu0
        %v1376 = vmax.f32 %v1282, 0.0
        %v1377 = vmax.f32 %v1284, 0.0
        %v1378 = vmax.f32 %v1325, 0.0
        %v1379 = vmax.f32 %v1327, 0.0
        %v1380 = vmax.f32 %v1368, 0.0
        %v1381 = vmax.f32 %v1370, 0.0
        %v1382 = vmax.f32 %v1286, 0.0
        %v1383 = vmax.f32 %v1288, 0.0
        %v1384 = vmax.f32 %v1329, 0.0
        %v1385 = vmax.f32 %v1331, 0.0
        %v1386 = vmax.f32 %v1372, 0.0
        %v1387 = vmax.f32 %v1374, 0.0
        %v1388 = vpack.c.bf16 %v1235, %v1229
        %v1389 = vpack.c.bf16 %v1236, %v1230
        %v1390 = vpack.c.bf16 %v1237, %v1231
        %v1391 = vpack.c.bf16 %v1238, %v1232
        %v1392 = vpack.c.bf16 %v1239, %v1233
        %v1393 = vpack.c.bf16 %v1240, %v1234
        %v1394 = vld [vmem:[#allocation6] sm:$0xff]
        %v1395 = vld [vmem:[#allocation6 + $0x8] sm:$0xff]
        %v1396 = vld [vmem:[#allocation6 + $0x10] sm:$0xf]
        %v1397 = vld [vmem:[#allocation6 + $0x14] sm:$0xff]
        %v1398 = vld [vmem:[#allocation6 + $0x1c] sm:$0xff]
        %v1399 = vld [vmem:[#allocation6 + $0x24] sm:$0xf]
        %v1400 = vld [vmem:[#allocation6 + $0x28] sm:$0xff]
        %v1401 = vld [vmem:[#allocation6 + $0x30] sm:$0xff]
        %v1402 = vld [vmem:[#allocation6 + $0x38] sm:$0xf]
        %v1403 = vld [vmem:[#allocation6 + $0x3c] sm:$0xff]
        %v1404 = vld [vmem:[#allocation6 + $0x44] sm:$0xff]
        %v1405 = vld [vmem:[#allocation6 + $0x4c] sm:$0xf]
        %v1406 = vld [vmem:[#allocation6 + $0x50] sm:$0xff]
        %v1407 = vld [vmem:[#allocation6 + $0x58] sm:$0xff]
        %v1408 = vld [vmem:[#allocation6 + $0x60] sm:$0xf]
        %v1409 = vld [vmem:[#allocation6 + $0x64] sm:$0xff]
        %v1410 = vld [vmem:[#allocation6 + $0x6c] sm:$0xff]
        %v1411 = vld [vmem:[#allocation6 + $0x74] sm:$0xf]
        %v1412 = vld [vmem:[#allocation6 + $0x78] sm:$0xff]
        %v1413 = vld [vmem:[#allocation6 + $0x80] sm:$0xff]
        %v1414 = vld [vmem:[#allocation6 + $0x88] sm:$0xf]
        %v1415 = vld [vmem:[#allocation6 + $0x8c] sm:$0xff]
        %v1416 = vld [vmem:[#allocation6 + $0x94] sm:$0xff]
        %v1417 = vld [vmem:[#allocation6 + $0x9c] sm:$0xf]
        %v1418 = vld [vmem:[#allocation6 + $0xa0] sm:$0xff]
        %v1419 = vld [vmem:[#allocation6 + $0xa8] sm:$0xff]
        %v1420 = vld [vmem:[#allocation6 + $0xb0] sm:$0xf]
        %v1421 = vld [vmem:[#allocation6 + $0xb4] sm:$0xff]
        %v1422 = vld [vmem:[#allocation6 + $0xbc] sm:$0xff]
        %v1423 = vld [vmem:[#allocation6 + $0xc4] sm:$0xf]
        %v1424 = vld [vmem:[#allocation6 + $0xc8] sm:$0xff]
        %v1425 = vld [vmem:[#allocation6 + $0xd0] sm:$0xff]
        %v1426 = vld [vmem:[#allocation6 + $0xd8] sm:$0xf]
        %v1427 = vld [vmem:[#allocation6 + $0xdc] sm:$0xff]
        %v1428 = vld [vmem:[#allocation6 + $0xe4] sm:$0xff]
        %v1429 = vld [vmem:[#allocation6 + $0xec] sm:$0xf]
        %v1430 = vld [vmem:[#allocation6 + $0xf0] sm:$0xff]
        %v1431 = vld [vmem:[#allocation6 + $0xf8] sm:$0xff]
        %v1432 = vld [vmem:[#allocation6 + $0x100] sm:$0xf]
        %v1433 = vld [vmem:[#allocation6 + $0x104] sm:$0xff]
        %v1434 = vld [vmem:[#allocation6 + $0x10c] sm:$0xff]
        %v1435 = vld [vmem:[#allocation6 + $0x114] sm:$0xf]
        %v1436 = vld [vmem:[#allocation6 + $0x118] sm:$0xff]
        %v1437 = vld [vmem:[#allocation6 + $0x120] sm:$0xff]
        %v1438 = vld [vmem:[#allocation6 + $0x128] sm:$0xf]
        %v1439 = vld [vmem:[#allocation6 + $0x12c] sm:$0xff]
        %v1440 = vld [vmem:[#allocation6 + $0x134] sm:$0xff]
        %v1441 = vld [vmem:[#allocation6 + $0x13c] sm:$0xf]
        %v1442 = vld [vmem:[#allocation6 + $0x140] sm:$0xff]
        %v1443 = vld [vmem:[#allocation6 + $0x148] sm:$0xff]
        %v1444 = vld [vmem:[#allocation6 + $0x150] sm:$0xf]
        %v1445 = vld [vmem:[#allocation6 + $0x154] sm:$0xff]
        %v1446 = vld [vmem:[#allocation6 + $0x15c] sm:$0xff]
        %v1447 = vld [vmem:[#allocation6 + $0x164] sm:$0xf]
        %v1448 = vld [vmem:[#allocation6 + $0x168] sm:$0xff]
        %v1449 = vld [vmem:[#allocation6 + $0x170] sm:$0xff]
        %v1450 = vld [vmem:[#allocation6 + $0x178] sm:$0xf]
        %v1451 = vld [vmem:[#allocation6 + $0x17c] sm:$0xff]
        %v1452 = vld [vmem:[#allocation6 + $0x184] sm:$0xff]
        %v1453 = vld [vmem:[#allocation6 + $0x18c] sm:$0xf]
        %v1454 = vld [vmem:[#allocation6 + $0x190] sm:$0xff]
        %v1455 = vld [vmem:[#allocation6 + $0x198] sm:$0xff]
        %v1456 = vld [vmem:[#allocation6 + $0x1a0] sm:$0xf]
        %v1457 = vld [vmem:[#allocation6 + $0x1a4] sm:$0xff]
        %v1458 = vld [vmem:[#allocation6 + $0x1ac] sm:$0xff]
        %v1459 = vld [vmem:[#allocation6 + $0x1b4] sm:$0xf]
        %v1460 = vld [vmem:[#allocation6 + $0x1b8] sm:$0xff]
        %v1461 = vld [vmem:[#allocation6 + $0x1c0] sm:$0xff]
        %v1462 = vld [vmem:[#allocation6 + $0x1c8] sm:$0xf]
        %v1463 = vld [vmem:[#allocation6 + $0x1cc] sm:$0xff]
        %v1464 = vld [vmem:[#allocation6 + $0x1d4] sm:$0xff]
        %v1465 = vld [vmem:[#allocation6 + $0x1dc] sm:$0xf]
        %v1466 = vld [vmem:[#allocation6 + $0x1e0] sm:$0xff]
        %v1467 = vld [vmem:[#allocation6 + $0x1e8] sm:$0xff]
        %v1468 = vld [vmem:[#allocation6 + $0x1f0] sm:$0xf]
        %v1469 = vld [vmem:[#allocation6 + $0x1f4] sm:$0xff]
        %v1470 = vld [vmem:[#allocation6 + $0x1fc] sm:$0xff]
        %v1471 = vld [vmem:[#allocation6 + $0x204] sm:$0xf]
        %v1472 = vld [vmem:[#allocation6 + $0x208] sm:$0xff]
        %v1473 = vld [vmem:[#allocation6 + $0x210] sm:$0xff]
        %v1474 = vld [vmem:[#allocation6 + $0x218] sm:$0xf]
        %v1475 = vld [vmem:[#allocation6 + $0x21c] sm:$0xff]
        %v1476 = vld [vmem:[#allocation6 + $0x224] sm:$0xff]
        %v1477 = vld [vmem:[#allocation6 + $0x22c] sm:$0xf]
        %v1478 = vld [vmem:[#allocation6 + $0x230] sm:$0xff]
        %v1479 = vld [vmem:[#allocation6 + $0x238] sm:$0xff]
        %v1480 = vld [vmem:[#allocation6 + $0x240] sm:$0xf]
        %v1481 = vld [vmem:[#allocation6 + $0x244] sm:$0xff]
        %v1482 = vld [vmem:[#allocation6 + $0x24c] sm:$0xff]
        %v1483 = vld [vmem:[#allocation6 + $0x254] sm:$0xf]
        %v1484 = vld [vmem:[#allocation6 + $0x258] sm:$0xff]
        %v1485 = vld [vmem:[#allocation6 + $0x260] sm:$0xff]
        %v1486 = vld [vmem:[#allocation6 + $0x268] sm:$0xf]
        %v1487 = vld [vmem:[#allocation6 + $0x26c] sm:$0xff]
        %v1488 = vld [vmem:[#allocation6 + $0x274] sm:$0xff]
        %v1489 = vld [vmem:[#allocation6 + $0x27c] sm:$0xf]
        %v1490 = vld [vmem:[#allocation6 + $0x280] sm:$0xff]
        %v1491 = vld [vmem:[#allocation6 + $0x288] sm:$0xff]
        %v1492 = vld [vmem:[#allocation6 + $0x290] sm:$0xf]
        %v1493 = vld [vmem:[#allocation6 + $0x294] sm:$0xff]
        %v1494 = vld [vmem:[#allocation6 + $0x29c] sm:$0xff]
        %v1495 = vld [vmem:[#allocation6 + $0x2a4] sm:$0xf]
        %v1496 = vld [vmem:[#allocation6 + $0x2a8] sm:$0xff]
        %v1497 = vld [vmem:[#allocation6 + $0x2b0] sm:$0xff]
        %v1498 = vld [vmem:[#allocation6 + $0x2b8] sm:$0xf]
        %v1499 = vld [vmem:[#allocation6 + $0x2bc] sm:$0xff]
        %v1500 = vld [vmem:[#allocation6 + $0x2c4] sm:$0xff]
        %v1501 = vld [vmem:[#allocation6 + $0x2cc] sm:$0xf]
        %v1502 = vld [vmem:[#allocation6 + $0x2d0] sm:$0xff]
        %v1503 = vld [vmem:[#allocation6 + $0x2d8] sm:$0xff]
        %v1504 = vld [vmem:[#allocation6 + $0x2e0] sm:$0xf]
        %v1505 = vld [vmem:[#allocation6 + $0x2e4] sm:$0xff]
        %v1506 = vld [vmem:[#allocation6 + $0x2ec] sm:$0xff]
        %v1507 = vld [vmem:[#allocation6 + $0x2f4] sm:$0xf]
        %v1508 = vld [vmem:[#allocation6 + $0x2f8] sm:$0xff]
        %v1509 = vld [vmem:[#allocation6 + $0x300] sm:$0xff]
        %v1510 = vld [vmem:[#allocation6 + $0x308] sm:$0xf]
        %v1511 = vld [vmem:[#allocation6 + $0x30c] sm:$0xff]
        %v1512 = vld [vmem:[#allocation6 + $0x314] sm:$0xff]
        %v1513 = vld [vmem:[#allocation6 + $0x31c] sm:$0xf]
        %v1514 = vld [vmem:[#allocation6 + $0x320] sm:$0xff]
        %v1515 = vld [vmem:[#allocation6 + $0x328] sm:$0xff]
        %v1516 = vld [vmem:[#allocation6 + $0x330] sm:$0xf]
        %v1517 = vld [vmem:[#allocation6 + $0x334] sm:$0xff]
        %v1518 = vld [vmem:[#allocation6 + $0x33c] sm:$0xff]
        %v1519 = vld [vmem:[#allocation6 + $0x344] sm:$0xf]
        %v1520 = vld [vmem:[#allocation6 + $0x348] sm:$0xff]
        %v1521 = vld [vmem:[#allocation6 + $0x350] sm:$0xff]
        %v1522 = vld [vmem:[#allocation6 + $0x358] sm:$0xf]
        %v1523 = vld [vmem:[#allocation6 + $0x35c] sm:$0xff]
        %v1524 = vld [vmem:[#allocation6 + $0x364] sm:$0xff]
        %v1525 = vld [vmem:[#allocation6 + $0x36c] sm:$0xf]
        %v1526 = vld [vmem:[#allocation6 + $0x370] sm:$0xff]
        %v1527 = vld [vmem:[#allocation6 + $0x378] sm:$0xff]
        %v1528 = vld [vmem:[#allocation6 + $0x380] sm:$0xf]
        %v1529 = vld [vmem:[#allocation6 + $0x384] sm:$0xff]
        %v1530 = vld [vmem:[#allocation6 + $0x38c] sm:$0xff]
        %v1531 = vld [vmem:[#allocation6 + $0x394] sm:$0xf]
        %v1532 = vld [vmem:[#allocation6 + $0x398] sm:$0xff]
        %v1533 = vld [vmem:[#allocation6 + $0x3a0] sm:$0xff]
        %v1534 = vld [vmem:[#allocation6 + $0x3a8] sm:$0xf]
        %v1535 = vld [vmem:[#allocation6 + $0x3ac] sm:$0xff]
        %v1536 = vld [vmem:[#allocation6 + $0x3b4] sm:$0xff]
        %v1537 = vld [vmem:[#allocation6 + $0x3bc] sm:$0xf]
        %v1538 = vld [vmem:[#allocation6 + $0x3c0] sm:$0xff]
        %v1539 = vld [vmem:[#allocation6 + $0x3c8] sm:$0xff]
        %v1540 = vld [vmem:[#allocation6 + $0x3d0] sm:$0xf]
        %v1541 = vld [vmem:[#allocation6 + $0x3d4] sm:$0xff]
        %v1542 = vld [vmem:[#allocation6 + $0x3dc] sm:$0xff]
        %v1543 = vld [vmem:[#allocation6 + $0x3e4] sm:$0xf]
        %v1544 = vld [vmem:[#allocation6 + $0x3e8] sm:$0xff]
        %v1545 = vld [vmem:[#allocation6 + $0x3f0] sm:$0xff]
        %v1546 = vld [vmem:[#allocation6 + $0x3f8] sm:$0xf]
        %v1547 = vld [vmem:[#allocation6 + $0x3fc] sm:$0xff]
        %v1548 = vld [vmem:[#allocation6 + $0x404] sm:$0xff]
        %v1549 = vld [vmem:[#allocation6 + $0x40c] sm:$0xf]
        %v1550 = vld [vmem:[#allocation6 + $0x410] sm:$0xff]
        %v1551 = vld [vmem:[#allocation6 + $0x418] sm:$0xff]
        %v1552 = vld [vmem:[#allocation6 + $0x420] sm:$0xf]
        %v1553 = vld [vmem:[#allocation6 + $0x424] sm:$0xff]
        %v1554 = vld [vmem:[#allocation6 + $0x42c] sm:$0xff]
        %v1555 = vld [vmem:[#allocation6 + $0x434] sm:$0xf]
        %v1556 = vld [vmem:[#allocation6 + $0x438] sm:$0xff]
        %v1557 = vld [vmem:[#allocation6 + $0x440] sm:$0xff]
        %v1558 = vld [vmem:[#allocation6 + $0x448] sm:$0xf]
        %v1559 = vld [vmem:[#allocation6 + $0x44c] sm:$0xff]
        %v1560 = vld [vmem:[#allocation6 + $0x454] sm:$0xff]
        %v1561 = vld [vmem:[#allocation6 + $0x45c] sm:$0xf]
        %v1562 = vld [vmem:[#allocation6 + $0x460] sm:$0xff]
        %v1563 = vld [vmem:[#allocation6 + $0x468] sm:$0xff]
        %v1564 = vld [vmem:[#allocation6 + $0x470] sm:$0xf]
        %v1565 = vld [vmem:[#allocation6 + $0x474] sm:$0xff]
        %v1566 = vld [vmem:[#allocation6 + $0x47c] sm:$0xff]
        %v1567 = vld [vmem:[#allocation6 + $0x484] sm:$0xf]
        %v1568 = vld [vmem:[#allocation6 + $0x488] sm:$0xff]
        %v1569 = vld [vmem:[#allocation6 + $0x490] sm:$0xff]
        %v1570 = vld [vmem:[#allocation6 + $0x498] sm:$0xf]
        %v1571 = vld [vmem:[#allocation6 + $0x49c] sm:$0xff]
        %v1572 = vld [vmem:[#allocation6 + $0x4a4] sm:$0xff]
        %v1573 = vld [vmem:[#allocation6 + $0x4ac] sm:$0xf]
        %v1574 = vld [vmem:[#allocation6 + $0x4b0] sm:$0xff]
        %v1575 = vld [vmem:[#allocation6 + $0x4b8] sm:$0xff]
        %v1576 = vld [vmem:[#allocation6 + $0x4c0] sm:$0xf]
        %v1577 = vld [vmem:[#allocation6 + $0x4c4] sm:$0xff]
        %v1578 = vld [vmem:[#allocation6 + $0x4cc] sm:$0xff]
        %v1579 = vld [vmem:[#allocation6 + $0x4d4] sm:$0xf]
        %v1580 = vld [vmem:[#allocation6 + $0x4d8] sm:$0xff]
        %v1581 = vld [vmem:[#allocation6 + $0x4e0] sm:$0xff]
        %v1582 = vld [vmem:[#allocation6 + $0x4e8] sm:$0xf]
        %v1583 = vld [vmem:[#allocation6 + $0x4ec] sm:$0xff]
        %v1584 = vld [vmem:[#allocation6 + $0x4f4] sm:$0xff]
        %v1585 = vld [vmem:[#allocation6 + $0x4fc] sm:$0xf]
        %v1586 = vld [vmem:[#allocation6 + $0x500] sm:$0xff]
        %v1587 = vld [vmem:[#allocation6 + $0x508] sm:$0xff]
        %v1588 = vld [vmem:[#allocation6 + $0x510] sm:$0xf]
        %v1589 = vld [vmem:[#allocation6 + $0x514] sm:$0xff]
        %v1590 = vld [vmem:[#allocation6 + $0x51c] sm:$0xff]
        %v1591 = vld [vmem:[#allocation6 + $0x524] sm:$0xf]
        %v1592 = vld [vmem:[#allocation6 + $0x528] sm:$0xff]
        %v1593 = vld [vmem:[#allocation6 + $0x530] sm:$0xff]
        %v1594 = vld [vmem:[#allocation6 + $0x538] sm:$0xf]
        %v1595 = vld [vmem:[#allocation6 + $0x53c] sm:$0xff]
        %v1596 = vld [vmem:[#allocation6 + $0x544] sm:$0xff]
        %v1597 = vld [vmem:[#allocation6 + $0x54c] sm:$0xf]
        %v1598 = vld [vmem:[#allocation6 + $0x550] sm:$0xff]
        %v1599 = vld [vmem:[#allocation6 + $0x558] sm:$0xff]
        %v1600 = vld [vmem:[#allocation6 + $0x560] sm:$0xf]
        %v1601 = vld [vmem:[#allocation6 + $0x564] sm:$0xff]
        %v1602 = vld [vmem:[#allocation6 + $0x56c] sm:$0xff]
        %v1603 = vld [vmem:[#allocation6 + $0x574] sm:$0xf]
        %v1604 = vld [vmem:[#allocation6 + $0x578] sm:$0xff]
        %v1605 = vld [vmem:[#allocation6 + $0x580] sm:$0xff]
        %v1606 = vld [vmem:[#allocation6 + $0x588] sm:$0xf]
        %v1607 = vld [vmem:[#allocation6 + $0x58c] sm:$0xff]
        %v1608 = vld [vmem:[#allocation6 + $0x594] sm:$0xff]
        %v1609 = vld [vmem:[#allocation6 + $0x59c] sm:$0xf]
        %v1610 = vld [vmem:[#allocation6 + $0x5a0] sm:$0xff]
        %v1611 = vld [vmem:[#allocation6 + $0x5a8] sm:$0xff]
        %v1612 = vld [vmem:[#allocation6 + $0x5b0] sm:$0xf]
        %v1613 = vld [vmem:[#allocation6 + $0x5b4] sm:$0xff]
        %v1614 = vld [vmem:[#allocation6 + $0x5bc] sm:$0xff]
        %v1615 = vld [vmem:[#allocation6 + $0x5c4] sm:$0xf]
        %v1616 = vld [vmem:[#allocation6 + $0x5c8] sm:$0xff]
        %v1617 = vld [vmem:[#allocation6 + $0x5d0] sm:$0xff]
        %v1618 = vld [vmem:[#allocation6 + $0x5d8] sm:$0xf]
        %v1619 = vld [vmem:[#allocation6 + $0x5dc] sm:$0xff]
        %v1620 = vld [vmem:[#allocation6 + $0x5e4] sm:$0xff]
        %v1621 = vld [vmem:[#allocation6 + $0x5ec] sm:$0xf]
        %v1622 = vld [vmem:[#allocation6 + $0x5f0] sm:$0xff]
        %v1623 = vld [vmem:[#allocation6 + $0x5f8] sm:$0xff]
        %v1624 = vld [vmem:[#allocation6 + $0x600] sm:$0xf]
        %v1625 = vld [vmem:[#allocation6 + $0x604] sm:$0xff]
        %v1626 = vld [vmem:[#allocation6 + $0x60c] sm:$0xff]
        %v1627 = vld [vmem:[#allocation6 + $0x614] sm:$0xf]
        %v1628 = vld [vmem:[#allocation6 + $0x618] sm:$0xff]
        %v1629 = vld [vmem:[#allocation6 + $0x620] sm:$0xff]
        %v1630 = vld [vmem:[#allocation6 + $0x628] sm:$0xf]
        %v1631 = vld [vmem:[#allocation6 + $0x62c] sm:$0xff]
        %v1632 = vld [vmem:[#allocation6 + $0x634] sm:$0xff]
        %v1633 = vld [vmem:[#allocation6 + $0x63c] sm:$0xf]
        %v1634 = vld [vmem:[#allocation6 + $0x640] sm:$0xff]
        %v1635 = vld [vmem:[#allocation6 + $0x648] sm:$0xff]
        %v1636 = vld [vmem:[#allocation6 + $0x650] sm:$0xf]
        %v1637 = vld [vmem:[#allocation6 + $0x654] sm:$0xff]
        %v1638 = vld [vmem:[#allocation6 + $0x65c] sm:$0xff]
        %v1639 = vld [vmem:[#allocation6 + $0x664] sm:$0xf]
        %v1640 = vld [vmem:[#allocation6 + $0x668] sm:$0xff]
        %v1641 = vld [vmem:[#allocation6 + $0x670] sm:$0xff]
        %v1642 = vld [vmem:[#allocation6 + $0x678] sm:$0xf]
        %v1643 = vld [vmem:[#allocation6 + $0x67c] sm:$0xff]
        %v1644 = vld [vmem:[#allocation6 + $0x684] sm:$0xff]
        %v1645 = vld [vmem:[#allocation6 + $0x68c] sm:$0xf]
        %v1646 = vld [vmem:[#allocation6 + $0x690] sm:$0xff]
        %v1647 = vld [vmem:[#allocation6 + $0x698] sm:$0xff]
        %v1648 = vld [vmem:[#allocation6 + $0x6a0] sm:$0xf]
        %v1649 = vld [vmem:[#allocation6 + $0x6a4] sm:$0xff]
        %v1650 = vld [vmem:[#allocation6 + $0x6ac] sm:$0xff]
        %v1651 = vld [vmem:[#allocation6 + $0x6b4] sm:$0xf]
        %v1652 = vld [vmem:[#allocation6 + $0x6b8] sm:$0xff]
        %v1653 = vld [vmem:[#allocation6 + $0x6c0] sm:$0xff]
        %v1654 = vld [vmem:[#allocation6 + $0x6c8] sm:$0xf]
        %v1655 = vld [vmem:[#allocation6 + $0x6cc] sm:$0xff]
        %v1656 = vld [vmem:[#allocation6 + $0x6d4] sm:$0xff]
        %v1657 = vld [vmem:[#allocation6 + $0x6dc] sm:$0xf]
        %v1658 = vld [vmem:[#allocation6 + $0x6e0] sm:$0xff]
        %v1659 = vld [vmem:[#allocation6 + $0x6e8] sm:$0xff]
        %v1660 = vld [vmem:[#allocation6 + $0x6f0] sm:$0xf]
        %v1661 = vld [vmem:[#allocation6 + $0x6f4] sm:$0xff]
        %v1662 = vld [vmem:[#allocation6 + $0x6fc] sm:$0xff]
        %v1663 = vld [vmem:[#allocation6 + $0x704] sm:$0xf]
        %v1664 = vld [vmem:[#allocation6 + $0x708] sm:$0xff]
        %v1665 = vld [vmem:[#allocation6 + $0x710] sm:$0xff]
        %v1666 = vld [vmem:[#allocation6 + $0x718] sm:$0xf]
        %v1667 = vld [vmem:[#allocation6 + $0x71c] sm:$0xff]
        %v1668 = vld [vmem:[#allocation6 + $0x724] sm:$0xff]
        %v1669 = vld [vmem:[#allocation6 + $0x72c] sm:$0xf]
        %v1670 = vld [vmem:[#allocation6 + $0x730] sm:$0xff]
        %v1671 = vld [vmem:[#allocation6 + $0x738] sm:$0xff]
        %v1672 = vld [vmem:[#allocation6 + $0x740] sm:$0xf]
        %v1673 = vld [vmem:[#allocation6 + $0x744] sm:$0xff]
        %v1674 = vld [vmem:[#allocation6 + $0x74c] sm:$0xff]
        %v1675 = vld [vmem:[#allocation6 + $0x754] sm:$0xf]
        %v1676 = vld [vmem:[#allocation6 + $0x758] sm:$0xff]
        %v1677 = vld [vmem:[#allocation6 + $0x760] sm:$0xff]
        %v1678 = vld [vmem:[#allocation6 + $0x768] sm:$0xf]
        %v1679 = vld [vmem:[#allocation6 + $0x76c] sm:$0xff]
        %v1680 = vld [vmem:[#allocation6 + $0x774] sm:$0xff]
        %v1681 = vld [vmem:[#allocation6 + $0x77c] sm:$0xf]
        %v1682 = vld [vmem:[#allocation7] sm:$0x1f]
        %v1684 = vlaneseq
        %v1685 = vshrl.u32 %v1684, 7
        %v1686 = vsub.s32 0, %v1685
        %v1687 = vrot.slane %v1682, %v1686
        %v1688 = vlaneseq
        %v1689 = vshrl.u32 %v1688, 7
        %v1690 = vsub.s32 1, %v1689
        %v1691 = vrot.slane %v1682, %v1690
        %v1692 = vlaneseq
        %v1693 = vshrl.u32 %v1692, 7
        %v1694 = vsub.s32 2, %v1693
        %v1695 = vrot.slane %v1682, %v1694
        %v1696 = vlaneseq
        %v1697 = vshrl.u32 %v1696, 7
        %v1698 = vsub.s32 3, %v1697
        %v1699 = vrot.slane %v1682, %v1698
        %v1700 = vlaneseq
        %v1701 = vshrl.u32 %v1700, 7
        %v1702 = vsub.s32 4, %v1701
        %v1703 = vrot.slane %v1682, %v1702
        %v1997 = vunpack.c.l.b16 %v1394
        %v1998 = vunpack.c.h.b16 %v1394
        %v1999 = vunpack.c.l.b16 %v1395
        %v2000 = vunpack.c.h.b16 %v1395
        %v2001 = vunpack.c.l.b16 %v1396
        %v2002 = vunpack.c.l.b16 %v1397
        %v2003 = vunpack.c.h.b16 %v1397
        %v2004 = vunpack.c.l.b16 %v1398
        %v2005 = vunpack.c.h.b16 %v1398
        %v2006 = vunpack.c.l.b16 %v1399
        %v2007 = vunpack.c.l.b16 %v1400
        %v2008 = vunpack.c.h.b16 %v1400
        %v2009 = vunpack.c.l.b16 %v1401
        %v2010 = vunpack.c.h.b16 %v1401
        %v2011 = vunpack.c.l.b16 %v1402
        %v2012 = vunpack.c.l.b16 %v1403
        %v2013 = vunpack.c.h.b16 %v1403
        %v2014 = vunpack.c.l.b16 %v1404
        %v2015 = vunpack.c.h.b16 %v1404
        %v2016 = vunpack.c.l.b16 %v1405
        %v2017 = vunpack.c.l.b16 %v1406
        %v2018 = vunpack.c.h.b16 %v1406
        %v2019 = vunpack.c.l.b16 %v1407
        %v2020 = vunpack.c.h.b16 %v1407
        %v2021 = vunpack.c.l.b16 %v1408
        %v2022 = vunpack.c.l.b16 %v1409
        %v2023 = vunpack.c.h.b16 %v1409
        %v2024 = vunpack.c.l.b16 %v1410
        %v2025 = vunpack.c.h.b16 %v1410
        %v2026 = vunpack.c.l.b16 %v1411
        %v2027 = vunpack.c.l.b16 %v1412
        %v2028 = vunpack.c.h.b16 %v1412
        %v2029 = vunpack.c.l.b16 %v1413
        %v2030 = vunpack.c.h.b16 %v1413
        %v2031 = vunpack.c.l.b16 %v1414
        %v2032 = vunpack.c.l.b16 %v1415
        %v2033 = vunpack.c.h.b16 %v1415
        %v2034 = vunpack.c.l.b16 %v1416
        %v2035 = vunpack.c.h.b16 %v1416
        %v2036 = vunpack.c.l.b16 %v1417
        %v2037 = vunpack.c.l.b16 %v1418
        %v2038 = vunpack.c.h.b16 %v1418
        %v2039 = vunpack.c.l.b16 %v1419
        %v2040 = vunpack.c.h.b16 %v1419
        %v2041 = vunpack.c.l.b16 %v1420
        %v2042 = vunpack.c.l.b16 %v1421
        %v2043 = vunpack.c.h.b16 %v1421
        %v2044 = vunpack.c.l.b16 %v1422
        %v2045 = vunpack.c.h.b16 %v1422
        %v2046 = vunpack.c.l.b16 %v1423
        %v2047 = vunpack.c.l.b16 %v1424
        %v2048 = vunpack.c.h.b16 %v1424
        %v2049 = vunpack.c.l.b16 %v1425
        %v2050 = vunpack.c.h.b16 %v1425
        %v2051 = vunpack.c.l.b16 %v1426
        %v2052 = vunpack.c.l.b16 %v1427
        %v2053 = vunpack.c.h.b16 %v1427
        %v2054 = vunpack.c.l.b16 %v1428
        %v2055 = vunpack.c.h.b16 %v1428
        %v2056 = vunpack.c.l.b16 %v1429
        %v2057 = vunpack.c.l.b16 %v1430
        %v2058 = vunpack.c.h.b16 %v1430
        %v2059 = vunpack.c.l.b16 %v1431
        %v2060 = vunpack.c.h.b16 %v1431
        %v2061 = vunpack.c.l.b16 %v1432
        %v2062 = vunpack.c.l.b16 %v1433
        %v2063 = vunpack.c.h.b16 %v1433
        %v2064 = vunpack.c.l.b16 %v1434
        %v2065 = vunpack.c.h.b16 %v1434
        %v2066 = vunpack.c.l.b16 %v1435
        %v2067 = vunpack.c.l.b16 %v1436
        %v2068 = vunpack.c.h.b16 %v1436
        %v2069 = vunpack.c.l.b16 %v1437
        %v2070 = vunpack.c.h.b16 %v1437
        %v2071 = vunpack.c.l.b16 %v1438
        %v2072 = vunpack.c.l.b16 %v1439
        %v2073 = vunpack.c.h.b16 %v1439
        %v2074 = vunpack.c.l.b16 %v1440
        %v2075 = vunpack.c.h.b16 %v1440
        %v2076 = vunpack.c.l.b16 %v1441
        %v2077 = vunpack.c.l.b16 %v1442
        %v2078 = vunpack.c.h.b16 %v1442
        %v2079 = vunpack.c.l.b16 %v1443
        %v2080 = vunpack.c.h.b16 %v1443
        %v2081 = vunpack.c.l.b16 %v1444
        %v2082 = vunpack.c.l.b16 %v1445
        %v2083 = vunpack.c.h.b16 %v1445
        %v2084 = vunpack.c.l.b16 %v1446
        %v2085 = vunpack.c.h.b16 %v1446
        %v2086 = vunpack.c.l.b16 %v1447
        %v2087 = vunpack.c.l.b16 %v1448
        %v2088 = vunpack.c.h.b16 %v1448
        %v2089 = vunpack.c.l.b16 %v1449
        %v2090 = vunpack.c.h.b16 %v1449
        %v2091 = vunpack.c.l.b16 %v1450
        %v2092 = vunpack.c.l.b16 %v1451
        %v2093 = vunpack.c.h.b16 %v1451
        %v2094 = vunpack.c.l.b16 %v1452
        %v2095 = vunpack.c.h.b16 %v1452
        %v2096 = vunpack.c.l.b16 %v1453
        %v2097 = vunpack.c.l.b16 %v1454
        %v2098 = vunpack.c.h.b16 %v1454
        %v2099 = vunpack.c.l.b16 %v1455
        %v2100 = vunpack.c.h.b16 %v1455
        %v2101 = vunpack.c.l.b16 %v1456
        %v2102 = vunpack.c.l.b16 %v1457
        %v2103 = vunpack.c.h.b16 %v1457
        %v2104 = vunpack.c.l.b16 %v1458
        %v2105 = vunpack.c.h.b16 %v1458
        %v2106 = vunpack.c.l.b16 %v1459
        %v2107 = vunpack.c.l.b16 %v1460
        %v2108 = vunpack.c.h.b16 %v1460
        %v2109 = vunpack.c.l.b16 %v1461
        %v2110 = vunpack.c.h.b16 %v1461
        %v2111 = vunpack.c.l.b16 %v1462
        %v2112 = vunpack.c.l.b16 %v1463
        %v2113 = vunpack.c.h.b16 %v1463
        %v2114 = vunpack.c.l.b16 %v1464
        %v2115 = vunpack.c.h.b16 %v1464
        %v2116 = vunpack.c.l.b16 %v1465
        %v2117 = vunpack.c.l.b16 %v1466
        %v2118 = vunpack.c.h.b16 %v1466
        %v2119 = vunpack.c.l.b16 %v1467
        %v2120 = vunpack.c.h.b16 %v1467
        %v2121 = vunpack.c.l.b16 %v1468
        %v2122 = vunpack.c.l.b16 %v1469
        %v2123 = vunpack.c.h.b16 %v1469
        %v2124 = vunpack.c.l.b16 %v1470
        %v2125 = vunpack.c.h.b16 %v1470
        %v2126 = vunpack.c.l.b16 %v1471
        %v2127 = vunpack.c.l.b16 %v1472
        %v2128 = vunpack.c.h.b16 %v1472
        %v2129 = vunpack.c.l.b16 %v1473
        %v2130 = vunpack.c.h.b16 %v1473
        %v2131 = vunpack.c.l.b16 %v1474
        %v2132 = vunpack.c.l.b16 %v1475
        %v2133 = vunpack.c.h.b16 %v1475
        %v2134 = vunpack.c.l.b16 %v1476
        %v2135 = vunpack.c.h.b16 %v1476
        %v2136 = vunpack.c.l.b16 %v1477
        %v2137 = vunpack.c.l.b16 %v1478
        %v2138 = vunpack.c.h.b16 %v1478
        %v2139 = vunpack.c.l.b16 %v1479
        %v2140 = vunpack.c.h.b16 %v1479
        %v2141 = vunpack.c.l.b16 %v1480
        %v2142 = vunpack.c.l.b16 %v1481
        %v2143 = vunpack.c.h.b16 %v1481
        %v2144 = vunpack.c.l.b16 %v1482
        %v2145 = vunpack.c.h.b16 %v1482
        %v2146 = vunpack.c.l.b16 %v1483
        %v2147 = vunpack.c.l.b16 %v1484
        %v2148 = vunpack.c.h.b16 %v1484
        %v2149 = vunpack.c.l.b16 %v1485
        %v2150 = vunpack.c.h.b16 %v1485
        %v2151 = vunpack.c.l.b16 %v1486
        %v2152 = vunpack.c.l.b16 %v1487
        %v2153 = vunpack.c.h.b16 %v1487
        %v2154 = vunpack.c.l.b16 %v1488
        %v2155 = vunpack.c.h.b16 %v1488
        %v2156 = vunpack.c.l.b16 %v1489
        %v2157 = vunpack.c.l.b16 %v1490
        %v2158 = vunpack.c.h.b16 %v1490
        %v2159 = vunpack.c.l.b16 %v1491
        %v2160 = vunpack.c.h.b16 %v1491
        %v2161 = vunpack.c.l.b16 %v1492
        %v2162 = vunpack.c.l.b16 %v1493
        %v2163 = vunpack.c.h.b16 %v1493
        %v2164 = vunpack.c.l.b16 %v1494
        %v2165 = vunpack.c.h.b16 %v1494
        %v2166 = vunpack.c.l.b16 %v1495
        %v2167 = vunpack.c.l.b16 %v1496
        %v2168 = vunpack.c.h.b16 %v1496
        %v2169 = vunpack.c.l.b16 %v1497
        %v2170 = vunpack.c.h.b16 %v1497
        %v2171 = vunpack.c.l.b16 %v1498
        %v2172 = vunpack.c.l.b16 %v1499
        %v2173 = vunpack.c.h.b16 %v1499
        %v2174 = vunpack.c.l.b16 %v1500
        %v2175 = vunpack.c.h.b16 %v1500
        %v2176 = vunpack.c.l.b16 %v1501
        %v2177 = vunpack.c.l.b16 %v1502
        %v2178 = vunpack.c.h.b16 %v1502
        %v2179 = vunpack.c.l.b16 %v1503
        %v2180 = vunpack.c.h.b16 %v1503
        %v2181 = vunpack.c.l.b16 %v1504
        %v2182 = vunpack.c.l.b16 %v1505
        %v2183 = vunpack.c.h.b16 %v1505
        %v2184 = vunpack.c.l.b16 %v1506
        %v2185 = vunpack.c.h.b16 %v1506
        %v2186 = vunpack.c.l.b16 %v1507
        %v2187 = vunpack.c.l.b16 %v1508
        %v2188 = vunpack.c.h.b16 %v1508
        %v2189 = vunpack.c.l.b16 %v1509
        %v2190 = vunpack.c.h.b16 %v1509
        %v2191 = vunpack.c.l.b16 %v1510
        %v2192 = vunpack.c.l.b16 %v1511
        %v2193 = vunpack.c.h.b16 %v1511
        %v2194 = vunpack.c.l.b16 %v1512
        %v2195 = vunpack.c.h.b16 %v1512
        %v2196 = vunpack.c.l.b16 %v1513
        %v2197 = vunpack.c.l.b16 %v1514
        %v2198 = vunpack.c.h.b16 %v1514
        %v2199 = vunpack.c.l.b16 %v1515
        %v2200 = vunpack.c.h.b16 %v1515
        %v2201 = vunpack.c.l.b16 %v1516
        %v2202 = vunpack.c.l.b16 %v1517
        %v2203 = vunpack.c.h.b16 %v1517
        %v2204 = vunpack.c.l.b16 %v1518
        %v2205 = vunpack.c.h.b16 %v1518
        %v2206 = vunpack.c.l.b16 %v1519
        %v2207 = vunpack.c.l.b16 %v1520
        %v2208 = vunpack.c.h.b16 %v1520
        %v2209 = vunpack.c.l.b16 %v1521
        %v2210 = vunpack.c.h.b16 %v1521
        %v2211 = vunpack.c.l.b16 %v1522
        %v2212 = vunpack.c.l.b16 %v1523
        %v2213 = vunpack.c.h.b16 %v1523
        %v2214 = vunpack.c.l.b16 %v1524
        %v2215 = vunpack.c.h.b16 %v1524
        %v2216 = vunpack.c.l.b16 %v1525
        %v2217 = vunpack.c.l.b16 %v1526
        %v2218 = vunpack.c.h.b16 %v1526
        %v2219 = vunpack.c.l.b16 %v1527
        %v2220 = vunpack.c.h.b16 %v1527
        %v2221 = vunpack.c.l.b16 %v1528
        %v2222 = vunpack.c.l.b16 %v1529
        %v2223 = vunpack.c.h.b16 %v1529
        %v2224 = vunpack.c.l.b16 %v1530
        %v2225 = vunpack.c.h.b16 %v1530
        %v2226 = vunpack.c.l.b16 %v1531
        %v2227 = vunpack.c.l.b16 %v1532
        %v2228 = vunpack.c.h.b16 %v1532
        %v2229 = vunpack.c.l.b16 %v1533
        %v2230 = vunpack.c.h.b16 %v1533
        %v2231 = vunpack.c.l.b16 %v1534
        %v2232 = vunpack.c.l.b16 %v1535
        %v2233 = vunpack.c.h.b16 %v1535
        %v2234 = vunpack.c.l.b16 %v1536
        %v2235 = vunpack.c.h.b16 %v1536
        %v2236 = vunpack.c.l.b16 %v1537
        %v2237 = vunpack.c.l.b16 %v1538
        %v2238 = vunpack.c.h.b16 %v1538
        %v2239 = vunpack.c.l.b16 %v1539
        %v2240 = vunpack.c.h.b16 %v1539
        %v2241 = vunpack.c.l.b16 %v1540
        %v2242 = vunpack.c.l.b16 %v1541
        %v2243 = vunpack.c.h.b16 %v1541
        %v2244 = vunpack.c.l.b16 %v1542
        %v2245 = vunpack.c.h.b16 %v1542
        %v2246 = vunpack.c.l.b16 %v1543
        %v2247 = vunpack.c.l.b16 %v1544
        %v2248 = vunpack.c.h.b16 %v1544
        %v2249 = vunpack.c.l.b16 %v1545
        %v2250 = vunpack.c.h.b16 %v1545
        %v2251 = vunpack.c.l.b16 %v1546
        %v2252 = vunpack.c.l.b16 %v1547
        %v2253 = vunpack.c.h.b16 %v1547
        %v2254 = vunpack.c.l.b16 %v1548
        %v2255 = vunpack.c.h.b16 %v1548
        %v2256 = vunpack.c.l.b16 %v1549
        %v2257 = vunpack.c.l.b16 %v1550
        %v2258 = vunpack.c.h.b16 %v1550
        %v2259 = vunpack.c.l.b16 %v1551
        %v2260 = vunpack.c.h.b16 %v1551
        %v2261 = vunpack.c.l.b16 %v1552
        %v2262 = vunpack.c.l.b16 %v1553
        %v2263 = vunpack.c.h.b16 %v1553
        %v2264 = vunpack.c.l.b16 %v1554
        %v2265 = vunpack.c.h.b16 %v1554
        %v2266 = vunpack.c.l.b16 %v1555
        %v2267 = vunpack.c.l.b16 %v1556
        %v2268 = vunpack.c.h.b16 %v1556
        %v2269 = vunpack.c.l.b16 %v1557
        %v2270 = vunpack.c.h.b16 %v1557
        %v2271 = vunpack.c.l.b16 %v1558
        %v2272 = vunpack.c.l.b16 %v1559
        %v2273 = vunpack.c.h.b16 %v1559
        %v2274 = vunpack.c.l.b16 %v1560
        %v2275 = vunpack.c.h.b16 %v1560
        %v2276 = vunpack.c.l.b16 %v1561
        %v2277 = vunpack.c.l.b16 %v1562
        %v2278 = vunpack.c.h.b16 %v1562
        %v2279 = vunpack.c.l.b16 %v1563
        %v2280 = vunpack.c.h.b16 %v1563
        %v2281 = vunpack.c.l.b16 %v1564
        %v2282 = vunpack.c.l.b16 %v1565
        %v2283 = vunpack.c.h.b16 %v1565
        %v2284 = vunpack.c.l.b16 %v1566
        %v2285 = vunpack.c.h.b16 %v1566
        %v2286 = vunpack.c.l.b16 %v1567
        %v2287 = vunpack.c.l.b16 %v1568
        %v2288 = vunpack.c.h.b16 %v1568
        %v2289 = vunpack.c.l.b16 %v1569
        %v2290 = vunpack.c.h.b16 %v1569
        %v2291 = vunpack.c.l.b16 %v1570
        %v2292 = vunpack.c.l.b16 %v1571
        %v2293 = vunpack.c.h.b16 %v1571
        %v2294 = vunpack.c.l.b16 %v1572
        %v2295 = vunpack.c.h.b16 %v1572
        %v2296 = vunpack.c.l.b16 %v1573
        %v2297 = vunpack.c.l.b16 %v1574
        %v2298 = vunpack.c.h.b16 %v1574
        %v2299 = vunpack.c.l.b16 %v1575
        %v2300 = vunpack.c.h.b16 %v1575
        %v2301 = vunpack.c.l.b16 %v1576
        %v2302 = vunpack.c.l.b16 %v1577
        %v2303 = vunpack.c.h.b16 %v1577
        %v2304 = vunpack.c.l.b16 %v1578
        %v2305 = vunpack.c.h.b16 %v1578
        %v2306 = vunpack.c.l.b16 %v1579
        %v2307 = vunpack.c.l.b16 %v1580
        %v2308 = vunpack.c.h.b16 %v1580
        %v2309 = vunpack.c.l.b16 %v1581
        %v2310 = vunpack.c.h.b16 %v1581
        %v2311 = vunpack.c.l.b16 %v1582
        %v2312 = vunpack.c.l.b16 %v1583
        %v2313 = vunpack.c.h.b16 %v1583
        %v2314 = vunpack.c.l.b16 %v1584
        %v2315 = vunpack.c.h.b16 %v1584
        %v2316 = vunpack.c.l.b16 %v1585
        %v2317 = vunpack.c.l.b16 %v1586
        %v2318 = vunpack.c.h.b16 %v1586
        %v2319 = vunpack.c.l.b16 %v1587
        %v2320 = vunpack.c.h.b16 %v1587
        %v2321 = vunpack.c.l.b16 %v1588
        %v2322 = vunpack.c.l.b16 %v1589
        %v2323 = vunpack.c.h.b16 %v1589
        %v2324 = vunpack.c.l.b16 %v1590
        %v2325 = vunpack.c.h.b16 %v1590
        %v2326 = vunpack.c.l.b16 %v1591
        %v2327 = vunpack.c.l.b16 %v1592
        %v2328 = vunpack.c.h.b16 %v1592
        %v2329 = vunpack.c.l.b16 %v1593
        %v2330 = vunpack.c.h.b16 %v1593
        %v2331 = vunpack.c.l.b16 %v1594
        %v2332 = vunpack.c.l.b16 %v1595
        %v2333 = vunpack.c.h.b16 %v1595
        %v2334 = vunpack.c.l.b16 %v1596
        %v2335 = vunpack.c.h.b16 %v1596
        %v2336 = vunpack.c.l.b16 %v1597
        %v2337 = vunpack.c.l.b16 %v1598
        %v2338 = vunpack.c.h.b16 %v1598
        %v2339 = vunpack.c.l.b16 %v1599
        %v2340 = vunpack.c.h.b16 %v1599
        %v2341 = vunpack.c.l.b16 %v1600
        %v2342 = vunpack.c.l.b16 %v1601
        %v2343 = vunpack.c.h.b16 %v1601
        %v2344 = vunpack.c.l.b16 %v1602
        %v2345 = vunpack.c.h.b16 %v1602
        %v2346 = vunpack.c.l.b16 %v1603
        %v2347 = vunpack.c.l.b16 %v1604
        %v2348 = vunpack.c.h.b16 %v1604
        %v2349 = vunpack.c.l.b16 %v1605
        %v2350 = vunpack.c.h.b16 %v1605
        %v2351 = vunpack.c.l.b16 %v1606
        %v2352 = vunpack.c.l.b16 %v1607
        %v2353 = vunpack.c.h.b16 %v1607
        %v2354 = vunpack.c.l.b16 %v1608
        %v2355 = vunpack.c.h.b16 %v1608
        %v2356 = vunpack.c.l.b16 %v1609
        %v2357 = vunpack.c.l.b16 %v1610
        %v2358 = vunpack.c.h.b16 %v1610
        %v2359 = vunpack.c.l.b16 %v1611
        %v2360 = vunpack.c.h.b16 %v1611
        %v2361 = vunpack.c.l.b16 %v1612
        %v2362 = vunpack.c.l.b16 %v1613
        %v2363 = vunpack.c.h.b16 %v1613
        %v2364 = vunpack.c.l.b16 %v1614
        %v2365 = vunpack.c.h.b16 %v1614
        %v2366 = vunpack.c.l.b16 %v1615
        %v2367 = vunpack.c.l.b16 %v1616
        %v2368 = vunpack.c.h.b16 %v1616
        %v2369 = vunpack.c.l.b16 %v1617
        %v2370 = vunpack.c.h.b16 %v1617
        %v2371 = vunpack.c.l.b16 %v1618
        %v2372 = vunpack.c.l.b16 %v1619
        %v2373 = vunpack.c.h.b16 %v1619
        %v2374 = vunpack.c.l.b16 %v1620
        %v2375 = vunpack.c.h.b16 %v1620
        %v2376 = vunpack.c.l.b16 %v1621
        %v2377 = vunpack.c.l.b16 %v1622
        %v2378 = vunpack.c.h.b16 %v1622
        %v2379 = vunpack.c.l.b16 %v1623
        %v2380 = vunpack.c.h.b16 %v1623
        %v2381 = vunpack.c.l.b16 %v1624
        %v2382 = vunpack.c.l.b16 %v1625
        %v2383 = vunpack.c.h.b16 %v1625
        %v2384 = vunpack.c.l.b16 %v1626
        %v2385 = vunpack.c.h.b16 %v1626
        %v2386 = vunpack.c.l.b16 %v1627
        %v2387 = vunpack.c.l.b16 %v1628
        %v2388 = vunpack.c.h.b16 %v1628
        %v2389 = vunpack.c.l.b16 %v1629
        %v2390 = vunpack.c.h.b16 %v1629
        %v2391 = vunpack.c.l.b16 %v1630
        %v2392 = vunpack.c.l.b16 %v1631
        %v2393 = vunpack.c.h.b16 %v1631
        %v2394 = vunpack.c.l.b16 %v1632
        %v2395 = vunpack.c.h.b16 %v1632
        %v2396 = vunpack.c.l.b16 %v1633
        %v2397 = vunpack.c.l.b16 %v1634
        %v2398 = vunpack.c.h.b16 %v1634
        %v2399 = vunpack.c.l.b16 %v1635
        %v2400 = vunpack.c.h.b16 %v1635
        %v2401 = vunpack.c.l.b16 %v1636
        %v2402 = vunpack.c.l.b16 %v1637
        %v2403 = vunpack.c.h.b16 %v1637
        %v2404 = vunpack.c.l.b16 %v1638
        %v2405 = vunpack.c.h.b16 %v1638
        %v2406 = vunpack.c.l.b16 %v1639
        %v2407 = vunpack.c.l.b16 %v1640
        %v2408 = vunpack.c.h.b16 %v1640
        %v2409 = vunpack.c.l.b16 %v1641
        %v2410 = vunpack.c.h.b16 %v1641
        %v2411 = vunpack.c.l.b16 %v1642
        %v2412 = vunpack.c.l.b16 %v1643
        %v2413 = vunpack.c.h.b16 %v1643
        %v2414 = vunpack.c.l.b16 %v1644
        %v2415 = vunpack.c.h.b16 %v1644
        %v2416 = vunpack.c.l.b16 %v1645
        %v2417 = vunpack.c.l.b16 %v1646
        %v2418 = vunpack.c.h.b16 %v1646
        %v2419 = vunpack.c.l.b16 %v1647
        %v2420 = vunpack.c.h.b16 %v1647
        %v2421 = vunpack.c.l.b16 %v1648
        %v2422 = vunpack.c.l.b16 %v1649
        %v2423 = vunpack.c.h.b16 %v1649
        %v2424 = vunpack.c.l.b16 %v1650
        %v2425 = vunpack.c.h.b16 %v1650
        %v2426 = vunpack.c.l.b16 %v1651
        %v2427 = vunpack.c.l.b16 %v1652
        %v2428 = vunpack.c.h.b16 %v1652
        %v2429 = vunpack.c.l.b16 %v1653
        %v2430 = vunpack.c.h.b16 %v1653
        %v2431 = vunpack.c.l.b16 %v1654
        %v2432 = vunpack.c.l.b16 %v1655
        %v2433 = vunpack.c.h.b16 %v1655
        %v2434 = vunpack.c.l.b16 %v1656
        %v2435 = vunpack.c.h.b16 %v1656
        %v2436 = vunpack.c.l.b16 %v1657
        %v2437 = vunpack.c.l.b16 %v1658
        %v2438 = vunpack.c.h.b16 %v1658
        %v2439 = vunpack.c.l.b16 %v1659
        %v2440 = vunpack.c.h.b16 %v1659
        %v2441 = vunpack.c.l.b16 %v1660
        %v2442 = vunpack.c.l.b16 %v1661
        %v2443 = vunpack.c.h.b16 %v1661
        %v2444 = vunpack.c.l.b16 %v1662
        %v2445 = vunpack.c.h.b16 %v1662
        %v2446 = vunpack.c.l.b16 %v1663
        %v2447 = vunpack.c.l.b16 %v1664
        %v2448 = vunpack.c.h.b16 %v1664
        %v2449 = vunpack.c.l.b16 %v1665
        %v2450 = vunpack.c.h.b16 %v1665
        %v2451 = vunpack.c.l.b16 %v1666
        %v2452 = vunpack.c.l.b16 %v1667
        %v2453 = vunpack.c.h.b16 %v1667
        %v2454 = vunpack.c.l.b16 %v1668
        %v2455 = vunpack.c.h.b16 %v1668
        %v2456 = vunpack.c.l.b16 %v1669
        %v2457 = vunpack.c.l.b16 %v1670
        %v2458 = vunpack.c.h.b16 %v1670
        %v2459 = vunpack.c.l.b16 %v1671
        %v2460 = vunpack.c.h.b16 %v1671
        %v2461 = vunpack.c.l.b16 %v1672
        %v2462 = vunpack.c.l.b16 %v1673
        %v2463 = vunpack.c.h.b16 %v1673
        %v2464 = vunpack.c.l.b16 %v1674
        %v2465 = vunpack.c.h.b16 %v1674
        %v2466 = vunpack.c.l.b16 %v1675
        %v2467 = vunpack.c.l.b16 %v1676
        %v2468 = vunpack.c.h.b16 %v1676
        %v2469 = vunpack.c.l.b16 %v1677
        %v2470 = vunpack.c.h.b16 %v1677
        %v2471 = vunpack.c.l.b16 %v1678
        %v2472 = vunpack.c.l.b16 %v1679
        %v2473 = vunpack.c.h.b16 %v1679
        %v2474 = vunpack.c.l.b16 %v1680
        %v2475 = vunpack.c.h.b16 %v1680
        %v2476 = vunpack.c.l.b16 %v1681
        %v2477 = vpack.c.b16 %v2002, %v1997
        %v2478 = vpack.c.b16 %v2003, %v1998
        %v2479 = vpack.c.b16 %v2004, %v1999
        %v2480 = vpack.c.b16 %v2005, %v2000
        %v2481 = vpack.c.b16 %v2006, %v2001
        %v2482 = vpack.c.b16 %v2012, %v2007
        %v2483 = vpack.c.b16 %v2013, %v2008
        %v2484 = vpack.c.b16 %v2014, %v2009
        %v2485 = vpack.c.b16 %v2015, %v2010
        %v2486 = vpack.c.b16 %v2016, %v2011
        %v2487 = vpack.c.b16 %v2022, %v2017
        %v2488 = vpack.c.b16 %v2023, %v2018
        %v2489 = vpack.c.b16 %v2024, %v2019
        %v2490 = vpack.c.b16 %v2025, %v2020
        %v2491 = vpack.c.b16 %v2026, %v2021
        %v2492 = vpack.c.b16 %v2032, %v2027
        %v2493 = vpack.c.b16 %v2033, %v2028
        %v2494 = vpack.c.b16 %v2034, %v2029
        %v2495 = vpack.c.b16 %v2035, %v2030
        %v2496 = vpack.c.b16 %v2036, %v2031
        %v2497 = vpack.c.b16 %v2042, %v2037
        %v2498 = vpack.c.b16 %v2043, %v2038
        %v2499 = vpack.c.b16 %v2044, %v2039
        %v2500 = vpack.c.b16 %v2045, %v2040
        %v2501 = vpack.c.b16 %v2046, %v2041
        %v2502 = vpack.c.b16 %v2052, %v2047
        %v2503 = vpack.c.b16 %v2053, %v2048
        %v2504 = vpack.c.b16 %v2054, %v2049
        %v2505 = vpack.c.b16 %v2055, %v2050
        %v2506 = vpack.c.b16 %v2056, %v2051
        %v2507 = vpack.c.b16 %v2062, %v2057
        %v2508 = vpack.c.b16 %v2063, %v2058
        %v2509 = vpack.c.b16 %v2064, %v2059
        %v2510 = vpack.c.b16 %v2065, %v2060
        %v2511 = vpack.c.b16 %v2066, %v2061
        %v2512 = vpack.c.b16 %v2072, %v2067
        %v2513 = vpack.c.b16 %v2073, %v2068
        %v2514 = vpack.c.b16 %v2074, %v2069
        %v2515 = vpack.c.b16 %v2075, %v2070
        %v2516 = vpack.c.b16 %v2076, %v2071
        %v2517 = vpack.c.b16 %v2082, %v2077
        %v2518 = vpack.c.b16 %v2083, %v2078
        %v2519 = vpack.c.b16 %v2084, %v2079
        %v2520 = vpack.c.b16 %v2085, %v2080
        %v2521 = vpack.c.b16 %v2086, %v2081
        %v2522 = vpack.c.b16 %v2092, %v2087
        %v2523 = vpack.c.b16 %v2093, %v2088
        %v2524 = vpack.c.b16 %v2094, %v2089
        %v2525 = vpack.c.b16 %v2095, %v2090
        %v2526 = vpack.c.b16 %v2096, %v2091
        %v2527 = vpack.c.b16 %v2102, %v2097
        %v2528 = vpack.c.b16 %v2103, %v2098
        %v2529 = vpack.c.b16 %v2104, %v2099
        %v2530 = vpack.c.b16 %v2105, %v2100
        %v2531 = vpack.c.b16 %v2106, %v2101
        %v2532 = vpack.c.b16 %v2112, %v2107
        %v2533 = vpack.c.b16 %v2113, %v2108
        %v2534 = vpack.c.b16 %v2114, %v2109
        %v2535 = vpack.c.b16 %v2115, %v2110
        %v2536 = vpack.c.b16 %v2116, %v2111
        %v2537 = vpack.c.b16 %v2122, %v2117
        %v2538 = vpack.c.b16 %v2123, %v2118
        %v2539 = vpack.c.b16 %v2124, %v2119
        %v2540 = vpack.c.b16 %v2125, %v2120
        %v2541 = vpack.c.b16 %v2126, %v2121
        %v2542 = vpack.c.b16 %v2132, %v2127
        %v2543 = vpack.c.b16 %v2133, %v2128
        %v2544 = vpack.c.b16 %v2134, %v2129
        %v2545 = vpack.c.b16 %v2135, %v2130
        %v2546 = vpack.c.b16 %v2136, %v2131
        %v2547 = vpack.c.b16 %v2142, %v2137
        %v2548 = vpack.c.b16 %v2143, %v2138
        %v2549 = vpack.c.b16 %v2144, %v2139
        %v2550 = vpack.c.b16 %v2145, %v2140
        %v2551 = vpack.c.b16 %v2146, %v2141
        %v2552 = vpack.c.b16 %v2152, %v2147
        %v2553 = vpack.c.b16 %v2153, %v2148
        %v2554 = vpack.c.b16 %v2154, %v2149
        %v2555 = vpack.c.b16 %v2155, %v2150
        %v2556 = vpack.c.b16 %v2156, %v2151
        %v2557 = vpack.c.b16 %v2162, %v2157
        %v2558 = vpack.c.b16 %v2163, %v2158
        %v2559 = vpack.c.b16 %v2164, %v2159
        %v2560 = vpack.c.b16 %v2165, %v2160
        %v2561 = vpack.c.b16 %v2166, %v2161
        %v2562 = vpack.c.b16 %v2172, %v2167
        %v2563 = vpack.c.b16 %v2173, %v2168
        %v2564 = vpack.c.b16 %v2174, %v2169
        %v2565 = vpack.c.b16 %v2175, %v2170
        %v2566 = vpack.c.b16 %v2176, %v2171
        %v2567 = vpack.c.b16 %v2182, %v2177
        %v2568 = vpack.c.b16 %v2183, %v2178
        %v2569 = vpack.c.b16 %v2184, %v2179
        %v2570 = vpack.c.b16 %v2185, %v2180
        %v2571 = vpack.c.b16 %v2186, %v2181
        %v2572 = vpack.c.b16 %v2192, %v2187
        %v2573 = vpack.c.b16 %v2193, %v2188
        %v2574 = vpack.c.b16 %v2194, %v2189
        %v2575 = vpack.c.b16 %v2195, %v2190
        %v2576 = vpack.c.b16 %v2196, %v2191
        %v2577 = vpack.c.b16 %v2202, %v2197
        %v2578 = vpack.c.b16 %v2203, %v2198
        %v2579 = vpack.c.b16 %v2204, %v2199
        %v2580 = vpack.c.b16 %v2205, %v2200
        %v2581 = vpack.c.b16 %v2206, %v2201
        %v2582 = vpack.c.b16 %v2212, %v2207
        %v2583 = vpack.c.b16 %v2213, %v2208
        %v2584 = vpack.c.b16 %v2214, %v2209
        %v2585 = vpack.c.b16 %v2215, %v2210
        %v2586 = vpack.c.b16 %v2216, %v2211
        %v2587 = vpack.c.b16 %v2222, %v2217
        %v2588 = vpack.c.b16 %v2223, %v2218
        %v2589 = vpack.c.b16 %v2224, %v2219
        %v2590 = vpack.c.b16 %v2225, %v2220
        %v2591 = vpack.c.b16 %v2226, %v2221
        %v2592 = vpack.c.b16 %v2232, %v2227
        %v2593 = vpack.c.b16 %v2233, %v2228
        %v2594 = vpack.c.b16 %v2234, %v2229
        %v2595 = vpack.c.b16 %v2235, %v2230
        %v2596 = vpack.c.b16 %v2236, %v2231
        %v2597 = vpack.c.b16 %v2242, %v2237
        %v2598 = vpack.c.b16 %v2243, %v2238
        %v2599 = vpack.c.b16 %v2244, %v2239
        %v2600 = vpack.c.b16 %v2245, %v2240
        %v2601 = vpack.c.b16 %v2246, %v2241
        %v2602 = vpack.c.b16 %v2252, %v2247
        %v2603 = vpack.c.b16 %v2253, %v2248
        %v2604 = vpack.c.b16 %v2254, %v2249
        %v2605 = vpack.c.b16 %v2255, %v2250
        %v2606 = vpack.c.b16 %v2256, %v2251
        %v2607 = vpack.c.b16 %v2262, %v2257
        %v2608 = vpack.c.b16 %v2263, %v2258
        %v2609 = vpack.c.b16 %v2264, %v2259
        %v2610 = vpack.c.b16 %v2265, %v2260
        %v2611 = vpack.c.b16 %v2266, %v2261
        %v2612 = vpack.c.b16 %v2272, %v2267
        %v2613 = vpack.c.b16 %v2273, %v2268
        %v2614 = vpack.c.b16 %v2274, %v2269
        %v2615 = vpack.c.b16 %v2275, %v2270
        %v2616 = vpack.c.b16 %v2276, %v2271
        %v2617 = vpack.c.b16 %v2282, %v2277
        %v2618 = vpack.c.b16 %v2283, %v2278
        %v2619 = vpack.c.b16 %v2284, %v2279
        %v2620 = vpack.c.b16 %v2285, %v2280
        %v2621 = vpack.c.b16 %v2286, %v2281
        %v2622 = vpack.c.b16 %v2292, %v2287
        %v2623 = vpack.c.b16 %v2293, %v2288
        %v2624 = vpack.c.b16 %v2294, %v2289
        %v2625 = vpack.c.b16 %v2295, %v2290
        %v2626 = vpack.c.b16 %v2296, %v2291
        %v2627 = vpack.c.b16 %v2302, %v2297
        %v2628 = vpack.c.b16 %v2303, %v2298
        %v2629 = vpack.c.b16 %v2304, %v2299
        %v2630 = vpack.c.b16 %v2305, %v2300
        %v2631 = vpack.c.b16 %v2306, %v2301
        %v2632 = vpack.c.b16 %v2312, %v2307
        %v2633 = vpack.c.b16 %v2313, %v2308
        %v2634 = vpack.c.b16 %v2314, %v2309
        %v2635 = vpack.c.b16 %v2315, %v2310
        %v2636 = vpack.c.b16 %v2316, %v2311
        %v2637 = vpack.c.b16 %v2322, %v2317
        %v2638 = vpack.c.b16 %v2323, %v2318
        %v2639 = vpack.c.b16 %v2324, %v2319
        %v2640 = vpack.c.b16 %v2325, %v2320
        %v2641 = vpack.c.b16 %v2326, %v2321
        %v2642 = vpack.c.b16 %v2332, %v2327
        %v2643 = vpack.c.b16 %v2333, %v2328
        %v2644 = vpack.c.b16 %v2334, %v2329
        %v2645 = vpack.c.b16 %v2335, %v2330
        %v2646 = vpack.c.b16 %v2336, %v2331
        %v2647 = vpack.c.b16 %v2342, %v2337
        %v2648 = vpack.c.b16 %v2343, %v2338
        %v2649 = vpack.c.b16 %v2344, %v2339
        %v2650 = vpack.c.b16 %v2345, %v2340
        %v2651 = vpack.c.b16 %v2346, %v2341
        %v2652 = vpack.c.b16 %v2352, %v2347
        %v2653 = vpack.c.b16 %v2353, %v2348
        %v2654 = vpack.c.b16 %v2354, %v2349
        %v2655 = vpack.c.b16 %v2355, %v2350
        %v2656 = vpack.c.b16 %v2356, %v2351
        %v2657 = vpack.c.b16 %v2362, %v2357
        %v2658 = vpack.c.b16 %v2363, %v2358
        %v2659 = vpack.c.b16 %v2364, %v2359
        %v2660 = vpack.c.b16 %v2365, %v2360
        %v2661 = vpack.c.b16 %v2366, %v2361
        %v2662 = vpack.c.b16 %v2372, %v2367
        %v2663 = vpack.c.b16 %v2373, %v2368
        %v2664 = vpack.c.b16 %v2374, %v2369
        %v2665 = vpack.c.b16 %v2375, %v2370
        %v2666 = vpack.c.b16 %v2376, %v2371
        %v2667 = vpack.c.b16 %v2382, %v2377
        %v2668 = vpack.c.b16 %v2383, %v2378
        %v2669 = vpack.c.b16 %v2384, %v2379
        %v2670 = vpack.c.b16 %v2385, %v2380
        %v2671 = vpack.c.b16 %v2386, %v2381
        %v2672 = vpack.c.b16 %v2392, %v2387
        %v2673 = vpack.c.b16 %v2393, %v2388
        %v2674 = vpack.c.b16 %v2394, %v2389
        %v2675 = vpack.c.b16 %v2395, %v2390
        %v2676 = vpack.c.b16 %v2396, %v2391
        %v2677 = vpack.c.b16 %v2402, %v2397
        %v2678 = vpack.c.b16 %v2403, %v2398
        %v2679 = vpack.c.b16 %v2404, %v2399
        %v2680 = vpack.c.b16 %v2405, %v2400
        %v2681 = vpack.c.b16 %v2406, %v2401
        %v2682 = vpack.c.b16 %v2412, %v2407
        %v2683 = vpack.c.b16 %v2413, %v2408
        %v2684 = vpack.c.b16 %v2414, %v2409
        %v2685 = vpack.c.b16 %v2415, %v2410
        %v2686 = vpack.c.b16 %v2416, %v2411
        %v2687 = vpack.c.b16 %v2422, %v2417
        %v2688 = vpack.c.b16 %v2423, %v2418
        %v2689 = vpack.c.b16 %v2424, %v2419
        %v2690 = vpack.c.b16 %v2425, %v2420
        %v2691 = vpack.c.b16 %v2426, %v2421
        %v2692 = vpack.c.b16 %v2432, %v2427
        %v2693 = vpack.c.b16 %v2433, %v2428
        %v2694 = vpack.c.b16 %v2434, %v2429
        %v2695 = vpack.c.b16 %v2435, %v2430
        %v2696 = vpack.c.b16 %v2436, %v2431
        %v2697 = vpack.c.b16 %v2442, %v2437
        %v2698 = vpack.c.b16 %v2443, %v2438
        %v2699 = vpack.c.b16 %v2444, %v2439
        %v2700 = vpack.c.b16 %v2445, %v2440
        %v2701 = vpack.c.b16 %v2446, %v2441
        %v2702 = vpack.c.b16 %v2452, %v2447
        %v2703 = vpack.c.b16 %v2453, %v2448
        %v2704 = vpack.c.b16 %v2454, %v2449
        %v2705 = vpack.c.b16 %v2455, %v2450
        %v2706 = vpack.c.b16 %v2456, %v2451
        %v2707 = vpack.c.b16 %v2462, %v2457
        %v2708 = vpack.c.b16 %v2463, %v2458
        %v2709 = vpack.c.b16 %v2464, %v2459
        %v2710 = vpack.c.b16 %v2465, %v2460
        %v2711 = vpack.c.b16 %v2466, %v2461
        %v2712 = vpack.c.b16 %v2472, %v2467
        %v2713 = vpack.c.b16 %v2473, %v2468
        %v2714 = vpack.c.b16 %v2474, %v2469
        %v2715 = vpack.c.b16 %v2475, %v2470
        %v2716 = vpack.c.b16 %v2476, %v2471
        %2957 = vmatprep.subr.bf16.mxu0 %v2478
        %2958 = vmatpush1.bf16.msra.mxu0 %v2477
        %2959 = vmatprep.subr.bf16.mxu0 %v2483
        %2960 = vmatpush1.bf16.msra.mxu0 %v2482
        %2961 = vmatprep.subr.bf16.mxu0 %v2488
        %2962 = vmatpush1.bf16.msra.mxu0 %v2487
        %2963 = vmatprep.subr.bf16.mxu0 %v2493
        %2964 = vmatpush1.bf16.msra.mxu0 %v2492
        %2965 = vmatprep.subr.bf16.mxu0 %v2498
        %2966 = vmatpush1.bf16.msra.mxu0 %v2497
        %2967 = vmatprep.subr.bf16.mxu0 %v2503
        %2968 = vmatpush1.bf16.msra.mxu0 %v2502
        %2969 = vmatprep.subr.bf16.mxu0 %v2508
        %2970 = vmatpush1.bf16.msra.mxu0 %v2507
        %2971 = vmatprep.subr.bf16.mxu0 %v2513
        %2972 = vmatpush1.bf16.msra.mxu0 %v2512
        %2973 = vmatprep.subr.bf16.mxu0 %v2518
        %2974 = vmatpush1.bf16.msra.mxu0 %v2517
        %2975 = vmatprep.subr.bf16.mxu0 %v2523
        %2976 = vmatpush1.bf16.msra.mxu0 %v2522
        %2977 = vmatprep.subr.bf16.mxu0 %v2528
        %2978 = vmatpush1.bf16.msra.mxu0 %v2527
        %2979 = vmatprep.subr.bf16.mxu0 %v2533
        %2980 = vmatpush1.bf16.msra.mxu0 %v2532
        %2981 = vmatprep.subr.bf16.mxu0 %v2538
        %2982 = vmatpush1.bf16.msra.mxu0 %v2537
        %2983 = vmatprep.subr.bf16.mxu0 %v2543
        %2984 = vmatpush1.bf16.msra.mxu0 %v2542
        %2985 = vmatprep.subr.bf16.mxu0 %v2548
        %2986 = vmatpush1.bf16.msra.mxu0 %v2547
        %2987 = vmatprep.subr.bf16.mxu0 %v2553
        %2988 = vmatpush1.bf16.msra.mxu0 %v2552
        %2989 = vmatprep.mubr.bf16.mxu0 %v1389
        %2990 = vmatmul.mubr.bf16.gmra.mrb[0].mxu0 %v1388
        %v2991 = vpop.f32.mrb[0].mxu0
        %v2992 = vadd.f32 %v1687, %v2991
        %v2993 = vpop.f32.mrb[0].mxu0
        %v2994 = vadd.f32 %v1691, %v2993
        %v2995 = vpop.f32.mrb[0].mxu0
        %v2996 = vadd.f32 %v1687, %v2995
        %v2997 = vpop.f32.mrb[0].mxu0
        %v2998 = vadd.f32 %v1691, %v2997
        %2999 = vdwg.mxu0
        %3000 = vmatprep.subr.bf16.mxu0 %v2558
        %3001 = vmatpush1.bf16.msra.mxu0 %v2557
        %3002 = vmatprep.subr.bf16.mxu0 %v2563
        %3003 = vmatpush1.bf16.msra.mxu0 %v2562
        %3004 = vmatprep.subr.bf16.mxu0 %v2568
        %3005 = vmatpush1.bf16.msra.mxu0 %v2567
        %3006 = vmatprep.subr.bf16.mxu0 %v2573
        %3007 = vmatpush1.bf16.msra.mxu0 %v2572
        %3008 = vmatprep.subr.bf16.mxu0 %v2578
        %3009 = vmatpush1.bf16.msra.mxu0 %v2577
        %3010 = vmatprep.subr.bf16.mxu0 %v2583
        %3011 = vmatpush1.bf16.msra.mxu0 %v2582
        %3012 = vmatprep.subr.bf16.mxu0 %v2588
        %3013 = vmatpush1.bf16.msra.mxu0 %v2587
        %3014 = vmatprep.subr.bf16.mxu0 %v2593
        %3015 = vmatpush1.bf16.msra.mxu0 %v2592
        %3016 = vmatprep.subr.bf16.mxu0 %v2598
        %3017 = vmatpush1.bf16.msra.mxu0 %v2597
        %3018 = vmatprep.subr.bf16.mxu0 %v2603
        %3019 = vmatpush1.bf16.msra.mxu0 %v2602
        %3020 = vmatprep.subr.bf16.mxu0 %v2608
        %3021 = vmatpush1.bf16.msra.mxu0 %v2607
        %3022 = vmatprep.subr.bf16.mxu0 %v2613
        %3023 = vmatpush1.bf16.msra.mxu0 %v2612
        %3024 = vmatprep.subr.bf16.mxu0 %v2618
        %3025 = vmatpush1.bf16.msra.mxu0 %v2617
        %3026 = vmatprep.subr.bf16.mxu0 %v2623
        %3027 = vmatpush1.bf16.msra.mxu0 %v2622
        %3028 = vmatprep.subr.bf16.mxu0 %v2628
        %3029 = vmatpush1.bf16.msra.mxu0 %v2627
        %3030 = vmatprep.subr.bf16.mxu0 %v2633
        %3031 = vmatpush1.bf16.msra.mxu0 %v2632
        %3032 = vmatprep.mubr.bf16.mxu0 %v1391
        %3033 = vmatmul.mubr.bf16.gmra.mrb[0].mxu0 %v1390
        %v3034 = vpop.f32.mrb[0].mxu0
        %v3035 = vadd.f32 %v2992, %v3034
        %v3036 = vpop.f32.mrb[0].mxu0
        %v3037 = vadd.f32 %v2994, %v3036
        %v3038 = vpop.f32.mrb[0].mxu0
        %v3039 = vadd.f32 %v2996, %v3038
        %v3040 = vpop.f32.mrb[0].mxu0
        %v3041 = vadd.f32 %v2998, %v3040
        %3042 = vdwg.mxu0
        %3043 = vmatprep.subr.bf16.mxu0 %v2638
        %3044 = vmatpush1.bf16.msra.mxu0 %v2637
        %3045 = vmatprep.subr.bf16.mxu0 %v2643
        %3046 = vmatpush1.bf16.msra.mxu0 %v2642
        %3047 = vmatprep.subr.bf16.mxu0 %v2648
        %3048 = vmatpush1.bf16.msra.mxu0 %v2647
        %3049 = vmatprep.subr.bf16.mxu0 %v2653
        %3050 = vmatpush1.bf16.msra.mxu0 %v2652
        %3051 = vmatprep.subr.bf16.mxu0 %v2658
        %3052 = vmatpush1.bf16.msra.mxu0 %v2657
        %3053 = vmatprep.subr.bf16.mxu0 %v2663
        %3054 = vmatpush1.bf16.msra.mxu0 %v2662
        %3055 = vmatprep.subr.bf16.mxu0 %v2668
        %3056 = vmatpush1.bf16.msra.mxu0 %v2667
        %3057 = vmatprep.subr.bf16.mxu0 %v2673
        %3058 = vmatpush1.bf16.msra.mxu0 %v2672
        %3059 = vmatprep.subr.bf16.mxu0 %v2678
        %3060 = vmatpush1.bf16.msra.mxu0 %v2677
        %3061 = vmatprep.subr.bf16.mxu0 %v2683
        %3062 = vmatpush1.bf16.msra.mxu0 %v2682
        %3063 = vmatprep.subr.bf16.mxu0 %v2688
        %3064 = vmatpush1.bf16.msra.mxu0 %v2687
        %3065 = vmatprep.subr.bf16.mxu0 %v2693
        %3066 = vmatpush1.bf16.msra.mxu0 %v2692
        %3067 = vmatprep.subr.bf16.mxu0 %v2698
        %3068 = vmatpush1.bf16.msra.mxu0 %v2697
        %3069 = vmatprep.subr.bf16.mxu0 %v2703
        %3070 = vmatpush1.bf16.msra.mxu0 %v2702
        %3071 = vmatprep.subr.bf16.mxu0 %v2708
        %3072 = vmatpush1.bf16.msra.mxu0 %v2707
        %3073 = vmatprep.subr.bf16.mxu0 %v2713
        %3074 = vmatpush1.bf16.msra.mxu0 %v2712
        %3075 = vmatprep.mubr.bf16.mxu0 %v1393
        %3076 = vmatmul.mubr.bf16.gmra.mrb[0].mxu0 %v1392
        %v3077 = vpop.f32.mrb[0].mxu0
        %v3078 = vadd.f32 %v3035, %v3077
        %v3079 = vpop.f32.mrb[0].mxu0
        %v3080 = vadd.f32 %v3037, %v3079
        %v3081 = vpop.f32.mrb[0].mxu0
        %v3082 = vadd.f32 %v3039, %v3081
        %v3083 = vpop.f32.mrb[0].mxu0
        %v3084 = vadd.f32 %v3041, %v3083
        %3085 = vdwg.mxu0
        %3086 = vmatprep.subr.bf16.mxu0 %v2480
        %3087 = vmatpush1.bf16.msra.mxu0 %v2479
        %3088 = vmatprep.subr.bf16.mxu0 %v2485
        %3089 = vmatpush1.bf16.msra.mxu0 %v2484
        %3090 = vmatprep.subr.bf16.mxu0 %v2490
        %3091 = vmatpush1.bf16.msra.mxu0 %v2489
        %3092 = vmatprep.subr.bf16.mxu0 %v2495
        %3093 = vmatpush1.bf16.msra.mxu0 %v2494
        %3094 = vmatprep.subr.bf16.mxu0 %v2500
        %3095 = vmatpush1.bf16.msra.mxu0 %v2499
        %3096 = vmatprep.subr.bf16.mxu0 %v2505
        %3097 = vmatpush1.bf16.msra.mxu0 %v2504
        %3098 = vmatprep.subr.bf16.mxu0 %v2510
        %3099 = vmatpush1.bf16.msra.mxu0 %v2509
        %3100 = vmatprep.subr.bf16.mxu0 %v2515
        %3101 = vmatpush1.bf16.msra.mxu0 %v2514
        %3102 = vmatprep.subr.bf16.mxu0 %v2520
        %3103 = vmatpush1.bf16.msra.mxu0 %v2519
        %3104 = vmatprep.subr.bf16.mxu0 %v2525
        %3105 = vmatpush1.bf16.msra.mxu0 %v2524
        %3106 = vmatprep.subr.bf16.mxu0 %v2530
        %3107 = vmatpush1.bf16.msra.mxu0 %v2529
        %3108 = vmatprep.subr.bf16.mxu0 %v2535
        %3109 = vmatpush1.bf16.msra.mxu0 %v2534
        %3110 = vmatprep.subr.bf16.mxu0 %v2540
        %3111 = vmatpush1.bf16.msra.mxu0 %v2539
        %3112 = vmatprep.subr.bf16.mxu0 %v2545
        %3113 = vmatpush1.bf16.msra.mxu0 %v2544
        %3114 = vmatprep.subr.bf16.mxu0 %v2550
        %3115 = vmatpush1.bf16.msra.mxu0 %v2549
        %3116 = vmatprep.subr.bf16.mxu0 %v2555
        %3117 = vmatpush1.bf16.msra.mxu0 %v2554
        %3118 = vmatprep.mubr.bf16.mxu0 %v1389
        %3119 = vmatmul.mubr.bf16.gmra.mrb[0].mxu0 %v1388
        %v3120 = vpop.f32.mrb[0].mxu0
        %v3121 = vadd.f32 %v1695, %v3120
        %v3122 = vpop.f32.mrb[0].mxu0
        %v3123 = vadd.f32 %v1699, %v3122
        %v3124 = vpop.f32.mrb[0].mxu0
        %v3125 = vadd.f32 %v1695, %v3124
        %v3126 = vpop.f32.mrb[0].mxu0
        %v3127 = vadd.f32 %v1699, %v3126
        %3128 = vdwg.mxu0
        %3129 = vmatprep.subr.bf16.mxu0 %v2560
        %3130 = vmatpush1.bf16.msra.mxu0 %v2559
        %3131 = vmatprep.subr.bf16.mxu0 %v2565
        %3132 = vmatpush1.bf16.msra.mxu0 %v2564
        %3133 = vmatprep.subr.bf16.mxu0 %v2570
        %3134 = vmatpush1.bf16.msra.mxu0 %v2569
        %3135 = vmatprep.subr.bf16.mxu0 %v2575
        %3136 = vmatpush1.bf16.msra.mxu0 %v2574
        %3137 = vmatprep.subr.bf16.mxu0 %v2580
        %3138 = vmatpush1.bf16.msra.mxu0 %v2579
        %3139 = vmatprep.subr.bf16.mxu0 %v2585
        %3140 = vmatpush1.bf16.msra.mxu0 %v2584
        %3141 = vmatprep.subr.bf16.mxu0 %v2590
        %3142 = vmatpush1.bf16.msra.mxu0 %v2589
        %3143 = vmatprep.subr.bf16.mxu0 %v2595
        %3144 = vmatpush1.bf16.msra.mxu0 %v2594
        %3145 = vmatprep.subr.bf16.mxu0 %v2600
        %3146 = vmatpush1.bf16.msra.mxu0 %v2599
        %3147 = vmatprep.subr.bf16.mxu0 %v2605
        %3148 = vmatpush1.bf16.msra.mxu0 %v2604
        %3149 = vmatprep.subr.bf16.mxu0 %v2610
        %3150 = vmatpush1.bf16.msra.mxu0 %v2609
        %3151 = vmatprep.subr.bf16.mxu0 %v2615
        %3152 = vmatpush1.bf16.msra.mxu0 %v2614
        %3153 = vmatprep.subr.bf16.mxu0 %v2620
        %3154 = vmatpush1.bf16.msra.mxu0 %v2619
        %3155 = vmatprep.subr.bf16.mxu0 %v2625
        %3156 = vmatpush1.bf16.msra.mxu0 %v2624
        %3157 = vmatprep.subr.bf16.mxu0 %v2630
        %3158 = vmatpush1.bf16.msra.mxu0 %v2629
        %3159 = vmatprep.subr.bf16.mxu0 %v2635
        %3160 = vmatpush1.bf16.msra.mxu0 %v2634
        %3161 = vmatprep.mubr.bf16.mxu0 %v1391
        %3162 = vmatmul.mubr.bf16.gmra.mrb[0].mxu0 %v1390
        %v3163 = vpop.f32.mrb[0].mxu0
        %v3164 = vadd.f32 %v3121, %v3163
        %v3165 = vpop.f32.mrb[0].mxu0
        %v3166 = vadd.f32 %v3123, %v3165
        %v3167 = vpop.f32.mrb[0].mxu0
        %v3168 = vadd.f32 %v3125, %v3167
        %v3169 = vpop.f32.mrb[0].mxu0
        %v3170 = vadd.f32 %v3127, %v3169
        %3171 = vdwg.mxu0
        %3172 = vmatprep.subr.bf16.mxu0 %v2640
        %3173 = vmatpush1.bf16.msra.mxu0 %v2639
        %3174 = vmatprep.subr.bf16.mxu0 %v2645
        %3175 = vmatpush1.bf16.msra.mxu0 %v2644
        %3176 = vmatprep.subr.bf16.mxu0 %v2650
        %3177 = vmatpush1.bf16.msra.mxu0 %v2649
        %3178 = vmatprep.subr.bf16.mxu0 %v2655
        %3179 = vmatpush1.bf16.msra.mxu0 %v2654
        %3180 = vmatprep.subr.bf16.mxu0 %v2660
        %3181 = vmatpush1.bf16.msra.mxu0 %v2659
        %3182 = vmatprep.subr.bf16.mxu0 %v2665
        %3183 = vmatpush1.bf16.msra.mxu0 %v2664
        %3184 = vmatprep.subr.bf16.mxu0 %v2670
        %3185 = vmatpush1.bf16.msra.mxu0 %v2669
        %3186 = vmatprep.subr.bf16.mxu0 %v2675
        %3187 = vmatpush1.bf16.msra.mxu0 %v2674
        %3188 = vmatprep.subr.bf16.mxu0 %v2680
        %3189 = vmatpush1.bf16.msra.mxu0 %v2679
        %3190 = vmatprep.subr.bf16.mxu0 %v2685
        %3191 = vmatpush1.bf16.msra.mxu0 %v2684
        %3192 = vmatprep.subr.bf16.mxu0 %v2690
        %3193 = vmatpush1.bf16.msra.mxu0 %v2689
        %3194 = vmatprep.subr.bf16.mxu0 %v2695
        %3195 = vmatpush1.bf16.msra.mxu0 %v2694
        %3196 = vmatprep.subr.bf16.mxu0 %v2700
        %3197 = vmatpush1.bf16.msra.mxu0 %v2699
        %3198 = vmatprep.subr.bf16.mxu0 %v2705
        %3199 = vmatpush1.bf16.msra.mxu0 %v2704
        %3200 = vmatprep.subr.bf16.mxu0 %v2710
        %3201 = vmatpush1.bf16.msra.mxu0 %v2709
        %3202 = vmatprep.subr.bf16.mxu0 %v2715
        %3203 = vmatpush1.bf16.msra.mxu0 %v2714
        %3204 = vmatprep.mubr.bf16.mxu0 %v1393
        %3205 = vmatmul.mubr.bf16.gmra.mrb[0].mxu0 %v1392
        %v3206 = vpop.f32.mrb[0].mxu0
        %v3207 = vadd.f32 %v3164, %v3206
        %v3208 = vpop.f32.mrb[0].mxu0
        %v3209 = vadd.f32 %v3166, %v3208
        %v3210 = vpop.f32.mrb[0].mxu0
        %v3211 = vadd.f32 %v3168, %v3210
        %v3212 = vpop.f32.mrb[0].mxu0
        %v3213 = vadd.f32 %v3170, %v3212
        %3214 = vdwg.mxu0
        %3215 = vmatprep.subr.bf16.mxu0 0
        %3216 = vmatpush1.bf16.msra.mxu0 %v2481
        %3217 = vmatprep.subr.bf16.mxu0 0
        %3218 = vmatpush1.bf16.msra.mxu0 %v2486
        %3219 = vmatprep.subr.bf16.mxu0 0
        %3220 = vmatpush1.bf16.msra.mxu0 %v2491
        %3221 = vmatprep.subr.bf16.mxu0 0
        %3222 = vmatpush1.bf16.msra.mxu0 %v2496
        %3223 = vmatprep.subr.bf16.mxu0 0
        %3224 = vmatpush1.bf16.msra.mxu0 %v2501
        %3225 = vmatprep.subr.bf16.mxu0 0
        %3226 = vmatpush1.bf16.msra.mxu0 %v2506
        %3227 = vmatprep.subr.bf16.mxu0 0
        %3228 = vmatpush1.bf16.msra.mxu0 %v2511
        %3229 = vmatprep.subr.bf16.mxu0 0
        %3230 = vmatpush1.bf16.msra.mxu0 %v2516
        %3231 = vmatprep.subr.bf16.mxu0 0
        %3232 = vmatpush1.bf16.msra.mxu0 %v2521
        %3233 = vmatprep.subr.bf16.mxu0 0
        %3234 = vmatpush1.bf16.msra.mxu0 %v2526
        %3235 = vmatprep.subr.bf16.mxu0 0
        %3236 = vmatpush1.bf16.msra.mxu0 %v2531
        %3237 = vmatprep.subr.bf16.mxu0 0
        %3238 = vmatpush1.bf16.msra.mxu0 %v2536
        %3239 = vmatprep.subr.bf16.mxu0 0
        %3240 = vmatpush1.bf16.msra.mxu0 %v2541
        %3241 = vmatprep.subr.bf16.mxu0 0
        %3242 = vmatpush1.bf16.msra.mxu0 %v2546
        %3243 = vmatprep.subr.bf16.mxu0 0
        %3244 = vmatpush1.bf16.msra.mxu0 %v2551
        %3245 = vmatprep.subr.bf16.mxu0 0
        %3246 = vmatpush1.bf16.msra.mxu0 %v2556
        %3247 = vmatprep.mubr.bf16.mxu0 %v1389
        %3248 = vmatmul.mubr.bf16.gmra.mrb[0].mxu0 %v1388
        %v3249 = vpop.f32.mrb[0].mxu0
        %v3250 = vadd.f32 %v1703, %v3249
        %v3251 = vpop.f32.mrb[0].mxu0
        %v3252 = vpop.f32.mrb[0].mxu0
        %v3253 = vadd.f32 %v1703, %v3252
        %v3254 = vpop.f32.mrb[0].mxu0
        %3255 = vdwg.mxu0
        %3256 = vmatprep.subr.bf16.mxu0 0
        %3257 = vmatpush1.bf16.msra.mxu0 %v2561
        %3258 = vmatprep.subr.bf16.mxu0 0
        %3259 = vmatpush1.bf16.msra.mxu0 %v2566
        %3260 = vmatprep.subr.bf16.mxu0 0
        %3261 = vmatpush1.bf16.msra.mxu0 %v2571
        %3262 = vmatprep.subr.bf16.mxu0 0
        %3263 = vmatpush1.bf16.msra.mxu0 %v2576
        %3264 = vmatprep.subr.bf16.mxu0 0
        %3265 = vmatpush1.bf16.msra.mxu0 %v2581
        %3266 = vmatprep.subr.bf16.mxu0 0
        %3267 = vmatpush1.bf16.msra.mxu0 %v2586
        %3268 = vmatprep.subr.bf16.mxu0 0
        %3269 = vmatpush1.bf16.msra.mxu0 %v2591
        %3270 = vmatprep.subr.bf16.mxu0 0
        %3271 = vmatpush1.bf16.msra.mxu0 %v2596
        %3272 = vmatprep.subr.bf16.mxu0 0
        %3273 = vmatpush1.bf16.msra.mxu0 %v2601
        %3274 = vmatprep.subr.bf16.mxu0 0
        %3275 = vmatpush1.bf16.msra.mxu0 %v2606
        %3276 = vmatprep.subr.bf16.mxu0 0
        %3277 = vmatpush1.bf16.msra.mxu0 %v2611
        %3278 = vmatprep.subr.bf16.mxu0 0
        %3279 = vmatpush1.bf16.msra.mxu0 %v2616
        %3280 = vmatprep.subr.bf16.mxu0 0
        %3281 = vmatpush1.bf16.msra.mxu0 %v2621
        %3282 = vmatprep.subr.bf16.mxu0 0
        %3283 = vmatpush1.bf16.msra.mxu0 %v2626
        %3284 = vmatprep.subr.bf16.mxu0 0
        %3285 = vmatpush1.bf16.msra.mxu0 %v2631
        %3286 = vmatprep.subr.bf16.mxu0 0
        %3287 = vmatpush1.bf16.msra.mxu0 %v2636
        %3288 = vmatprep.mubr.bf16.mxu0 %v1391
        %3289 = vmatmul.mubr.bf16.gmra.mrb[0].mxu0 %v1390
        %v3290 = vpop.f32.mrb[0].mxu0
        %v3291 = vadd.f32 %v3250, %v3290
        %v3292 = vpop.f32.mrb[0].mxu0
        %v3293 = vpop.f32.mrb[0].mxu0
        %v3294 = vadd.f32 %v3253, %v3293
        %v3295 = vpop.f32.mrb[0].mxu0
        %3296 = vdwg.mxu0
        %3297 = vmatprep.subr.bf16.mxu0 0
        %3298 = vmatpush1.bf16.msra.mxu0 %v2641
        %3299 = vmatprep.subr.bf16.mxu0 0
        %3300 = vmatpush1.bf16.msra.mxu0 %v2646
        %3301 = vmatprep.subr.bf16.mxu0 0
        %3302 = vmatpush1.bf16.msra.mxu0 %v2651
        %3303 = vmatprep.subr.bf16.mxu0 0
        %3304 = vmatpush1.bf16.msra.mxu0 %v2656
        %3305 = vmatprep.subr.bf16.mxu0 0
        %3306 = vmatpush1.bf16.msra.mxu0 %v2661
        %3307 = vmatprep.subr.bf16.mxu0 0
        %3308 = vmatpush1.bf16.msra.mxu0 %v2666
        %3309 = vmatprep.subr.bf16.mxu0 0
        %3310 = vmatpush1.bf16.msra.mxu0 %v2671
        %3311 = vmatprep.subr.bf16.mxu0 0
        %3312 = vmatpush1.bf16.msra.mxu0 %v2676
        %3313 = vmatprep.subr.bf16.mxu0 0
        %3314 = vmatpush1.bf16.msra.mxu0 %v2681
        %3315 = vmatprep.subr.bf16.mxu0 0
        %3316 = vmatpush1.bf16.msra.mxu0 %v2686
        %3317 = vmatprep.subr.bf16.mxu0 0
        %3318 = vmatpush1.bf16.msra.mxu0 %v2691
        %3319 = vmatprep.subr.bf16.mxu0 0
        %3320 = vmatpush1.bf16.msra.mxu0 %v2696
        %3321 = vmatprep.subr.bf16.mxu0 0
        %3322 = vmatpush1.bf16.msra.mxu0 %v2701
        %3323 = vmatprep.subr.bf16.mxu0 0
        %3324 = vmatpush1.bf16.msra.mxu0 %v2706
        %3325 = vmatprep.subr.bf16.mxu0 0
        %3326 = vmatpush1.bf16.msra.mxu0 %v2711
        %3327 = vmatprep.subr.bf16.mxu0 0
        %3328 = vmatpush1.bf16.msra.mxu0 %v2716
        %3329 = vmatprep.mubr.bf16.mxu0 %v1393
        %3330 = vmatmul.mubr.bf16.gmra.mrb[0].mxu0 %v1392
        %v3331 = vpop.f32.mrb[0].mxu0
        %v3332 = vadd.f32 %v3291, %v3331
        %v3333 = vpop.f32.mrb[0].mxu0
        %v3334 = vpop.f32.mrb[0].mxu0
        %v3335 = vadd.f32 %v3294, %v3334
        %v3336 = vpop.f32.mrb[0].mxu0
        %3337 = vdwg.mxu0
        %v3338 = vmax.f32 %v3078, 0.0
        %v3339 = vmax.f32 %v3080, 0.0
        %v3340 = vmax.f32 %v3207, 0.0
        %v3341 = vmax.f32 %v3209, 0.0
        %v3342 = vmax.f32 %v3332, 0.0
        %v3343 = vmax.f32 %v3082, 0.0
        %v3344 = vmax.f32 %v3084, 0.0
        %v3345 = vmax.f32 %v3211, 0.0
        %v3346 = vmax.f32 %v3213, 0.0
        %v3347 = vmax.f32 %v3335, 0.0
        %v3348 = vpack.c.bf16 %v1382, %v1376
        %v3349 = vpack.c.bf16 %v1383, %v1377
        %v3350 = vpack.c.bf16 %v1384, %v1378
        %v3351 = vpack.c.bf16 %v1385, %v1379
        %v3352 = vpack.c.bf16 %v1386, %v1380
        %v3353 = vpack.c.bf16 %v1387, %v1381
        %3354 = vmatprep.subr.bf16.mxu0 %v2478
        %3355 = vmatpush1.bf16.msra.mxu0 %v2477
        %3356 = vmatprep.subr.bf16.mxu0 %v2483
        %3357 = vmatpush1.bf16.msra.mxu0 %v2482
        %3358 = vmatprep.subr.bf16.mxu0 %v2488
        %3359 = vmatpush1.bf16.msra.mxu0 %v2487
        %3360 = vmatprep.subr.bf16.mxu0 %v2493
        %3361 = vmatpush1.bf16.msra.mxu0 %v2492
        %3362 = vmatprep.subr.bf16.mxu0 %v2498
        %3363 = vmatpush1.bf16.msra.mxu0 %v2497
        %3364 = vmatprep.subr.bf16.mxu0 %v2503
        %3365 = vmatpush1.bf16.msra.mxu0 %v2502
        %3366 = vmatprep.subr.bf16.mxu0 %v2508
        %3367 = vmatpush1.bf16.msra.mxu0 %v2507
        %3368 = vmatprep.subr.bf16.mxu0 %v2513
        %3369 = vmatpush1.bf16.msra.mxu0 %v2512
        %3370 = vmatprep.subr.bf16.mxu0 %v2518
        %3371 = vmatpush1.bf16.msra.mxu0 %v2517
        %3372 = vmatprep.subr.bf16.mxu0 %v2523
        %3373 = vmatpush1.bf16.msra.mxu0 %v2522
        %3374 = vmatprep.subr.bf16.mxu0 %v2528
        %3375 = vmatpush1.bf16.msra.mxu0 %v2527
        %3376 = vmatprep.subr.bf16.mxu0 %v2533
        %3377 = vmatpush1.bf16.msra.mxu0 %v2532
        %3378 = vmatprep.subr.bf16.mxu0 %v2538
        %3379 = vmatpush1.bf16.msra.mxu0 %v2537
        %3380 = vmatprep.subr.bf16.mxu0 %v2543
        %3381 = vmatpush1.bf16.msra.mxu0 %v2542
        %3382 = vmatprep.subr.bf16.mxu0 %v2548
        %3383 = vmatpush1.bf16.msra.mxu0 %v2547
        %3384 = vmatprep.subr.bf16.mxu0 %v2553
        %3385 = vmatpush1.bf16.msra.mxu0 %v2552
        %3386 = vmatprep.mubr.bf16.mxu0 %v3349
        %3387 = vmatmul.mubr.bf16.gmra.mrb[0].mxu0 %v3348
        %v3388 = vpop.f32.mrb[0].mxu0
        %v3389 = vadd.f32 %v1687, %v3388
        %v3390 = vpop.f32.mrb[0].mxu0
        %v3391 = vadd.f32 %v1691, %v3390
        %v3392 = vpop.f32.mrb[0].mxu0
        %v3393 = vadd.f32 %v1687, %v3392
        %v3394 = vpop.f32.mrb[0].mxu0
        %v3395 = vadd.f32 %v1691, %v3394
        %3396 = vdwg.mxu0
        %3397 = vmatprep.subr.bf16.mxu0 %v2558
        %3398 = vmatpush1.bf16.msra.mxu0 %v2557
        %3399 = vmatprep.subr.bf16.mxu0 %v2563
        %3400 = vmatpush1.bf16.msra.mxu0 %v2562
        %3401 = vmatprep.subr.bf16.mxu0 %v2568
        %3402 = vmatpush1.bf16.msra.mxu0 %v2567
        %3403 = vmatprep.subr.bf16.mxu0 %v2573
        %3404 = vmatpush1.bf16.msra.mxu0 %v2572
        %3405 = vmatprep.subr.bf16.mxu0 %v2578
        %3406 = vmatpush1.bf16.msra.mxu0 %v2577
        %3407 = vmatprep.subr.bf16.mxu0 %v2583
        %3408 = vmatpush1.bf16.msra.mxu0 %v2582
        %3409 = vmatprep.subr.bf16.mxu0 %v2588
        %3410 = vmatpush1.bf16.msra.mxu0 %v2587
        %3411 = vmatprep.subr.bf16.mxu0 %v2593
        %3412 = vmatpush1.bf16.msra.mxu0 %v2592
        %3413 = vmatprep.subr.bf16.mxu0 %v2598
        %3414 = vmatpush1.bf16.msra.mxu0 %v2597
        %3415 = vmatprep.subr.bf16.mxu0 %v2603
        %3416 = vmatpush1.bf16.msra.mxu0 %v2602
        %3417 = vmatprep.subr.bf16.mxu0 %v2608
        %3418 = vmatpush1.bf16.msra.mxu0 %v2607
        %3419 = vmatprep.subr.bf16.mxu0 %v2613
        %3420 = vmatpush1.bf16.msra.mxu0 %v2612
        %3421 = vmatprep.subr.bf16.mxu0 %v2618
        %3422 = vmatpush1.bf16.msra.mxu0 %v2617
        %3423 = vmatprep.subr.bf16.mxu0 %v2623
        %3424 = vmatpush1.bf16.msra.mxu0 %v2622
        %3425 = vmatprep.subr.bf16.mxu0 %v2628
        %3426 = vmatpush1.bf16.msra.mxu0 %v2627
        %3427 = vmatprep.subr.bf16.mxu0 %v2633
        %3428 = vmatpush1.bf16.msra.mxu0 %v2632
        %3429 = vmatprep.mubr.bf16.mxu0 %v3351
        %3430 = vmatmul.mubr.bf16.gmra.mrb[0].mxu0 %v3350
        %v3431 = vpop.f32.mrb[0].mxu0
        %v3432 = vadd.f32 %v3389, %v3431
        %v3433 = vpop.f32.mrb[0].mxu0
        %v3434 = vadd.f32 %v3391, %v3433
        %v3435 = vpop.f32.mrb[0].mxu0
        %v3436 = vadd.f32 %v3393, %v3435
        %v3437 = vpop.f32.mrb[0].mxu0
        %v3438 = vadd.f32 %v3395, %v3437
        %3439 = vdwg.mxu0
        %3440 = vmatprep.subr.bf16.mxu0 %v2638
        %3441 = vmatpush1.bf16.msra.mxu0 %v2637
        %3442 = vmatprep.subr.bf16.mxu0 %v2643
        %3443 = vmatpush1.bf16.msra.mxu0 %v2642
        %3444 = vmatprep.subr.bf16.mxu0 %v2648
        %3445 = vmatpush1.bf16.msra.mxu0 %v2647
        %3446 = vmatprep.subr.bf16.mxu0 %v2653
        %3447 = vmatpush1.bf16.msra.mxu0 %v2652
        %3448 = vmatprep.subr.bf16.mxu0 %v2658
        %3449 = vmatpush1.bf16.msra.mxu0 %v2657
        %3450 = vmatprep.subr.bf16.mxu0 %v2663
        %3451 = vmatpush1.bf16.msra.mxu0 %v2662
        %3452 = vmatprep.subr.bf16.mxu0 %v2668
        %3453 = vmatpush1.bf16.msra.mxu0 %v2667
        %3454 = vmatprep.subr.bf16.mxu0 %v2673
        %3455 = vmatpush1.bf16.msra.mxu0 %v2672
        %3456 = vmatprep.subr.bf16.mxu0 %v2678
        %3457 = vmatpush1.bf16.msra.mxu0 %v2677
        %3458 = vmatprep.subr.bf16.mxu0 %v2683
        %3459 = vmatpush1.bf16.msra.mxu0 %v2682
        %3460 = vmatprep.subr.bf16.mxu0 %v2688
        %3461 = vmatpush1.bf16.msra.mxu0 %v2687
        %3462 = vmatprep.subr.bf16.mxu0 %v2693
        %3463 = vmatpush1.bf16.msra.mxu0 %v2692
        %3464 = vmatprep.subr.bf16.mxu0 %v2698
        %3465 = vmatpush1.bf16.msra.mxu0 %v2697
        %3466 = vmatprep.subr.bf16.mxu0 %v2703
        %3467 = vmatpush1.bf16.msra.mxu0 %v2702
        %3468 = vmatprep.subr.bf16.mxu0 %v2708
        %3469 = vmatpush1.bf16.msra.mxu0 %v2707
        %3470 = vmatprep.subr.bf16.mxu0 %v2713
        %3471 = vmatpush1.bf16.msra.mxu0 %v2712
        %3472 = vmatprep.mubr.bf16.mxu0 %v3353
        %3473 = vmatmul.mubr.bf16.gmra.mrb[0].mxu0 %v3352
        %v3474 = vpop.f32.mrb[0].mxu0
        %v3475 = vadd.f32 %v3432, %v3474
        %v3476 = vpop.f32.mrb[0].mxu0
        %v3477 = vadd.f32 %v3434, %v3476
        %v3478 = vpop.f32.mrb[0].mxu0
        %v3479 = vadd.f32 %v3436, %v3478
        %v3480 = vpop.f32.mrb[0].mxu0
        %v3481 = vadd.f32 %v3438, %v3480
        %3482 = vdwg.mxu0
        %3483 = vmatprep.subr.bf16.mxu0 %v2480
        %3484 = vmatpush1.bf16.msra.mxu0 %v2479
        %3485 = vmatprep.subr.bf16.mxu0 %v2485
        %3486 = vmatpush1.bf16.msra.mxu0 %v2484
        %3487 = vmatprep.subr.bf16.mxu0 %v2490
        %3488 = vmatpush1.bf16.msra.mxu0 %v2489
        %3489 = vmatprep.subr.bf16.mxu0 %v2495
        %3490 = vmatpush1.bf16.msra.mxu0 %v2494
        %3491 = vmatprep.subr.bf16.mxu0 %v2500
        %3492 = vmatpush1.bf16.msra.mxu0 %v2499
        %3493 = vmatprep.subr.bf16.mxu0 %v2505
        %3494 = vmatpush1.bf16.msra.mxu0 %v2504
        %3495 = vmatprep.subr.bf16.mxu0 %v2510
        %3496 = vmatpush1.bf16.msra.mxu0 %v2509
        %3497 = vmatprep.subr.bf16.mxu0 %v2515
        %3498 = vmatpush1.bf16.msra.mxu0 %v2514
        %3499 = vmatprep.subr.bf16.mxu0 %v2520
        %3500 = vmatpush1.bf16.msra.mxu0 %v2519
        %3501 = vmatprep.subr.bf16.mxu0 %v2525
        %3502 = vmatpush1.bf16.msra.mxu0 %v2524
        %3503 = vmatprep.subr.bf16.mxu0 %v2530
        %3504 = vmatpush1.bf16.msra.mxu0 %v2529
        %3505 = vmatprep.subr.bf16.mxu0 %v2535
        %3506 = vmatpush1.bf16.msra.mxu0 %v2534
        %3507 = vmatprep.subr.bf16.mxu0 %v2540
        %3508 = vmatpush1.bf16.msra.mxu0 %v2539
        %3509 = vmatprep.subr.bf16.mxu0 %v2545
        %3510 = vmatpush1.bf16.msra.mxu0 %v2544
        %3511 = vmatprep.subr.bf16.mxu0 %v2550
        %3512 = vmatpush1.bf16.msra.mxu0 %v2549
        %3513 = vmatprep.subr.bf16.mxu0 %v2555
        %3514 = vmatpush1.bf16.msra.mxu0 %v2554
        %3515 = vmatprep.mubr.bf16.mxu0 %v3349
        %3516 = vmatmul.mubr.bf16.gmra.mrb[0].mxu0 %v3348
        %v3517 = vpop.f32.mrb[0].mxu0
        %v3518 = vadd.f32 %v1695, %v3517
        %v3519 = vpop.f32.mrb[0].mxu0
        %v3520 = vadd.f32 %v1699, %v3519
        %v3521 = vpop.f32.mrb[0].mxu0
        %v3522 = vadd.f32 %v1695, %v3521
        %v3523 = vpop.f32.mrb[0].mxu0
        %v3524 = vadd.f32 %v1699, %v3523
        %3525 = vdwg.mxu0
        %3526 = vmatprep.subr.bf16.mxu0 %v2560
        %3527 = vmatpush1.bf16.msra.mxu0 %v2559
        %3528 = vmatprep.subr.bf16.mxu0 %v2565
        %3529 = vmatpush1.bf16.msra.mxu0 %v2564
        %3530 = vmatprep.subr.bf16.mxu0 %v2570
        %3531 = vmatpush1.bf16.msra.mxu0 %v2569
        %3532 = vmatprep.subr.bf16.mxu0 %v2575
        %3533 = vmatpush1.bf16.msra.mxu0 %v2574
        %3534 = vmatprep.subr.bf16.mxu0 %v2580
        %3535 = vmatpush1.bf16.msra.mxu0 %v2579
        %3536 = vmatprep.subr.bf16.mxu0 %v2585
        %3537 = vmatpush1.bf16.msra.mxu0 %v2584
        %3538 = vmatprep.subr.bf16.mxu0 %v2590
        %3539 = vmatpush1.bf16.msra.mxu0 %v2589
        %3540 = vmatprep.subr.bf16.mxu0 %v2595
        %3541 = vmatpush1.bf16.msra.mxu0 %v2594
        %3542 = vmatprep.subr.bf16.mxu0 %v2600
        %3543 = vmatpush1.bf16.msra.mxu0 %v2599
        %3544 = vmatprep.subr.bf16.mxu0 %v2605
        %3545 = vmatpush1.bf16.msra.mxu0 %v2604
        %3546 = vmatprep.subr.bf16.mxu0 %v2610
        %3547 = vmatpush1.bf16.msra.mxu0 %v2609
        %3548 = vmatprep.subr.bf16.mxu0 %v2615
        %3549 = vmatpush1.bf16.msra.mxu0 %v2614
        %3550 = vmatprep.subr.bf16.mxu0 %v2620
        %3551 = vmatpush1.bf16.msra.mxu0 %v2619
        %3552 = vmatprep.subr.bf16.mxu0 %v2625
        %3553 = vmatpush1.bf16.msra.mxu0 %v2624
        %3554 = vmatprep.subr.bf16.mxu0 %v2630
        %3555 = vmatpush1.bf16.msra.mxu0 %v2629
        %3556 = vmatprep.subr.bf16.mxu0 %v2635
        %3557 = vmatpush1.bf16.msra.mxu0 %v2634
        %3558 = vmatprep.mubr.bf16.mxu0 %v3351
        %3559 = vmatmul.mubr.bf16.gmra.mrb[0].mxu0 %v3350
        %v3560 = vpop.f32.mrb[0].mxu0
        %v3561 = vadd.f32 %v3518, %v3560
        %v3562 = vpop.f32.mrb[0].mxu0
        %v3563 = vadd.f32 %v3520, %v3562
        %v3564 = vpop.f32.mrb[0].mxu0
        %v3565 = vadd.f32 %v3522, %v3564
        %v3566 = vpop.f32.mrb[0].mxu0
        %v3567 = vadd.f32 %v3524, %v3566
        %3568 = vdwg.mxu0
        %3569 = vmatprep.subr.bf16.mxu0 %v2640
        %3570 = vmatpush1.bf16.msra.mxu0 %v2639
        %3571 = vmatprep.subr.bf16.mxu0 %v2645
        %3572 = vmatpush1.bf16.msra.mxu0 %v2644
        %3573 = vmatprep.subr.bf16.mxu0 %v2650
        %3574 = vmatpush1.bf16.msra.mxu0 %v2649
        %3575 = vmatprep.subr.bf16.mxu0 %v2655
        %3576 = vmatpush1.bf16.msra.mxu0 %v2654
        %3577 = vmatprep.subr.bf16.mxu0 %v2660
        %3578 = vmatpush1.bf16.msra.mxu0 %v2659
        %3579 = vmatprep.subr.bf16.mxu0 %v2665
        %3580 = vmatpush1.bf16.msra.mxu0 %v2664
        %3581 = vmatprep.subr.bf16.mxu0 %v2670
        %3582 = vmatpush1.bf16.msra.mxu0 %v2669
        %3583 = vmatprep.subr.bf16.mxu0 %v2675
        %3584 = vmatpush1.bf16.msra.mxu0 %v2674
        %3585 = vmatprep.subr.bf16.mxu0 %v2680
        %3586 = vmatpush1.bf16.msra.mxu0 %v2679
        %3587 = vmatprep.subr.bf16.mxu0 %v2685
        %3588 = vmatpush1.bf16.msra.mxu0 %v2684
        %3589 = vmatprep.subr.bf16.mxu0 %v2690
        %3590 = vmatpush1.bf16.msra.mxu0 %v2689
        %3591 = vmatprep.subr.bf16.mxu0 %v2695
        %3592 = vmatpush1.bf16.msra.mxu0 %v2694
        %3593 = vmatprep.subr.bf16.mxu0 %v2700
        %3594 = vmatpush1.bf16.msra.mxu0 %v2699
        %3595 = vmatprep.subr.bf16.mxu0 %v2705
        %3596 = vmatpush1.bf16.msra.mxu0 %v2704
        %3597 = vmatprep.subr.bf16.mxu0 %v2710
        %3598 = vmatpush1.bf16.msra.mxu0 %v2709
        %3599 = vmatprep.subr.bf16.mxu0 %v2715
        %3600 = vmatpush1.bf16.msra.mxu0 %v2714
        %3601 = vmatprep.mubr.bf16.mxu0 %v3353
        %3602 = vmatmul.mubr.bf16.gmra.mrb[0].mxu0 %v3352
        %v3603 = vpop.f32.mrb[0].mxu0
        %v3604 = vadd.f32 %v3561, %v3603
        %v3605 = vpop.f32.mrb[0].mxu0
        %v3606 = vadd.f32 %v3563, %v3605
        %v3607 = vpop.f32.mrb[0].mxu0
        %v3608 = vadd.f32 %v3565, %v3607
        %v3609 = vpop.f32.mrb[0].mxu0
        %v3610 = vadd.f32 %v3567, %v3609
        %3611 = vdwg.mxu0
        %3612 = vmatprep.subr.bf16.mxu0 0
        %3613 = vmatpush1.bf16.msra.mxu0 %v2481
        %3614 = vmatprep.subr.bf16.mxu0 0
        %3615 = vmatpush1.bf16.msra.mxu0 %v2486
        %3616 = vmatprep.subr.bf16.mxu0 0
        %3617 = vmatpush1.bf16.msra.mxu0 %v2491
        %3618 = vmatprep.subr.bf16.mxu0 0
        %3619 = vmatpush1.bf16.msra.mxu0 %v2496
        %3620 = vmatprep.subr.bf16.mxu0 0
        %3621 = vmatpush1.bf16.msra.mxu0 %v2501
        %3622 = vmatprep.subr.bf16.mxu0 0
        %3623 = vmatpush1.bf16.msra.mxu0 %v2506
        %3624 = vmatprep.subr.bf16.mxu0 0
        %3625 = vmatpush1.bf16.msra.mxu0 %v2511
        %3626 = vmatprep.subr.bf16.mxu0 0
        %3627 = vmatpush1.bf16.msra.mxu0 %v2516
        %3628 = vmatprep.subr.bf16.mxu0 0
        %3629 = vmatpush1.bf16.msra.mxu0 %v2521
        %3630 = vmatprep.subr.bf16.mxu0 0
        %3631 = vmatpush1.bf16.msra.mxu0 %v2526
        %3632 = vmatprep.subr.bf16.mxu0 0
        %3633 = vmatpush1.bf16.msra.mxu0 %v2531
        %3634 = vmatprep.subr.bf16.mxu0 0
        %3635 = vmatpush1.bf16.msra.mxu0 %v2536
        %3636 = vmatprep.subr.bf16.mxu0 0
        %3637 = vmatpush1.bf16.msra.mxu0 %v2541
        %3638 = vmatprep.subr.bf16.mxu0 0
        %3639 = vmatpush1.bf16.msra.mxu0 %v2546
        %3640 = vmatprep.subr.bf16.mxu0 0
        %3641 = vmatpush1.bf16.msra.mxu0 %v2551
        %3642 = vmatprep.subr.bf16.mxu0 0
        %3643 = vmatpush1.bf16.msra.mxu0 %v2556
        %3644 = vmatprep.mubr.bf16.mxu0 %v3349
        %3645 = vmatmul.mubr.bf16.gmra.mrb[0].mxu0 %v3348
        %v3646 = vpop.f32.mrb[0].mxu0
        %v3647 = vadd.f32 %v1703, %v3646
        %v3648 = vpop.f32.mrb[0].mxu0
        %v3649 = vpop.f32.mrb[0].mxu0
        %v3650 = vadd.f32 %v1703, %v3649
        %v3651 = vpop.f32.mrb[0].mxu0
        %3652 = vdwg.mxu0
        %3653 = vmatprep.subr.bf16.mxu0 0
        %3654 = vmatpush1.bf16.msra.mxu0 %v2561
        %3655 = vmatprep.subr.bf16.mxu0 0
        %3656 = vmatpush1.bf16.msra.mxu0 %v2566
        %3657 = vmatprep.subr.bf16.mxu0 0
        %3658 = vmatpush1.bf16.msra.mxu0 %v2571
        %3659 = vmatprep.subr.bf16.mxu0 0
        %3660 = vmatpush1.bf16.msra.mxu0 %v2576
        %3661 = vmatprep.subr.bf16.mxu0 0
        %3662 = vmatpush1.bf16.msra.mxu0 %v2581
        %3663 = vmatprep.subr.bf16.mxu0 0
        %3664 = vmatpush1.bf16.msra.mxu0 %v2586
        %3665 = vmatprep.subr.bf16.mxu0 0
        %3666 = vmatpush1.bf16.msra.mxu0 %v2591
        %3667 = vmatprep.subr.bf16.mxu0 0
        %3668 = vmatpush1.bf16.msra.mxu0 %v2596
        %3669 = vmatprep.subr.bf16.mxu0 0
        %3670 = vmatpush1.bf16.msra.mxu0 %v2601
        %3671 = vmatprep.subr.bf16.mxu0 0
        %3672 = vmatpush1.bf16.msra.mxu0 %v2606
        %3673 = vmatprep.subr.bf16.mxu0 0
        %3674 = vmatpush1.bf16.msra.mxu0 %v2611
        %3675 = vmatprep.subr.bf16.mxu0 0
        %3676 = vmatpush1.bf16.msra.mxu0 %v2616
        %3677 = vmatprep.subr.bf16.mxu0 0
        %3678 = vmatpush1.bf16.msra.mxu0 %v2621
        %3679 = vmatprep.subr.bf16.mxu0 0
        %3680 = vmatpush1.bf16.msra.mxu0 %v2626
        %3681 = vmatprep.subr.bf16.mxu0 0
        %3682 = vmatpush1.bf16.msra.mxu0 %v2631
        %3683 = vmatprep.subr.bf16.mxu0 0
        %3684 = vmatpush1.bf16.msra.mxu0 %v2636
        %3685 = vmatprep.mubr.bf16.mxu0 %v3351
        %3686 = vmatmul.mubr.bf16.gmra.mrb[0].mxu0 %v3350
        %v3687 = vpop.f32.mrb[0].mxu0
        %v3688 = vadd.f32 %v3647, %v3687
        %v3689 = vpop.f32.mrb[0].mxu0
        %v3690 = vpop.f32.mrb[0].mxu0
        %v3691 = vadd.f32 %v3650, %v3690
        %v3692 = vpop.f32.mrb[0].mxu0
        %3693 = vdwg.mxu0
        %3694 = vmatprep.subr.bf16.mxu0 0
        %3695 = vmatpush1.bf16.msra.mxu0 %v2641
        %3696 = vmatprep.subr.bf16.mxu0 0
        %3697 = vmatpush1.bf16.msra.mxu0 %v2646
        %3698 = vmatprep.subr.bf16.mxu0 0
        %3699 = vmatpush1.bf16.msra.mxu0 %v2651
        %3700 = vmatprep.subr.bf16.mxu0 0
        %3701 = vmatpush1.bf16.msra.mxu0 %v2656
        %3702 = vmatprep.subr.bf16.mxu0 0
        %3703 = vmatpush1.bf16.msra.mxu0 %v2661
        %3704 = vmatprep.subr.bf16.mxu0 0
        %3705 = vmatpush1.bf16.msra.mxu0 %v2666
        %3706 = vmatprep.subr.bf16.mxu0 0
        %3707 = vmatpush1.bf16.msra.mxu0 %v2671
        %3708 = vmatprep.subr.bf16.mxu0 0
        %3709 = vmatpush1.bf16.msra.mxu0 %v2676
        %3710 = vmatprep.subr.bf16.mxu0 0
        %3711 = vmatpush1.bf16.msra.mxu0 %v2681
        %3712 = vmatprep.subr.bf16.mxu0 0
        %3713 = vmatpush1.bf16.msra.mxu0 %v2686
        %3714 = vmatprep.subr.bf16.mxu0 0
        %3715 = vmatpush1.bf16.msra.mxu0 %v2691
        %3716 = vmatprep.subr.bf16.mxu0 0
        %3717 = vmatpush1.bf16.msra.mxu0 %v2696
        %3718 = vmatprep.subr.bf16.mxu0 0
        %3719 = vmatpush1.bf16.msra.mxu0 %v2701
        %3720 = vmatprep.subr.bf16.mxu0 0
        %3721 = vmatpush1.bf16.msra.mxu0 %v2706
        %3722 = vmatprep.subr.bf16.mxu0 0
        %3723 = vmatpush1.bf16.msra.mxu0 %v2711
        %3724 = vmatprep.subr.bf16.mxu0 0
        %3725 = vmatpush1.bf16.msra.mxu0 %v2716
        %3726 = vmatprep.mubr.bf16.mxu0 %v3353
        %3727 = vmatmul.mubr.bf16.gmra.mrb[0].mxu0 %v3352
        %v3728 = vpop.f32.mrb[0].mxu0
        %v3729 = vadd.f32 %v3688, %v3728
        %v3730 = vpop.f32.mrb[0].mxu0
        %v3731 = vpop.f32.mrb[0].mxu0
        %v3732 = vadd.f32 %v3691, %v3731
        %v3733 = vpop.f32.mrb[0].mxu0
        %3734 = vdwg.mxu0
        %v3735 = vmax.f32 %v3475, 0.0
        %v3736 = vmax.f32 %v3477, 0.0
        %v3737 = vmax.f32 %v3604, 0.0
        %v3738 = vmax.f32 %v3606, 0.0
        %v3739 = vmax.f32 %v3729, 0.0
        %v3740 = vmax.f32 %v3479, 0.0
        %v3741 = vmax.f32 %v3481, 0.0
        %v3742 = vmax.f32 %v3608, 0.0
        %v3743 = vmax.f32 %v3610, 0.0
        %v3744 = vmax.f32 %v3732, 0.0
        %v3745 = vpack.c.bf16 %v3343, %v3338
        %v3746 = vpack.c.bf16 %v3344, %v3339
        %v3747 = vpack.c.bf16 %v3345, %v3340
        %v3748 = vpack.c.bf16 %v3346, %v3341
        %v3749 = vpack.c.bf16 %v3347, %v3342
        %v3750 = vld [vmem:[#allocation9] sm:$0xff]
        %v3751 = vld [vmem:[#allocation9 + $0x8] sm:$0xff]
        %v3752 = vld [vmem:[#allocation9 + $0x10] sm:$0xff]
        %v3753 = vld [vmem:[#allocation9 + $0x18] sm:$0xff]
        %v3754 = vld [vmem:[#allocation9 + $0x20] sm:$0xff]
        %v3755 = vld [vmem:[#allocation9 + $0x28] sm:$0xff]
        %v3756 = vld [vmem:[#allocation9 + $0x30] sm:$0xff]
        %v3757 = vld [vmem:[#allocation9 + $0x38] sm:$0xff]
        %v3758 = vld [vmem:[#allocation9 + $0x40] sm:$0xff]
        %v3759 = vld [vmem:[#allocation9 + $0x48] sm:$0xff]
        %v3760 = vld [vmem:[#allocation9 + $0x50] sm:$0xff]
        %v3761 = vld [vmem:[#allocation9 + $0x58] sm:$0xff]
        %v3762 = vld [vmem:[#allocation9 + $0x60] sm:$0xff]
        %v3763 = vld [vmem:[#allocation9 + $0x68] sm:$0xff]
        %v3764 = vld [vmem:[#allocation9 + $0x70] sm:$0xff]
        %v3765 = vld [vmem:[#allocation9 + $0x78] sm:$0xff]
        %v3766 = vld [vmem:[#allocation9 + $0x80] sm:$0xff]
        %v3767 = vld [vmem:[#allocation9 + $0x88] sm:$0xff]
        %v3768 = vld [vmem:[#allocation9 + $0x90] sm:$0xff]
        %v3769 = vld [vmem:[#allocation9 + $0x98] sm:$0xff]
        %v3770 = vld [vmem:[#allocation9 + $0xa0] sm:$0xff]
        %v3771 = vld [vmem:[#allocation9 + $0xa8] sm:$0xff]
        %v3772 = vld [vmem:[#allocation9 + $0xb0] sm:$0xff]
        %v3773 = vld [vmem:[#allocation9 + $0xb8] sm:$0xff]
        %v3774 = vld [vmem:[#allocation9 + $0xc0] sm:$0xff]
        %v3775 = vld [vmem:[#allocation9 + $0xc8] sm:$0xff]
        %v3776 = vld [vmem:[#allocation9 + $0xd0] sm:$0xff]
        %v3777 = vld [vmem:[#allocation9 + $0xd8] sm:$0xff]
        %v3778 = vld [vmem:[#allocation9 + $0xe0] sm:$0xff]
        %v3779 = vld [vmem:[#allocation9 + $0xe8] sm:$0xff]
        %v3780 = vld [vmem:[#allocation9 + $0xf0] sm:$0xff]
        %v3781 = vld [vmem:[#allocation9 + $0xf8] sm:$0xff]
        %v3782 = vld [vmem:[#allocation9 + $0x100] sm:$0xff]
        %v3783 = vld [vmem:[#allocation9 + $0x108] sm:$0xff]
        %v3784 = vld [vmem:[#allocation9 + $0x110] sm:$0xff]
        %v3785 = vld [vmem:[#allocation9 + $0x118] sm:$0xff]
        %v3786 = vld [vmem:[#allocation9 + $0x120] sm:$0xff]
        %v3787 = vld [vmem:[#allocation9 + $0x128] sm:$0xff]
        %v3788 = vld [vmem:[#allocation9 + $0x130] sm:$0xff]
        %v3789 = vld [vmem:[#allocation9 + $0x138] sm:$0xff]
        %v3790 = vld [vmem:[#allocation9 + $0x140] sm:$0xff]
        %v3791 = vld [vmem:[#allocation9 + $0x148] sm:$0xff]
        %v3792 = vld [vmem:[#allocation9 + $0x150] sm:$0xff]
        %v3793 = vld [vmem:[#allocation9 + $0x158] sm:$0xff]
        %v3794 = vld [vmem:[#allocation9 + $0x160] sm:$0xff]
        %v3795 = vld [vmem:[#allocation9 + $0x168] sm:$0xff]
        %v3796 = vld [vmem:[#allocation9 + $0x170] sm:$0xff]
        %v3797 = vld [vmem:[#allocation9 + $0x178] sm:$0xff]
        %v3798 = vld [vmem:[#allocation9 + $0x180] sm:$0xff]
        %v3799 = vld [vmem:[#allocation9 + $0x188] sm:$0xff]
        %v3800 = vld [vmem:[#allocation9 + $0x190] sm:$0xff]
        %v3801 = vld [vmem:[#allocation9 + $0x198] sm:$0xff]
        %v3802 = vld [vmem:[#allocation9 + $0x1a0] sm:$0xff]
        %v3803 = vld [vmem:[#allocation9 + $0x1a8] sm:$0xff]
        %v3804 = vld [vmem:[#allocation9 + $0x1b0] sm:$0xff]
        %v3805 = vld [vmem:[#allocation9 + $0x1b8] sm:$0xff]
        %v3806 = vld [vmem:[#allocation9 + $0x1c0] sm:$0xff]
        %v3807 = vld [vmem:[#allocation9 + $0x1c8] sm:$0xff]
        %v3808 = vld [vmem:[#allocation9 + $0x1d0] sm:$0xff]
        %v3809 = vld [vmem:[#allocation9 + $0x1d8] sm:$0xff]
        %v3810 = vld [vmem:[#allocation9 + $0x1e0] sm:$0xff]
        %v3811 = vld [vmem:[#allocation9 + $0x1e8] sm:$0xff]
        %v3812 = vld [vmem:[#allocation9 + $0x1f0] sm:$0xff]
        %v3813 = vld [vmem:[#allocation9 + $0x1f8] sm:$0xff]
        %v3814 = vld [vmem:[#allocation9 + $0x200] sm:$0xff]
        %v3815 = vld [vmem:[#allocation9 + $0x208] sm:$0xff]
        %v3816 = vld [vmem:[#allocation9 + $0x210] sm:$0xff]
        %v3817 = vld [vmem:[#allocation9 + $0x218] sm:$0xff]
        %v3818 = vld [vmem:[#allocation9 + $0x220] sm:$0xff]
        %v3819 = vld [vmem:[#allocation9 + $0x228] sm:$0xff]
        %v3820 = vld [vmem:[#allocation9 + $0x230] sm:$0xff]
        %v3821 = vld [vmem:[#allocation9 + $0x238] sm:$0xff]
        %v3822 = vld [vmem:[#allocation9 + $0x240] sm:$0xff]
        %v3823 = vld [vmem:[#allocation9 + $0x248] sm:$0xff]
        %v3824 = vld [vmem:[#allocation9 + $0x250] sm:$0xff]
        %v3825 = vld [vmem:[#allocation9 + $0x258] sm:$0xff]
        %v3826 = vld [vmem:[#allocation9 + $0x260] sm:$0xff]
        %v3827 = vld [vmem:[#allocation9 + $0x268] sm:$0xff]
        %v3828 = vld [vmem:[#allocation9 + $0x270] sm:$0xff]
        %v3829 = vld [vmem:[#allocation9 + $0x278] sm:$0xff]
        %v3830 = vld [vmem:[#allocation9 + $0x280] sm:$0xff]
        %v3831 = vld [vmem:[#allocation9 + $0x288] sm:$0xff]
        %v3832 = vld [vmem:[#allocation9 + $0x290] sm:$0xff]
        %v3833 = vld [vmem:[#allocation9 + $0x298] sm:$0xff]
        %v3834 = vld [vmem:[#allocation9 + $0x2a0] sm:$0xff]
        %v3835 = vld [vmem:[#allocation9 + $0x2a8] sm:$0xff]
        %v3836 = vld [vmem:[#allocation9 + $0x2b0] sm:$0xff]
        %v3837 = vld [vmem:[#allocation9 + $0x2b8] sm:$0xff]
        %v3838 = vld [vmem:[#allocation9 + $0x2c0] sm:$0xff]
        %v3839 = vld [vmem:[#allocation9 + $0x2c8] sm:$0xff]
        %v3840 = vld [vmem:[#allocation9 + $0x2d0] sm:$0xff]
        %v3841 = vld [vmem:[#allocation9 + $0x2d8] sm:$0xff]
        %v3842 = vld [vmem:[#allocation9 + $0x2e0] sm:$0xff]
        %v3843 = vld [vmem:[#allocation9 + $0x2e8] sm:$0xff]
        %v3844 = vld [vmem:[#allocation9 + $0x2f0] sm:$0xff]
        %v3845 = vld [vmem:[#allocation9 + $0x2f8] sm:$0xff]
        %v3846 = vld [vmem:[#allocation9 + $0x300] sm:$0xff]
        %v3847 = vld [vmem:[#allocation9 + $0x308] sm:$0xff]
        %v3848 = vld [vmem:[#allocation9 + $0x310] sm:$0xff]
        %v3849 = vld [vmem:[#allocation9 + $0x318] sm:$0xff]
        %v3850 = vld [vmem:[#allocation9 + $0x320] sm:$0xff]
        %v3851 = vld [vmem:[#allocation9 + $0x328] sm:$0xff]
        %v3852 = vld [vmem:[#allocation9 + $0x330] sm:$0xff]
        %v3853 = vld [vmem:[#allocation9 + $0x338] sm:$0xff]
        %v3854 = vld [vmem:[#allocation9 + $0x340] sm:$0xff]
        %v3855 = vld [vmem:[#allocation9 + $0x348] sm:$0xff]
        %v3856 = vld [vmem:[#allocation9 + $0x350] sm:$0xff]
        %v3857 = vld [vmem:[#allocation9 + $0x358] sm:$0xff]
        %v3858 = vld [vmem:[#allocation9 + $0x360] sm:$0xff]
        %v3859 = vld [vmem:[#allocation9 + $0x368] sm:$0xff]
        %v3860 = vld [vmem:[#allocation9 + $0x370] sm:$0xff]
        %v3861 = vld [vmem:[#allocation9 + $0x378] sm:$0xff]
        %v3862 = vld [vmem:[#allocation9 + $0x380] sm:$0xff]
        %v3863 = vld [vmem:[#allocation9 + $0x388] sm:$0xff]
        %v3864 = vld [vmem:[#allocation9 + $0x390] sm:$0xff]
        %v3865 = vld [vmem:[#allocation9 + $0x398] sm:$0xff]
        %v3866 = vld [vmem:[#allocation9 + $0x3a0] sm:$0xff]
        %v3867 = vld [vmem:[#allocation9 + $0x3a8] sm:$0xff]
        %v3868 = vld [vmem:[#allocation9 + $0x3b0] sm:$0xff]
        %v3869 = vld [vmem:[#allocation9 + $0x3b8] sm:$0xff]
        %v3870 = vld [vmem:[#allocation9 + $0x3c0] sm:$0xff]
        %v3871 = vld [vmem:[#allocation9 + $0x3c8] sm:$0xff]
        %v3872 = vld [vmem:[#allocation9 + $0x3d0] sm:$0xff]
        %v3873 = vld [vmem:[#allocation9 + $0x3d8] sm:$0xff]
        %v3874 = vld [vmem:[#allocation9 + $0x3e0] sm:$0xff]
        %v3875 = vld [vmem:[#allocation9 + $0x3e8] sm:$0xff]
        %v3876 = vld [vmem:[#allocation9 + $0x3f0] sm:$0xff]
        %v3877 = vld [vmem:[#allocation9 + $0x3f8] sm:$0xff]
        %v3878 = vld [vmem:[#allocation9 + $0x400] sm:$0xff]
        %v3879 = vld [vmem:[#allocation9 + $0x408] sm:$0xff]
        %v3880 = vld [vmem:[#allocation9 + $0x410] sm:$0xff]
        %v3881 = vld [vmem:[#allocation9 + $0x418] sm:$0xff]
        %v3882 = vld [vmem:[#allocation9 + $0x420] sm:$0xff]
        %v3883 = vld [vmem:[#allocation9 + $0x428] sm:$0xff]
        %v3884 = vld [vmem:[#allocation9 + $0x430] sm:$0xff]
        %v3885 = vld [vmem:[#allocation9 + $0x438] sm:$0xff]
        %v3886 = vld [vmem:[#allocation9 + $0x440] sm:$0xff]
        %v3887 = vld [vmem:[#allocation9 + $0x448] sm:$0xff]
        %v3888 = vld [vmem:[#allocation9 + $0x450] sm:$0xff]
        %v3889 = vld [vmem:[#allocation9 + $0x458] sm:$0xff]
        %v3890 = vld [vmem:[#allocation9 + $0x460] sm:$0xff]
        %v3891 = vld [vmem:[#allocation9 + $0x468] sm:$0xff]
        %v3892 = vld [vmem:[#allocation9 + $0x470] sm:$0xff]
        %v3893 = vld [vmem:[#allocation9 + $0x478] sm:$0xff]
        %v3894 = vld [vmem:[#allocation9 + $0x480] sm:$0xff]
        %v3895 = vld [vmem:[#allocation9 + $0x488] sm:$0xff]
        %v3896 = vld [vmem:[#allocation9 + $0x490] sm:$0xff]
        %v3897 = vld [vmem:[#allocation9 + $0x498] sm:$0xff]
        %v3898 = vld [vmem:[#allocation9 + $0x4a0] sm:$0xff]
        %v3899 = vld [vmem:[#allocation9 + $0x4a8] sm:$0xff]
        %v3900 = vld [vmem:[#allocation9 + $0x4b0] sm:$0xff]
        %v3901 = vld [vmem:[#allocation9 + $0x4b8] sm:$0xff]
        %v3902 = vld [vmem:[#allocation9 + $0x4c0] sm:$0xff]
        %v3903 = vld [vmem:[#allocation9 + $0x4c8] sm:$0xff]
        %v3904 = vld [vmem:[#allocation9 + $0x4d0] sm:$0xff]
        %v3905 = vld [vmem:[#allocation9 + $0x4d8] sm:$0xff]
        %v3906 = vld [vmem:[#allocation9 + $0x4e0] sm:$0xff]
        %v3907 = vld [vmem:[#allocation9 + $0x4e8] sm:$0xff]
        %v3908 = vld [vmem:[#allocation9 + $0x4f0] sm:$0xff]
        %v3909 = vld [vmem:[#allocation9 + $0x4f8] sm:$0xff]
        %v3910 = vld [vmem:[#allocation9 + $0x500] sm:$0xff]
        %v3911 = vld [vmem:[#allocation9 + $0x508] sm:$0xff]
        %v3912 = vld [vmem:[#allocation9 + $0x510] sm:$0xff]
        %v3913 = vld [vmem:[#allocation9 + $0x518] sm:$0xff]
        %v3914 = vld [vmem:[#allocation9 + $0x520] sm:$0xff]
        %v3915 = vld [vmem:[#allocation9 + $0x528] sm:$0xff]
        %v3916 = vld [vmem:[#allocation9 + $0x530] sm:$0xff]
        %v3917 = vld [vmem:[#allocation9 + $0x538] sm:$0xff]
        %v3918 = vld [vmem:[#allocation9 + $0x540] sm:$0xff]
        %v3919 = vld [vmem:[#allocation9 + $0x548] sm:$0xff]
        %v3920 = vld [vmem:[#allocation9 + $0x550] sm:$0xff]
        %v3921 = vld [vmem:[#allocation9 + $0x558] sm:$0xff]
        %v3922 = vld [vmem:[#allocation9 + $0x560] sm:$0xff]
        %v3923 = vld [vmem:[#allocation9 + $0x568] sm:$0xff]
        %v3924 = vld [vmem:[#allocation9 + $0x570] sm:$0xff]
        %v3925 = vld [vmem:[#allocation9 + $0x578] sm:$0xff]
        %v3926 = vld [vmem:[#allocation9 + $0x580] sm:$0xff]
        %v3927 = vld [vmem:[#allocation9 + $0x588] sm:$0xff]
        %v3928 = vld [vmem:[#allocation9 + $0x590] sm:$0xff]
        %v3929 = vld [vmem:[#allocation9 + $0x598] sm:$0xff]
        %v3930 = vld [vmem:[#allocation9 + $0x5a0] sm:$0xff]
        %v3931 = vld [vmem:[#allocation9 + $0x5a8] sm:$0xff]
        %v3932 = vld [vmem:[#allocation9 + $0x5b0] sm:$0xff]
        %v3933 = vld [vmem:[#allocation9 + $0x5b8] sm:$0xff]
        %v3934 = vld [vmem:[#allocation9 + $0x5c0] sm:$0xff]
        %v3935 = vld [vmem:[#allocation9 + $0x5c8] sm:$0xff]
        %v3936 = vld [vmem:[#allocation9 + $0x5d0] sm:$0xff]
        %v3937 = vld [vmem:[#allocation9 + $0x5d8] sm:$0xff]
        %v3938 = vld [vmem:[#allocation9 + $0x5e0] sm:$0xff]
        %v3939 = vld [vmem:[#allocation9 + $0x5e8] sm:$0xff]
        %v3940 = vld [vmem:[#allocation9 + $0x5f0] sm:$0xff]
        %v3941 = vld [vmem:[#allocation9 + $0x5f8] sm:$0xff]
        %v3942 = vld [vmem:[#allocation9 + $0x600] sm:$0xff]
        %v3943 = vld [vmem:[#allocation9 + $0x608] sm:$0xff]
        %v3944 = vld [vmem:[#allocation9 + $0x610] sm:$0xff]
        %v3945 = vld [vmem:[#allocation9 + $0x618] sm:$0xff]
        %v3946 = vld [vmem:[#allocation9 + $0x620] sm:$0xff]
        %v3947 = vld [vmem:[#allocation9 + $0x628] sm:$0xff]
        %v3948 = vld [vmem:[#allocation9 + $0x630] sm:$0xff]
        %v3949 = vld [vmem:[#allocation9 + $0x638] sm:$0xff]
        %v3950 = vld [vmem:[#allocation9 + $0x640] sm:$0xff]
        %v3951 = vld [vmem:[#allocation9 + $0x648] sm:$0xff]
        %v3952 = vld [vmem:[#allocation9 + $0x650] sm:$0xff]
        %v3953 = vld [vmem:[#allocation9 + $0x658] sm:$0xff]
        %v3954 = vld [vmem:[#allocation9 + $0x660] sm:$0xff]
        %v3955 = vld [vmem:[#allocation9 + $0x668] sm:$0xff]
        %v3956 = vld [vmem:[#allocation9 + $0x670] sm:$0xff]
        %v3957 = vld [vmem:[#allocation9 + $0x678] sm:$0xff]
        %v3958 = vld [vmem:[#allocation9 + $0x680] sm:$0xff]
        %v3959 = vld [vmem:[#allocation9 + $0x688] sm:$0xff]
        %v3960 = vld [vmem:[#allocation9 + $0x690] sm:$0xff]
        %v3961 = vld [vmem:[#allocation9 + $0x698] sm:$0xff]
        %v3962 = vld [vmem:[#allocation9 + $0x6a0] sm:$0xff]
        %v3963 = vld [vmem:[#allocation9 + $0x6a8] sm:$0xff]
        %v3964 = vld [vmem:[#allocation9 + $0x6b0] sm:$0xff]
        %v3965 = vld [vmem:[#allocation9 + $0x6b8] sm:$0xff]
        %v3966 = vld [vmem:[#allocation9 + $0x6c0] sm:$0xff]
        %v3967 = vld [vmem:[#allocation9 + $0x6c8] sm:$0xff]
        %v3968 = vld [vmem:[#allocation9 + $0x6d0] sm:$0xff]
        %v3969 = vld [vmem:[#allocation9 + $0x6d8] sm:$0xff]
        %v3970 = vld [vmem:[#allocation9 + $0x6e0] sm:$0xff]
        %v3971 = vld [vmem:[#allocation9 + $0x6e8] sm:$0xff]
        %v3972 = vld [vmem:[#allocation9 + $0x6f0] sm:$0xff]
        %v3973 = vld [vmem:[#allocation9 + $0x6f8] sm:$0xff]
        %v3974 = vld [vmem:[#allocation9 + $0x700] sm:$0xff]
        %v3975 = vld [vmem:[#allocation9 + $0x708] sm:$0xff]
        %v3976 = vld [vmem:[#allocation9 + $0x710] sm:$0xff]
        %v3977 = vld [vmem:[#allocation9 + $0x718] sm:$0xff]
        %v3978 = vld [vmem:[#allocation9 + $0x720] sm:$0xff]
        %v3979 = vld [vmem:[#allocation9 + $0x728] sm:$0xff]
        %v3980 = vld [vmem:[#allocation9 + $0x730] sm:$0xff]
        %v3981 = vld [vmem:[#allocation9 + $0x738] sm:$0xff]
        %v3982 = vld [vmem:[#allocation9 + $0x740] sm:$0xff]
        %v3983 = vld [vmem:[#allocation9 + $0x748] sm:$0xff]
        %v3984 = vld [vmem:[#allocation9 + $0x750] sm:$0xff]
        %v3985 = vld [vmem:[#allocation9 + $0x758] sm:$0xff]
        %v3986 = vld [vmem:[#allocation9 + $0x760] sm:$0xff]
        %v3987 = vld [vmem:[#allocation9 + $0x768] sm:$0xff]
        %v3988 = vld [vmem:[#allocation9 + $0x770] sm:$0xff]
        %v3989 = vld [vmem:[#allocation9 + $0x778] sm:$0xff]
        %v3990 = vld [vmem:[#allocation9 + $0x780] sm:$0xff]
        %v3991 = vld [vmem:[#allocation9 + $0x788] sm:$0xff]
        %v3992 = vld [vmem:[#allocation9 + $0x790] sm:$0xff]
        %v3993 = vld [vmem:[#allocation9 + $0x798] sm:$0xff]
        %v3994 = vld [vmem:[#allocation9 + $0x7a0] sm:$0xff]
        %v3995 = vld [vmem:[#allocation9 + $0x7a8] sm:$0xff]
        %v3996 = vld [vmem:[#allocation9 + $0x7b0] sm:$0xff]
        %v3997 = vld [vmem:[#allocation9 + $0x7b8] sm:$0xff]
        %v3998 = vld [vmem:[#allocation9 + $0x7c0] sm:$0xff]
        %v3999 = vld [vmem:[#allocation9 + $0x7c8] sm:$0xff]
        %v4000 = vld [vmem:[#allocation9 + $0x7d0] sm:$0xff]
        %v4001 = vld [vmem:[#allocation9 + $0x7d8] sm:$0xff]
        %v4002 = vld [vmem:[#allocation9 + $0x7e0] sm:$0xff]
        %v4003 = vld [vmem:[#allocation9 + $0x7e8] sm:$0xff]
        %v4004 = vld [vmem:[#allocation9 + $0x7f0] sm:$0xff]
        %v4005 = vld [vmem:[#allocation9 + $0x7f8] sm:$0xff]
        %v4006 = vld [vmem:[#allocation9 + $0x800] sm:$0xff]
        %v4007 = vld [vmem:[#allocation9 + $0x808] sm:$0xff]
        %v4008 = vld [vmem:[#allocation9 + $0x810] sm:$0xff]
        %v4009 = vld [vmem:[#allocation9 + $0x818] sm:$0xff]
        %v4010 = vld [vmem:[#allocation9 + $0x820] sm:$0xff]
        %v4011 = vld [vmem:[#allocation9 + $0x828] sm:$0xff]
        %v4012 = vld [vmem:[#allocation9 + $0x830] sm:$0xff]
        %v4013 = vld [vmem:[#allocation9 + $0x838] sm:$0xff]
        %v4014 = vld [vmem:[#allocation9 + $0x840] sm:$0xff]
        %v4015 = vld [vmem:[#allocation9 + $0x848] sm:$0xff]
        %v4016 = vld [vmem:[#allocation9 + $0x850] sm:$0xff]
        %v4017 = vld [vmem:[#allocation9 + $0x858] sm:$0xff]
        %v4018 = vld [vmem:[#allocation9 + $0x860] sm:$0xff]
        %v4019 = vld [vmem:[#allocation9 + $0x868] sm:$0xff]
        %v4020 = vld [vmem:[#allocation9 + $0x870] sm:$0xff]
        %v4021 = vld [vmem:[#allocation9 + $0x878] sm:$0xff]
        %v4022 = vld [vmem:[#allocation9 + $0x880] sm:$0xff]
        %v4023 = vld [vmem:[#allocation9 + $0x888] sm:$0xff]
        %v4024 = vld [vmem:[#allocation9 + $0x890] sm:$0xff]
        %v4025 = vld [vmem:[#allocation9 + $0x898] sm:$0xff]
        %v4026 = vld [vmem:[#allocation9 + $0x8a0] sm:$0xff]
        %v4027 = vld [vmem:[#allocation9 + $0x8a8] sm:$0xff]
        %v4028 = vld [vmem:[#allocation9 + $0x8b0] sm:$0xff]
        %v4029 = vld [vmem:[#allocation9 + $0x8b8] sm:$0xff]
        %v4030 = vld [vmem:[#allocation9 + $0x8c0] sm:$0xff]
        %v4031 = vld [vmem:[#allocation9 + $0x8c8] sm:$0xff]
        %v4032 = vld [vmem:[#allocation9 + $0x8d0] sm:$0xff]
        %v4033 = vld [vmem:[#allocation9 + $0x8d8] sm:$0xff]
        %v4034 = vld [vmem:[#allocation9 + $0x8e0] sm:$0xff]
        %v4035 = vld [vmem:[#allocation9 + $0x8e8] sm:$0xff]
        %v4036 = vld [vmem:[#allocation9 + $0x8f0] sm:$0xff]
        %v4037 = vld [vmem:[#allocation9 + $0x8f8] sm:$0xff]
        %v4038 = vld [vmem:[#allocation9 + $0x900] sm:$0xff]
        %v4039 = vld [vmem:[#allocation9 + $0x908] sm:$0xff]
        %v4040 = vld [vmem:[#allocation9 + $0x910] sm:$0xff]
        %v4041 = vld [vmem:[#allocation9 + $0x918] sm:$0xff]
        %v4042 = vld [vmem:[#allocation9 + $0x920] sm:$0xff]
        %v4043 = vld [vmem:[#allocation9 + $0x928] sm:$0xff]
        %v4044 = vld [vmem:[#allocation9 + $0x930] sm:$0xff]
        %v4045 = vld [vmem:[#allocation9 + $0x938] sm:$0xff]
        %v4046 = vld [vmem:[#allocation9 + $0x940] sm:$0xff]
        %v4047 = vld [vmem:[#allocation9 + $0x948] sm:$0xff]
        %v4048 = vld [vmem:[#allocation9 + $0x950] sm:$0xff]
        %v4049 = vld [vmem:[#allocation9 + $0x958] sm:$0xff]
        %v4050 = vld [vmem:[#allocation9 + $0x960] sm:$0xff]
        %v4051 = vld [vmem:[#allocation9 + $0x968] sm:$0xff]
        %v4052 = vld [vmem:[#allocation9 + $0x970] sm:$0xff]
        %v4053 = vld [vmem:[#allocation9 + $0x978] sm:$0xff]
        %v4054 = vld [vmem:[#allocation9 + $0x980] sm:$0xff]
        %v4055 = vld [vmem:[#allocation9 + $0x988] sm:$0xff]
        %v4056 = vld [vmem:[#allocation9 + $0x990] sm:$0xff]
        %v4057 = vld [vmem:[#allocation9 + $0x998] sm:$0xff]
        %v4058 = vld [vmem:[#allocation9 + $0x9a0] sm:$0xff]
        %v4059 = vld [vmem:[#allocation9 + $0x9a8] sm:$0xff]
        %v4060 = vld [vmem:[#allocation9 + $0x9b0] sm:$0xff]
        %v4061 = vld [vmem:[#allocation9 + $0x9b8] sm:$0xff]
        %v4062 = vld [vmem:[#allocation9 + $0x9c0] sm:$0xff]
        %v4063 = vld [vmem:[#allocation9 + $0x9c8] sm:$0xff]
        %v4064 = vld [vmem:[#allocation9 + $0x9d0] sm:$0xff]
        %v4065 = vld [vmem:[#allocation9 + $0x9d8] sm:$0xff]
        %v4066 = vld [vmem:[#allocation9 + $0x9e0] sm:$0xff]
        %v4067 = vld [vmem:[#allocation9 + $0x9e8] sm:$0xff]
        %v4068 = vld [vmem:[#allocation9 + $0x9f0] sm:$0xff]
        %v4069 = vld [vmem:[#allocation9 + $0x9f8] sm:$0xff]
        %v4070 = vld [vmem:[#allocation9 + $0xa00] sm:$0xff]
        %v4071 = vld [vmem:[#allocation9 + $0xa08] sm:$0xff]
        %v4072 = vld [vmem:[#allocation9 + $0xa10] sm:$0xff]
        %v4073 = vld [vmem:[#allocation9 + $0xa18] sm:$0xff]
        %v4074 = vld [vmem:[#allocation9 + $0xa20] sm:$0xff]
        %v4075 = vld [vmem:[#allocation9 + $0xa28] sm:$0xff]
        %v4076 = vld [vmem:[#allocation9 + $0xa30] sm:$0xff]
        %v4077 = vld [vmem:[#allocation9 + $0xa38] sm:$0xff]
        %v4078 = vld [vmem:[#allocation9 + $0xa40] sm:$0xff]
        %v4079 = vld [vmem:[#allocation9 + $0xa48] sm:$0xff]
        %v4080 = vld [vmem:[#allocation9 + $0xa50] sm:$0xff]
        %v4081 = vld [vmem:[#allocation9 + $0xa58] sm:$0xff]
        %v4082 = vld [vmem:[#allocation9 + $0xa60] sm:$0xff]
        %v4083 = vld [vmem:[#allocation9 + $0xa68] sm:$0xff]
        %v4084 = vld [vmem:[#allocation9 + $0xa70] sm:$0xff]
        %v4085 = vld [vmem:[#allocation9 + $0xa78] sm:$0xff]
        %v4086 = vld [vmem:[#allocation9 + $0xa80] sm:$0xff]
        %v4087 = vld [vmem:[#allocation9 + $0xa88] sm:$0xff]
        %v4088 = vld [vmem:[#allocation9 + $0xa90] sm:$0xff]
        %v4089 = vld [vmem:[#allocation9 + $0xa98] sm:$0xff]
        %v4090 = vld [vmem:[#allocation9 + $0xaa0] sm:$0xff]
        %v4091 = vld [vmem:[#allocation9 + $0xaa8] sm:$0xff]
        %v4092 = vld [vmem:[#allocation9 + $0xab0] sm:$0xff]
        %v4093 = vld [vmem:[#allocation9 + $0xab8] sm:$0xff]
        %v4094 = vld [vmem:[#allocation9 + $0xac0] sm:$0xff]
        %v4095 = vld [vmem:[#allocation9 + $0xac8] sm:$0xff]
        %v4096 = vld [vmem:[#allocation9 + $0xad0] sm:$0xff]
        %v4097 = vld [vmem:[#allocation9 + $0xad8] sm:$0xff]
        %v4098 = vld [vmem:[#allocation9 + $0xae0] sm:$0xff]
        %v4099 = vld [vmem:[#allocation9 + $0xae8] sm:$0xff]
        %v4100 = vld [vmem:[#allocation9 + $0xaf0] sm:$0xff]
        %v4101 = vld [vmem:[#allocation9 + $0xaf8] sm:$0xff]
        %v4102 = vld [vmem:[#allocation9 + $0xb00] sm:$0xff]
        %v4103 = vld [vmem:[#allocation9 + $0xb08] sm:$0xff]
        %v4104 = vld [vmem:[#allocation9 + $0xb10] sm:$0xff]
        %v4105 = vld [vmem:[#allocation9 + $0xb18] sm:$0xff]
        %v4106 = vld [vmem:[#allocation9 + $0xb20] sm:$0xff]
        %v4107 = vld [vmem:[#allocation9 + $0xb28] sm:$0xff]
        %v4108 = vld [vmem:[#allocation9 + $0xb30] sm:$0xff]
        %v4109 = vld [vmem:[#allocation9 + $0xb38] sm:$0xff]
        %v4110 = vld [vmem:[#allocation9 + $0xb40] sm:$0xff]
        %v4111 = vld [vmem:[#allocation9 + $0xb48] sm:$0xff]
        %v4112 = vld [vmem:[#allocation9 + $0xb50] sm:$0xff]
        %v4113 = vld [vmem:[#allocation9 + $0xb58] sm:$0xff]
        %v4114 = vld [vmem:[#allocation9 + $0xb60] sm:$0xff]
        %v4115 = vld [vmem:[#allocation9 + $0xb68] sm:$0xff]
        %v4116 = vld [vmem:[#allocation9 + $0xb70] sm:$0xff]
        %v4117 = vld [vmem:[#allocation9 + $0xb78] sm:$0xff]
        %v4118 = vld [vmem:[#allocation9 + $0xb80] sm:$0xff]
        %v4119 = vld [vmem:[#allocation9 + $0xb88] sm:$0xff]
        %v4120 = vld [vmem:[#allocation9 + $0xb90] sm:$0xff]
        %v4121 = vld [vmem:[#allocation9 + $0xb98] sm:$0xff]
        %v4122 = vld [vmem:[#allocation9 + $0xba0] sm:$0xff]
        %v4123 = vld [vmem:[#allocation9 + $0xba8] sm:$0xff]
        %v4124 = vld [vmem:[#allocation9 + $0xbb0] sm:$0xff]
        %v4125 = vld [vmem:[#allocation9 + $0xbb8] sm:$0xff]
        %v4126 = vld [vmem:[#allocation9 + $0xbc0] sm:$0xff]
        %v4127 = vld [vmem:[#allocation9 + $0xbc8] sm:$0xff]
        %v4128 = vld [vmem:[#allocation9 + $0xbd0] sm:$0xff]
        %v4129 = vld [vmem:[#allocation9 + $0xbd8] sm:$0xff]
        %v4130 = vld [vmem:[#allocation9 + $0xbe0] sm:$0xff]
        %v4131 = vld [vmem:[#allocation9 + $0xbe8] sm:$0xff]
        %v4132 = vld [vmem:[#allocation9 + $0xbf0] sm:$0xff]
        %v4133 = vld [vmem:[#allocation9 + $0xbf8] sm:$0xff]
        %v4134 = vld [vmem:[#allocation9 + $0xc00] sm:$0xff]
        %v4135 = vld [vmem:[#allocation9 + $0xc08] sm:$0xff]
        %v4136 = vld [vmem:[#allocation9 + $0xc10] sm:$0xff]
        %v4137 = vld [vmem:[#allocation9 + $0xc18] sm:$0xff]
        %v4138 = vld [vmem:[#allocation9 + $0xc20] sm:$0xff]
        %v4139 = vld [vmem:[#allocation9 + $0xc28] sm:$0xff]
        %v4140 = vld [vmem:[#allocation9 + $0xc30] sm:$0xff]
        %v4141 = vld [vmem:[#allocation9 + $0xc38] sm:$0xff]
        %v4142 = vld [vmem:[#allocation9 + $0xc40] sm:$0xff]
        %v4143 = vld [vmem:[#allocation9 + $0xc48] sm:$0xff]
        %v4144 = vld [vmem:[#allocation9 + $0xc50] sm:$0xff]
        %v4145 = vld [vmem:[#allocation9 + $0xc58] sm:$0xff]
        %v4146 = vld [vmem:[#allocation9 + $0xc60] sm:$0xff]
        %v4147 = vld [vmem:[#allocation9 + $0xc68] sm:$0xff]
        %v4148 = vld [vmem:[#allocation9 + $0xc70] sm:$0xff]
        %v4149 = vld [vmem:[#allocation9 + $0xc78] sm:$0xff]
        %v4150 = vld [vmem:[#allocation10] sm:$0xff]
        %v4151 = vld [vmem:[#allocation10 + $0x8] sm:$0x3]
        %v4154 = vlaneseq
        %v4155 = vshrl.u32 %v4154, 7
        %v4156 = vsub.s32 0, %v4155
        %v4157 = vrot.slane %v4150, %v4156
        %v4158 = vlaneseq
        %v4159 = vshrl.u32 %v4158, 7
        %v4160 = vsub.s32 1, %v4159
        %v4161 = vrot.slane %v4150, %v4160
        %v4162 = vlaneseq
        %v4163 = vshrl.u32 %v4162, 7
        %v4164 = vsub.s32 2, %v4163
        %v4165 = vrot.slane %v4150, %v4164
        %v4166 = vlaneseq
        %v4167 = vshrl.u32 %v4166, 7
        %v4168 = vsub.s32 3, %v4167
        %v4169 = vrot.slane %v4150, %v4168
        %v4170 = vlaneseq
        %v4171 = vshrl.u32 %v4170, 7
        %v4172 = vsub.s32 4, %v4171
        %v4173 = vrot.slane %v4150, %v4172
        %v4174 = vlaneseq
        %v4175 = vshrl.u32 %v4174, 7
        %v4176 = vsub.s32 5, %v4175
        %v4177 = vrot.slane %v4150, %v4176
        %v4178 = vlaneseq
        %v4179 = vshrl.u32 %v4178, 7
        %v4180 = vsub.s32 6, %v4179
        %v4181 = vrot.slane %v4150, %v4180
        %v4182 = vlaneseq
        %v4183 = vshrl.u32 %v4182, 7
        %v4184 = vsub.s32 7, %v4183
        %v4185 = vrot.slane %v4150, %v4184
        %v4186 = vlaneseq
        %v4187 = vshrl.u32 %v4186, 7
        %v4188 = vsub.s32 0, %v4187
        %v4189 = vrot.slane %v4151, %v4188
        %v4190 = vlaneseq
        %v4191 = vshrl.u32 %v4190, 7
        %v4192 = vsub.s32 1, %v4191
        %v4193 = vrot.slane %v4151, %v4192
        %v4604 = vunpack.c.l.b16 %v3750
        %v4605 = vunpack.c.h.b16 %v3750
        %v4606 = vunpack.c.l.b16 %v3751
        %v4607 = vunpack.c.h.b16 %v3751
        %v4608 = vunpack.c.l.b16 %v3752
        %v4609 = vunpack.c.h.b16 %v3752
        %v4610 = vunpack.c.l.b16 %v3753
        %v4611 = vunpack.c.h.b16 %v3753
        %v4612 = vunpack.c.l.b16 %v3754
        %v4613 = vunpack.c.h.b16 %v3754
        %v4614 = vunpack.c.l.b16 %v3755
        %v4615 = vunpack.c.h.b16 %v3755
        %v4616 = vunpack.c.l.b16 %v3756
        %v4617 = vunpack.c.h.b16 %v3756
        %v4618 = vunpack.c.l.b16 %v3757
        %v4619 = vunpack.c.h.b16 %v3757
        %v4620 = vunpack.c.l.b16 %v3758
        %v4621 = vunpack.c.h.b16 %v3758
        %v4622 = vunpack.c.l.b16 %v3759
        %v4623 = vunpack.c.h.b16 %v3759
        %v4624 = vunpack.c.l.b16 %v3760
        %v4625 = vunpack.c.h.b16 %v3760
        %v4626 = vunpack.c.l.b16 %v3761
        %v4627 = vunpack.c.h.b16 %v3761
        %v4628 = vunpack.c.l.b16 %v3762
        %v4629 = vunpack.c.h.b16 %v3762
        %v4630 = vunpack.c.l.b16 %v3763
        %v4631 = vunpack.c.h.b16 %v3763
        %v4632 = vunpack.c.l.b16 %v3764
        %v4633 = vunpack.c.h.b16 %v3764
        %v4634 = vunpack.c.l.b16 %v3765
        %v4635 = vunpack.c.h.b16 %v3765
        %v4636 = vunpack.c.l.b16 %v3766
        %v4637 = vunpack.c.h.b16 %v3766
        %v4638 = vunpack.c.l.b16 %v3767
        %v4639 = vunpack.c.h.b16 %v3767
        %v4640 = vunpack.c.l.b16 %v3768
        %v4641 = vunpack.c.h.b16 %v3768
        %v4642 = vunpack.c.l.b16 %v3769
        %v4643 = vunpack.c.h.b16 %v3769
        %v4644 = vunpack.c.l.b16 %v3770
        %v4645 = vunpack.c.h.b16 %v3770
        %v4646 = vunpack.c.l.b16 %v3771
        %v4647 = vunpack.c.h.b16 %v3771
        %v4648 = vunpack.c.l.b16 %v3772
        %v4649 = vunpack.c.h.b16 %v3772
        %v4650 = vunpack.c.l.b16 %v3773
        %v4651 = vunpack.c.h.b16 %v3773
        %v4652 = vunpack.c.l.b16 %v3774
        %v4653 = vunpack.c.h.b16 %v3774
        %v4654 = vunpack.c.l.b16 %v3775
        %v4655 = vunpack.c.h.b16 %v3775
        %v4656 = vunpack.c.l.b16 %v3776
        %v4657 = vunpack.c.h.b16 %v3776
        %v4658 = vunpack.c.l.b16 %v3777
        %v4659 = vunpack.c.h.b16 %v3777
        %v4660 = vunpack.c.l.b16 %v3778
        %v4661 = vunpack.c.h.b16 %v3778
        %v4662 = vunpack.c.l.b16 %v3779
        %v4663 = vunpack.c.h.b16 %v3779
        %v4664 = vunpack.c.l.b16 %v3780
        %v4665 = vunpack.c.h.b16 %v3780
        %v4666 = vunpack.c.l.b16 %v3781
        %v4667 = vunpack.c.h.b16 %v3781
        %v4668 = vunpack.c.l.b16 %v3782
        %v4669 = vunpack.c.h.b16 %v3782
        %v4670 = vunpack.c.l.b16 %v3783
        %v4671 = vunpack.c.h.b16 %v3783
        %v4672 = vunpack.c.l.b16 %v3784
        %v4673 = vunpack.c.h.b16 %v3784
        %v4674 = vunpack.c.l.b16 %v3785
        %v4675 = vunpack.c.h.b16 %v3785
        %v4676 = vunpack.c.l.b16 %v3786
        %v4677 = vunpack.c.h.b16 %v3786
        %v4678 = vunpack.c.l.b16 %v3787
        %v4679 = vunpack.c.h.b16 %v3787
        %v4680 = vunpack.c.l.b16 %v3788
        %v4681 = vunpack.c.h.b16 %v3788
        %v4682 = vunpack.c.l.b16 %v3789
        %v4683 = vunpack.c.h.b16 %v3789
        %v4684 = vunpack.c.l.b16 %v3790
        %v4685 = vunpack.c.h.b16 %v3790
        %v4686 = vunpack.c.l.b16 %v3791
        %v4687 = vunpack.c.h.b16 %v3791
        %v4688 = vunpack.c.l.b16 %v3792
        %v4689 = vunpack.c.h.b16 %v3792
        %v4690 = vunpack.c.l.b16 %v3793
        %v4691 = vunpack.c.h.b16 %v3793
        %v4692 = vunpack.c.l.b16 %v3794
        %v4693 = vunpack.c.h.b16 %v3794
        %v4694 = vunpack.c.l.b16 %v3795
        %v4695 = vunpack.c.h.b16 %v3795
        %v4696 = vunpack.c.l.b16 %v3796
        %v4697 = vunpack.c.h.b16 %v3796
        %v4698 = vunpack.c.l.b16 %v3797
        %v4699 = vunpack.c.h.b16 %v3797
        %v4700 = vunpack.c.l.b16 %v3798
        %v4701 = vunpack.c.h.b16 %v3798
        %v4702 = vunpack.c.l.b16 %v3799
        %v4703 = vunpack.c.h.b16 %v3799
        %v4704 = vunpack.c.l.b16 %v3800
        %v4705 = vunpack.c.h.b16 %v3800
        %v4706 = vunpack.c.l.b16 %v3801
        %v4707 = vunpack.c.h.b16 %v3801
        %v4708 = vunpack.c.l.b16 %v3802
        %v4709 = vunpack.c.h.b16 %v3802
        %v4710 = vunpack.c.l.b16 %v3803
        %v4711 = vunpack.c.h.b16 %v3803
        %v4712 = vunpack.c.l.b16 %v3804
        %v4713 = vunpack.c.h.b16 %v3804
        %v4714 = vunpack.c.l.b16 %v3805
        %v4715 = vunpack.c.h.b16 %v3805
        %v4716 = vunpack.c.l.b16 %v3806
        %v4717 = vunpack.c.h.b16 %v3806
        %v4718 = vunpack.c.l.b16 %v3807
        %v4719 = vunpack.c.h.b16 %v3807
        %v4720 = vunpack.c.l.b16 %v3808
        %v4721 = vunpack.c.h.b16 %v3808
        %v4722 = vunpack.c.l.b16 %v3809
        %v4723 = vunpack.c.h.b16 %v3809
        %v4724 = vunpack.c.l.b16 %v3810
        %v4725 = vunpack.c.h.b16 %v3810
        %v4726 = vunpack.c.l.b16 %v3811
        %v4727 = vunpack.c.h.b16 %v3811
        %v4728 = vunpack.c.l.b16 %v3812
        %v4729 = vunpack.c.h.b16 %v3812
        %v4730 = vunpack.c.l.b16 %v3813
        %v4731 = vunpack.c.h.b16 %v3813
        %v4732 = vunpack.c.l.b16 %v3814
        %v4733 = vunpack.c.h.b16 %v3814
        %v4734 = vunpack.c.l.b16 %v3815
        %v4735 = vunpack.c.h.b16 %v3815
        %v4736 = vunpack.c.l.b16 %v3816
        %v4737 = vunpack.c.h.b16 %v3816
        %v4738 = vunpack.c.l.b16 %v3817
        %v4739 = vunpack.c.h.b16 %v3817
        %v4740 = vunpack.c.l.b16 %v3818
        %v4741 = vunpack.c.h.b16 %v3818
        %v4742 = vunpack.c.l.b16 %v3819
        %v4743 = vunpack.c.h.b16 %v3819
        %v4744 = vunpack.c.l.b16 %v3820
        %v4745 = vunpack.c.h.b16 %v3820
        %v4746 = vunpack.c.l.b16 %v3821
        %v4747 = vunpack.c.h.b16 %v3821
        %v4748 = vunpack.c.l.b16 %v3822
        %v4749 = vunpack.c.h.b16 %v3822
        %v4750 = vunpack.c.l.b16 %v3823
        %v4751 = vunpack.c.h.b16 %v3823
        %v4752 = vunpack.c.l.b16 %v3824
        %v4753 = vunpack.c.h.b16 %v3824
        %v4754 = vunpack.c.l.b16 %v3825
        %v4755 = vunpack.c.h.b16 %v3825
        %v4756 = vunpack.c.l.b16 %v3826
        %v4757 = vunpack.c.h.b16 %v3826
        %v4758 = vunpack.c.l.b16 %v3827
        %v4759 = vunpack.c.h.b16 %v3827
        %v4760 = vunpack.c.l.b16 %v3828
        %v4761 = vunpack.c.h.b16 %v3828
        %v4762 = vunpack.c.l.b16 %v3829
        %v4763 = vunpack.c.h.b16 %v3829
        %v4764 = vunpack.c.l.b16 %v3830
        %v4765 = vunpack.c.h.b16 %v3830
        %v4766 = vunpack.c.l.b16 %v3831
        %v4767 = vunpack.c.h.b16 %v3831
        %v4768 = vunpack.c.l.b16 %v3832
        %v4769 = vunpack.c.h.b16 %v3832
        %v4770 = vunpack.c.l.b16 %v3833
        %v4771 = vunpack.c.h.b16 %v3833
        %v4772 = vunpack.c.l.b16 %v3834
        %v4773 = vunpack.c.h.b16 %v3834
        %v4774 = vunpack.c.l.b16 %v3835
        %v4775 = vunpack.c.h.b16 %v3835
        %v4776 = vunpack.c.l.b16 %v3836
        %v4777 = vunpack.c.h.b16 %v3836
        %v4778 = vunpack.c.l.b16 %v3837
        %v4779 = vunpack.c.h.b16 %v3837
        %v4780 = vunpack.c.l.b16 %v3838
        %v4781 = vunpack.c.h.b16 %v3838
        %v4782 = vunpack.c.l.b16 %v3839
        %v4783 = vunpack.c.h.b16 %v3839
        %v4784 = vunpack.c.l.b16 %v3840
        %v4785 = vunpack.c.h.b16 %v3840
        %v4786 = vunpack.c.l.b16 %v3841
        %v4787 = vunpack.c.h.b16 %v3841
        %v4788 = vunpack.c.l.b16 %v3842
        %v4789 = vunpack.c.h.b16 %v3842
        %v4790 = vunpack.c.l.b16 %v3843
        %v4791 = vunpack.c.h.b16 %v3843
        %v4792 = vunpack.c.l.b16 %v3844
        %v4793 = vunpack.c.h.b16 %v3844
        %v4794 = vunpack.c.l.b16 %v3845
        %v4795 = vunpack.c.h.b16 %v3845
        %v4796 = vunpack.c.l.b16 %v3846
        %v4797 = vunpack.c.h.b16 %v3846
        %v4798 = vunpack.c.l.b16 %v3847
        %v4799 = vunpack.c.h.b16 %v3847
        %v4800 = vunpack.c.l.b16 %v3848
        %v4801 = vunpack.c.h.b16 %v3848
        %v4802 = vunpack.c.l.b16 %v3849
        %v4803 = vunpack.c.h.b16 %v3849
        %v4804 = vunpack.c.l.b16 %v3850
        %v4805 = vunpack.c.h.b16 %v3850
        %v4806 = vunpack.c.l.b16 %v3851
        %v4807 = vunpack.c.h.b16 %v3851
        %v4808 = vunpack.c.l.b16 %v3852
        %v4809 = vunpack.c.h.b16 %v3852
        %v4810 = vunpack.c.l.b16 %v3853
        %v4811 = vunpack.c.h.b16 %v3853
        %v4812 = vunpack.c.l.b16 %v3854
        %v4813 = vunpack.c.h.b16 %v3854
        %v4814 = vunpack.c.l.b16 %v3855
        %v4815 = vunpack.c.h.b16 %v3855
        %v4816 = vunpack.c.l.b16 %v3856
        %v4817 = vunpack.c.h.b16 %v3856
        %v4818 = vunpack.c.l.b16 %v3857
        %v4819 = vunpack.c.h.b16 %v3857
        %v4820 = vunpack.c.l.b16 %v3858
        %v4821 = vunpack.c.h.b16 %v3858
        %v4822 = vunpack.c.l.b16 %v3859
        %v4823 = vunpack.c.h.b16 %v3859
        %v4824 = vunpack.c.l.b16 %v3860
        %v4825 = vunpack.c.h.b16 %v3860
        %v4826 = vunpack.c.l.b16 %v3861
        %v4827 = vunpack.c.h.b16 %v3861
        %v4828 = vunpack.c.l.b16 %v3862
        %v4829 = vunpack.c.h.b16 %v3862
        %v4830 = vunpack.c.l.b16 %v3863
        %v4831 = vunpack.c.h.b16 %v3863
        %v4832 = vunpack.c.l.b16 %v3864
        %v4833 = vunpack.c.h.b16 %v3864
        %v4834 = vunpack.c.l.b16 %v3865
        %v4835 = vunpack.c.h.b16 %v3865
        %v4836 = vunpack.c.l.b16 %v3866
        %v4837 = vunpack.c.h.b16 %v3866
        %v4838 = vunpack.c.l.b16 %v3867
        %v4839 = vunpack.c.h.b16 %v3867
        %v4840 = vunpack.c.l.b16 %v3868
        %v4841 = vunpack.c.h.b16 %v3868
        %v4842 = vunpack.c.l.b16 %v3869
        %v4843 = vunpack.c.h.b16 %v3869
        %v4844 = vunpack.c.l.b16 %v3870
        %v4845 = vunpack.c.h.b16 %v3870
        %v4846 = vunpack.c.l.b16 %v3871
        %v4847 = vunpack.c.h.b16 %v3871
        %v4848 = vunpack.c.l.b16 %v3872
        %v4849 = vunpack.c.h.b16 %v3872
        %v4850 = vunpack.c.l.b16 %v3873
        %v4851 = vunpack.c.h.b16 %v3873
        %v4852 = vunpack.c.l.b16 %v3874
        %v4853 = vunpack.c.h.b16 %v3874
        %v4854 = vunpack.c.l.b16 %v3875
        %v4855 = vunpack.c.h.b16 %v3875
        %v4856 = vunpack.c.l.b16 %v3876
        %v4857 = vunpack.c.h.b16 %v3876
        %v4858 = vunpack.c.l.b16 %v3877
        %v4859 = vunpack.c.h.b16 %v3877
        %v4860 = vunpack.c.l.b16 %v3878
        %v4861 = vunpack.c.h.b16 %v3878
        %v4862 = vunpack.c.l.b16 %v3879
        %v4863 = vunpack.c.h.b16 %v3879
        %v4864 = vunpack.c.l.b16 %v3880
        %v4865 = vunpack.c.h.b16 %v3880
        %v4866 = vunpack.c.l.b16 %v3881
        %v4867 = vunpack.c.h.b16 %v3881
        %v4868 = vunpack.c.l.b16 %v3882
        %v4869 = vunpack.c.h.b16 %v3882
        %v4870 = vunpack.c.l.b16 %v3883
        %v4871 = vunpack.c.h.b16 %v3883
        %v4872 = vunpack.c.l.b16 %v3884
        %v4873 = vunpack.c.h.b16 %v3884
        %v4874 = vunpack.c.l.b16 %v3885
        %v4875 = vunpack.c.h.b16 %v3885
        %v4876 = vunpack.c.l.b16 %v3886
        %v4877 = vunpack.c.h.b16 %v3886
        %v4878 = vunpack.c.l.b16 %v3887
        %v4879 = vunpack.c.h.b16 %v3887
        %v4880 = vunpack.c.l.b16 %v3888
        %v4881 = vunpack.c.h.b16 %v3888
        %v4882 = vunpack.c.l.b16 %v3889
        %v4883 = vunpack.c.h.b16 %v3889
        %v4884 = vunpack.c.l.b16 %v3890
        %v4885 = vunpack.c.h.b16 %v3890
        %v4886 = vunpack.c.l.b16 %v3891
        %v4887 = vunpack.c.h.b16 %v3891
        %v4888 = vunpack.c.l.b16 %v3892
        %v4889 = vunpack.c.h.b16 %v3892
        %v4890 = vunpack.c.l.b16 %v3893
        %v4891 = vunpack.c.h.b16 %v3893
        %v4892 = vunpack.c.l.b16 %v3894
        %v4893 = vunpack.c.h.b16 %v3894
        %v4894 = vunpack.c.l.b16 %v3895
        %v4895 = vunpack.c.h.b16 %v3895
        %v4896 = vunpack.c.l.b16 %v3896
        %v4897 = vunpack.c.h.b16 %v3896
        %v4898 = vunpack.c.l.b16 %v3897
        %v4899 = vunpack.c.h.b16 %v3897
        %v4900 = vunpack.c.l.b16 %v3898
        %v4901 = vunpack.c.h.b16 %v3898
        %v4902 = vunpack.c.l.b16 %v3899
        %v4903 = vunpack.c.h.b16 %v3899
        %v4904 = vunpack.c.l.b16 %v3900
        %v4905 = vunpack.c.h.b16 %v3900
        %v4906 = vunpack.c.l.b16 %v3901
        %v4907 = vunpack.c.h.b16 %v3901
        %v4908 = vunpack.c.l.b16 %v3902
        %v4909 = vunpack.c.h.b16 %v3902
        %v4910 = vunpack.c.l.b16 %v3903
        %v4911 = vunpack.c.h.b16 %v3903
        %v4912 = vunpack.c.l.b16 %v3904
        %v4913 = vunpack.c.h.b16 %v3904
        %v4914 = vunpack.c.l.b16 %v3905
        %v4915 = vunpack.c.h.b16 %v3905
        %v4916 = vunpack.c.l.b16 %v3906
        %v4917 = vunpack.c.h.b16 %v3906
        %v4918 = vunpack.c.l.b16 %v3907
        %v4919 = vunpack.c.h.b16 %v3907
        %v4920 = vunpack.c.l.b16 %v3908
        %v4921 = vunpack.c.h.b16 %v3908
        %v4922 = vunpack.c.l.b16 %v3909
        %v4923 = vunpack.c.h.b16 %v3909
        %v4924 = vunpack.c.l.b16 %v3910
        %v4925 = vunpack.c.h.b16 %v3910
        %v4926 = vunpack.c.l.b16 %v3911
        %v4927 = vunpack.c.h.b16 %v3911
        %v4928 = vunpack.c.l.b16 %v3912
        %v4929 = vunpack.c.h.b16 %v3912
        %v4930 = vunpack.c.l.b16 %v3913
        %v4931 = vunpack.c.h.b16 %v3913
        %v4932 = vunpack.c.l.b16 %v3914
        %v4933 = vunpack.c.h.b16 %v3914
        %v4934 = vunpack.c.l.b16 %v3915
        %v4935 = vunpack.c.h.b16 %v3915
        %v4936 = vunpack.c.l.b16 %v3916
        %v4937 = vunpack.c.h.b16 %v3916
        %v4938 = vunpack.c.l.b16 %v3917
        %v4939 = vunpack.c.h.b16 %v3917
        %v4940 = vunpack.c.l.b16 %v3918
        %v4941 = vunpack.c.h.b16 %v3918
        %v4942 = vunpack.c.l.b16 %v3919
        %v4943 = vunpack.c.h.b16 %v3919
        %v4944 = vunpack.c.l.b16 %v3920
        %v4945 = vunpack.c.h.b16 %v3920
        %v4946 = vunpack.c.l.b16 %v3921
        %v4947 = vunpack.c.h.b16 %v3921
        %v4948 = vunpack.c.l.b16 %v3922
        %v4949 = vunpack.c.h.b16 %v3922
        %v4950 = vunpack.c.l.b16 %v3923
        %v4951 = vunpack.c.h.b16 %v3923
        %v4952 = vunpack.c.l.b16 %v3924
        %v4953 = vunpack.c.h.b16 %v3924
        %v4954 = vunpack.c.l.b16 %v3925
        %v4955 = vunpack.c.h.b16 %v3925
        %v4956 = vunpack.c.l.b16 %v3926
        %v4957 = vunpack.c.h.b16 %v3926
        %v4958 = vunpack.c.l.b16 %v3927
        %v4959 = vunpack.c.h.b16 %v3927
        %v4960 = vunpack.c.l.b16 %v3928
        %v4961 = vunpack.c.h.b16 %v3928
        %v4962 = vunpack.c.l.b16 %v3929
        %v4963 = vunpack.c.h.b16 %v3929
        %v4964 = vunpack.c.l.b16 %v3930
        %v4965 = vunpack.c.h.b16 %v3930
        %v4966 = vunpack.c.l.b16 %v3931
        %v4967 = vunpack.c.h.b16 %v3931
        %v4968 = vunpack.c.l.b16 %v3932
        %v4969 = vunpack.c.h.b16 %v3932
        %v4970 = vunpack.c.l.b16 %v3933
        %v4971 = vunpack.c.h.b16 %v3933
        %v4972 = vunpack.c.l.b16 %v3934
        %v4973 = vunpack.c.h.b16 %v3934
        %v4974 = vunpack.c.l.b16 %v3935
        %v4975 = vunpack.c.h.b16 %v3935
        %v4976 = vunpack.c.l.b16 %v3936
        %v4977 = vunpack.c.h.b16 %v3936
        %v4978 = vunpack.c.l.b16 %v3937
        %v4979 = vunpack.c.h.b16 %v3937
        %v4980 = vunpack.c.l.b16 %v3938
        %v4981 = vunpack.c.h.b16 %v3938
        %v4982 = vunpack.c.l.b16 %v3939
        %v4983 = vunpack.c.h.b16 %v3939
        %v4984 = vunpack.c.l.b16 %v3940
        %v4985 = vunpack.c.h.b16 %v3940
        %v4986 = vunpack.c.l.b16 %v3941
        %v4987 = vunpack.c.h.b16 %v3941
        %v4988 = vunpack.c.l.b16 %v3942
        %v4989 = vunpack.c.h.b16 %v3942
        %v4990 = vunpack.c.l.b16 %v3943
        %v4991 = vunpack.c.h.b16 %v3943
        %v4992 = vunpack.c.l.b16 %v3944
        %v4993 = vunpack.c.h.b16 %v3944
        %v4994 = vunpack.c.l.b16 %v3945
        %v4995 = vunpack.c.h.b16 %v3945
        %v4996 = vunpack.c.l.b16 %v3946
        %v4997 = vunpack.c.h.b16 %v3946
        %v4998 = vunpack.c.l.b16 %v3947
        %v4999 = vunpack.c.h.b16 %v3947
        %v5000 = vunpack.c.l.b16 %v3948
        %v5001 = vunpack.c.h.b16 %v3948
        %v5002 = vunpack.c.l.b16 %v3949
        %v5003 = vunpack.c.h.b16 %v3949
        %v5004 = vunpack.c.l.b16 %v3950
        %v5005 = vunpack.c.h.b16 %v3950
        %v5006 = vunpack.c.l.b16 %v3951
        %v5007 = vunpack.c.h.b16 %v3951
        %v5008 = vunpack.c.l.b16 %v3952
        %v5009 = vunpack.c.h.b16 %v3952
        %v5010 = vunpack.c.l.b16 %v3953
        %v5011 = vunpack.c.h.b16 %v3953
        %v5012 = vunpack.c.l.b16 %v3954
        %v5013 = vunpack.c.h.b16 %v3954
        %v5014 = vunpack.c.l.b16 %v3955
        %v5015 = vunpack.c.h.b16 %v3955
        %v5016 = vunpack.c.l.b16 %v3956
        %v5017 = vunpack.c.h.b16 %v3956
        %v5018 = vunpack.c.l.b16 %v3957
        %v5019 = vunpack.c.h.b16 %v3957
        %v5020 = vunpack.c.l.b16 %v3958
        %v5021 = vunpack.c.h.b16 %v3958
        %v5022 = vunpack.c.l.b16 %v3959
        %v5023 = vunpack.c.h.b16 %v3959
        %v5024 = vunpack.c.l.b16 %v3960
        %v5025 = vunpack.c.h.b16 %v3960
        %v5026 = vunpack.c.l.b16 %v3961
        %v5027 = vunpack.c.h.b16 %v3961
        %v5028 = vunpack.c.l.b16 %v3962
        %v5029 = vunpack.c.h.b16 %v3962
        %v5030 = vunpack.c.l.b16 %v3963
        %v5031 = vunpack.c.h.b16 %v3963
        %v5032 = vunpack.c.l.b16 %v3964
        %v5033 = vunpack.c.h.b16 %v3964
        %v5034 = vunpack.c.l.b16 %v3965
        %v5035 = vunpack.c.h.b16 %v3965
        %v5036 = vunpack.c.l.b16 %v3966
        %v5037 = vunpack.c.h.b16 %v3966
        %v5038 = vunpack.c.l.b16 %v3967
        %v5039 = vunpack.c.h.b16 %v3967
        %v5040 = vunpack.c.l.b16 %v3968
        %v5041 = vunpack.c.h.b16 %v3968
        %v5042 = vunpack.c.l.b16 %v3969
        %v5043 = vunpack.c.h.b16 %v3969
        %v5044 = vunpack.c.l.b16 %v3970
        %v5045 = vunpack.c.h.b16 %v3970
        %v5046 = vunpack.c.l.b16 %v3971
        %v5047 = vunpack.c.h.b16 %v3971
        %v5048 = vunpack.c.l.b16 %v3972
        %v5049 = vunpack.c.h.b16 %v3972
        %v5050 = vunpack.c.l.b16 %v3973
        %v5051 = vunpack.c.h.b16 %v3973
        %v5052 = vunpack.c.l.b16 %v3974
        %v5053 = vunpack.c.h.b16 %v3974
        %v5054 = vunpack.c.l.b16 %v3975
        %v5055 = vunpack.c.h.b16 %v3975
        %v5056 = vunpack.c.l.b16 %v3976
        %v5057 = vunpack.c.h.b16 %v3976
        %v5058 = vunpack.c.l.b16 %v3977
        %v5059 = vunpack.c.h.b16 %v3977
        %v5060 = vunpack.c.l.b16 %v3978
        %v5061 = vunpack.c.h.b16 %v3978
        %v5062 = vunpack.c.l.b16 %v3979
        %v5063 = vunpack.c.h.b16 %v3979
        %v5064 = vunpack.c.l.b16 %v3980
        %v5065 = vunpack.c.h.b16 %v3980
        %v5066 = vunpack.c.l.b16 %v3981
        %v5067 = vunpack.c.h.b16 %v3981
        %v5068 = vunpack.c.l.b16 %v3982
        %v5069 = vunpack.c.h.b16 %v3982
        %v5070 = vunpack.c.l.b16 %v3983
        %v5071 = vunpack.c.h.b16 %v3983
        %v5072 = vunpack.c.l.b16 %v3984
        %v5073 = vunpack.c.h.b16 %v3984
        %v5074 = vunpack.c.l.b16 %v3985
        %v5075 = vunpack.c.h.b16 %v3985
        %v5076 = vunpack.c.l.b16 %v3986
        %v5077 = vunpack.c.h.b16 %v3986
        %v5078 = vunpack.c.l.b16 %v3987
        %v5079 = vunpack.c.h.b16 %v3987
        %v5080 = vunpack.c.l.b16 %v3988
        %v5081 = vunpack.c.h.b16 %v3988
        %v5082 = vunpack.c.l.b16 %v3989
        %v5083 = vunpack.c.h.b16 %v3989
        %v5084 = vunpack.c.l.b16 %v3990
        %v5085 = vunpack.c.h.b16 %v3990
        %v5086 = vunpack.c.l.b16 %v3991
        %v5087 = vunpack.c.h.b16 %v3991
        %v5088 = vunpack.c.l.b16 %v3992
        %v5089 = vunpack.c.h.b16 %v3992
        %v5090 = vunpack.c.l.b16 %v3993
        %v5091 = vunpack.c.h.b16 %v3993
        %v5092 = vunpack.c.l.b16 %v3994
        %v5093 = vunpack.c.h.b16 %v3994
        %v5094 = vunpack.c.l.b16 %v3995
        %v5095 = vunpack.c.h.b16 %v3995
        %v5096 = vunpack.c.l.b16 %v3996
        %v5097 = vunpack.c.h.b16 %v3996
        %v5098 = vunpack.c.l.b16 %v3997
        %v5099 = vunpack.c.h.b16 %v3997
        %v5100 = vunpack.c.l.b16 %v3998
        %v5101 = vunpack.c.h.b16 %v3998
        %v5102 = vunpack.c.l.b16 %v3999
        %v5103 = vunpack.c.h.b16 %v3999
        %v5104 = vunpack.c.l.b16 %v4000
        %v5105 = vunpack.c.h.b16 %v4000
        %v5106 = vunpack.c.l.b16 %v4001
        %v5107 = vunpack.c.h.b16 %v4001
        %v5108 = vunpack.c.l.b16 %v4002
        %v5109 = vunpack.c.h.b16 %v4002
        %v5110 = vunpack.c.l.b16 %v4003
        %v5111 = vunpack.c.h.b16 %v4003
        %v5112 = vunpack.c.l.b16 %v4004
        %v5113 = vunpack.c.h.b16 %v4004
        %v5114 = vunpack.c.l.b16 %v4005
        %v5115 = vunpack.c.h.b16 %v4005
        %v5116 = vunpack.c.l.b16 %v4006
        %v5117 = vunpack.c.h.b16 %v4006
        %v5118 = vunpack.c.l.b16 %v4007
        %v5119 = vunpack.c.h.b16 %v4007
        %v5120 = vunpack.c.l.b16 %v4008
        %v5121 = vunpack.c.h.b16 %v4008
        %v5122 = vunpack.c.l.b16 %v4009
        %v5123 = vunpack.c.h.b16 %v4009
        %v5124 = vunpack.c.l.b16 %v4010
        %v5125 = vunpack.c.h.b16 %v4010
        %v5126 = vunpack.c.l.b16 %v4011
        %v5127 = vunpack.c.h.b16 %v4011
        %v5128 = vunpack.c.l.b16 %v4012
        %v5129 = vunpack.c.h.b16 %v4012
        %v5130 = vunpack.c.l.b16 %v4013
        %v5131 = vunpack.c.h.b16 %v4013
        %v5132 = vunpack.c.l.b16 %v4014
        %v5133 = vunpack.c.h.b16 %v4014
        %v5134 = vunpack.c.l.b16 %v4015
        %v5135 = vunpack.c.h.b16 %v4015
        %v5136 = vunpack.c.l.b16 %v4016
        %v5137 = vunpack.c.h.b16 %v4016
        %v5138 = vunpack.c.l.b16 %v4017
        %v5139 = vunpack.c.h.b16 %v4017
        %v5140 = vunpack.c.l.b16 %v4018
        %v5141 = vunpack.c.h.b16 %v4018
        %v5142 = vunpack.c.l.b16 %v4019
        %v5143 = vunpack.c.h.b16 %v4019
        %v5144 = vunpack.c.l.b16 %v4020
        %v5145 = vunpack.c.h.b16 %v4020
        %v5146 = vunpack.c.l.b16 %v4021
        %v5147 = vunpack.c.h.b16 %v4021
        %v5148 = vunpack.c.l.b16 %v4022
        %v5149 = vunpack.c.h.b16 %v4022
        %v5150 = vunpack.c.l.b16 %v4023
        %v5151 = vunpack.c.h.b16 %v4023
        %v5152 = vunpack.c.l.b16 %v4024
        %v5153 = vunpack.c.h.b16 %v4024
        %v5154 = vunpack.c.l.b16 %v4025
        %v5155 = vunpack.c.h.b16 %v4025
        %v5156 = vunpack.c.l.b16 %v4026
        %v5157 = vunpack.c.h.b16 %v4026
        %v5158 = vunpack.c.l.b16 %v4027
        %v5159 = vunpack.c.h.b16 %v4027
        %v5160 = vunpack.c.l.b16 %v4028
        %v5161 = vunpack.c.h.b16 %v4028
        %v5162 = vunpack.c.l.b16 %v4029
        %v5163 = vunpack.c.h.b16 %v4029
        %v5164 = vunpack.c.l.b16 %v4030
        %v5165 = vunpack.c.h.b16 %v4030
        %v5166 = vunpack.c.l.b16 %v4031
        %v5167 = vunpack.c.h.b16 %v4031
        %v5168 = vunpack.c.l.b16 %v4032
        %v5169 = vunpack.c.h.b16 %v4032
        %v5170 = vunpack.c.l.b16 %v4033
        %v5171 = vunpack.c.h.b16 %v4033
        %v5172 = vunpack.c.l.b16 %v4034
        %v5173 = vunpack.c.h.b16 %v4034
        %v5174 = vunpack.c.l.b16 %v4035
        %v5175 = vunpack.c.h.b16 %v4035
        %v5176 = vunpack.c.l.b16 %v4036
        %v5177 = vunpack.c.h.b16 %v4036
        %v5178 = vunpack.c.l.b16 %v4037
        %v5179 = vunpack.c.h.b16 %v4037
        %v5180 = vunpack.c.l.b16 %v4038
        %v5181 = vunpack.c.h.b16 %v4038
        %v5182 = vunpack.c.l.b16 %v4039
        %v5183 = vunpack.c.h.b16 %v4039
        %v5184 = vunpack.c.l.b16 %v4040
        %v5185 = vunpack.c.h.b16 %v4040
        %v5186 = vunpack.c.l.b16 %v4041
        %v5187 = vunpack.c.h.b16 %v4041
        %v5188 = vunpack.c.l.b16 %v4042
        %v5189 = vunpack.c.h.b16 %v4042
        %v5190 = vunpack.c.l.b16 %v4043
        %v5191 = vunpack.c.h.b16 %v4043
        %v5192 = vunpack.c.l.b16 %v4044
        %v5193 = vunpack.c.h.b16 %v4044
        %v5194 = vunpack.c.l.b16 %v4045
        %v5195 = vunpack.c.h.b16 %v4045
        %v5196 = vunpack.c.l.b16 %v4046
        %v5197 = vunpack.c.h.b16 %v4046
        %v5198 = vunpack.c.l.b16 %v4047
        %v5199 = vunpack.c.h.b16 %v4047
        %v5200 = vunpack.c.l.b16 %v4048
        %v5201 = vunpack.c.h.b16 %v4048
        %v5202 = vunpack.c.l.b16 %v4049
        %v5203 = vunpack.c.h.b16 %v4049
        %v5204 = vunpack.c.l.b16 %v4050
        %v5205 = vunpack.c.h.b16 %v4050
        %v5206 = vunpack.c.l.b16 %v4051
        %v5207 = vunpack.c.h.b16 %v4051
        %v5208 = vunpack.c.l.b16 %v4052
        %v5209 = vunpack.c.h.b16 %v4052
        %v5210 = vunpack.c.l.b16 %v4053
        %v5211 = vunpack.c.h.b16 %v4053
        %v5212 = vunpack.c.l.b16 %v4054
        %v5213 = vunpack.c.h.b16 %v4054
        %v5214 = vunpack.c.l.b16 %v4055
        %v5215 = vunpack.c.h.b16 %v4055
        %v5216 = vunpack.c.l.b16 %v4056
        %v5217 = vunpack.c.h.b16 %v4056
        %v5218 = vunpack.c.l.b16 %v4057
        %v5219 = vunpack.c.h.b16 %v4057
        %v5220 = vunpack.c.l.b16 %v4058
        %v5221 = vunpack.c.h.b16 %v4058
        %v5222 = vunpack.c.l.b16 %v4059
        %v5223 = vunpack.c.h.b16 %v4059
        %v5224 = vunpack.c.l.b16 %v4060
        %v5225 = vunpack.c.h.b16 %v4060
        %v5226 = vunpack.c.l.b16 %v4061
        %v5227 = vunpack.c.h.b16 %v4061
        %v5228 = vunpack.c.l.b16 %v4062
        %v5229 = vunpack.c.h.b16 %v4062
        %v5230 = vunpack.c.l.b16 %v4063
        %v5231 = vunpack.c.h.b16 %v4063
        %v5232 = vunpack.c.l.b16 %v4064
        %v5233 = vunpack.c.h.b16 %v4064
        %v5234 = vunpack.c.l.b16 %v4065
        %v5235 = vunpack.c.h.b16 %v4065
        %v5236 = vunpack.c.l.b16 %v4066
        %v5237 = vunpack.c.h.b16 %v4066
        %v5238 = vunpack.c.l.b16 %v4067
        %v5239 = vunpack.c.h.b16 %v4067
        %v5240 = vunpack.c.l.b16 %v4068
        %v5241 = vunpack.c.h.b16 %v4068
        %v5242 = vunpack.c.l.b16 %v4069
        %v5243 = vunpack.c.h.b16 %v4069
        %v5244 = vunpack.c.l.b16 %v4070
        %v5245 = vunpack.c.h.b16 %v4070
        %v5246 = vunpack.c.l.b16 %v4071
        %v5247 = vunpack.c.h.b16 %v4071
        %v5248 = vunpack.c.l.b16 %v4072
        %v5249 = vunpack.c.h.b16 %v4072
        %v5250 = vunpack.c.l.b16 %v4073
        %v5251 = vunpack.c.h.b16 %v4073
        %v5252 = vunpack.c.l.b16 %v4074
        %v5253 = vunpack.c.h.b16 %v4074
        %v5254 = vunpack.c.l.b16 %v4075
        %v5255 = vunpack.c.h.b16 %v4075
        %v5256 = vunpack.c.l.b16 %v4076
        %v5257 = vunpack.c.h.b16 %v4076
        %v5258 = vunpack.c.l.b16 %v4077
        %v5259 = vunpack.c.h.b16 %v4077
        %v5260 = vunpack.c.l.b16 %v4078
        %v5261 = vunpack.c.h.b16 %v4078
        %v5262 = vunpack.c.l.b16 %v4079
        %v5263 = vunpack.c.h.b16 %v4079
        %v5264 = vunpack.c.l.b16 %v4080
        %v5265 = vunpack.c.h.b16 %v4080
        %v5266 = vunpack.c.l.b16 %v4081
        %v5267 = vunpack.c.h.b16 %v4081
        %v5268 = vunpack.c.l.b16 %v4082
        %v5269 = vunpack.c.h.b16 %v4082
        %v5270 = vunpack.c.l.b16 %v4083
        %v5271 = vunpack.c.h.b16 %v4083
        %v5272 = vunpack.c.l.b16 %v4084
        %v5273 = vunpack.c.h.b16 %v4084
        %v5274 = vunpack.c.l.b16 %v4085
        %v5275 = vunpack.c.h.b16 %v4085
        %v5276 = vunpack.c.l.b16 %v4086
        %v5277 = vunpack.c.h.b16 %v4086
        %v5278 = vunpack.c.l.b16 %v4087
        %v5279 = vunpack.c.h.b16 %v4087
        %v5280 = vunpack.c.l.b16 %v4088
        %v5281 = vunpack.c.h.b16 %v4088
        %v5282 = vunpack.c.l.b16 %v4089
        %v5283 = vunpack.c.h.b16 %v4089
        %v5284 = vunpack.c.l.b16 %v4090
        %v5285 = vunpack.c.h.b16 %v4090
        %v5286 = vunpack.c.l.b16 %v4091
        %v5287 = vunpack.c.h.b16 %v4091
        %v5288 = vunpack.c.l.b16 %v4092
        %v5289 = vunpack.c.h.b16 %v4092
        %v5290 = vunpack.c.l.b16 %v4093
        %v5291 = vunpack.c.h.b16 %v4093
        %v5292 = vunpack.c.l.b16 %v4094
        %v5293 = vunpack.c.h.b16 %v4094
        %v5294 = vunpack.c.l.b16 %v4095
        %v5295 = vunpack.c.h.b16 %v4095
        %v5296 = vunpack.c.l.b16 %v4096
        %v5297 = vunpack.c.h.b16 %v4096
        %v5298 = vunpack.c.l.b16 %v4097
        %v5299 = vunpack.c.h.b16 %v4097
        %v5300 = vunpack.c.l.b16 %v4098
        %v5301 = vunpack.c.h.b16 %v4098
        %v5302 = vunpack.c.l.b16 %v4099
        %v5303 = vunpack.c.h.b16 %v4099
        %v5304 = vunpack.c.l.b16 %v4100
        %v5305 = vunpack.c.h.b16 %v4100
        %v5306 = vunpack.c.l.b16 %v4101
        %v5307 = vunpack.c.h.b16 %v4101
        %v5308 = vunpack.c.l.b16 %v4102
        %v5309 = vunpack.c.h.b16 %v4102
        %v5310 = vunpack.c.l.b16 %v4103
        %v5311 = vunpack.c.h.b16 %v4103
        %v5312 = vunpack.c.l.b16 %v4104
        %v5313 = vunpack.c.h.b16 %v4104
        %v5314 = vunpack.c.l.b16 %v4105
        %v5315 = vunpack.c.h.b16 %v4105
        %v5316 = vunpack.c.l.b16 %v4106
        %v5317 = vunpack.c.h.b16 %v4106
        %v5318 = vunpack.c.l.b16 %v4107
        %v5319 = vunpack.c.h.b16 %v4107
        %v5320 = vunpack.c.l.b16 %v4108
        %v5321 = vunpack.c.h.b16 %v4108
        %v5322 = vunpack.c.l.b16 %v4109
        %v5323 = vunpack.c.h.b16 %v4109
        %v5324 = vunpack.c.l.b16 %v4110
        %v5325 = vunpack.c.h.b16 %v4110
        %v5326 = vunpack.c.l.b16 %v4111
        %v5327 = vunpack.c.h.b16 %v4111
        %v5328 = vunpack.c.l.b16 %v4112
        %v5329 = vunpack.c.h.b16 %v4112
        %v5330 = vunpack.c.l.b16 %v4113
        %v5331 = vunpack.c.h.b16 %v4113
        %v5332 = vunpack.c.l.b16 %v4114
        %v5333 = vunpack.c.h.b16 %v4114
        %v5334 = vunpack.c.l.b16 %v4115
        %v5335 = vunpack.c.h.b16 %v4115
        %v5336 = vunpack.c.l.b16 %v4116
        %v5337 = vunpack.c.h.b16 %v4116
        %v5338 = vunpack.c.l.b16 %v4117
        %v5339 = vunpack.c.h.b16 %v4117
        %v5340 = vunpack.c.l.b16 %v4118
        %v5341 = vunpack.c.h.b16 %v4118
        %v5342 = vunpack.c.l.b16 %v4119
        %v5343 = vunpack.c.h.b16 %v4119
        %v5344 = vunpack.c.l.b16 %v4120
        %v5345 = vunpack.c.h.b16 %v4120
        %v5346 = vunpack.c.l.b16 %v4121
        %v5347 = vunpack.c.h.b16 %v4121
        %v5348 = vunpack.c.l.b16 %v4122
        %v5349 = vunpack.c.h.b16 %v4122
        %v5350 = vunpack.c.l.b16 %v4123
        %v5351 = vunpack.c.h.b16 %v4123
        %v5352 = vunpack.c.l.b16 %v4124
        %v5353 = vunpack.c.h.b16 %v4124
        %v5354 = vunpack.c.l.b16 %v4125
        %v5355 = vunpack.c.h.b16 %v4125
        %v5356 = vunpack.c.l.b16 %v4126
        %v5357 = vunpack.c.h.b16 %v4126
        %v5358 = vunpack.c.l.b16 %v4127
        %v5359 = vunpack.c.h.b16 %v4127
        %v5360 = vunpack.c.l.b16 %v4128
        %v5361 = vunpack.c.h.b16 %v4128
        %v5362 = vunpack.c.l.b16 %v4129
        %v5363 = vunpack.c.h.b16 %v4129
        %v5364 = vunpack.c.l.b16 %v4130
        %v5365 = vunpack.c.h.b16 %v4130
        %v5366 = vunpack.c.l.b16 %v4131
        %v5367 = vunpack.c.h.b16 %v4131
        %v5368 = vunpack.c.l.b16 %v4132
        %v5369 = vunpack.c.h.b16 %v4132
        %v5370 = vunpack.c.l.b16 %v4133
        %v5371 = vunpack.c.h.b16 %v4133
        %v5372 = vunpack.c.l.b16 %v4134
        %v5373 = vunpack.c.h.b16 %v4134
        %v5374 = vunpack.c.l.b16 %v4135
        %v5375 = vunpack.c.h.b16 %v4135
        %v5376 = vunpack.c.l.b16 %v4136
        %v5377 = vunpack.c.h.b16 %v4136
        %v5378 = vunpack.c.l.b16 %v4137
        %v5379 = vunpack.c.h.b16 %v4137
        %v5380 = vunpack.c.l.b16 %v4138
        %v5381 = vunpack.c.h.b16 %v4138
        %v5382 = vunpack.c.l.b16 %v4139
        %v5383 = vunpack.c.h.b16 %v4139
        %v5384 = vunpack.c.l.b16 %v4140
        %v5385 = vunpack.c.h.b16 %v4140
        %v5386 = vunpack.c.l.b16 %v4141
        %v5387 = vunpack.c.h.b16 %v4141
        %v5388 = vunpack.c.l.b16 %v4142
        %v5389 = vunpack.c.h.b16 %v4142
        %v5390 = vunpack.c.l.b16 %v4143
        %v5391 = vunpack.c.h.b16 %v4143
        %v5392 = vunpack.c.l.b16 %v4144
        %v5393 = vunpack.c.h.b16 %v4144
        %v5394 = vunpack.c.l.b16 %v4145
        %v5395 = vunpack.c.h.b16 %v4145
        %v5396 = vunpack.c.l.b16 %v4146
        %v5397 = vunpack.c.h.b16 %v4146
        %v5398 = vunpack.c.l.b16 %v4147
        %v5399 = vunpack.c.h.b16 %v4147
        %v5400 = vunpack.c.l.b16 %v4148
        %v5401 = vunpack.c.h.b16 %v4148
        %v5402 = vunpack.c.l.b16 %v4149
        %v5403 = vunpack.c.h.b16 %v4149
        %v5404 = vpack.c.b16 %v4614, %v4604
        %v5405 = vpack.c.b16 %v4615, %v4605
        %v5406 = vpack.c.b16 %v4616, %v4606
        %v5407 = vpack.c.b16 %v4617, %v4607
        %v5408 = vpack.c.b16 %v4618, %v4608
        %v5409 = vpack.c.b16 %v4619, %v4609
        %v5410 = vpack.c.b16 %v4620, %v4610
        %v5411 = vpack.c.b16 %v4621, %v4611
        %v5412 = vpack.c.b16 %v4622, %v4612
        %v5413 = vpack.c.b16 %v4623, %v4613
        %v5414 = vpack.c.b16 %v4634, %v4624
        %v5415 = vpack.c.b16 %v4635, %v4625
        %v5416 = vpack.c.b16 %v4636, %v4626
        %v5417 = vpack.c.b16 %v4637, %v4627
        %v5418 = vpack.c.b16 %v4638, %v4628
        %v5419 = vpack.c.b16 %v4639, %v4629
        %v5420 = vpack.c.b16 %v4640, %v4630
        %v5421 = vpack.c.b16 %v4641, %v4631
        %v5422 = vpack.c.b16 %v4642, %v4632
        %v5423 = vpack.c.b16 %v4643, %v4633
        %v5424 = vpack.c.b16 %v4654, %v4644
        %v5425 = vpack.c.b16 %v4655, %v4645
        %v5426 = vpack.c.b16 %v4656, %v4646
        %v5427 = vpack.c.b16 %v4657, %v4647
        %v5428 = vpack.c.b16 %v4658, %v4648
        %v5429 = vpack.c.b16 %v4659, %v4649
        %v5430 = vpack.c.b16 %v4660, %v4650
        %v5431 = vpack.c.b16 %v4661, %v4651
        %v5432 = vpack.c.b16 %v4662, %v4652
        %v5433 = vpack.c.b16 %v4663, %v4653
        %v5434 = vpack.c.b16 %v4674, %v4664
        %v5435 = vpack.c.b16 %v4675, %v4665
        %v5436 = vpack.c.b16 %v4676, %v4666
        %v5437 = vpack.c.b16 %v4677, %v4667
        %v5438 = vpack.c.b16 %v4678, %v4668
        %v5439 = vpack.c.b16 %v4679, %v4669
        %v5440 = vpack.c.b16 %v4680, %v4670
        %v5441 = vpack.c.b16 %v4681, %v4671
        %v5442 = vpack.c.b16 %v4682, %v4672
        %v5443 = vpack.c.b16 %v4683, %v4673
        %v5444 = vpack.c.b16 %v4694, %v4684
        %v5445 = vpack.c.b16 %v4695, %v4685
        %v5446 = vpack.c.b16 %v4696, %v4686
        %v5447 = vpack.c.b16 %v4697, %v4687
        %v5448 = vpack.c.b16 %v4698, %v4688
        %v5449 = vpack.c.b16 %v4699, %v4689
        %v5450 = vpack.c.b16 %v4700, %v4690
        %v5451 = vpack.c.b16 %v4701, %v4691
        %v5452 = vpack.c.b16 %v4702, %v4692
        %v5453 = vpack.c.b16 %v4703, %v4693
        %v5454 = vpack.c.b16 %v4714, %v4704
        %v5455 = vpack.c.b16 %v4715, %v4705
        %v5456 = vpack.c.b16 %v4716, %v4706
        %v5457 = vpack.c.b16 %v4717, %v4707
        %v5458 = vpack.c.b16 %v4718, %v4708
        %v5459 = vpack.c.b16 %v4719, %v4709
        %v5460 = vpack.c.b16 %v4720, %v4710
        %v5461 = vpack.c.b16 %v4721, %v4711
        %v5462 = vpack.c.b16 %v4722, %v4712
        %v5463 = vpack.c.b16 %v4723, %v4713
        %v5464 = vpack.c.b16 %v4734, %v4724
        %v5465 = vpack.c.b16 %v4735, %v4725
        %v5466 = vpack.c.b16 %v4736, %v4726
        %v5467 = vpack.c.b16 %v4737, %v4727
        %v5468 = vpack.c.b16 %v4738, %v4728
        %v5469 = vpack.c.b16 %v4739, %v4729
        %v5470 = vpack.c.b16 %v4740, %v4730
        %v5471 = vpack.c.b16 %v4741, %v4731
        %v5472 = vpack.c.b16 %v4742, %v4732
        %v5473 = vpack.c.b16 %v4743, %v4733
        %v5474 = vpack.c.b16 %v4754, %v4744
        %v5475 = vpack.c.b16 %v4755, %v4745
        %v5476 = vpack.c.b16 %v4756, %v4746
        %v5477 = vpack.c.b16 %v4757, %v4747
        %v5478 = vpack.c.b16 %v4758, %v4748
        %v5479 = vpack.c.b16 %v4759, %v4749
        %v5480 = vpack.c.b16 %v4760, %v4750
        %v5481 = vpack.c.b16 %v4761, %v4751
        %v5482 = vpack.c.b16 %v4762, %v4752
        %v5483 = vpack.c.b16 %v4763, %v4753
        %v5484 = vpack.c.b16 %v4774, %v4764
        %v5485 = vpack.c.b16 %v4775, %v4765
        %v5486 = vpack.c.b16 %v4776, %v4766
        %v5487 = vpack.c.b16 %v4777, %v4767
        %v5488 = vpack.c.b16 %v4778, %v4768
        %v5489 = vpack.c.b16 %v4779, %v4769
        %v5490 = vpack.c.b16 %v4780, %v4770
        %v5491 = vpack.c.b16 %v4781, %v4771
        %v5492 = vpack.c.b16 %v4782, %v4772
        %v5493 = vpack.c.b16 %v4783, %v4773
        %v5494 = vpack.c.b16 %v4794, %v4784
        %v5495 = vpack.c.b16 %v4795, %v4785
        %v5496 = vpack.c.b16 %v4796, %v4786
        %v5497 = vpack.c.b16 %v4797, %v4787
        %v5498 = vpack.c.b16 %v4798, %v4788
        %v5499 = vpack.c.b16 %v4799, %v4789
        %v5500 = vpack.c.b16 %v4800, %v4790
        %v5501 = vpack.c.b16 %v4801, %v4791
        %v5502 = vpack.c.b16 %v4802, %v4792
        %v5503 = vpack.c.b16 %v4803, %v4793
        %v5504 = vpack.c.b16 %v4814, %v4804
        %v5505 = vpack.c.b16 %v4815, %v4805
        %v5506 = vpack.c.b16 %v4816, %v4806
        %v5507 = vpack.c.b16 %v4817, %v4807
        %v5508 = vpack.c.b16 %v4818, %v4808
        %v5509 = vpack.c.b16 %v4819, %v4809
        %v5510 = vpack.c.b16 %v4820, %v4810
        %v5511 = vpack.c.b16 %v4821, %v4811
        %v5512 = vpack.c.b16 %v4822, %v4812
        %v5513 = vpack.c.b16 %v4823, %v4813
        %v5514 = vpack.c.b16 %v4834, %v4824
        %v5515 = vpack.c.b16 %v4835, %v4825
        %v5516 = vpack.c.b16 %v4836, %v4826
        %v5517 = vpack.c.b16 %v4837, %v4827
        %v5518 = vpack.c.b16 %v4838, %v4828
        %v5519 = vpack.c.b16 %v4839, %v4829
        %v5520 = vpack.c.b16 %v4840, %v4830
        %v5521 = vpack.c.b16 %v4841, %v4831
        %v5522 = vpack.c.b16 %v4842, %v4832
        %v5523 = vpack.c.b16 %v4843, %v4833
        %v5524 = vpack.c.b16 %v4854, %v4844
        %v5525 = vpack.c.b16 %v4855, %v4845
        %v5526 = vpack.c.b16 %v4856, %v4846
        %v5527 = vpack.c.b16 %v4857, %v4847
        %v5528 = vpack.c.b16 %v4858, %v4848
        %v5529 = vpack.c.b16 %v4859, %v4849
        %v5530 = vpack.c.b16 %v4860, %v4850
        %v5531 = vpack.c.b16 %v4861, %v4851
        %v5532 = vpack.c.b16 %v4862, %v4852
        %v5533 = vpack.c.b16 %v4863, %v4853
        %v5534 = vpack.c.b16 %v4874, %v4864
        %v5535 = vpack.c.b16 %v4875, %v4865
        %v5536 = vpack.c.b16 %v4876, %v4866
        %v5537 = vpack.c.b16 %v4877, %v4867
        %v5538 = vpack.c.b16 %v4878, %v4868
        %v5539 = vpack.c.b16 %v4879, %v4869
        %v5540 = vpack.c.b16 %v4880, %v4870
        %v5541 = vpack.c.b16 %v4881, %v4871
        %v5542 = vpack.c.b16 %v4882, %v4872
        %v5543 = vpack.c.b16 %v4883, %v4873
        %v5544 = vpack.c.b16 %v4894, %v4884
        %v5545 = vpack.c.b16 %v4895, %v4885
        %v5546 = vpack.c.b16 %v4896, %v4886
        %v5547 = vpack.c.b16 %v4897, %v4887
        %v5548 = vpack.c.b16 %v4898, %v4888
        %v5549 = vpack.c.b16 %v4899, %v4889
        %v5550 = vpack.c.b16 %v4900, %v4890
        %v5551 = vpack.c.b16 %v4901, %v4891
        %v5552 = vpack.c.b16 %v4902, %v4892
        %v5553 = vpack.c.b16 %v4903, %v4893
        %v5554 = vpack.c.b16 %v4914, %v4904
        %v5555 = vpack.c.b16 %v4915, %v4905
        %v5556 = vpack.c.b16 %v4916, %v4906
        %v5557 = vpack.c.b16 %v4917, %v4907
        %v5558 = vpack.c.b16 %v4918, %v4908
        %v5559 = vpack.c.b16 %v4919, %v4909
        %v5560 = vpack.c.b16 %v4920, %v4910
        %v5561 = vpack.c.b16 %v4921, %v4911
        %v5562 = vpack.c.b16 %v4922, %v4912
        %v5563 = vpack.c.b16 %v4923, %v4913
        %v5564 = vpack.c.b16 %v4934, %v4924
        %v5565 = vpack.c.b16 %v4935, %v4925
        %v5566 = vpack.c.b16 %v4936, %v4926
        %v5567 = vpack.c.b16 %v4937, %v4927
        %v5568 = vpack.c.b16 %v4938, %v4928
        %v5569 = vpack.c.b16 %v4939, %v4929
        %v5570 = vpack.c.b16 %v4940, %v4930
        %v5571 = vpack.c.b16 %v4941, %v4931
        %v5572 = vpack.c.b16 %v4942, %v4932
        %v5573 = vpack.c.b16 %v4943, %v4933
        %v5574 = vpack.c.b16 %v4954, %v4944
        %v5575 = vpack.c.b16 %v4955, %v4945
        %v5576 = vpack.c.b16 %v4956, %v4946
        %v5577 = vpack.c.b16 %v4957, %v4947
        %v5578 = vpack.c.b16 %v4958, %v4948
        %v5579 = vpack.c.b16 %v4959, %v4949
        %v5580 = vpack.c.b16 %v4960, %v4950
        %v5581 = vpack.c.b16 %v4961, %v4951
        %v5582 = vpack.c.b16 %v4962, %v4952
        %v5583 = vpack.c.b16 %v4963, %v4953
        %v5584 = vpack.c.b16 %v4974, %v4964
        %v5585 = vpack.c.b16 %v4975, %v4965
        %v5586 = vpack.c.b16 %v4976, %v4966
        %v5587 = vpack.c.b16 %v4977, %v4967
        %v5588 = vpack.c.b16 %v4978, %v4968
        %v5589 = vpack.c.b16 %v4979, %v4969
        %v5590 = vpack.c.b16 %v4980, %v4970
        %v5591 = vpack.c.b16 %v4981, %v4971
        %v5592 = vpack.c.b16 %v4982, %v4972
        %v5593 = vpack.c.b16 %v4983, %v4973
        %v5594 = vpack.c.b16 %v4994, %v4984
        %v5595 = vpack.c.b16 %v4995, %v4985
        %v5596 = vpack.c.b16 %v4996, %v4986
        %v5597 = vpack.c.b16 %v4997, %v4987
        %v5598 = vpack.c.b16 %v4998, %v4988
        %v5599 = vpack.c.b16 %v4999, %v4989
        %v5600 = vpack.c.b16 %v5000, %v4990
        %v5601 = vpack.c.b16 %v5001, %v4991
        %v5602 = vpack.c.b16 %v5002, %v4992
        %v5603 = vpack.c.b16 %v5003, %v4993
        %v5604 = vpack.c.b16 %v5014, %v5004
        %v5605 = vpack.c.b16 %v5015, %v5005
        %v5606 = vpack.c.b16 %v5016, %v5006
        %v5607 = vpack.c.b16 %v5017, %v5007
        %v5608 = vpack.c.b16 %v5018, %v5008
        %v5609 = vpack.c.b16 %v5019, %v5009
        %v5610 = vpack.c.b16 %v5020, %v5010
        %v5611 = vpack.c.b16 %v5021, %v5011
        %v5612 = vpack.c.b16 %v5022, %v5012
        %v5613 = vpack.c.b16 %v5023, %v5013
        %v5614 = vpack.c.b16 %v5034, %v5024
        %v5615 = vpack.c.b16 %v5035, %v5025
        %v5616 = vpack.c.b16 %v5036, %v5026
        %v5617 = vpack.c.b16 %v5037, %v5027
        %v5618 = vpack.c.b16 %v5038, %v5028
        %v5619 = vpack.c.b16 %v5039, %v5029
        %v5620 = vpack.c.b16 %v5040, %v5030
        %v5621 = vpack.c.b16 %v5041, %v5031
        %v5622 = vpack.c.b16 %v5042, %v5032
        %v5623 = vpack.c.b16 %v5043, %v5033
        %v5624 = vpack.c.b16 %v5054, %v5044
        %v5625 = vpack.c.b16 %v5055, %v5045
        %v5626 = vpack.c.b16 %v5056, %v5046
        %v5627 = vpack.c.b16 %v5057, %v5047
        %v5628 = vpack.c.b16 %v5058, %v5048
        %v5629 = vpack.c.b16 %v5059, %v5049
        %v5630 = vpack.c.b16 %v5060, %v5050
        %v5631 = vpack.c.b16 %v5061, %v5051
        %v5632 = vpack.c.b16 %v5062, %v5052
        %v5633 = vpack.c.b16 %v5063, %v5053
        %v5634 = vpack.c.b16 %v5074, %v5064
        %v5635 = vpack.c.b16 %v5075, %v5065
        %v5636 = vpack.c.b16 %v5076, %v5066
        %v5637 = vpack.c.b16 %v5077, %v5067
        %v5638 = vpack.c.b16 %v5078, %v5068
        %v5639 = vpack.c.b16 %v5079, %v5069
        %v5640 = vpack.c.b16 %v5080, %v5070
        %v5641 = vpack.c.b16 %v5081, %v5071
        %v5642 = vpack.c.b16 %v5082, %v5072
        %v5643 = vpack.c.b16 %v5083, %v5073
        %v5644 = vpack.c.b16 %v5094, %v5084
        %v5645 = vpack.c.b16 %v5095, %v5085
        %v5646 = vpack.c.b16 %v5096, %v5086
        %v5647 = vpack.c.b16 %v5097, %v5087
        %v5648 = vpack.c.b16 %v5098, %v5088
        %v5649 = vpack.c.b16 %v5099, %v5089
        %v5650 = vpack.c.b16 %v5100, %v5090
        %v5651 = vpack.c.b16 %v5101, %v5091
        %v5652 = vpack.c.b16 %v5102, %v5092
        %v5653 = vpack.c.b16 %v5103, %v5093
        %v5654 = vpack.c.b16 %v5114, %v5104
        %v5655 = vpack.c.b16 %v5115, %v5105
        %v5656 = vpack.c.b16 %v5116, %v5106
        %v5657 = vpack.c.b16 %v5117, %v5107
        %v5658 = vpack.c.b16 %v5118, %v5108
        %v5659 = vpack.c.b16 %v5119, %v5109
        %v5660 = vpack.c.b16 %v5120, %v5110
        %v5661 = vpack.c.b16 %v5121, %v5111
        %v5662 = vpack.c.b16 %v5122, %v5112
        %v5663 = vpack.c.b16 %v5123, %v5113
        %v5664 = vpack.c.b16 %v5134, %v5124
        %v5665 = vpack.c.b16 %v5135, %v5125
        %v5666 = vpack.c.b16 %v5136, %v5126
        %v5667 = vpack.c.b16 %v5137, %v5127
        %v5668 = vpack.c.b16 %v5138, %v5128
        %v5669 = vpack.c.b16 %v5139, %v5129
        %v5670 = vpack.c.b16 %v5140, %v5130
        %v5671 = vpack.c.b16 %v5141, %v5131
        %v5672 = vpack.c.b16 %v5142, %v5132
        %v5673 = vpack.c.b16 %v5143, %v5133
        %v5674 = vpack.c.b16 %v5154, %v5144
        %v5675 = vpack.c.b16 %v5155, %v5145
        %v5676 = vpack.c.b16 %v5156, %v5146
        %v5677 = vpack.c.b16 %v5157, %v5147
        %v5678 = vpack.c.b16 %v5158, %v5148
        %v5679 = vpack.c.b16 %v5159, %v5149
        %v5680 = vpack.c.b16 %v5160, %v5150
        %v5681 = vpack.c.b16 %v5161, %v5151
        %v5682 = vpack.c.b16 %v5162, %v5152
        %v5683 = vpack.c.b16 %v5163, %v5153
        %v5684 = vpack.c.b16 %v5174, %v5164
        %v5685 = vpack.c.b16 %v5175, %v5165
        %v5686 = vpack.c.b16 %v5176, %v5166
        %v5687 = vpack.c.b16 %v5177, %v5167
        %v5688 = vpack.c.b16 %v5178, %v5168
        %v5689 = vpack.c.b16 %v5179, %v5169
        %v5690 = vpack.c.b16 %v5180, %v5170
        %v5691 = vpack.c.b16 %v5181, %v5171
        %v5692 = vpack.c.b16 %v5182, %v5172
        %v5693 = vpack.c.b16 %v5183, %v5173
        %v5694 = vpack.c.b16 %v5194, %v5184
        %v5695 = vpack.c.b16 %v5195, %v5185
        %v5696 = vpack.c.b16 %v5196, %v5186
        %v5697 = vpack.c.b16 %v5197, %v5187
        %v5698 = vpack.c.b16 %v5198, %v5188
        %v5699 = vpack.c.b16 %v5199, %v5189
        %v5700 = vpack.c.b16 %v5200, %v5190
        %v5701 = vpack.c.b16 %v5201, %v5191
        %v5702 = vpack.c.b16 %v5202, %v5192
        %v5703 = vpack.c.b16 %v5203, %v5193
        %v5704 = vpack.c.b16 %v5214, %v5204
        %v5705 = vpack.c.b16 %v5215, %v5205
        %v5706 = vpack.c.b16 %v5216, %v5206
        %v5707 = vpack.c.b16 %v5217, %v5207
        %v5708 = vpack.c.b16 %v5218, %v5208
        %v5709 = vpack.c.b16 %v5219, %v5209
        %v5710 = vpack.c.b16 %v5220, %v5210
        %v5711 = vpack.c.b16 %v5221, %v5211
        %v5712 = vpack.c.b16 %v5222, %v5212
        %v5713 = vpack.c.b16 %v5223, %v5213
        %v5714 = vpack.c.b16 %v5234, %v5224
        %v5715 = vpack.c.b16 %v5235, %v5225
        %v5716 = vpack.c.b16 %v5236, %v5226
        %v5717 = vpack.c.b16 %v5237, %v5227
        %v5718 = vpack.c.b16 %v5238, %v5228
        %v5719 = vpack.c.b16 %v5239, %v5229
        %v5720 = vpack.c.b16 %v5240, %v5230
        %v5721 = vpack.c.b16 %v5241, %v5231
        %v5722 = vpack.c.b16 %v5242, %v5232
        %v5723 = vpack.c.b16 %v5243, %v5233
        %v5724 = vpack.c.b16 %v5254, %v5244
        %v5725 = vpack.c.b16 %v5255, %v5245
        %v5726 = vpack.c.b16 %v5256, %v5246
        %v5727 = vpack.c.b16 %v5257, %v5247
        %v5728 = vpack.c.b16 %v5258, %v5248
        %v5729 = vpack.c.b16 %v5259, %v5249
        %v5730 = vpack.c.b16 %v5260, %v5250
        %v5731 = vpack.c.b16 %v5261, %v5251
        %v5732 = vpack.c.b16 %v5262, %v5252
        %v5733 = vpack.c.b16 %v5263, %v5253
        %v5734 = vpack.c.b16 %v5274, %v5264
        %v5735 = vpack.c.b16 %v5275, %v5265
        %v5736 = vpack.c.b16 %v5276, %v5266
        %v5737 = vpack.c.b16 %v5277, %v5267
        %v5738 = vpack.c.b16 %v5278, %v5268
        %v5739 = vpack.c.b16 %v5279, %v5269
        %v5740 = vpack.c.b16 %v5280, %v5270
        %v5741 = vpack.c.b16 %v5281, %v5271
        %v5742 = vpack.c.b16 %v5282, %v5272
        %v5743 = vpack.c.b16 %v5283, %v5273
        %v5744 = vpack.c.b16 %v5294, %v5284
        %v5745 = vpack.c.b16 %v5295, %v5285
        %v5746 = vpack.c.b16 %v5296, %v5286
        %v5747 = vpack.c.b16 %v5297, %v5287
        %v5748 = vpack.c.b16 %v5298, %v5288
        %v5749 = vpack.c.b16 %v5299, %v5289
        %v5750 = vpack.c.b16 %v5300, %v5290
        %v5751 = vpack.c.b16 %v5301, %v5291
        %v5752 = vpack.c.b16 %v5302, %v5292
        %v5753 = vpack.c.b16 %v5303, %v5293
        %v5754 = vpack.c.b16 %v5314, %v5304
        %v5755 = vpack.c.b16 %v5315, %v5305
        %v5756 = vpack.c.b16 %v5316, %v5306
        %v5757 = vpack.c.b16 %v5317, %v5307
        %v5758 = vpack.c.b16 %v5318, %v5308
        %v5759 = vpack.c.b16 %v5319, %v5309
        %v5760 = vpack.c.b16 %v5320, %v5310
        %v5761 = vpack.c.b16 %v5321, %v5311
        %v5762 = vpack.c.b16 %v5322, %v5312
        %v5763 = vpack.c.b16 %v5323, %v5313
        %v5764 = vpack.c.b16 %v5334, %v5324
        %v5765 = vpack.c.b16 %v5335, %v5325
        %v5766 = vpack.c.b16 %v5336, %v5326
        %v5767 = vpack.c.b16 %v5337, %v5327
        %v5768 = vpack.c.b16 %v5338, %v5328
        %v5769 = vpack.c.b16 %v5339, %v5329
        %v5770 = vpack.c.b16 %v5340, %v5330
        %v5771 = vpack.c.b16 %v5341, %v5331
        %v5772 = vpack.c.b16 %v5342, %v5332
        %v5773 = vpack.c.b16 %v5343, %v5333
        %v5774 = vpack.c.b16 %v5354, %v5344
        %v5775 = vpack.c.b16 %v5355, %v5345
        %v5776 = vpack.c.b16 %v5356, %v5346
        %v5777 = vpack.c.b16 %v5357, %v5347
        %v5778 = vpack.c.b16 %v5358, %v5348
        %v5779 = vpack.c.b16 %v5359, %v5349
        %v5780 = vpack.c.b16 %v5360, %v5350
        %v5781 = vpack.c.b16 %v5361, %v5351
        %v5782 = vpack.c.b16 %v5362, %v5352
        %v5783 = vpack.c.b16 %v5363, %v5353
        %v5784 = vpack.c.b16 %v5374, %v5364
        %v5785 = vpack.c.b16 %v5375, %v5365
        %v5786 = vpack.c.b16 %v5376, %v5366
        %v5787 = vpack.c.b16 %v5377, %v5367
        %v5788 = vpack.c.b16 %v5378, %v5368
        %v5789 = vpack.c.b16 %v5379, %v5369
        %v5790 = vpack.c.b16 %v5380, %v5370
        %v5791 = vpack.c.b16 %v5381, %v5371
        %v5792 = vpack.c.b16 %v5382, %v5372
        %v5793 = vpack.c.b16 %v5383, %v5373
        %v5794 = vpack.c.b16 %v5394, %v5384
        %v5795 = vpack.c.b16 %v5395, %v5385
        %v5796 = vpack.c.b16 %v5396, %v5386
        %v5797 = vpack.c.b16 %v5397, %v5387
        %v5798 = vpack.c.b16 %v5398, %v5388
        %v5799 = vpack.c.b16 %v5399, %v5389
        %v5800 = vpack.c.b16 %v5400, %v5390
        %v5801 = vpack.c.b16 %v5401, %v5391
        %v5802 = vpack.c.b16 %v5402, %v5392
        %v5803 = vpack.c.b16 %v5403, %v5393
        %6204 = vmatprep.subr.bf16.mxu0 %v5405
        %6205 = vmatpush1.bf16.msra.mxu0 %v5404
        %6206 = vmatprep.subr.bf16.mxu0 %v5415
        %6207 = vmatpush1.bf16.msra.mxu0 %v5414
        %6208 = vmatprep.subr.bf16.mxu0 %v5425
        %6209 = vmatpush1.bf16.msra.mxu0 %v5424
        %6210 = vmatprep.subr.bf16.mxu0 %v5435
        %6211 = vmatpush1.bf16.msra.mxu0 %v5434
        %6212 = vmatprep.subr.bf16.mxu0 %v5445
        %6213 = vmatpush1.bf16.msra.mxu0 %v5444
        %6214 = vmatprep.subr.bf16.mxu0 %v5455
        %6215 = vmatpush1.bf16.msra.mxu0 %v5454
        %6216 = vmatprep.subr.bf16.mxu0 %v5465
        %6217 = vmatpush1.bf16.msra.mxu0 %v5464
        %6218 = vmatprep.subr.bf16.mxu0 %v5475
        %6219 = vmatpush1.bf16.msra.mxu0 %v5474
        %6220 = vmatprep.subr.bf16.mxu0 %v5485
        %6221 = vmatpush1.bf16.msra.mxu0 %v5484
        %6222 = vmatprep.subr.bf16.mxu0 %v5495
        %6223 = vmatpush1.bf16.msra.mxu0 %v5494
        %6224 = vmatprep.subr.bf16.mxu0 %v5505
        %6225 = vmatpush1.bf16.msra.mxu0 %v5504
        %6226 = vmatprep.subr.bf16.mxu0 %v5515
        %6227 = vmatpush1.bf16.msra.mxu0 %v5514
        %6228 = vmatprep.subr.bf16.mxu0 %v5525
        %6229 = vmatpush1.bf16.msra.mxu0 %v5524
        %6230 = vmatprep.subr.bf16.mxu0 %v5535
        %6231 = vmatpush1.bf16.msra.mxu0 %v5534
        %6232 = vmatprep.subr.bf16.mxu0 %v5545
        %6233 = vmatpush1.bf16.msra.mxu0 %v5544
        %6234 = vmatprep.subr.bf16.mxu0 %v5555
        %6235 = vmatpush1.bf16.msra.mxu0 %v5554
        %6236 = vmatprep.mubr.bf16.mxu0 %v3746
        %6237 = vmatmul.mubr.bf16.gmra.mrb[0].mxu0 %v3745
        %v6238 = vpop.f32.mrb[0].mxu0
        %v6239 = vadd.f32 %v4157, %v6238
        %v6240 = vpop.f32.mrb[0].mxu0
        %v6241 = vadd.f32 %v4161, %v6240
        %v6242 = vpop.f32.mrb[0].mxu0
        %v6243 = vadd.f32 %v4157, %v6242
        %v6244 = vpop.f32.mrb[0].mxu0
        %v6245 = vadd.f32 %v4161, %v6244
        %6246 = vdwg.mxu0
        %6247 = vmatprep.subr.bf16.mxu0 %v5565
        %6248 = vmatpush1.bf16.msra.mxu0 %v5564
        %6249 = vmatprep.subr.bf16.mxu0 %v5575
        %6250 = vmatpush1.bf16.msra.mxu0 %v5574
        %6251 = vmatprep.subr.bf16.mxu0 %v5585
        %6252 = vmatpush1.bf16.msra.mxu0 %v5584
        %6253 = vmatprep.subr.bf16.mxu0 %v5595
        %6254 = vmatpush1.bf16.msra.mxu0 %v5594
        %6255 = vmatprep.subr.bf16.mxu0 %v5605
        %6256 = vmatpush1.bf16.msra.mxu0 %v5604
        %6257 = vmatprep.subr.bf16.mxu0 %v5615
        %6258 = vmatpush1.bf16.msra.mxu0 %v5614
        %6259 = vmatprep.subr.bf16.mxu0 %v5625
        %6260 = vmatpush1.bf16.msra.mxu0 %v5624
        %6261 = vmatprep.subr.bf16.mxu0 %v5635
        %6262 = vmatpush1.bf16.msra.mxu0 %v5634
        %6263 = vmatprep.subr.bf16.mxu0 %v5645
        %6264 = vmatpush1.bf16.msra.mxu0 %v5644
        %6265 = vmatprep.subr.bf16.mxu0 %v5655
        %6266 = vmatpush1.bf16.msra.mxu0 %v5654
        %6267 = vmatprep.subr.bf16.mxu0 %v5665
        %6268 = vmatpush1.bf16.msra.mxu0 %v5664
        %6269 = vmatprep.subr.bf16.mxu0 %v5675
        %6270 = vmatpush1.bf16.msra.mxu0 %v5674
        %6271 = vmatprep.subr.bf16.mxu0 %v5685
        %6272 = vmatpush1.bf16.msra.mxu0 %v5684
        %6273 = vmatprep.subr.bf16.mxu0 %v5695
        %6274 = vmatpush1.bf16.msra.mxu0 %v5694
        %6275 = vmatprep.subr.bf16.mxu0 %v5705
        %6276 = vmatpush1.bf16.msra.mxu0 %v5704
        %6277 = vmatprep.subr.bf16.mxu0 %v5715
        %6278 = vmatpush1.bf16.msra.mxu0 %v5714
        %6279 = vmatprep.mubr.bf16.mxu0 %v3748
        %6280 = vmatmul.mubr.bf16.gmra.mrb[0].mxu0 %v3747
        %v6281 = vpop.f32.mrb[0].mxu0
        %v6282 = vadd.f32 %v6239, %v6281
        %v6283 = vpop.f32.mrb[0].mxu0
        %v6284 = vadd.f32 %v6241, %v6283
        %v6285 = vpop.f32.mrb[0].mxu0
        %v6286 = vadd.f32 %v6243, %v6285
        %v6287 = vpop.f32.mrb[0].mxu0
        %v6288 = vadd.f32 %v6245, %v6287
        %6289 = vdwg.mxu0
        %6290 = vmatprep.subr.bf16.mxu0 %v5725
        %6291 = vmatpush1.bf16.msra.mxu0 %v5724
        %6292 = vmatprep.subr.bf16.mxu0 %v5735
        %6293 = vmatpush1.bf16.msra.mxu0 %v5734
        %6294 = vmatprep.subr.bf16.mxu0 %v5745
        %6295 = vmatpush1.bf16.msra.mxu0 %v5744
        %6296 = vmatprep.subr.bf16.mxu0 %v5755
        %6297 = vmatpush1.bf16.msra.mxu0 %v5754
        %6298 = vmatprep.subr.bf16.mxu0 %v5765
        %6299 = vmatpush1.bf16.msra.mxu0 %v5764
        %6300 = vmatprep.subr.bf16.mxu0 %v5775
        %6301 = vmatpush1.bf16.msra.mxu0 %v5774
        %6302 = vmatprep.subr.bf16.mxu0 %v5785
        %6303 = vmatpush1.bf16.msra.mxu0 %v5784
        %6304 = vmatprep.subr.bf16.mxu0 %v5795
        %6305 = vmatpush1.bf16.msra.mxu0 %v5794
        %6306 = vmatprep.subr.bf16.mxu0 0
        %6307 = vmatpush1.bf16.msra.mxu0 0
        %6308 = vmatprep.subr.bf16.mxu0 0
        %6309 = vmatpush1.bf16.msra.mxu0 0
        %6310 = vmatprep.subr.bf16.mxu0 0
        %6311 = vmatpush1.bf16.msra.mxu0 0
        %6312 = vmatprep.subr.bf16.mxu0 0
        %6313 = vmatpush1.bf16.msra.mxu0 0
        %6314 = vmatprep.subr.bf16.mxu0 0
        %6315 = vmatpush1.bf16.msra.mxu0 0
        %6316 = vmatprep.subr.bf16.mxu0 0
        %6317 = vmatpush1.bf16.msra.mxu0 0
        %6318 = vmatprep.subr.bf16.mxu0 0
        %6319 = vmatpush1.bf16.msra.mxu0 0
        %6320 = vmatprep.subr.bf16.mxu0 0
        %6321 = vmatpush1.bf16.msra.mxu0 0
        %6322 = vmatprep.mubr.bf16.mxu0 0
        %6323 = vmatmul.mubr.bf16.gmra.mrb[0].mxu0 %v3749
        %v6324 = vpop.f32.mrb[0].mxu0
        %v6325 = vadd.f32 %v6282, %v6324
        %v6326 = vpop.f32.mrb[0].mxu0
        %v6327 = vadd.f32 %v6284, %v6326
        %v6328 = vpop.f32.mrb[0].mxu0
        %v6329 = vadd.f32 %v6286, %v6328
        %v6330 = vpop.f32.mrb[0].mxu0
        %v6331 = vadd.f32 %v6288, %v6330
        %6332 = vdwg.mxu0
        %6333 = vmatprep.subr.bf16.mxu0 %v5407
        %6334 = vmatpush1.bf16.msra.mxu0 %v5406
        %6335 = vmatprep.subr.bf16.mxu0 %v5417
        %6336 = vmatpush1.bf16.msra.mxu0 %v5416
        %6337 = vmatprep.subr.bf16.mxu0 %v5427
        %6338 = vmatpush1.bf16.msra.mxu0 %v5426
        %6339 = vmatprep.subr.bf16.mxu0 %v5437
        %6340 = vmatpush1.bf16.msra.mxu0 %v5436
        %6341 = vmatprep.subr.bf16.mxu0 %v5447
        %6342 = vmatpush1.bf16.msra.mxu0 %v5446
        %6343 = vmatprep.subr.bf16.mxu0 %v5457
        %6344 = vmatpush1.bf16.msra.mxu0 %v5456
        %6345 = vmatprep.subr.bf16.mxu0 %v5467
        %6346 = vmatpush1.bf16.msra.mxu0 %v5466
        %6347 = vmatprep.subr.bf16.mxu0 %v5477
        %6348 = vmatpush1.bf16.msra.mxu0 %v5476
        %6349 = vmatprep.subr.bf16.mxu0 %v5487
        %6350 = vmatpush1.bf16.msra.mxu0 %v5486
        %6351 = vmatprep.subr.bf16.mxu0 %v5497
        %6352 = vmatpush1.bf16.msra.mxu0 %v5496
        %6353 = vmatprep.subr.bf16.mxu0 %v5507
        %6354 = vmatpush1.bf16.msra.mxu0 %v5506
        %6355 = vmatprep.subr.bf16.mxu0 %v5517
        %6356 = vmatpush1.bf16.msra.mxu0 %v5516
        %6357 = vmatprep.subr.bf16.mxu0 %v5527
        %6358 = vmatpush1.bf16.msra.mxu0 %v5526
        %6359 = vmatprep.subr.bf16.mxu0 %v5537
        %6360 = vmatpush1.bf16.msra.mxu0 %v5536
        %6361 = vmatprep.subr.bf16.mxu0 %v5547
        %6362 = vmatpush1.bf16.msra.mxu0 %v5546
        %6363 = vmatprep.subr.bf16.mxu0 %v5557
        %6364 = vmatpush1.bf16.msra.mxu0 %v5556
        %6365 = vmatprep.mubr.bf16.mxu0 %v3746
        %6366 = vmatmul.mubr.bf16.gmra.mrb[0].mxu0 %v3745
        %v6367 = vpop.f32.mrb[0].mxu0
        %v6368 = vadd.f32 %v4165, %v6367
        %v6369 = vpop.f32.mrb[0].mxu0
        %v6370 = vadd.f32 %v4169, %v6369
        %v6371 = vpop.f32.mrb[0].mxu0
        %v6372 = vadd.f32 %v4165, %v6371
        %v6373 = vpop.f32.mrb[0].mxu0
        %v6374 = vadd.f32 %v4169, %v6373
        %6375 = vdwg.mxu0
        %6376 = vmatprep.subr.bf16.mxu0 %v5567
        %6377 = vmatpush1.bf16.msra.mxu0 %v5566
        %6378 = vmatprep.subr.bf16.mxu0 %v5577
        %6379 = vmatpush1.bf16.msra.mxu0 %v5576
        %6380 = vmatprep.subr.bf16.mxu0 %v5587
        %6381 = vmatpush1.bf16.msra.mxu0 %v5586
        %6382 = vmatprep.subr.bf16.mxu0 %v5597
        %6383 = vmatpush1.bf16.msra.mxu0 %v5596
        %6384 = vmatprep.subr.bf16.mxu0 %v5607
        %6385 = vmatpush1.bf16.msra.mxu0 %v5606
        %6386 = vmatprep.subr.bf16.mxu0 %v5617
        %6387 = vmatpush1.bf16.msra.mxu0 %v5616
        %6388 = vmatprep.subr.bf16.mxu0 %v5627
        %6389 = vmatpush1.bf16.msra.mxu0 %v5626
        %6390 = vmatprep.subr.bf16.mxu0 %v5637
        %6391 = vmatpush1.bf16.msra.mxu0 %v5636
        %6392 = vmatprep.subr.bf16.mxu0 %v5647
        %6393 = vmatpush1.bf16.msra.mxu0 %v5646
        %6394 = vmatprep.subr.bf16.mxu0 %v5657
        %6395 = vmatpush1.bf16.msra.mxu0 %v5656
        %6396 = vmatprep.subr.bf16.mxu0 %v5667
        %6397 = vmatpush1.bf16.msra.mxu0 %v5666
        %6398 = vmatprep.subr.bf16.mxu0 %v5677
        %6399 = vmatpush1.bf16.msra.mxu0 %v5676
        %6400 = vmatprep.subr.bf16.mxu0 %v5687
        %6401 = vmatpush1.bf16.msra.mxu0 %v5686
        %6402 = vmatprep.subr.bf16.mxu0 %v5697
        %6403 = vmatpush1.bf16.msra.mxu0 %v5696
        %6404 = vmatprep.subr.bf16.mxu0 %v5707
        %6405 = vmatpush1.bf16.msra.mxu0 %v5706
        %6406 = vmatprep.subr.bf16.mxu0 %v5717
        %6407 = vmatpush1.bf16.msra.mxu0 %v5716
        %6408 = vmatprep.mubr.bf16.mxu0 %v3748
        %6409 = vmatmul.mubr.bf16.gmra.mrb[0].mxu0 %v3747
        %v6410 = vpop.f32.mrb[0].mxu0
        %v6411 = vadd.f32 %v6368, %v6410
        %v6412 = vpop.f32.mrb[0].mxu0
        %v6413 = vadd.f32 %v6370, %v6412
        %v6414 = vpop.f32.mrb[0].mxu0
        %v6415 = vadd.f32 %v6372, %v6414
        %v6416 = vpop.f32.mrb[0].mxu0
        %v6417 = vadd.f32 %v6374, %v6416
        %6418 = vdwg.mxu0
        %6419 = vmatprep.subr.bf16.mxu0 %v5727
        %6420 = vmatpush1.bf16.msra.mxu0 %v5726
        %6421 = vmatprep.subr.bf16.mxu0 %v5737
        %6422 = vmatpush1.bf16.msra.mxu0 %v5736
        %6423 = vmatprep.subr.bf16.mxu0 %v5747
        %6424 = vmatpush1.bf16.msra.mxu0 %v5746
        %6425 = vmatprep.subr.bf16.mxu0 %v5757
        %6426 = vmatpush1.bf16.msra.mxu0 %v5756
        %6427 = vmatprep.subr.bf16.mxu0 %v5767
        %6428 = vmatpush1.bf16.msra.mxu0 %v5766
        %6429 = vmatprep.subr.bf16.mxu0 %v5777
        %6430 = vmatpush1.bf16.msra.mxu0 %v5776
        %6431 = vmatprep.subr.bf16.mxu0 %v5787
        %6432 = vmatpush1.bf16.msra.mxu0 %v5786
        %6433 = vmatprep.subr.bf16.mxu0 %v5797
        %6434 = vmatpush1.bf16.msra.mxu0 %v5796
        %6435 = vmatprep.subr.bf16.mxu0 0
        %6436 = vmatpush1.bf16.msra.mxu0 0
        %6437 = vmatprep.subr.bf16.mxu0 0
        %6438 = vmatpush1.bf16.msra.mxu0 0
        %6439 = vmatprep.subr.bf16.mxu0 0
        %6440 = vmatpush1.bf16.msra.mxu0 0
        %6441 = vmatprep.subr.bf16.mxu0 0
        %6442 = vmatpush1.bf16.msra.mxu0 0
        %6443 = vmatprep.subr.bf16.mxu0 0
        %6444 = vmatpush1.bf16.msra.mxu0 0
        %6445 = vmatprep.subr.bf16.mxu0 0
        %6446 = vmatpush1.bf16.msra.mxu0 0
        %6447 = vmatprep.subr.bf16.mxu0 0
        %6448 = vmatpush1.bf16.msra.mxu0 0
        %6449 = vmatprep.subr.bf16.mxu0 0
        %6450 = vmatpush1.bf16.msra.mxu0 0
        %6451 = vmatprep.mubr.bf16.mxu0 0
        %6452 = vmatmul.mubr.bf16.gmra.mrb[0].mxu0 %v3749
        %v6453 = vpop.f32.mrb[0].mxu0
        %v6454 = vadd.f32 %v6411, %v6453
        %v6455 = vpop.f32.mrb[0].mxu0
        %v6456 = vadd.f32 %v6413, %v6455
        %v6457 = vpop.f32.mrb[0].mxu0
        %v6458 = vadd.f32 %v6415, %v6457
        %v6459 = vpop.f32.mrb[0].mxu0
        %v6460 = vadd.f32 %v6417, %v6459
        %6461 = vdwg.mxu0
        %6462 = vmatprep.subr.bf16.mxu0 %v5409
        %6463 = vmatpush1.bf16.msra.mxu0 %v5408
        %6464 = vmatprep.subr.bf16.mxu0 %v5419
        %6465 = vmatpush1.bf16.msra.mxu0 %v5418
        %6466 = vmatprep.subr.bf16.mxu0 %v5429
        %6467 = vmatpush1.bf16.msra.mxu0 %v5428
        %6468 = vmatprep.subr.bf16.mxu0 %v5439
        %6469 = vmatpush1.bf16.msra.mxu0 %v5438
        %6470 = vmatprep.subr.bf16.mxu0 %v5449
        %6471 = vmatpush1.bf16.msra.mxu0 %v5448
        %6472 = vmatprep.subr.bf16.mxu0 %v5459
        %6473 = vmatpush1.bf16.msra.mxu0 %v5458
        %6474 = vmatprep.subr.bf16.mxu0 %v5469
        %6475 = vmatpush1.bf16.msra.mxu0 %v5468
        %6476 = vmatprep.subr.bf16.mxu0 %v5479
        %6477 = vmatpush1.bf16.msra.mxu0 %v5478
        %6478 = vmatprep.subr.bf16.mxu0 %v5489
        %6479 = vmatpush1.bf16.msra.mxu0 %v5488
        %6480 = vmatprep.subr.bf16.mxu0 %v5499
        %6481 = vmatpush1.bf16.msra.mxu0 %v5498
        %6482 = vmatprep.subr.bf16.mxu0 %v5509
        %6483 = vmatpush1.bf16.msra.mxu0 %v5508
        %6484 = vmatprep.subr.bf16.mxu0 %v5519
        %6485 = vmatpush1.bf16.msra.mxu0 %v5518
        %6486 = vmatprep.subr.bf16.mxu0 %v5529
        %6487 = vmatpush1.bf16.msra.mxu0 %v5528
        %6488 = vmatprep.subr.bf16.mxu0 %v5539
        %6489 = vmatpush1.bf16.msra.mxu0 %v5538
        %6490 = vmatprep.subr.bf16.mxu0 %v5549
        %6491 = vmatpush1.bf16.msra.mxu0 %v5548
        %6492 = vmatprep.subr.bf16.mxu0 %v5559
        %6493 = vmatpush1.bf16.msra.mxu0 %v5558
        %6494 = vmatprep.mubr.bf16.mxu0 %v3746
        %6495 = vmatmul.mubr.bf16.gmra.mrb[0].mxu0 %v3745
        %v6496 = vpop.f32.mrb[0].mxu0
        %v6497 = vadd.f32 %v4173, %v6496
        %v6498 = vpop.f32.mrb[0].mxu0
        %v6499 = vadd.f32 %v4177, %v6498
        %v6500 = vpop.f32.mrb[0].mxu0
        %v6501 = vadd.f32 %v4173, %v6500
        %v6502 = vpop.f32.mrb[0].mxu0
        %v6503 = vadd.f32 %v4177, %v6502
        %6504 = vdwg.mxu0
        %6505 = vmatprep.subr.bf16.mxu0 %v5569
        %6506 = vmatpush1.bf16.msra.mxu0 %v5568
        %6507 = vmatprep.subr.bf16.mxu0 %v5579
        %6508 = vmatpush1.bf16.msra.mxu0 %v5578
        %6509 = vmatprep.subr.bf16.mxu0 %v5589
        %6510 = vmatpush1.bf16.msra.mxu0 %v5588
        %6511 = vmatprep.subr.bf16.mxu0 %v5599
        %6512 = vmatpush1.bf16.msra.mxu0 %v5598
        %6513 = vmatprep.subr.bf16.mxu0 %v5609
        %6514 = vmatpush1.bf16.msra.mxu0 %v5608
        %6515 = vmatprep.subr.bf16.mxu0 %v5619
        %6516 = vmatpush1.bf16.msra.mxu0 %v5618
        %6517 = vmatprep.subr.bf16.mxu0 %v5629
        %6518 = vmatpush1.bf16.msra.mxu0 %v5628
        %6519 = vmatprep.subr.bf16.mxu0 %v5639
        %6520 = vmatpush1.bf16.msra.mxu0 %v5638
        %6521 = vmatprep.subr.bf16.mxu0 %v5649
        %6522 = vmatpush1.bf16.msra.mxu0 %v5648
        %6523 = vmatprep.subr.bf16.mxu0 %v5659
        %6524 = vmatpush1.bf16.msra.mxu0 %v5658
        %6525 = vmatprep.subr.bf16.mxu0 %v5669
        %6526 = vmatpush1.bf16.msra.mxu0 %v5668
        %6527 = vmatprep.subr.bf16.mxu0 %v5679
        %6528 = vmatpush1.bf16.msra.mxu0 %v5678
        %6529 = vmatprep.subr.bf16.mxu0 %v5689
        %6530 = vmatpush1.bf16.msra.mxu0 %v5688
        %6531 = vmatprep.subr.bf16.mxu0 %v5699
        %6532 = vmatpush1.bf16.msra.mxu0 %v5698
        %6533 = vmatprep.subr.bf16.mxu0 %v5709
        %6534 = vmatpush1.bf16.msra.mxu0 %v5708
        %6535 = vmatprep.subr.bf16.mxu0 %v5719
        %6536 = vmatpush1.bf16.msra.mxu0 %v5718
        %6537 = vmatprep.mubr.bf16.mxu0 %v3748
        %6538 = vmatmul.mubr.bf16.gmra.mrb[0].mxu0 %v3747
        %v6539 = vpop.f32.mrb[0].mxu0
        %v6540 = vadd.f32 %v6497, %v6539
        %v6541 = vpop.f32.mrb[0].mxu0
        %v6542 = vadd.f32 %v6499, %v6541
        %v6543 = vpop.f32.mrb[0].mxu0
        %v6544 = vadd.f32 %v6501, %v6543
        %v6545 = vpop.f32.mrb[0].mxu0
        %v6546 = vadd.f32 %v6503, %v6545
        %6547 = vdwg.mxu0
        %6548 = vmatprep.subr.bf16.mxu0 %v5729
        %6549 = vmatpush1.bf16.msra.mxu0 %v5728
        %6550 = vmatprep.subr.bf16.mxu0 %v5739
        %6551 = vmatpush1.bf16.msra.mxu0 %v5738
        %6552 = vmatprep.subr.bf16.mxu0 %v5749
        %6553 = vmatpush1.bf16.msra.mxu0 %v5748
        %6554 = vmatprep.subr.bf16.mxu0 %v5759
        %6555 = vmatpush1.bf16.msra.mxu0 %v5758
        %6556 = vmatprep.subr.bf16.mxu0 %v5769
        %6557 = vmatpush1.bf16.msra.mxu0 %v5768
        %6558 = vmatprep.subr.bf16.mxu0 %v5779
        %6559 = vmatpush1.bf16.msra.mxu0 %v5778
        %6560 = vmatprep.subr.bf16.mxu0 %v5789
        %6561 = vmatpush1.bf16.msra.mxu0 %v5788
        %6562 = vmatprep.subr.bf16.mxu0 %v5799
        %6563 = vmatpush1.bf16.msra.mxu0 %v5798
        %6564 = vmatprep.subr.bf16.mxu0 0
        %6565 = vmatpush1.bf16.msra.mxu0 0
        %6566 = vmatprep.subr.bf16.mxu0 0
        %6567 = vmatpush1.bf16.msra.mxu0 0
        %6568 = vmatprep.subr.bf16.mxu0 0
        %6569 = vmatpush1.bf16.msra.mxu0 0
        %6570 = vmatprep.subr.bf16.mxu0 0
        %6571 = vmatpush1.bf16.msra.mxu0 0
        %6572 = vmatprep.subr.bf16.mxu0 0
        %6573 = vmatpush1.bf16.msra.mxu0 0
        %6574 = vmatprep.subr.bf16.mxu0 0
        %6575 = vmatpush1.bf16.msra.mxu0 0
        %6576 = vmatprep.subr.bf16.mxu0 0
        %6577 = vmatpush1.bf16.msra.mxu0 0
        %6578 = vmatprep.subr.bf16.mxu0 0
        %6579 = vmatpush1.bf16.msra.mxu0 0
        %6580 = vmatprep.mubr.bf16.mxu0 0
        %6581 = vmatmul.mubr.bf16.gmra.mrb[0].mxu0 %v3749
        %v6582 = vpop.f32.mrb[0].mxu0
        %v6583 = vadd.f32 %v6540, %v6582
        %v6584 = vpop.f32.mrb[0].mxu0
        %v6585 = vadd.f32 %v6542, %v6584
        %v6586 = vpop.f32.mrb[0].mxu0
        %v6587 = vadd.f32 %v6544, %v6586
        %v6588 = vpop.f32.mrb[0].mxu0
        %v6589 = vadd.f32 %v6546, %v6588
        %6590 = vdwg.mxu0
        %6591 = vmatprep.subr.bf16.mxu0 %v5411
        %6592 = vmatpush1.bf16.msra.mxu0 %v5410
        %6593 = vmatprep.subr.bf16.mxu0 %v5421
        %6594 = vmatpush1.bf16.msra.mxu0 %v5420
        %6595 = vmatprep.subr.bf16.mxu0 %v5431
        %6596 = vmatpush1.bf16.msra.mxu0 %v5430
        %6597 = vmatprep.subr.bf16.mxu0 %v5441
        %6598 = vmatpush1.bf16.msra.mxu0 %v5440
        %6599 = vmatprep.subr.bf16.mxu0 %v5451
        %6600 = vmatpush1.bf16.msra.mxu0 %v5450
        %6601 = vmatprep.subr.bf16.mxu0 %v5461
        %6602 = vmatpush1.bf16.msra.mxu0 %v5460
        %6603 = vmatprep.subr.bf16.mxu0 %v5471
        %6604 = vmatpush1.bf16.msra.mxu0 %v5470
        %6605 = vmatprep.subr.bf16.mxu0 %v5481
        %6606 = vmatpush1.bf16.msra.mxu0 %v5480
        %6607 = vmatprep.subr.bf16.mxu0 %v5491
        %6608 = vmatpush1.bf16.msra.mxu0 %v5490
        %6609 = vmatprep.subr.bf16.mxu0 %v5501
        %6610 = vmatpush1.bf16.msra.mxu0 %v5500
        %6611 = vmatprep.subr.bf16.mxu0 %v5511
        %6612 = vmatpush1.bf16.msra.mxu0 %v5510
        %6613 = vmatprep.subr.bf16.mxu0 %v5521
        %6614 = vmatpush1.bf16.msra.mxu0 %v5520
        %6615 = vmatprep.subr.bf16.mxu0 %v5531
        %6616 = vmatpush1.bf16.msra.mxu0 %v5530
        %6617 = vmatprep.subr.bf16.mxu0 %v5541
        %6618 = vmatpush1.bf16.msra.mxu0 %v5540
        %6619 = vmatprep.subr.bf16.mxu0 %v5551
        %6620 = vmatpush1.bf16.msra.mxu0 %v5550
        %6621 = vmatprep.subr.bf16.mxu0 %v5561
        %6622 = vmatpush1.bf16.msra.mxu0 %v5560
        %6623 = vmatprep.mubr.bf16.mxu0 %v3746
        %6624 = vmatmul.mubr.bf16.gmra.mrb[0].mxu0 %v3745
        %v6625 = vpop.f32.mrb[0].mxu0
        %v6626 = vadd.f32 %v4181, %v6625
        %v6627 = vpop.f32.mrb[0].mxu0
        %v6628 = vadd.f32 %v4185, %v6627
        %v6629 = vpop.f32.mrb[0].mxu0
        %v6630 = vadd.f32 %v4181, %v6629
        %v6631 = vpop.f32.mrb[0].mxu0
        %v6632 = vadd.f32 %v4185, %v6631
        %6633 = vdwg.mxu0
        %6634 = vmatprep.subr.bf16.mxu0 %v5571
        %6635 = vmatpush1.bf16.msra.mxu0 %v5570
        %6636 = vmatprep.subr.bf16.mxu0 %v5581
        %6637 = vmatpush1.bf16.msra.mxu0 %v5580
        %6638 = vmatprep.subr.bf16.mxu0 %v5591
        %6639 = vmatpush1.bf16.msra.mxu0 %v5590
        %6640 = vmatprep.subr.bf16.mxu0 %v5601
        %6641 = vmatpush1.bf16.msra.mxu0 %v5600
        %6642 = vmatprep.subr.bf16.mxu0 %v5611
        %6643 = vmatpush1.bf16.msra.mxu0 %v5610
        %6644 = vmatprep.subr.bf16.mxu0 %v5621
        %6645 = vmatpush1.bf16.msra.mxu0 %v5620
        %6646 = vmatprep.subr.bf16.mxu0 %v5631
        %6647 = vmatpush1.bf16.msra.mxu0 %v5630
        %6648 = vmatprep.subr.bf16.mxu0 %v5641
        %6649 = vmatpush1.bf16.msra.mxu0 %v5640
        %6650 = vmatprep.subr.bf16.mxu0 %v5651
        %6651 = vmatpush1.bf16.msra.mxu0 %v5650
        %6652 = vmatprep.subr.bf16.mxu0 %v5661
        %6653 = vmatpush1.bf16.msra.mxu0 %v5660
        %6654 = vmatprep.subr.bf16.mxu0 %v5671
        %6655 = vmatpush1.bf16.msra.mxu0 %v5670
        %6656 = vmatprep.subr.bf16.mxu0 %v5681
        %6657 = vmatpush1.bf16.msra.mxu0 %v5680
        %6658 = vmatprep.subr.bf16.mxu0 %v5691
        %6659 = vmatpush1.bf16.msra.mxu0 %v5690
        %6660 = vmatprep.subr.bf16.mxu0 %v5701
        %6661 = vmatpush1.bf16.msra.mxu0 %v5700
        %6662 = vmatprep.subr.bf16.mxu0 %v5711
        %6663 = vmatpush1.bf16.msra.mxu0 %v5710
        %6664 = vmatprep.subr.bf16.mxu0 %v5721
        %6665 = vmatpush1.bf16.msra.mxu0 %v5720
        %6666 = vmatprep.mubr.bf16.mxu0 %v3748
        %6667 = vmatmul.mubr.bf16.gmra.mrb[0].mxu0 %v3747
        %v6668 = vpop.f32.mrb[0].mxu0
        %v6669 = vadd.f32 %v6626, %v6668
        %v6670 = vpop.f32.mrb[0].mxu0
        %v6671 = vadd.f32 %v6628, %v6670
        %v6672 = vpop.f32.mrb[0].mxu0
        %v6673 = vadd.f32 %v6630, %v6672
        %v6674 = vpop.f32.mrb[0].mxu0
        %v6675 = vadd.f32 %v6632, %v6674
        %6676 = vdwg.mxu0
        %6677 = vmatprep.subr.bf16.mxu0 %v5731
        %6678 = vmatpush1.bf16.msra.mxu0 %v5730
        %6679 = vmatprep.subr.bf16.mxu0 %v5741
        %6680 = vmatpush1.bf16.msra.mxu0 %v5740
        %6681 = vmatprep.subr.bf16.mxu0 %v5751
        %6682 = vmatpush1.bf16.msra.mxu0 %v5750
        %6683 = vmatprep.subr.bf16.mxu0 %v5761
        %6684 = vmatpush1.bf16.msra.mxu0 %v5760
        %6685 = vmatprep.subr.bf16.mxu0 %v5771
        %6686 = vmatpush1.bf16.msra.mxu0 %v5770
        %6687 = vmatprep.subr.bf16.mxu0 %v5781
        %6688 = vmatpush1.bf16.msra.mxu0 %v5780
        %6689 = vmatprep.subr.bf16.mxu0 %v5791
        %6690 = vmatpush1.bf16.msra.mxu0 %v5790
        %6691 = vmatprep.subr.bf16.mxu0 %v5801
        %6692 = vmatpush1.bf16.msra.mxu0 %v5800
        %6693 = vmatprep.subr.bf16.mxu0 0
        %6694 = vmatpush1.bf16.msra.mxu0 0
        %6695 = vmatprep.subr.bf16.mxu0 0
        %6696 = vmatpush1.bf16.msra.mxu0 0
        %6697 = vmatprep.subr.bf16.mxu0 0
        %6698 = vmatpush1.bf16.msra.mxu0 0
        %6699 = vmatprep.subr.bf16.mxu0 0
        %6700 = vmatpush1.bf16.msra.mxu0 0
        %6701 = vmatprep.subr.bf16.mxu0 0
        %6702 = vmatpush1.bf16.msra.mxu0 0
        %6703 = vmatprep.subr.bf16.mxu0 0
        %6704 = vmatpush1.bf16.msra.mxu0 0
        %6705 = vmatprep.subr.bf16.mxu0 0
        %6706 = vmatpush1.bf16.msra.mxu0 0
        %6707 = vmatprep.subr.bf16.mxu0 0
        %6708 = vmatpush1.bf16.msra.mxu0 0
        %6709 = vmatprep.mubr.bf16.mxu0 0
        %6710 = vmatmul.mubr.bf16.gmra.mrb[0].mxu0 %v3749
        %v6711 = vpop.f32.mrb[0].mxu0
        %v6712 = vadd.f32 %v6669, %v6711
        %v6713 = vpop.f32.mrb[0].mxu0
        %v6714 = vadd.f32 %v6671, %v6713
        %v6715 = vpop.f32.mrb[0].mxu0
        %v6716 = vadd.f32 %v6673, %v6715
        %v6717 = vpop.f32.mrb[0].mxu0
        %v6718 = vadd.f32 %v6675, %v6717
        %6719 = vdwg.mxu0
        %6720 = vmatprep.subr.bf16.mxu0 %v5413
        %6721 = vmatpush1.bf16.msra.mxu0 %v5412
        %6722 = vmatprep.subr.bf16.mxu0 %v5423
        %6723 = vmatpush1.bf16.msra.mxu0 %v5422
        %6724 = vmatprep.subr.bf16.mxu0 %v5433
        %6725 = vmatpush1.bf16.msra.mxu0 %v5432
        %6726 = vmatprep.subr.bf16.mxu0 %v5443
        %6727 = vmatpush1.bf16.msra.mxu0 %v5442
        %6728 = vmatprep.subr.bf16.mxu0 %v5453
        %6729 = vmatpush1.bf16.msra.mxu0 %v5452
        %6730 = vmatprep.subr.bf16.mxu0 %v5463
        %6731 = vmatpush1.bf16.msra.mxu0 %v5462
        %6732 = vmatprep.subr.bf16.mxu0 %v5473
        %6733 = vmatpush1.bf16.msra.mxu0 %v5472
        %6734 = vmatprep.subr.bf16.mxu0 %v5483
        %6735 = vmatpush1.bf16.msra.mxu0 %v5482
        %6736 = vmatprep.subr.bf16.mxu0 %v5493
        %6737 = vmatpush1.bf16.msra.mxu0 %v5492
        %6738 = vmatprep.subr.bf16.mxu0 %v5503
        %6739 = vmatpush1.bf16.msra.mxu0 %v5502
        %6740 = vmatprep.subr.bf16.mxu0 %v5513
        %6741 = vmatpush1.bf16.msra.mxu0 %v5512
        %6742 = vmatprep.subr.bf16.mxu0 %v5523
        %6743 = vmatpush1.bf16.msra.mxu0 %v5522
        %6744 = vmatprep.subr.bf16.mxu0 %v5533
        %6745 = vmatpush1.bf16.msra.mxu0 %v5532
        %6746 = vmatprep.subr.bf16.mxu0 %v5543
        %6747 = vmatpush1.bf16.msra.mxu0 %v5542
        %6748 = vmatprep.subr.bf16.mxu0 %v5553
        %6749 = vmatpush1.bf16.msra.mxu0 %v5552
        %6750 = vmatprep.subr.bf16.mxu0 %v5563
        %6751 = vmatpush1.bf16.msra.mxu0 %v5562
        %6752 = vmatprep.mubr.bf16.mxu0 %v3746
        %6753 = vmatmul.mubr.bf16.gmra.mrb[0].mxu0 %v3745
        %v6754 = vpop.f32.mrb[0].mxu0
        %v6755 = vadd.f32 %v4189, %v6754
        %v6756 = vpop.f32.mrb[0].mxu0
        %v6757 = vadd.f32 %v4193, %v6756
        %v6758 = vpop.f32.mrb[0].mxu0
        %v6759 = vadd.f32 %v4189, %v6758
        %v6760 = vpop.f32.mrb[0].mxu0
        %v6761 = vadd.f32 %v4193, %v6760
        %6762 = vdwg.mxu0
        %6763 = vmatprep.subr.bf16.mxu0 %v5573
        %6764 = vmatpush1.bf16.msra.mxu0 %v5572
        %6765 = vmatprep.subr.bf16.mxu0 %v5583
        %6766 = vmatpush1.bf16.msra.mxu0 %v5582
        %6767 = vmatprep.subr.bf16.mxu0 %v5593
        %6768 = vmatpush1.bf16.msra.mxu0 %v5592
        %6769 = vmatprep.subr.bf16.mxu0 %v5603
        %6770 = vmatpush1.bf16.msra.mxu0 %v5602
        %6771 = vmatprep.subr.bf16.mxu0 %v5613
        %6772 = vmatpush1.bf16.msra.mxu0 %v5612
        %6773 = vmatprep.subr.bf16.mxu0 %v5623
        %6774 = vmatpush1.bf16.msra.mxu0 %v5622
        %6775 = vmatprep.subr.bf16.mxu0 %v5633
        %6776 = vmatpush1.bf16.msra.mxu0 %v5632
        %6777 = vmatprep.subr.bf16.mxu0 %v5643
        %6778 = vmatpush1.bf16.msra.mxu0 %v5642
        %6779 = vmatprep.subr.bf16.mxu0 %v5653
        %6780 = vmatpush1.bf16.msra.mxu0 %v5652
        %6781 = vmatprep.subr.bf16.mxu0 %v5663
        %6782 = vmatpush1.bf16.msra.mxu0 %v5662
        %6783 = vmatprep.subr.bf16.mxu0 %v5673
        %6784 = vmatpush1.bf16.msra.mxu0 %v5672
        %6785 = vmatprep.subr.bf16.mxu0 %v5683
        %6786 = vmatpush1.bf16.msra.mxu0 %v5682
        %6787 = vmatprep.subr.bf16.mxu0 %v5693
        %6788 = vmatpush1.bf16.msra.mxu0 %v5692
        %6789 = vmatprep.subr.bf16.mxu0 %v5703
        %6790 = vmatpush1.bf16.msra.mxu0 %v5702
        %6791 = vmatprep.subr.bf16.mxu0 %v5713
        %6792 = vmatpush1.bf16.msra.mxu0 %v5712
        %6793 = vmatprep.subr.bf16.mxu0 %v5723
        %6794 = vmatpush1.bf16.msra.mxu0 %v5722
        %6795 = vmatprep.mubr.bf16.mxu0 %v3748
        %6796 = vmatmul.mubr.bf16.gmra.mrb[0].mxu0 %v3747
        %v6797 = vpop.f32.mrb[0].mxu0
        %v6798 = vadd.f32 %v6755, %v6797
        %v6799 = vpop.f32.mrb[0].mxu0
        %v6800 = vadd.f32 %v6757, %v6799
        %v6801 = vpop.f32.mrb[0].mxu0
        %v6802 = vadd.f32 %v6759, %v6801
        %v6803 = vpop.f32.mrb[0].mxu0
        %v6804 = vadd.f32 %v6761, %v6803
        %6805 = vdwg.mxu0
        %6806 = vmatprep.subr.bf16.mxu0 %v5733
        %6807 = vmatpush1.bf16.msra.mxu0 %v5732
        %6808 = vmatprep.subr.bf16.mxu0 %v5743
        %6809 = vmatpush1.bf16.msra.mxu0 %v5742
        %6810 = vmatprep.subr.bf16.mxu0 %v5753
        %6811 = vmatpush1.bf16.msra.mxu0 %v5752
        %6812 = vmatprep.subr.bf16.mxu0 %v5763
        %6813 = vmatpush1.bf16.msra.mxu0 %v5762
        %6814 = vmatprep.subr.bf16.mxu0 %v5773
        %6815 = vmatpush1.bf16.msra.mxu0 %v5772
        %6816 = vmatprep.subr.bf16.mxu0 %v5783
        %6817 = vmatpush1.bf16.msra.mxu0 %v5782
        %6818 = vmatprep.subr.bf16.mxu0 %v5793
        %6819 = vmatpush1.bf16.msra.mxu0 %v5792
        %6820 = vmatprep.subr.bf16.mxu0 %v5803
        %6821 = vmatpush1.bf16.msra.mxu0 %v5802
        %6822 = vmatprep.subr.bf16.mxu0 0
        %6823 = vmatpush1.bf16.msra.mxu0 0
        %6824 = vmatprep.subr.bf16.mxu0 0
        %6825 = vmatpush1.bf16.msra.mxu0 0
        %6826 = vmatprep.subr.bf16.mxu0 0
        %6827 = vmatpush1.bf16.msra.mxu0 0
        %6828 = vmatprep.subr.bf16.mxu0 0
        %6829 = vmatpush1.bf16.msra.mxu0 0
        %6830 = vmatprep.subr.bf16.mxu0 0
        %6831 = vmatpush1.bf16.msra.mxu0 0
        %6832 = vmatprep.subr.bf16.mxu0 0
        %6833 = vmatpush1.bf16.msra.mxu0 0
        %6834 = vmatprep.subr.bf16.mxu0 0
        %6835 = vmatpush1.bf16.msra.mxu0 0
        %6836 = vmatprep.subr.bf16.mxu0 0
        %6837 = vmatpush1.bf16.msra.mxu0 0
        %6838 = vmatprep.mubr.bf16.mxu0 0
        %6839 = vmatmul.mubr.bf16.gmra.mrb[0].mxu0 %v3749
        %v6840 = vpop.f32.mrb[0].mxu0
        %v6841 = vadd.f32 %v6798, %v6840
        %v6842 = vpop.f32.mrb[0].mxu0
        %v6843 = vadd.f32 %v6800, %v6842
        %v6844 = vpop.f32.mrb[0].mxu0
        %v6845 = vadd.f32 %v6802, %v6844
        %v6846 = vpop.f32.mrb[0].mxu0
        %v6847 = vadd.f32 %v6804, %v6846
        %6848 = vdwg.mxu0
        %v6849 = vmax.f32 %v6325, 0.0
        %v6850 = vmax.f32 %v6327, 0.0
        %v6851 = vmax.f32 %v6454, 0.0
        %v6852 = vmax.f32 %v6456, 0.0
        %v6853 = vmax.f32 %v6583, 0.0
        %v6854 = vmax.f32 %v6585, 0.0
        %v6855 = vmax.f32 %v6712, 0.0
        %v6856 = vmax.f32 %v6714, 0.0
        %v6857 = vmax.f32 %v6841, 0.0
        %v6858 = vmax.f32 %v6843, 0.0
        %v6859 = vmax.f32 %v6329, 0.0
        %v6860 = vmax.f32 %v6331, 0.0
        %v6861 = vmax.f32 %v6458, 0.0
        %v6862 = vmax.f32 %v6460, 0.0
        %v6863 = vmax.f32 %v6587, 0.0
        %v6864 = vmax.f32 %v6589, 0.0
        %v6865 = vmax.f32 %v6716, 0.0
        %v6866 = vmax.f32 %v6718, 0.0
        %v6867 = vmax.f32 %v6845, 0.0
        %v6868 = vmax.f32 %v6847, 0.0
        %v6869 = vpack.c.bf16 %v3740, %v3735
        %v6870 = vpack.c.bf16 %v3741, %v3736
        %v6871 = vpack.c.bf16 %v3742, %v3737
        %v6872 = vpack.c.bf16 %v3743, %v3738
        %v6873 = vpack.c.bf16 %v3744, %v3739
        %6874 = vmatprep.subr.bf16.mxu0 %v5405
        %6875 = vmatpush1.bf16.msra.mxu0 %v5404
        %6876 = vmatprep.subr.bf16.mxu0 %v5415
        %6877 = vmatpush1.bf16.msra.mxu0 %v5414
        %6878 = vmatprep.subr.bf16.mxu0 %v5425
        %6879 = vmatpush1.bf16.msra.mxu0 %v5424
        %6880 = vmatprep.subr.bf16.mxu0 %v5435
        %6881 = vmatpush1.bf16.msra.mxu0 %v5434
        %6882 = vmatprep.subr.bf16.mxu0 %v5445
        %6883 = vmatpush1.bf16.msra.mxu0 %v5444
        %6884 = vmatprep.subr.bf16.mxu0 %v5455
        %6885 = vmatpush1.bf16.msra.mxu0 %v5454
        %6886 = vmatprep.subr.bf16.mxu0 %v5465
        %6887 = vmatpush1.bf16.msra.mxu0 %v5464
        %6888 = vmatprep.subr.bf16.mxu0 %v5475
        %6889 = vmatpush1.bf16.msra.mxu0 %v5474
        %6890 = vmatprep.subr.bf16.mxu0 %v5485
        %6891 = vmatpush1.bf16.msra.mxu0 %v5484
        %6892 = vmatprep.subr.bf16.mxu0 %v5495
        %6893 = vmatpush1.bf16.msra.mxu0 %v5494
        %6894 = vmatprep.subr.bf16.mxu0 %v5505
        %6895 = vmatpush1.bf16.msra.mxu0 %v5504
        %6896 = vmatprep.subr.bf16.mxu0 %v5515
        %6897 = vmatpush1.bf16.msra.mxu0 %v5514
        %6898 = vmatprep.subr.bf16.mxu0 %v5525
        %6899 = vmatpush1.bf16.msra.mxu0 %v5524
        %6900 = vmatprep.subr.bf16.mxu0 %v5535
        %6901 = vmatpush1.bf16.msra.mxu0 %v5534
        %6902 = vmatprep.subr.bf16.mxu0 %v5545
        %6903 = vmatpush1.bf16.msra.mxu0 %v5544
        %6904 = vmatprep.subr.bf16.mxu0 %v5555
        %6905 = vmatpush1.bf16.msra.mxu0 %v5554
        %6906 = vmatprep.mubr.bf16.mxu0 %v6870
        %6907 = vmatmul.mubr.bf16.gmra.mrb[0].mxu0 %v6869
        %v6908 = vpop.f32.mrb[0].mxu0
        %v6909 = vadd.f32 %v4157, %v6908
        %v6910 = vpop.f32.mrb[0].mxu0
        %v6911 = vadd.f32 %v4161, %v6910
        %v6912 = vpop.f32.mrb[0].mxu0
        %v6913 = vadd.f32 %v4157, %v6912
        %v6914 = vpop.f32.mrb[0].mxu0
        %v6915 = vadd.f32 %v4161, %v6914
        %6916 = vdwg.mxu0
        %6917 = vmatprep.subr.bf16.mxu0 %v5565
        %6918 = vmatpush1.bf16.msra.mxu0 %v5564
        %6919 = vmatprep.subr.bf16.mxu0 %v5575
        %6920 = vmatpush1.bf16.msra.mxu0 %v5574
        %6921 = vmatprep.subr.bf16.mxu0 %v5585
        %6922 = vmatpush1.bf16.msra.mxu0 %v5584
        %6923 = vmatprep.subr.bf16.mxu0 %v5595
        %6924 = vmatpush1.bf16.msra.mxu0 %v5594
        %6925 = vmatprep.subr.bf16.mxu0 %v5605
        %6926 = vmatpush1.bf16.msra.mxu0 %v5604
        %6927 = vmatprep.subr.bf16.mxu0 %v5615
        %6928 = vmatpush1.bf16.msra.mxu0 %v5614
        %6929 = vmatprep.subr.bf16.mxu0 %v5625
        %6930 = vmatpush1.bf16.msra.mxu0 %v5624
        %6931 = vmatprep.subr.bf16.mxu0 %v5635
        %6932 = vmatpush1.bf16.msra.mxu0 %v5634
        %6933 = vmatprep.subr.bf16.mxu0 %v5645
        %6934 = vmatpush1.bf16.msra.mxu0 %v5644
        %6935 = vmatprep.subr.bf16.mxu0 %v5655
        %6936 = vmatpush1.bf16.msra.mxu0 %v5654
        %6937 = vmatprep.subr.bf16.mxu0 %v5665
        %6938 = vmatpush1.bf16.msra.mxu0 %v5664
        %6939 = vmatprep.subr.bf16.mxu0 %v5675
        %6940 = vmatpush1.bf16.msra.mxu0 %v5674
        %6941 = vmatprep.subr.bf16.mxu0 %v5685
        %6942 = vmatpush1.bf16.msra.mxu0 %v5684
        %6943 = vmatprep.subr.bf16.mxu0 %v5695
        %6944 = vmatpush1.bf16.msra.mxu0 %v5694
        %6945 = vmatprep.subr.bf16.mxu0 %v5705
        %6946 = vmatpush1.bf16.msra.mxu0 %v5704
        %6947 = vmatprep.subr.bf16.mxu0 %v5715
        %6948 = vmatpush1.bf16.msra.mxu0 %v5714
        %6949 = vmatprep.mubr.bf16.mxu0 %v6872
        %6950 = vmatmul.mubr.bf16.gmra.mrb[0].mxu0 %v6871
        %v6951 = vpop.f32.mrb[0].mxu0
        %v6952 = vadd.f32 %v6909, %v6951
        %v6953 = vpop.f32.mrb[0].mxu0
        %v6954 = vadd.f32 %v6911, %v6953
        %v6955 = vpop.f32.mrb[0].mxu0
        %v6956 = vadd.f32 %v6913, %v6955
        %v6957 = vpop.f32.mrb[0].mxu0
        %v6958 = vadd.f32 %v6915, %v6957
        %6959 = vdwg.mxu0
        %6960 = vmatprep.subr.bf16.mxu0 %v5725
        %6961 = vmatpush1.bf16.msra.mxu0 %v5724
        %6962 = vmatprep.subr.bf16.mxu0 %v5735
        %6963 = vmatpush1.bf16.msra.mxu0 %v5734
        %6964 = vmatprep.subr.bf16.mxu0 %v5745
        %6965 = vmatpush1.bf16.msra.mxu0 %v5744
        %6966 = vmatprep.subr.bf16.mxu0 %v5755
        %6967 = vmatpush1.bf16.msra.mxu0 %v5754
        %6968 = vmatprep.subr.bf16.mxu0 %v5765
        %6969 = vmatpush1.bf16.msra.mxu0 %v5764
        %6970 = vmatprep.subr.bf16.mxu0 %v5775
        %6971 = vmatpush1.bf16.msra.mxu0 %v5774
        %6972 = vmatprep.subr.bf16.mxu0 %v5785
        %6973 = vmatpush1.bf16.msra.mxu0 %v5784
        %6974 = vmatprep.subr.bf16.mxu0 %v5795
        %6975 = vmatpush1.bf16.msra.mxu0 %v5794
        %6976 = vmatprep.subr.bf16.mxu0 0
        %6977 = vmatpush1.bf16.msra.mxu0 0
        %6978 = vmatprep.subr.bf16.mxu0 0
        %6979 = vmatpush1.bf16.msra.mxu0 0
        %6980 = vmatprep.subr.bf16.mxu0 0
        %6981 = vmatpush1.bf16.msra.mxu0 0
        %6982 = vmatprep.subr.bf16.mxu0 0
        %6983 = vmatpush1.bf16.msra.mxu0 0
        %6984 = vmatprep.subr.bf16.mxu0 0
        %6985 = vmatpush1.bf16.msra.mxu0 0
        %6986 = vmatprep.subr.bf16.mxu0 0
        %6987 = vmatpush1.bf16.msra.mxu0 0
        %6988 = vmatprep.subr.bf16.mxu0 0
        %6989 = vmatpush1.bf16.msra.mxu0 0
        %6990 = vmatprep.subr.bf16.mxu0 0
        %6991 = vmatpush1.bf16.msra.mxu0 0
        %6992 = vmatprep.mubr.bf16.mxu0 0
        %6993 = vmatmul.mubr.bf16.gmra.mrb[0].mxu0 %v6873
        %v6994 = vpop.f32.mrb[0].mxu0
        %v6995 = vadd.f32 %v6952, %v6994
        %v6996 = vpop.f32.mrb[0].mxu0
        %v6997 = vadd.f32 %v6954, %v6996
        %v6998 = vpop.f32.mrb[0].mxu0
        %v6999 = vadd.f32 %v6956, %v6998
        %v7000 = vpop.f32.mrb[0].mxu0
        %v7001 = vadd.f32 %v6958, %v7000
        %7002 = vdwg.mxu0
        %7003 = vmatprep.subr.bf16.mxu0 %v5407
        %7004 = vmatpush1.bf16.msra.mxu0 %v5406
        %7005 = vmatprep.subr.bf16.mxu0 %v5417
        %7006 = vmatpush1.bf16.msra.mxu0 %v5416
        %7007 = vmatprep.subr.bf16.mxu0 %v5427
        %7008 = vmatpush1.bf16.msra.mxu0 %v5426
        %7009 = vmatprep.subr.bf16.mxu0 %v5437
        %7010 = vmatpush1.bf16.msra.mxu0 %v5436
        %7011 = vmatprep.subr.bf16.mxu0 %v5447
        %7012 = vmatpush1.bf16.msra.mxu0 %v5446
        %7013 = vmatprep.subr.bf16.mxu0 %v5457
        %7014 = vmatpush1.bf16.msra.mxu0 %v5456
        %7015 = vmatprep.subr.bf16.mxu0 %v5467
        %7016 = vmatpush1.bf16.msra.mxu0 %v5466
        %7017 = vmatprep.subr.bf16.mxu0 %v5477
        %7018 = vmatpush1.bf16.msra.mxu0 %v5476
        %7019 = vmatprep.subr.bf16.mxu0 %v5487
        %7020 = vmatpush1.bf16.msra.mxu0 %v5486
        %7021 = vmatprep.subr.bf16.mxu0 %v5497
        %7022 = vmatpush1.bf16.msra.mxu0 %v5496
        %7023 = vmatprep.subr.bf16.mxu0 %v5507
        %7024 = vmatpush1.bf16.msra.mxu0 %v5506
        %7025 = vmatprep.subr.bf16.mxu0 %v5517
        %7026 = vmatpush1.bf16.msra.mxu0 %v5516
        %7027 = vmatprep.subr.bf16.mxu0 %v5527
        %7028 = vmatpush1.bf16.msra.mxu0 %v5526
        %7029 = vmatprep.subr.bf16.mxu0 %v5537
        %7030 = vmatpush1.bf16.msra.mxu0 %v5536
        %7031 = vmatprep.subr.bf16.mxu0 %v5547
        %7032 = vmatpush1.bf16.msra.mxu0 %v5546
        %7033 = vmatprep.subr.bf16.mxu0 %v5557
        %7034 = vmatpush1.bf16.msra.mxu0 %v5556
        %7035 = vmatprep.mubr.bf16.mxu0 %v6870
        %7036 = vmatmul.mubr.bf16.gmra.mrb[0].mxu0 %v6869
        %v7037 = vpop.f32.mrb[0].mxu0
        %v7038 = vadd.f32 %v4165, %v7037
        %v7039 = vpop.f32.mrb[0].mxu0
        %v7040 = vadd.f32 %v4169, %v7039
        %v7041 = vpop.f32.mrb[0].mxu0
        %v7042 = vadd.f32 %v4165, %v7041
        %v7043 = vpop.f32.mrb[0].mxu0
        %v7044 = vadd.f32 %v4169, %v7043
        %7045 = vdwg.mxu0
        %7046 = vmatprep.subr.bf16.mxu0 %v5567
        %7047 = vmatpush1.bf16.msra.mxu0 %v5566
        %7048 = vmatprep.subr.bf16.mxu0 %v5577
        %7049 = vmatpush1.bf16.msra.mxu0 %v5576
        %7050 = vmatprep.subr.bf16.mxu0 %v5587
        %7051 = vmatpush1.bf16.msra.mxu0 %v5586
        %7052 = vmatprep.subr.bf16.mxu0 %v5597
        %7053 = vmatpush1.bf16.msra.mxu0 %v5596
        %7054 = vmatprep.subr.bf16.mxu0 %v5607
        %7055 = vmatpush1.bf16.msra.mxu0 %v5606
        %7056 = vmatprep.subr.bf16.mxu0 %v5617
        %7057 = vmatpush1.bf16.msra.mxu0 %v5616
        %7058 = vmatprep.subr.bf16.mxu0 %v5627
        %7059 = vmatpush1.bf16.msra.mxu0 %v5626
        %7060 = vmatprep.subr.bf16.mxu0 %v5637
        %7061 = vmatpush1.bf16.msra.mxu0 %v5636
        %7062 = vmatprep.subr.bf16.mxu0 %v5647
        %7063 = vmatpush1.bf16.msra.mxu0 %v5646
        %7064 = vmatprep.subr.bf16.mxu0 %v5657
        %7065 = vmatpush1.bf16.msra.mxu0 %v5656
        %7066 = vmatprep.subr.bf16.mxu0 %v5667
        %7067 = vmatpush1.bf16.msra.mxu0 %v5666
        %7068 = vmatprep.subr.bf16.mxu0 %v5677
        %7069 = vmatpush1.bf16.msra.mxu0 %v5676
        %7070 = vmatprep.subr.bf16.mxu0 %v5687
        %7071 = vmatpush1.bf16.msra.mxu0 %v5686
        %7072 = vmatprep.subr.bf16.mxu0 %v5697
        %7073 = vmatpush1.bf16.msra.mxu0 %v5696
        %7074 = vmatprep.subr.bf16.mxu0 %v5707
        %7075 = vmatpush1.bf16.msra.mxu0 %v5706
        %7076 = vmatprep.subr.bf16.mxu0 %v5717
        %7077 = vmatpush1.bf16.msra.mxu0 %v5716
        %7078 = vmatprep.mubr.bf16.mxu0 %v6872
        %7079 = vmatmul.mubr.bf16.gmra.mrb[0].mxu0 %v6871
        %v7080 = vpop.f32.mrb[0].mxu0
        %v7081 = vadd.f32 %v7038, %v7080
        %v7082 = vpop.f32.mrb[0].mxu0
        %v7083 = vadd.f32 %v7040, %v7082
        %v7084 = vpop.f32.mrb[0].mxu0
        %v7085 = vadd.f32 %v7042, %v7084
        %v7086 = vpop.f32.mrb[0].mxu0
        %v7087 = vadd.f32 %v7044, %v7086
        %7088 = vdwg.mxu0
        %7089 = vmatprep.subr.bf16.mxu0 %v5727
        %7090 = vmatpush1.bf16.msra.mxu0 %v5726
        %7091 = vmatprep.subr.bf16.mxu0 %v5737
        %7092 = vmatpush1.bf16.msra.mxu0 %v5736
        %7093 = vmatprep.subr.bf16.mxu0 %v5747
        %7094 = vmatpush1.bf16.msra.mxu0 %v5746
        %7095 = vmatprep.subr.bf16.mxu0 %v5757
        %7096 = vmatpush1.bf16.msra.mxu0 %v5756
        %7097 = vmatprep.subr.bf16.mxu0 %v5767
        %7098 = vmatpush1.bf16.msra.mxu0 %v5766
        %7099 = vmatprep.subr.bf16.mxu0 %v5777
        %7100 = vmatpush1.bf16.msra.mxu0 %v5776
        %7101 = vmatprep.subr.bf16.mxu0 %v5787
        %7102 = vmatpush1.bf16.msra.mxu0 %v5786
        %7103 = vmatprep.subr.bf16.mxu0 %v5797
        %7104 = vmatpush1.bf16.msra.mxu0 %v5796
        %7105 = vmatprep.subr.bf16.mxu0 0
        %7106 = vmatpush1.bf16.msra.mxu0 0
        %7107 = vmatprep.subr.bf16.mxu0 0
        %7108 = vmatpush1.bf16.msra.mxu0 0
        %7109 = vmatprep.subr.bf16.mxu0 0
        %7110 = vmatpush1.bf16.msra.mxu0 0
        %7111 = vmatprep.subr.bf16.mxu0 0
        %7112 = vmatpush1.bf16.msra.mxu0 0
        %7113 = vmatprep.subr.bf16.mxu0 0
        %7114 = vmatpush1.bf16.msra.mxu0 0
        %7115 = vmatprep.subr.bf16.mxu0 0
        %7116 = vmatpush1.bf16.msra.mxu0 0
        %7117 = vmatprep.subr.bf16.mxu0 0
        %7118 = vmatpush1.bf16.msra.mxu0 0
        %7119 = vmatprep.subr.bf16.mxu0 0
        %7120 = vmatpush1.bf16.msra.mxu0 0
        %7121 = vmatprep.mubr.bf16.mxu0 0
        %7122 = vmatmul.mubr.bf16.gmra.mrb[0].mxu0 %v6873
        %v7123 = vpop.f32.mrb[0].mxu0
        %v7124 = vadd.f32 %v7081, %v7123
        %v7125 = vpop.f32.mrb[0].mxu0
        %v7126 = vadd.f32 %v7083, %v7125
        %v7127 = vpop.f32.mrb[0].mxu0
        %v7128 = vadd.f32 %v7085, %v7127
        %v7129 = vpop.f32.mrb[0].mxu0
        %v7130 = vadd.f32 %v7087, %v7129
        %7131 = vdwg.mxu0
        %7132 = vmatprep.subr.bf16.mxu0 %v5409
        %7133 = vmatpush1.bf16.msra.mxu0 %v5408
        %7134 = vmatprep.subr.bf16.mxu0 %v5419
        %7135 = vmatpush1.bf16.msra.mxu0 %v5418
        %7136 = vmatprep.subr.bf16.mxu0 %v5429
        %7137 = vmatpush1.bf16.msra.mxu0 %v5428
        %7138 = vmatprep.subr.bf16.mxu0 %v5439
        %7139 = vmatpush1.bf16.msra.mxu0 %v5438
        %7140 = vmatprep.subr.bf16.mxu0 %v5449
        %7141 = vmatpush1.bf16.msra.mxu0 %v5448
        %7142 = vmatprep.subr.bf16.mxu0 %v5459
        %7143 = vmatpush1.bf16.msra.mxu0 %v5458
        %7144 = vmatprep.subr.bf16.mxu0 %v5469
        %7145 = vmatpush1.bf16.msra.mxu0 %v5468
        %7146 = vmatprep.subr.bf16.mxu0 %v5479
        %7147 = vmatpush1.bf16.msra.mxu0 %v5478
        %7148 = vmatprep.subr.bf16.mxu0 %v5489
        %7149 = vmatpush1.bf16.msra.mxu0 %v5488
        %7150 = vmatprep.subr.bf16.mxu0 %v5499
        %7151 = vmatpush1.bf16.msra.mxu0 %v5498
        %7152 = vmatprep.subr.bf16.mxu0 %v5509
        %7153 = vmatpush1.bf16.msra.mxu0 %v5508
        %7154 = vmatprep.subr.bf16.mxu0 %v5519
        %7155 = vmatpush1.bf16.msra.mxu0 %v5518
        %7156 = vmatprep.subr.bf16.mxu0 %v5529
        %7157 = vmatpush1.bf16.msra.mxu0 %v5528
        %7158 = vmatprep.subr.bf16.mxu0 %v5539
        %7159 = vmatpush1.bf16.msra.mxu0 %v5538
        %7160 = vmatprep.subr.bf16.mxu0 %v5549
        %7161 = vmatpush1.bf16.msra.mxu0 %v5548
        %7162 = vmatprep.subr.bf16.mxu0 %v5559
        %7163 = vmatpush1.bf16.msra.mxu0 %v5558
        %7164 = vmatprep.mubr.bf16.mxu0 %v6870
        %7165 = vmatmul.mubr.bf16.gmra.mrb[0].mxu0 %v6869
        %v7166 = vpop.f32.mrb[0].mxu0
        %v7167 = vadd.f32 %v4173, %v7166
        %v7168 = vpop.f32.mrb[0].mxu0
        %v7169 = vadd.f32 %v4177, %v7168
        %v7170 = vpop.f32.mrb[0].mxu0
        %v7171 = vadd.f32 %v4173, %v7170
        %v7172 = vpop.f32.mrb[0].mxu0
        %v7173 = vadd.f32 %v4177, %v7172
        %7174 = vdwg.mxu0
        %7175 = vmatprep.subr.bf16.mxu0 %v5569
        %7176 = vmatpush1.bf16.msra.mxu0 %v5568
        %7177 = vmatprep.subr.bf16.mxu0 %v5579
        %7178 = vmatpush1.bf16.msra.mxu0 %v5578
        %7179 = vmatprep.subr.bf16.mxu0 %v5589
        %7180 = vmatpush1.bf16.msra.mxu0 %v5588
        %7181 = vmatprep.subr.bf16.mxu0 %v5599
        %7182 = vmatpush1.bf16.msra.mxu0 %v5598
        %7183 = vmatprep.subr.bf16.mxu0 %v5609
        %7184 = vmatpush1.bf16.msra.mxu0 %v5608
        %7185 = vmatprep.subr.bf16.mxu0 %v5619
        %7186 = vmatpush1.bf16.msra.mxu0 %v5618
        %7187 = vmatprep.subr.bf16.mxu0 %v5629
        %7188 = vmatpush1.bf16.msra.mxu0 %v5628
        %7189 = vmatprep.subr.bf16.mxu0 %v5639
        %7190 = vmatpush1.bf16.msra.mxu0 %v5638
        %7191 = vmatprep.subr.bf16.mxu0 %v5649
        %7192 = vmatpush1.bf16.msra.mxu0 %v5648
        %7193 = vmatprep.subr.bf16.mxu0 %v5659
        %7194 = vmatpush1.bf16.msra.mxu0 %v5658
        %7195 = vmatprep.subr.bf16.mxu0 %v5669
        %7196 = vmatpush1.bf16.msra.mxu0 %v5668
        %7197 = vmatprep.subr.bf16.mxu0 %v5679
        %7198 = vmatpush1.bf16.msra.mxu0 %v5678
        %7199 = vmatprep.subr.bf16.mxu0 %v5689
        %7200 = vmatpush1.bf16.msra.mxu0 %v5688
        %7201 = vmatprep.subr.bf16.mxu0 %v5699
        %7202 = vmatpush1.bf16.msra.mxu0 %v5698
        %7203 = vmatprep.subr.bf16.mxu0 %v5709
        %7204 = vmatpush1.bf16.msra.mxu0 %v5708
        %7205 = vmatprep.subr.bf16.mxu0 %v5719
        %7206 = vmatpush1.bf16.msra.mxu0 %v5718
        %7207 = vmatprep.mubr.bf16.mxu0 %v6872
        %7208 = vmatmul.mubr.bf16.gmra.mrb[0].mxu0 %v6871
        %v7209 = vpop.f32.mrb[0].mxu0
        %v7210 = vadd.f32 %v7167, %v7209
        %v7211 = vpop.f32.mrb[0].mxu0
        %v7212 = vadd.f32 %v7169, %v7211
        %v7213 = vpop.f32.mrb[0].mxu0
        %v7214 = vadd.f32 %v7171, %v7213
        %v7215 = vpop.f32.mrb[0].mxu0
        %v7216 = vadd.f32 %v7173, %v7215
        %7217 = vdwg.mxu0
        %7218 = vmatprep.subr.bf16.mxu0 %v5729
        %7219 = vmatpush1.bf16.msra.mxu0 %v5728
        %7220 = vmatprep.subr.bf16.mxu0 %v5739
        %7221 = vmatpush1.bf16.msra.mxu0 %v5738
        %7222 = vmatprep.subr.bf16.mxu0 %v5749
        %7223 = vmatpush1.bf16.msra.mxu0 %v5748
        %7224 = vmatprep.subr.bf16.mxu0 %v5759
        %7225 = vmatpush1.bf16.msra.mxu0 %v5758
        %7226 = vmatprep.subr.bf16.mxu0 %v5769
        %7227 = vmatpush1.bf16.msra.mxu0 %v5768
        %7228 = vmatprep.subr.bf16.mxu0 %v5779
        %7229 = vmatpush1.bf16.msra.mxu0 %v5778
        %7230 = vmatprep.subr.bf16.mxu0 %v5789
        %7231 = vmatpush1.bf16.msra.mxu0 %v5788
        %7232 = vmatprep.subr.bf16.mxu0 %v5799
        %7233 = vmatpush1.bf16.msra.mxu0 %v5798
        %7234 = vmatprep.subr.bf16.mxu0 0
        %7235 = vmatpush1.bf16.msra.mxu0 0
        %7236 = vmatprep.subr.bf16.mxu0 0
        %7237 = vmatpush1.bf16.msra.mxu0 0
        %7238 = vmatprep.subr.bf16.mxu0 0
        %7239 = vmatpush1.bf16.msra.mxu0 0
        %7240 = vmatprep.subr.bf16.mxu0 0
        %7241 = vmatpush1.bf16.msra.mxu0 0
        %7242 = vmatprep.subr.bf16.mxu0 0
        %7243 = vmatpush1.bf16.msra.mxu0 0
        %7244 = vmatprep.subr.bf16.mxu0 0
        %7245 = vmatpush1.bf16.msra.mxu0 0
        %7246 = vmatprep.subr.bf16.mxu0 0
        %7247 = vmatpush1.bf16.msra.mxu0 0
        %7248 = vmatprep.subr.bf16.mxu0 0
        %7249 = vmatpush1.bf16.msra.mxu0 0
        %7250 = vmatprep.mubr.bf16.mxu0 0
        %7251 = vmatmul.mubr.bf16.gmra.mrb[0].mxu0 %v6873
        %v7252 = vpop.f32.mrb[0].mxu0
        %v7253 = vadd.f32 %v7210, %v7252
        %v7254 = vpop.f32.mrb[0].mxu0
        %v7255 = vadd.f32 %v7212, %v7254
        %v7256 = vpop.f32.mrb[0].mxu0
        %v7257 = vadd.f32 %v7214, %v7256
        %v7258 = vpop.f32.mrb[0].mxu0
        %v7259 = vadd.f32 %v7216, %v7258
        %7260 = vdwg.mxu0
        %7261 = vmatprep.subr.bf16.mxu0 %v5411
        %7262 = vmatpush1.bf16.msra.mxu0 %v5410
        %7263 = vmatprep.subr.bf16.mxu0 %v5421
        %7264 = vmatpush1.bf16.msra.mxu0 %v5420
        %7265 = vmatprep.subr.bf16.mxu0 %v5431
        %7266 = vmatpush1.bf16.msra.mxu0 %v5430
        %7267 = vmatprep.subr.bf16.mxu0 %v5441
        %7268 = vmatpush1.bf16.msra.mxu0 %v5440
        %7269 = vmatprep.subr.bf16.mxu0 %v5451
        %7270 = vmatpush1.bf16.msra.mxu0 %v5450
        %7271 = vmatprep.subr.bf16.mxu0 %v5461
        %7272 = vmatpush1.bf16.msra.mxu0 %v5460
        %7273 = vmatprep.subr.bf16.mxu0 %v5471
        %7274 = vmatpush1.bf16.msra.mxu0 %v5470
        %7275 = vmatprep.subr.bf16.mxu0 %v5481
        %7276 = vmatpush1.bf16.msra.mxu0 %v5480
        %7277 = vmatprep.subr.bf16.mxu0 %v5491
        %7278 = vmatpush1.bf16.msra.mxu0 %v5490
        %7279 = vmatprep.subr.bf16.mxu0 %v5501
        %7280 = vmatpush1.bf16.msra.mxu0 %v5500
        %7281 = vmatprep.subr.bf16.mxu0 %v5511
        %7282 = vmatpush1.bf16.msra.mxu0 %v5510
        %7283 = vmatprep.subr.bf16.mxu0 %v5521
        %7284 = vmatpush1.bf16.msra.mxu0 %v5520
        %7285 = vmatprep.subr.bf16.mxu0 %v5531
        %7286 = vmatpush1.bf16.msra.mxu0 %v5530
        %7287 = vmatprep.subr.bf16.mxu0 %v5541
        %7288 = vmatpush1.bf16.msra.mxu0 %v5540
        %7289 = vmatprep.subr.bf16.mxu0 %v5551
        %7290 = vmatpush1.bf16.msra.mxu0 %v5550
        %7291 = vmatprep.subr.bf16.mxu0 %v5561
        %7292 = vmatpush1.bf16.msra.mxu0 %v5560
        %7293 = vmatprep.mubr.bf16.mxu0 %v6870
        %7294 = vmatmul.mubr.bf16.gmra.mrb[0].mxu0 %v6869
        %v7295 = vpop.f32.mrb[0].mxu0
        %v7296 = vadd.f32 %v4181, %v7295
        %v7297 = vpop.f32.mrb[0].mxu0
        %v7298 = vadd.f32 %v4185, %v7297
        %v7299 = vpop.f32.mrb[0].mxu0
        %v7300 = vadd.f32 %v4181, %v7299
        %v7301 = vpop.f32.mrb[0].mxu0
        %v7302 = vadd.f32 %v4185, %v7301
        %7303 = vdwg.mxu0
        %7304 = vmatprep.subr.bf16.mxu0 %v5571
        %7305 = vmatpush1.bf16.msra.mxu0 %v5570
        %7306 = vmatprep.subr.bf16.mxu0 %v5581
        %7307 = vmatpush1.bf16.msra.mxu0 %v5580
        %7308 = vmatprep.subr.bf16.mxu0 %v5591
        %7309 = vmatpush1.bf16.msra.mxu0 %v5590
        %7310 = vmatprep.subr.bf16.mxu0 %v5601
        %7311 = vmatpush1.bf16.msra.mxu0 %v5600
        %7312 = vmatprep.subr.bf16.mxu0 %v5611
        %7313 = vmatpush1.bf16.msra.mxu0 %v5610
        %7314 = vmatprep.subr.bf16.mxu0 %v5621
        %7315 = vmatpush1.bf16.msra.mxu0 %v5620
        %7316 = vmatprep.subr.bf16.mxu0 %v5631
        %7317 = vmatpush1.bf16.msra.mxu0 %v5630
        %7318 = vmatprep.subr.bf16.mxu0 %v5641
        %7319 = vmatpush1.bf16.msra.mxu0 %v5640
        %7320 = vmatprep.subr.bf16.mxu0 %v5651
        %7321 = vmatpush1.bf16.msra.mxu0 %v5650
        %7322 = vmatprep.subr.bf16.mxu0 %v5661
        %7323 = vmatpush1.bf16.msra.mxu0 %v5660
        %7324 = vmatprep.subr.bf16.mxu0 %v5671
        %7325 = vmatpush1.bf16.msra.mxu0 %v5670
        %7326 = vmatprep.subr.bf16.mxu0 %v5681
        %7327 = vmatpush1.bf16.msra.mxu0 %v5680
        %7328 = vmatprep.subr.bf16.mxu0 %v5691
        %7329 = vmatpush1.bf16.msra.mxu0 %v5690
        %7330 = vmatprep.subr.bf16.mxu0 %v5701
        %7331 = vmatpush1.bf16.msra.mxu0 %v5700
        %7332 = vmatprep.subr.bf16.mxu0 %v5711
        %7333 = vmatpush1.bf16.msra.mxu0 %v5710
        %7334 = vmatprep.subr.bf16.mxu0 %v5721
        %7335 = vmatpush1.bf16.msra.mxu0 %v5720
        %7336 = vmatprep.mubr.bf16.mxu0 %v6872
        %7337 = vmatmul.mubr.bf16.gmra.mrb[0].mxu0 %v6871
        %v7338 = vpop.f32.mrb[0].mxu0
        %v7339 = vadd.f32 %v7296, %v7338
        %v7340 = vpop.f32.mrb[0].mxu0
        %v7341 = vadd.f32 %v7298, %v7340
        %v7342 = vpop.f32.mrb[0].mxu0
        %v7343 = vadd.f32 %v7300, %v7342
        %v7344 = vpop.f32.mrb[0].mxu0
        %v7345 = vadd.f32 %v7302, %v7344
        %7346 = vdwg.mxu0
        %7347 = vmatprep.subr.bf16.mxu0 %v5731
        %7348 = vmatpush1.bf16.msra.mxu0 %v5730
        %7349 = vmatprep.subr.bf16.mxu0 %v5741
        %7350 = vmatpush1.bf16.msra.mxu0 %v5740
        %7351 = vmatprep.subr.bf16.mxu0 %v5751
        %7352 = vmatpush1.bf16.msra.mxu0 %v5750
        %7353 = vmatprep.subr.bf16.mxu0 %v5761
        %7354 = vmatpush1.bf16.msra.mxu0 %v5760
        %7355 = vmatprep.subr.bf16.mxu0 %v5771
        %7356 = vmatpush1.bf16.msra.mxu0 %v5770
        %7357 = vmatprep.subr.bf16.mxu0 %v5781
        %7358 = vmatpush1.bf16.msra.mxu0 %v5780
        %7359 = vmatprep.subr.bf16.mxu0 %v5791
        %7360 = vmatpush1.bf16.msra.mxu0 %v5790
        %7361 = vmatprep.subr.bf16.mxu0 %v5801
        %7362 = vmatpush1.bf16.msra.mxu0 %v5800
        %7363 = vmatprep.subr.bf16.mxu0 0
        %7364 = vmatpush1.bf16.msra.mxu0 0
        %7365 = vmatprep.subr.bf16.mxu0 0
        %7366 = vmatpush1.bf16.msra.mxu0 0
        %7367 = vmatprep.subr.bf16.mxu0 0
        %7368 = vmatpush1.bf16.msra.mxu0 0
        %7369 = vmatprep.subr.bf16.mxu0 0
        %7370 = vmatpush1.bf16.msra.mxu0 0
        %7371 = vmatprep.subr.bf16.mxu0 0
        %7372 = vmatpush1.bf16.msra.mxu0 0
        %7373 = vmatprep.subr.bf16.mxu0 0
        %7374 = vmatpush1.bf16.msra.mxu0 0
        %7375 = vmatprep.subr.bf16.mxu0 0
        %7376 = vmatpush1.bf16.msra.mxu0 0
        %7377 = vmatprep.subr.bf16.mxu0 0
        %7378 = vmatpush1.bf16.msra.mxu0 0
        %7379 = vmatprep.mubr.bf16.mxu0 0
        %7380 = vmatmul.mubr.bf16.gmra.mrb[0].mxu0 %v6873
        %v7381 = vpop.f32.mrb[0].mxu0
        %v7382 = vadd.f32 %v7339, %v7381
        %v7383 = vpop.f32.mrb[0].mxu0
        %v7384 = vadd.f32 %v7341, %v7383
        %v7385 = vpop.f32.mrb[0].mxu0
        %v7386 = vadd.f32 %v7343, %v7385
        %v7387 = vpop.f32.mrb[0].mxu0
        %v7388 = vadd.f32 %v7345, %v7387
        %7389 = vdwg.mxu0
        %7390 = vmatprep.subr.bf16.mxu0 %v5413
        %7391 = vmatpush1.bf16.msra.mxu0 %v5412
        %7392 = vmatprep.subr.bf16.mxu0 %v5423
        %7393 = vmatpush1.bf16.msra.mxu0 %v5422
        %7394 = vmatprep.subr.bf16.mxu0 %v5433
        %7395 = vmatpush1.bf16.msra.mxu0 %v5432
        %7396 = vmatprep.subr.bf16.mxu0 %v5443
        %7397 = vmatpush1.bf16.msra.mxu0 %v5442
        %7398 = vmatprep.subr.bf16.mxu0 %v5453
        %7399 = vmatpush1.bf16.msra.mxu0 %v5452
        %7400 = vmatprep.subr.bf16.mxu0 %v5463
        %7401 = vmatpush1.bf16.msra.mxu0 %v5462
        %7402 = vmatprep.subr.bf16.mxu0 %v5473
        %7403 = vmatpush1.bf16.msra.mxu0 %v5472
        %7404 = vmatprep.subr.bf16.mxu0 %v5483
        %7405 = vmatpush1.bf16.msra.mxu0 %v5482
        %7406 = vmatprep.subr.bf16.mxu0 %v5493
        %7407 = vmatpush1.bf16.msra.mxu0 %v5492
        %7408 = vmatprep.subr.bf16.mxu0 %v5503
        %7409 = vmatpush1.bf16.msra.mxu0 %v5502
        %7410 = vmatprep.subr.bf16.mxu0 %v5513
        %7411 = vmatpush1.bf16.msra.mxu0 %v5512
        %7412 = vmatprep.subr.bf16.mxu0 %v5523
        %7413 = vmatpush1.bf16.msra.mxu0 %v5522
        %7414 = vmatprep.subr.bf16.mxu0 %v5533
        %7415 = vmatpush1.bf16.msra.mxu0 %v5532
        %7416 = vmatprep.subr.bf16.mxu0 %v5543
        %7417 = vmatpush1.bf16.msra.mxu0 %v5542
        %7418 = vmatprep.subr.bf16.mxu0 %v5553
        %7419 = vmatpush1.bf16.msra.mxu0 %v5552
        %7420 = vmatprep.subr.bf16.mxu0 %v5563
        %7421 = vmatpush1.bf16.msra.mxu0 %v5562
        %7422 = vmatprep.mubr.bf16.mxu0 %v6870
        %7423 = vmatmul.mubr.bf16.gmra.mrb[0].mxu0 %v6869
        %v7424 = vpop.f32.mrb[0].mxu0
        %v7425 = vadd.f32 %v4189, %v7424
        %v7426 = vpop.f32.mrb[0].mxu0
        %v7427 = vadd.f32 %v4193, %v7426
        %v7428 = vpop.f32.mrb[0].mxu0
        %v7429 = vadd.f32 %v4189, %v7428
        %v7430 = vpop.f32.mrb[0].mxu0
        %v7431 = vadd.f32 %v4193, %v7430
        %7432 = vdwg.mxu0
        %7433 = vmatprep.subr.bf16.mxu0 %v5573
        %7434 = vmatpush1.bf16.msra.mxu0 %v5572
        %7435 = vmatprep.subr.bf16.mxu0 %v5583
        %7436 = vmatpush1.bf16.msra.mxu0 %v5582
        %7437 = vmatprep.subr.bf16.mxu0 %v5593
        %7438 = vmatpush1.bf16.msra.mxu0 %v5592
        %7439 = vmatprep.subr.bf16.mxu0 %v5603
        %7440 = vmatpush1.bf16.msra.mxu0 %v5602
        %7441 = vmatprep.subr.bf16.mxu0 %v5613
        %7442 = vmatpush1.bf16.msra.mxu0 %v5612
        %7443 = vmatprep.subr.bf16.mxu0 %v5623
        %7444 = vmatpush1.bf16.msra.mxu0 %v5622
        %7445 = vmatprep.subr.bf16.mxu0 %v5633
        %7446 = vmatpush1.bf16.msra.mxu0 %v5632
        %7447 = vmatprep.subr.bf16.mxu0 %v5643
        %7448 = vmatpush1.bf16.msra.mxu0 %v5642
        %7449 = vmatprep.subr.bf16.mxu0 %v5653
        %7450 = vmatpush1.bf16.msra.mxu0 %v5652
        %7451 = vmatprep.subr.bf16.mxu0 %v5663
        %7452 = vmatpush1.bf16.msra.mxu0 %v5662
        %7453 = vmatprep.subr.bf16.mxu0 %v5673
        %7454 = vmatpush1.bf16.msra.mxu0 %v5672
        %7455 = vmatprep.subr.bf16.mxu0 %v5683
        %7456 = vmatpush1.bf16.msra.mxu0 %v5682
        %7457 = vmatprep.subr.bf16.mxu0 %v5693
        %7458 = vmatpush1.bf16.msra.mxu0 %v5692
        %7459 = vmatprep.subr.bf16.mxu0 %v5703
        %7460 = vmatpush1.bf16.msra.mxu0 %v5702
        %7461 = vmatprep.subr.bf16.mxu0 %v5713
        %7462 = vmatpush1.bf16.msra.mxu0 %v5712
        %7463 = vmatprep.subr.bf16.mxu0 %v5723
        %7464 = vmatpush1.bf16.msra.mxu0 %v5722
        %7465 = vmatprep.mubr.bf16.mxu0 %v6872
        %7466 = vmatmul.mubr.bf16.gmra.mrb[0].mxu0 %v6871
        %v7467 = vpop.f32.mrb[0].mxu0
        %v7468 = vadd.f32 %v7425, %v7467
        %v7469 = vpop.f32.mrb[0].mxu0
        %v7470 = vadd.f32 %v7427, %v7469
        %v7471 = vpop.f32.mrb[0].mxu0
        %v7472 = vadd.f32 %v7429, %v7471
        %v7473 = vpop.f32.mrb[0].mxu0
        %v7474 = vadd.f32 %v7431, %v7473
        %7475 = vdwg.mxu0
        %7476 = vmatprep.subr.bf16.mxu0 %v5733
        %7477 = vmatpush1.bf16.msra.mxu0 %v5732
        %7478 = vmatprep.subr.bf16.mxu0 %v5743
        %7479 = vmatpush1.bf16.msra.mxu0 %v5742
        %7480 = vmatprep.subr.bf16.mxu0 %v5753
        %7481 = vmatpush1.bf16.msra.mxu0 %v5752
        %7482 = vmatprep.subr.bf16.mxu0 %v5763
        %7483 = vmatpush1.bf16.msra.mxu0 %v5762
        %7484 = vmatprep.subr.bf16.mxu0 %v5773
        %7485 = vmatpush1.bf16.msra.mxu0 %v5772
        %7486 = vmatprep.subr.bf16.mxu0 %v5783
        %7487 = vmatpush1.bf16.msra.mxu0 %v5782
        %7488 = vmatprep.subr.bf16.mxu0 %v5793
        %7489 = vmatpush1.bf16.msra.mxu0 %v5792
        %7490 = vmatprep.subr.bf16.mxu0 %v5803
        %7491 = vmatpush1.bf16.msra.mxu0 %v5802
        %7492 = vmatprep.subr.bf16.mxu0 0
        %7493 = vmatpush1.bf16.msra.mxu0 0
        %7494 = vmatprep.subr.bf16.mxu0 0
        %7495 = vmatpush1.bf16.msra.mxu0 0
        %7496 = vmatprep.subr.bf16.mxu0 0
        %7497 = vmatpush1.bf16.msra.mxu0 0
        %7498 = vmatprep.subr.bf16.mxu0 0
        %7499 = vmatpush1.bf16.msra.mxu0 0
        %7500 = vmatprep.subr.bf16.mxu0 0
        %7501 = vmatpush1.bf16.msra.mxu0 0
        %7502 = vmatprep.subr.bf16.mxu0 0
        %7503 = vmatpush1.bf16.msra.mxu0 0
        %7504 = vmatprep.subr.bf16.mxu0 0
        %7505 = vmatpush1.bf16.msra.mxu0 0
        %7506 = vmatprep.subr.bf16.mxu0 0
        %7507 = vmatpush1.bf16.msra.mxu0 0
        %7508 = vmatprep.mubr.bf16.mxu0 0
        %7509 = vmatmul.mubr.bf16.gmra.mrb[0].mxu0 %v6873
        %v7510 = vpop.f32.mrb[0].mxu0
        %v7511 = vadd.f32 %v7468, %v7510
        %v7512 = vpop.f32.mrb[0].mxu0
        %v7513 = vadd.f32 %v7470, %v7512
        %v7514 = vpop.f32.mrb[0].mxu0
        %v7515 = vadd.f32 %v7472, %v7514
        %v7516 = vpop.f32.mrb[0].mxu0
        %v7517 = vadd.f32 %v7474, %v7516
        %7518 = vdwg.mxu0
        %v7519 = vmax.f32 %v6995, 0.0
        %v7520 = vmax.f32 %v6997, 0.0
        %v7521 = vmax.f32 %v7124, 0.0
        %v7522 = vmax.f32 %v7126, 0.0
        %v7523 = vmax.f32 %v7253, 0.0
        %v7524 = vmax.f32 %v7255, 0.0
        %v7525 = vmax.f32 %v7382, 0.0
        %v7526 = vmax.f32 %v7384, 0.0
        %v7527 = vmax.f32 %v7511, 0.0
        %v7528 = vmax.f32 %v7513, 0.0
        %v7529 = vmax.f32 %v6999, 0.0
        %v7530 = vmax.f32 %v7001, 0.0
        %v7531 = vmax.f32 %v7128, 0.0
        %v7532 = vmax.f32 %v7130, 0.0
        %v7533 = vmax.f32 %v7257, 0.0
        %v7534 = vmax.f32 %v7259, 0.0
        %v7535 = vmax.f32 %v7386, 0.0
        %v7536 = vmax.f32 %v7388, 0.0
        %v7537 = vmax.f32 %v7515, 0.0
        %v7538 = vmax.f32 %v7517, 0.0
        %v7539 = vpack.c.bf16 %v6859, %v6849
        %v7540 = vpack.c.bf16 %v6860, %v6850
        %v7541 = vpack.c.bf16 %v6861, %v6851
        %v7542 = vpack.c.bf16 %v6862, %v6852
        %v7543 = vpack.c.bf16 %v6863, %v6853
        %v7544 = vpack.c.bf16 %v6864, %v6854
        %v7545 = vpack.c.bf16 %v6865, %v6855
        %v7546 = vpack.c.bf16 %v6866, %v6856
        %v7547 = vpack.c.bf16 %v6867, %v6857
        %v7548 = vpack.c.bf16 %v6868, %v6858
        %v7549 = vld [vmem:[#allocation12] sm:$0xff]
        %v7550 = vld [vmem:[#allocation12 + $0x8] sm:$0xf]
        %v7551 = vld [vmem:[#allocation12 + $0xc] sm:$0xff]
        %v7552 = vld [vmem:[#allocation12 + $0x14] sm:$0xf]
        %v7553 = vld [vmem:[#allocation12 + $0x18] sm:$0xff]
        %v7554 = vld [vmem:[#allocation12 + $0x20] sm:$0xf]
        %v7555 = vld [vmem:[#allocation12 + $0x24] sm:$0xff]
        %v7556 = vld [vmem:[#allocation12 + $0x2c] sm:$0xf]
        %v7557 = vld [vmem:[#allocation12 + $0x30] sm:$0xff]
        %v7558 = vld [vmem:[#allocation12 + $0x38] sm:$0xf]
        %v7559 = vld [vmem:[#allocation12 + $0x3c] sm:$0xff]
        %v7560 = vld [vmem:[#allocation12 + $0x44] sm:$0xf]
        %v7561 = vld [vmem:[#allocation12 + $0x48] sm:$0xff]
        %v7562 = vld [vmem:[#allocation12 + $0x50] sm:$0xf]
        %v7563 = vld [vmem:[#allocation12 + $0x54] sm:$0xff]
        %v7564 = vld [vmem:[#allocation12 + $0x5c] sm:$0xf]
        %v7565 = vld [vmem:[#allocation12 + $0x60] sm:$0xff]
        %v7566 = vld [vmem:[#allocation12 + $0x68] sm:$0xf]
        %v7567 = vld [vmem:[#allocation12 + $0x6c] sm:$0xff]
        %v7568 = vld [vmem:[#allocation12 + $0x74] sm:$0xf]
        %v7569 = vld [vmem:[#allocation12 + $0x78] sm:$0xff]
        %v7570 = vld [vmem:[#allocation12 + $0x80] sm:$0xf]
        %v7571 = vld [vmem:[#allocation12 + $0x84] sm:$0xff]
        %v7572 = vld [vmem:[#allocation12 + $0x8c] sm:$0xf]
        %v7573 = vld [vmem:[#allocation12 + $0x90] sm:$0xff]
        %v7574 = vld [vmem:[#allocation12 + $0x98] sm:$0xf]
        %v7575 = vld [vmem:[#allocation12 + $0x9c] sm:$0xff]
        %v7576 = vld [vmem:[#allocation12 + $0xa4] sm:$0xf]
        %v7577 = vld [vmem:[#allocation12 + $0xa8] sm:$0xff]
        %v7578 = vld [vmem:[#allocation12 + $0xb0] sm:$0xf]
        %v7579 = vld [vmem:[#allocation12 + $0xb4] sm:$0xff]
        %v7580 = vld [vmem:[#allocation12 + $0xbc] sm:$0xf]
        %v7581 = vld [vmem:[#allocation12 + $0xc0] sm:$0xff]
        %v7582 = vld [vmem:[#allocation12 + $0xc8] sm:$0xf]
        %v7583 = vld [vmem:[#allocation12 + $0xcc] sm:$0xff]
        %v7584 = vld [vmem:[#allocation12 + $0xd4] sm:$0xf]
        %v7585 = vld [vmem:[#allocation12 + $0xd8] sm:$0xff]
        %v7586 = vld [vmem:[#allocation12 + $0xe0] sm:$0xf]
        %v7587 = vld [vmem:[#allocation12 + $0xe4] sm:$0xff]
        %v7588 = vld [vmem:[#allocation12 + $0xec] sm:$0xf]
        %v7589 = vld [vmem:[#allocation12 + $0xf0] sm:$0xff]
        %v7590 = vld [vmem:[#allocation12 + $0xf8] sm:$0xf]
        %v7591 = vld [vmem:[#allocation12 + $0xfc] sm:$0xff]
        %v7592 = vld [vmem:[#allocation12 + $0x104] sm:$0xf]
        %v7593 = vld [vmem:[#allocation12 + $0x108] sm:$0xff]
        %v7594 = vld [vmem:[#allocation12 + $0x110] sm:$0xf]
        %v7595 = vld [vmem:[#allocation12 + $0x114] sm:$0xff]
        %v7596 = vld [vmem:[#allocation12 + $0x11c] sm:$0xf]
        %v7597 = vld [vmem:[#allocation12 + $0x120] sm:$0xff]
        %v7598 = vld [vmem:[#allocation12 + $0x128] sm:$0xf]
        %v7599 = vld [vmem:[#allocation12 + $0x12c] sm:$0xff]
        %v7600 = vld [vmem:[#allocation12 + $0x134] sm:$0xf]
        %v7601 = vld [vmem:[#allocation12 + $0x138] sm:$0xff]
        %v7602 = vld [vmem:[#allocation12 + $0x140] sm:$0xf]
        %v7603 = vld [vmem:[#allocation12 + $0x144] sm:$0xff]
        %v7604 = vld [vmem:[#allocation12 + $0x14c] sm:$0xf]
        %v7605 = vld [vmem:[#allocation12 + $0x150] sm:$0xff]
        %v7606 = vld [vmem:[#allocation12 + $0x158] sm:$0xf]
        %v7607 = vld [vmem:[#allocation12 + $0x15c] sm:$0xff]
        %v7608 = vld [vmem:[#allocation12 + $0x164] sm:$0xf]
        %v7609 = vld [vmem:[#allocation12 + $0x168] sm:$0xff]
        %v7610 = vld [vmem:[#allocation12 + $0x170] sm:$0xf]
        %v7611 = vld [vmem:[#allocation12 + $0x174] sm:$0xff]
        %v7612 = vld [vmem:[#allocation12 + $0x17c] sm:$0xf]
        %v7613 = vld [vmem:[#allocation12 + $0x180] sm:$0xff]
        %v7614 = vld [vmem:[#allocation12 + $0x188] sm:$0xf]
        %v7615 = vld [vmem:[#allocation12 + $0x18c] sm:$0xff]
        %v7616 = vld [vmem:[#allocation12 + $0x194] sm:$0xf]
        %v7617 = vld [vmem:[#allocation12 + $0x198] sm:$0xff]
        %v7618 = vld [vmem:[#allocation12 + $0x1a0] sm:$0xf]
        %v7619 = vld [vmem:[#allocation12 + $0x1a4] sm:$0xff]
        %v7620 = vld [vmem:[#allocation12 + $0x1ac] sm:$0xf]
        %v7621 = vld [vmem:[#allocation12 + $0x1b0] sm:$0xff]
        %v7622 = vld [vmem:[#allocation12 + $0x1b8] sm:$0xf]
        %v7623 = vld [vmem:[#allocation12 + $0x1bc] sm:$0xff]
        %v7624 = vld [vmem:[#allocation12 + $0x1c4] sm:$0xf]
        %v7625 = vld [vmem:[#allocation12 + $0x1c8] sm:$0xff]
        %v7626 = vld [vmem:[#allocation12 + $0x1d0] sm:$0xf]
        %v7627 = vld [vmem:[#allocation12 + $0x1d4] sm:$0xff]
        %v7628 = vld [vmem:[#allocation12 + $0x1dc] sm:$0xf]
        %v7629 = vld [vmem:[#allocation12 + $0x1e0] sm:$0xff]
        %v7630 = vld [vmem:[#allocation12 + $0x1e8] sm:$0xf]
        %v7631 = vld [vmem:[#allocation12 + $0x1ec] sm:$0xff]
        %v7632 = vld [vmem:[#allocation12 + $0x1f4] sm:$0xf]
        %v7633 = vld [vmem:[#allocation12 + $0x1f8] sm:$0xff]
        %v7634 = vld [vmem:[#allocation12 + $0x200] sm:$0xf]
        %v7635 = vld [vmem:[#allocation12 + $0x204] sm:$0xff]
        %v7636 = vld [vmem:[#allocation12 + $0x20c] sm:$0xf]
        %v7637 = vld [vmem:[#allocation12 + $0x210] sm:$0xff]
        %v7638 = vld [vmem:[#allocation12 + $0x218] sm:$0xf]
        %v7639 = vld [vmem:[#allocation12 + $0x21c] sm:$0xff]
        %v7640 = vld [vmem:[#allocation12 + $0x224] sm:$0xf]
        %v7641 = vld [vmem:[#allocation12 + $0x228] sm:$0xff]
        %v7642 = vld [vmem:[#allocation12 + $0x230] sm:$0xf]
        %v7643 = vld [vmem:[#allocation12 + $0x234] sm:$0xff]
        %v7644 = vld [vmem:[#allocation12 + $0x23c] sm:$0xf]
        %v7645 = vld [vmem:[#allocation12 + $0x240] sm:$0xff]
        %v7646 = vld [vmem:[#allocation12 + $0x248] sm:$0xf]
        %v7647 = vld [vmem:[#allocation12 + $0x24c] sm:$0xff]
        %v7648 = vld [vmem:[#allocation12 + $0x254] sm:$0xf]
        %v7649 = vld [vmem:[#allocation12 + $0x258] sm:$0xff]
        %v7650 = vld [vmem:[#allocation12 + $0x260] sm:$0xf]
        %v7651 = vld [vmem:[#allocation12 + $0x264] sm:$0xff]
        %v7652 = vld [vmem:[#allocation12 + $0x26c] sm:$0xf]
        %v7653 = vld [vmem:[#allocation12 + $0x270] sm:$0xff]
        %v7654 = vld [vmem:[#allocation12 + $0x278] sm:$0xf]
        %v7655 = vld [vmem:[#allocation12 + $0x27c] sm:$0xff]
        %v7656 = vld [vmem:[#allocation12 + $0x284] sm:$0xf]
        %v7657 = vld [vmem:[#allocation12 + $0x288] sm:$0xff]
        %v7658 = vld [vmem:[#allocation12 + $0x290] sm:$0xf]
        %v7659 = vld [vmem:[#allocation12 + $0x294] sm:$0xff]
        %v7660 = vld [vmem:[#allocation12 + $0x29c] sm:$0xf]
        %v7661 = vld [vmem:[#allocation12 + $0x2a0] sm:$0xff]
        %v7662 = vld [vmem:[#allocation12 + $0x2a8] sm:$0xf]
        %v7663 = vld [vmem:[#allocation12 + $0x2ac] sm:$0xff]
        %v7664 = vld [vmem:[#allocation12 + $0x2b4] sm:$0xf]
        %v7665 = vld [vmem:[#allocation12 + $0x2b8] sm:$0xff]
        %v7666 = vld [vmem:[#allocation12 + $0x2c0] sm:$0xf]
        %v7667 = vld [vmem:[#allocation12 + $0x2c4] sm:$0xff]
        %v7668 = vld [vmem:[#allocation12 + $0x2cc] sm:$0xf]
        %v7669 = vld [vmem:[#allocation12 + $0x2d0] sm:$0xff]
        %v7670 = vld [vmem:[#allocation12 + $0x2d8] sm:$0xf]
        %v7671 = vld [vmem:[#allocation12 + $0x2dc] sm:$0xff]
        %v7672 = vld [vmem:[#allocation12 + $0x2e4] sm:$0xf]
        %v7673 = vld [vmem:[#allocation12 + $0x2e8] sm:$0xff]
        %v7674 = vld [vmem:[#allocation12 + $0x2f0] sm:$0xf]
        %v7675 = vld [vmem:[#allocation12 + $0x2f4] sm:$0xff]
        %v7676 = vld [vmem:[#allocation12 + $0x2fc] sm:$0xf]
        %v7677 = vld [vmem:[#allocation12 + $0x300] sm:$0xff]
        %v7678 = vld [vmem:[#allocation12 + $0x308] sm:$0xf]
        %v7679 = vld [vmem:[#allocation12 + $0x30c] sm:$0xff]
        %v7680 = vld [vmem:[#allocation12 + $0x314] sm:$0xf]
        %v7681 = vld [vmem:[#allocation12 + $0x318] sm:$0xff]
        %v7682 = vld [vmem:[#allocation12 + $0x320] sm:$0xf]
        %v7683 = vld [vmem:[#allocation12 + $0x324] sm:$0xff]
        %v7684 = vld [vmem:[#allocation12 + $0x32c] sm:$0xf]
        %v7685 = vld [vmem:[#allocation12 + $0x330] sm:$0xff]
        %v7686 = vld [vmem:[#allocation12 + $0x338] sm:$0xf]
        %v7687 = vld [vmem:[#allocation12 + $0x33c] sm:$0xff]
        %v7688 = vld [vmem:[#allocation12 + $0x344] sm:$0xf]
        %v7689 = vld [vmem:[#allocation12 + $0x348] sm:$0xff]
        %v7690 = vld [vmem:[#allocation12 + $0x350] sm:$0xf]
        %v7691 = vld [vmem:[#allocation12 + $0x354] sm:$0xff]
        %v7692 = vld [vmem:[#allocation12 + $0x35c] sm:$0xf]
        %v7693 = vld [vmem:[#allocation12 + $0x360] sm:$0xff]
        %v7694 = vld [vmem:[#allocation12 + $0x368] sm:$0xf]
        %v7695 = vld [vmem:[#allocation12 + $0x36c] sm:$0xff]
        %v7696 = vld [vmem:[#allocation12 + $0x374] sm:$0xf]
        %v7697 = vld [vmem:[#allocation12 + $0x378] sm:$0xff]
        %v7698 = vld [vmem:[#allocation12 + $0x380] sm:$0xf]
        %v7699 = vld [vmem:[#allocation12 + $0x384] sm:$0xff]
        %v7700 = vld [vmem:[#allocation12 + $0x38c] sm:$0xf]
        %v7701 = vld [vmem:[#allocation12 + $0x390] sm:$0xff]
        %v7702 = vld [vmem:[#allocation12 + $0x398] sm:$0xf]
        %v7703 = vld [vmem:[#allocation12 + $0x39c] sm:$0xff]
        %v7704 = vld [vmem:[#allocation12 + $0x3a4] sm:$0xf]
        %v7705 = vld [vmem:[#allocation12 + $0x3a8] sm:$0xff]
        %v7706 = vld [vmem:[#allocation12 + $0x3b0] sm:$0xf]
        %v7707 = vld [vmem:[#allocation12 + $0x3b4] sm:$0xff]
        %v7708 = vld [vmem:[#allocation12 + $0x3bc] sm:$0xf]
        %v7709 = vld [vmem:[#allocation12 + $0x3c0] sm:$0xff]
        %v7710 = vld [vmem:[#allocation12 + $0x3c8] sm:$0xf]
        %v7711 = vld [vmem:[#allocation12 + $0x3cc] sm:$0xff]
        %v7712 = vld [vmem:[#allocation12 + $0x3d4] sm:$0xf]
        %v7713 = vld [vmem:[#allocation12 + $0x3d8] sm:$0xff]
        %v7714 = vld [vmem:[#allocation12 + $0x3e0] sm:$0xf]
        %v7715 = vld [vmem:[#allocation12 + $0x3e4] sm:$0xff]
        %v7716 = vld [vmem:[#allocation12 + $0x3ec] sm:$0xf]
        %v7717 = vld [vmem:[#allocation12 + $0x3f0] sm:$0xff]
        %v7718 = vld [vmem:[#allocation12 + $0x3f8] sm:$0xf]
        %v7719 = vld [vmem:[#allocation12 + $0x3fc] sm:$0xff]
        %v7720 = vld [vmem:[#allocation12 + $0x404] sm:$0xf]
        %v7721 = vld [vmem:[#allocation12 + $0x408] sm:$0xff]
        %v7722 = vld [vmem:[#allocation12 + $0x410] sm:$0xf]
        %v7723 = vld [vmem:[#allocation12 + $0x414] sm:$0xff]
        %v7724 = vld [vmem:[#allocation12 + $0x41c] sm:$0xf]
        %v7725 = vld [vmem:[#allocation12 + $0x420] sm:$0xff]
        %v7726 = vld [vmem:[#allocation12 + $0x428] sm:$0xf]
        %v7727 = vld [vmem:[#allocation12 + $0x42c] sm:$0xff]
        %v7728 = vld [vmem:[#allocation12 + $0x434] sm:$0xf]
        %v7729 = vld [vmem:[#allocation12 + $0x438] sm:$0xff]
        %v7730 = vld [vmem:[#allocation12 + $0x440] sm:$0xf]
        %v7731 = vld [vmem:[#allocation12 + $0x444] sm:$0xff]
        %v7732 = vld [vmem:[#allocation12 + $0x44c] sm:$0xf]
        %v7733 = vld [vmem:[#allocation12 + $0x450] sm:$0xff]
        %v7734 = vld [vmem:[#allocation12 + $0x458] sm:$0xf]
        %v7735 = vld [vmem:[#allocation12 + $0x45c] sm:$0xff]
        %v7736 = vld [vmem:[#allocation12 + $0x464] sm:$0xf]
        %v7737 = vld [vmem:[#allocation12 + $0x468] sm:$0xff]
        %v7738 = vld [vmem:[#allocation12 + $0x470] sm:$0xf]
        %v7739 = vld [vmem:[#allocation12 + $0x474] sm:$0xff]
        %v7740 = vld [vmem:[#allocation12 + $0x47c] sm:$0xf]
        %v7741 = vld [vmem:[#allocation12 + $0x480] sm:$0xff]
        %v7742 = vld [vmem:[#allocation12 + $0x488] sm:$0xf]
        %v7743 = vld [vmem:[#allocation12 + $0x48c] sm:$0xff]
        %v7744 = vld [vmem:[#allocation12 + $0x494] sm:$0xf]
        %v7745 = vld [vmem:[#allocation12 + $0x498] sm:$0xff]
        %v7746 = vld [vmem:[#allocation12 + $0x4a0] sm:$0xf]
        %v7747 = vld [vmem:[#allocation12 + $0x4a4] sm:$0xff]
        %v7748 = vld [vmem:[#allocation12 + $0x4ac] sm:$0xf]
        %v7749 = vld [vmem:[#allocation12 + $0x4b0] sm:$0xff]
        %v7750 = vld [vmem:[#allocation12 + $0x4b8] sm:$0xf]
        %v7751 = vld [vmem:[#allocation12 + $0x4bc] sm:$0xff]
        %v7752 = vld [vmem:[#allocation12 + $0x4c4] sm:$0xf]
        %v7753 = vld [vmem:[#allocation12 + $0x4c8] sm:$0xff]
        %v7754 = vld [vmem:[#allocation12 + $0x4d0] sm:$0xf]
        %v7755 = vld [vmem:[#allocation12 + $0x4d4] sm:$0xff]
        %v7756 = vld [vmem:[#allocation12 + $0x4dc] sm:$0xf]
        %v7757 = vld [vmem:[#allocation12 + $0x4e0] sm:$0xff]
        %v7758 = vld [vmem:[#allocation12 + $0x4e8] sm:$0xf]
        %v7759 = vld [vmem:[#allocation12 + $0x4ec] sm:$0xff]
        %v7760 = vld [vmem:[#allocation12 + $0x4f4] sm:$0xf]
        %v7761 = vld [vmem:[#allocation12 + $0x4f8] sm:$0xff]
        %v7762 = vld [vmem:[#allocation12 + $0x500] sm:$0xf]
        %v7763 = vld [vmem:[#allocation12 + $0x504] sm:$0xff]
        %v7764 = vld [vmem:[#allocation12 + $0x50c] sm:$0xf]
        %v7765 = vld [vmem:[#allocation12 + $0x510] sm:$0xff]
        %v7766 = vld [vmem:[#allocation12 + $0x518] sm:$0xf]
        %v7767 = vld [vmem:[#allocation12 + $0x51c] sm:$0xff]
        %v7768 = vld [vmem:[#allocation12 + $0x524] sm:$0xf]
        %v7769 = vld [vmem:[#allocation12 + $0x528] sm:$0xff]
        %v7770 = vld [vmem:[#allocation12 + $0x530] sm:$0xf]
        %v7771 = vld [vmem:[#allocation12 + $0x534] sm:$0xff]
        %v7772 = vld [vmem:[#allocation12 + $0x53c] sm:$0xf]
        %v7773 = vld [vmem:[#allocation12 + $0x540] sm:$0xff]
        %v7774 = vld [vmem:[#allocation12 + $0x548] sm:$0xf]
        %v7775 = vld [vmem:[#allocation12 + $0x54c] sm:$0xff]
        %v7776 = vld [vmem:[#allocation12 + $0x554] sm:$0xf]
        %v7777 = vld [vmem:[#allocation12 + $0x558] sm:$0xff]
        %v7778 = vld [vmem:[#allocation12 + $0x560] sm:$0xf]
        %v7779 = vld [vmem:[#allocation12 + $0x564] sm:$0xff]
        %v7780 = vld [vmem:[#allocation12 + $0x56c] sm:$0xf]
        %v7781 = vld [vmem:[#allocation12 + $0x570] sm:$0xff]
        %v7782 = vld [vmem:[#allocation12 + $0x578] sm:$0xf]
        %v7783 = vld [vmem:[#allocation12 + $0x57c] sm:$0xff]
        %v7784 = vld [vmem:[#allocation12 + $0x584] sm:$0xf]
        %v7785 = vld [vmem:[#allocation12 + $0x588] sm:$0xff]
        %v7786 = vld [vmem:[#allocation12 + $0x590] sm:$0xf]
        %v7787 = vld [vmem:[#allocation12 + $0x594] sm:$0xff]
        %v7788 = vld [vmem:[#allocation12 + $0x59c] sm:$0xf]
        %v7789 = vld [vmem:[#allocation12 + $0x5a0] sm:$0xff]
        %v7790 = vld [vmem:[#allocation12 + $0x5a8] sm:$0xf]
        %v7791 = vld [vmem:[#allocation12 + $0x5ac] sm:$0xff]
        %v7792 = vld [vmem:[#allocation12 + $0x5b4] sm:$0xf]
        %v7793 = vld [vmem:[#allocation12 + $0x5b8] sm:$0xff]
        %v7794 = vld [vmem:[#allocation12 + $0x5c0] sm:$0xf]
        %v7795 = vld [vmem:[#allocation12 + $0x5c4] sm:$0xff]
        %v7796 = vld [vmem:[#allocation12 + $0x5cc] sm:$0xf]
        %v7797 = vld [vmem:[#allocation12 + $0x5d0] sm:$0xff]
        %v7798 = vld [vmem:[#allocation12 + $0x5d8] sm:$0xf]
        %v7799 = vld [vmem:[#allocation12 + $0x5dc] sm:$0xff]
        %v7800 = vld [vmem:[#allocation12 + $0x5e4] sm:$0xf]
        %v7801 = vld [vmem:[#allocation12 + $0x5e8] sm:$0xff]
        %v7802 = vld [vmem:[#allocation12 + $0x5f0] sm:$0xf]
        %v7803 = vld [vmem:[#allocation12 + $0x5f4] sm:$0xff]
        %v7804 = vld [vmem:[#allocation12 + $0x5fc] sm:$0xf]
        %v7805 = vld [vmem:[#allocation12 + $0x600] sm:$0xff]
        %v7806 = vld [vmem:[#allocation12 + $0x608] sm:$0xf]
        %v7807 = vld [vmem:[#allocation12 + $0x60c] sm:$0xff]
        %v7808 = vld [vmem:[#allocation12 + $0x614] sm:$0xf]
        %v7809 = vld [vmem:[#allocation12 + $0x618] sm:$0xff]
        %v7810 = vld [vmem:[#allocation12 + $0x620] sm:$0xf]
        %v7811 = vld [vmem:[#allocation12 + $0x624] sm:$0xff]
        %v7812 = vld [vmem:[#allocation12 + $0x62c] sm:$0xf]
        %v7813 = vld [vmem:[#allocation12 + $0x630] sm:$0xff]
        %v7814 = vld [vmem:[#allocation12 + $0x638] sm:$0xf]
        %v7815 = vld [vmem:[#allocation12 + $0x63c] sm:$0xff]
        %v7816 = vld [vmem:[#allocation12 + $0x644] sm:$0xf]
        %v7817 = vld [vmem:[#allocation12 + $0x648] sm:$0xff]
        %v7818 = vld [vmem:[#allocation12 + $0x650] sm:$0xf]
        %v7819 = vld [vmem:[#allocation12 + $0x654] sm:$0xff]
        %v7820 = vld [vmem:[#allocation12 + $0x65c] sm:$0xf]
        %v7821 = vld [vmem:[#allocation12 + $0x660] sm:$0xff]
        %v7822 = vld [vmem:[#allocation12 + $0x668] sm:$0xf]
        %v7823 = vld [vmem:[#allocation12 + $0x66c] sm:$0xff]
        %v7824 = vld [vmem:[#allocation12 + $0x674] sm:$0xf]
        %v7825 = vld [vmem:[#allocation12 + $0x678] sm:$0xff]
        %v7826 = vld [vmem:[#allocation12 + $0x680] sm:$0xf]
        %v7827 = vld [vmem:[#allocation12 + $0x684] sm:$0xff]
        %v7828 = vld [vmem:[#allocation12 + $0x68c] sm:$0xf]
        %v7829 = vld [vmem:[#allocation12 + $0x690] sm:$0xff]
        %v7830 = vld [vmem:[#allocation12 + $0x698] sm:$0xf]
        %v7831 = vld [vmem:[#allocation12 + $0x69c] sm:$0xff]
        %v7832 = vld [vmem:[#allocation12 + $0x6a4] sm:$0xf]
        %v7833 = vld [vmem:[#allocation12 + $0x6a8] sm:$0xff]
        %v7834 = vld [vmem:[#allocation12 + $0x6b0] sm:$0xf]
        %v7835 = vld [vmem:[#allocation12 + $0x6b4] sm:$0xff]
        %v7836 = vld [vmem:[#allocation12 + $0x6bc] sm:$0xf]
        %v7837 = vld [vmem:[#allocation12 + $0x6c0] sm:$0xff]
        %v7838 = vld [vmem:[#allocation12 + $0x6c8] sm:$0xf]
        %v7839 = vld [vmem:[#allocation12 + $0x6cc] sm:$0xff]
        %v7840 = vld [vmem:[#allocation12 + $0x6d4] sm:$0xf]
        %v7841 = vld [vmem:[#allocation12 + $0x6d8] sm:$0xff]
        %v7842 = vld [vmem:[#allocation12 + $0x6e0] sm:$0xf]
        %v7843 = vld [vmem:[#allocation12 + $0x6e4] sm:$0xff]
        %v7844 = vld [vmem:[#allocation12 + $0x6ec] sm:$0xf]
        %v7845 = vld [vmem:[#allocation12 + $0x6f0] sm:$0xff]
        %v7846 = vld [vmem:[#allocation12 + $0x6f8] sm:$0xf]
        %v7847 = vld [vmem:[#allocation12 + $0x6fc] sm:$0xff]
        %v7848 = vld [vmem:[#allocation12 + $0x704] sm:$0xf]
        %v7849 = vld [vmem:[#allocation12 + $0x708] sm:$0xff]
        %v7850 = vld [vmem:[#allocation12 + $0x710] sm:$0xf]
        %v7851 = vld [vmem:[#allocation12 + $0x714] sm:$0xff]
        %v7852 = vld [vmem:[#allocation12 + $0x71c] sm:$0xf]
        %v7853 = vld [vmem:[#allocation12 + $0x720] sm:$0xff]
        %v7854 = vld [vmem:[#allocation12 + $0x728] sm:$0xf]
        %v7855 = vld [vmem:[#allocation12 + $0x72c] sm:$0xff]
        %v7856 = vld [vmem:[#allocation12 + $0x734] sm:$0xf]
        %v7857 = vld [vmem:[#allocation12 + $0x738] sm:$0xff]
        %v7858 = vld [vmem:[#allocation12 + $0x740] sm:$0xf]
        %v7859 = vld [vmem:[#allocation12 + $0x744] sm:$0xff]
        %v7860 = vld [vmem:[#allocation12 + $0x74c] sm:$0xf]
        %v7861 = vld [vmem:[#allocation12 + $0x750] sm:$0xff]
        %v7862 = vld [vmem:[#allocation12 + $0x758] sm:$0xf]
        %v7863 = vld [vmem:[#allocation12 + $0x75c] sm:$0xff]
        %v7864 = vld [vmem:[#allocation12 + $0x764] sm:$0xf]
        %v7865 = vld [vmem:[#allocation12 + $0x768] sm:$0xff]
        %v7866 = vld [vmem:[#allocation12 + $0x770] sm:$0xf]
        %v7867 = vld [vmem:[#allocation12 + $0x774] sm:$0xff]
        %v7868 = vld [vmem:[#allocation12 + $0x77c] sm:$0xf]
        %v7869 = vld [vmem:[#allocation13] sm:$0x7]
        %v7871 = vlaneseq
        %v7872 = vshrl.u32 %v7871, 7
        %v7873 = vsub.s32 0, %v7872
        %v7874 = vrot.slane %v7869, %v7873
        %v7875 = vlaneseq
        %v7876 = vshrl.u32 %v7875, 7
        %v7877 = vsub.s32 1, %v7876
        %v7878 = vrot.slane %v7869, %v7877
        %v7879 = vlaneseq
        %v7880 = vshrl.u32 %v7879, 7
        %v7881 = vsub.s32 2, %v7880
        %v7882 = vrot.slane %v7869, %v7881
        %v8206 = vunpack.c.l.b16 %v7549
        %v8207 = vunpack.c.h.b16 %v7549
        %v8208 = vunpack.c.l.b16 %v7550
        %v8209 = vunpack.c.l.b16 %v7551
        %v8210 = vunpack.c.h.b16 %v7551
        %v8211 = vunpack.c.l.b16 %v7552
        %v8212 = vunpack.c.l.b16 %v7553
        %v8213 = vunpack.c.h.b16 %v7553
        %v8214 = vunpack.c.l.b16 %v7554
        %v8215 = vunpack.c.l.b16 %v7555
        %v8216 = vunpack.c.h.b16 %v7555
        %v8217 = vunpack.c.l.b16 %v7556
        %v8218 = vunpack.c.l.b16 %v7557
        %v8219 = vunpack.c.h.b16 %v7557
        %v8220 = vunpack.c.l.b16 %v7558
        %v8221 = vunpack.c.l.b16 %v7559
        %v8222 = vunpack.c.h.b16 %v7559
        %v8223 = vunpack.c.l.b16 %v7560
        %v8224 = vunpack.c.l.b16 %v7561
        %v8225 = vunpack.c.h.b16 %v7561
        %v8226 = vunpack.c.l.b16 %v7562
        %v8227 = vunpack.c.l.b16 %v7563
        %v8228 = vunpack.c.h.b16 %v7563
        %v8229 = vunpack.c.l.b16 %v7564
        %v8230 = vunpack.c.l.b16 %v7565
        %v8231 = vunpack.c.h.b16 %v7565
        %v8232 = vunpack.c.l.b16 %v7566
        %v8233 = vunpack.c.l.b16 %v7567
        %v8234 = vunpack.c.h.b16 %v7567
        %v8235 = vunpack.c.l.b16 %v7568
        %v8236 = vunpack.c.l.b16 %v7569
        %v8237 = vunpack.c.h.b16 %v7569
        %v8238 = vunpack.c.l.b16 %v7570
        %v8239 = vunpack.c.l.b16 %v7571
        %v8240 = vunpack.c.h.b16 %v7571
        %v8241 = vunpack.c.l.b16 %v7572
        %v8242 = vunpack.c.l.b16 %v7573
        %v8243 = vunpack.c.h.b16 %v7573
        %v8244 = vunpack.c.l.b16 %v7574
        %v8245 = vunpack.c.l.b16 %v7575
        %v8246 = vunpack.c.h.b16 %v7575
        %v8247 = vunpack.c.l.b16 %v7576
        %v8248 = vunpack.c.l.b16 %v7577
        %v8249 = vunpack.c.h.b16 %v7577
        %v8250 = vunpack.c.l.b16 %v7578
        %v8251 = vunpack.c.l.b16 %v7579
        %v8252 = vunpack.c.h.b16 %v7579
        %v8253 = vunpack.c.l.b16 %v7580
        %v8254 = vunpack.c.l.b16 %v7581
        %v8255 = vunpack.c.h.b16 %v7581
        %v8256 = vunpack.c.l.b16 %v7582
        %v8257 = vunpack.c.l.b16 %v7583
        %v8258 = vunpack.c.h.b16 %v7583
        %v8259 = vunpack.c.l.b16 %v7584
        %v8260 = vunpack.c.l.b16 %v7585
        %v8261 = vunpack.c.h.b16 %v7585
        %v8262 = vunpack.c.l.b16 %v7586
        %v8263 = vunpack.c.l.b16 %v7587
        %v8264 = vunpack.c.h.b16 %v7587
        %v8265 = vunpack.c.l.b16 %v7588
        %v8266 = vunpack.c.l.b16 %v7589
        %v8267 = vunpack.c.h.b16 %v7589
        %v8268 = vunpack.c.l.b16 %v7590
        %v8269 = vunpack.c.l.b16 %v7591
        %v8270 = vunpack.c.h.b16 %v7591
        %v8271 = vunpack.c.l.b16 %v7592
        %v8272 = vunpack.c.l.b16 %v7593
        %v8273 = vunpack.c.h.b16 %v7593
        %v8274 = vunpack.c.l.b16 %v7594
        %v8275 = vunpack.c.l.b16 %v7595
        %v8276 = vunpack.c.h.b16 %v7595
        %v8277 = vunpack.c.l.b16 %v7596
        %v8278 = vunpack.c.l.b16 %v7597
        %v8279 = vunpack.c.h.b16 %v7597
        %v8280 = vunpack.c.l.b16 %v7598
        %v8281 = vunpack.c.l.b16 %v7599
        %v8282 = vunpack.c.h.b16 %v7599
        %v8283 = vunpack.c.l.b16 %v7600
        %v8284 = vunpack.c.l.b16 %v7601
        %v8285 = vunpack.c.h.b16 %v7601
        %v8286 = vunpack.c.l.b16 %v7602
        %v8287 = vunpack.c.l.b16 %v7603
        %v8288 = vunpack.c.h.b16 %v7603
        %v8289 = vunpack.c.l.b16 %v7604
        %v8290 = vunpack.c.l.b16 %v7605
        %v8291 = vunpack.c.h.b16 %v7605
        %v8292 = vunpack.c.l.b16 %v7606
        %v8293 = vunpack.c.l.b16 %v7607
        %v8294 = vunpack.c.h.b16 %v7607
        %v8295 = vunpack.c.l.b16 %v7608
        %v8296 = vunpack.c.l.b16 %v7609
        %v8297 = vunpack.c.h.b16 %v7609
        %v8298 = vunpack.c.l.b16 %v7610
        %v8299 = vunpack.c.l.b16 %v7611
        %v8300 = vunpack.c.h.b16 %v7611
        %v8301 = vunpack.c.l.b16 %v7612
        %v8302 = vunpack.c.l.b16 %v7613
        %v8303 = vunpack.c.h.b16 %v7613
        %v8304 = vunpack.c.l.b16 %v7614
        %v8305 = vunpack.c.l.b16 %v7615
        %v8306 = vunpack.c.h.b16 %v7615
        %v8307 = vunpack.c.l.b16 %v7616
        %v8308 = vunpack.c.l.b16 %v7617
        %v8309 = vunpack.c.h.b16 %v7617
        %v8310 = vunpack.c.l.b16 %v7618
        %v8311 = vunpack.c.l.b16 %v7619
        %v8312 = vunpack.c.h.b16 %v7619
        %v8313 = vunpack.c.l.b16 %v7620
        %v8314 = vunpack.c.l.b16 %v7621
        %v8315 = vunpack.c.h.b16 %v7621
        %v8316 = vunpack.c.l.b16 %v7622
        %v8317 = vunpack.c.l.b16 %v7623
        %v8318 = vunpack.c.h.b16 %v7623
        %v8319 = vunpack.c.l.b16 %v7624
        %v8320 = vunpack.c.l.b16 %v7625
        %v8321 = vunpack.c.h.b16 %v7625
        %v8322 = vunpack.c.l.b16 %v7626
        %v8323 = vunpack.c.l.b16 %v7627
        %v8324 = vunpack.c.h.b16 %v7627
        %v8325 = vunpack.c.l.b16 %v7628
        %v8326 = vunpack.c.l.b16 %v7629
        %v8327 = vunpack.c.h.b16 %v7629
        %v8328 = vunpack.c.l.b16 %v7630
        %v8329 = vunpack.c.l.b16 %v7631
        %v8330 = vunpack.c.h.b16 %v7631
        %v8331 = vunpack.c.l.b16 %v7632
        %v8332 = vunpack.c.l.b16 %v7633
        %v8333 = vunpack.c.h.b16 %v7633
        %v8334 = vunpack.c.l.b16 %v7634
        %v8335 = vunpack.c.l.b16 %v7635
        %v8336 = vunpack.c.h.b16 %v7635
        %v8337 = vunpack.c.l.b16 %v7636
        %v8338 = vunpack.c.l.b16 %v7637
        %v8339 = vunpack.c.h.b16 %v7637
        %v8340 = vunpack.c.l.b16 %v7638
        %v8341 = vunpack.c.l.b16 %v7639
        %v8342 = vunpack.c.h.b16 %v7639
        %v8343 = vunpack.c.l.b16 %v7640
        %v8344 = vunpack.c.l.b16 %v7641
        %v8345 = vunpack.c.h.b16 %v7641
        %v8346 = vunpack.c.l.b16 %v7642
        %v8347 = vunpack.c.l.b16 %v7643
        %v8348 = vunpack.c.h.b16 %v7643
        %v8349 = vunpack.c.l.b16 %v7644
        %v8350 = vunpack.c.l.b16 %v7645
        %v8351 = vunpack.c.h.b16 %v7645
        %v8352 = vunpack.c.l.b16 %v7646
        %v8353 = vunpack.c.l.b16 %v7647
        %v8354 = vunpack.c.h.b16 %v7647
        %v8355 = vunpack.c.l.b16 %v7648
        %v8356 = vunpack.c.l.b16 %v7649
        %v8357 = vunpack.c.h.b16 %v7649
        %v8358 = vunpack.c.l.b16 %v7650
        %v8359 = vunpack.c.l.b16 %v7651
        %v8360 = vunpack.c.h.b16 %v7651
        %v8361 = vunpack.c.l.b16 %v7652
        %v8362 = vunpack.c.l.b16 %v7653
        %v8363 = vunpack.c.h.b16 %v7653
        %v8364 = vunpack.c.l.b16 %v7654
        %v8365 = vunpack.c.l.b16 %v7655
        %v8366 = vunpack.c.h.b16 %v7655
        %v8367 = vunpack.c.l.b16 %v7656
        %v8368 = vunpack.c.l.b16 %v7657
        %v8369 = vunpack.c.h.b16 %v7657
        %v8370 = vunpack.c.l.b16 %v7658
        %v8371 = vunpack.c.l.b16 %v7659
        %v8372 = vunpack.c.h.b16 %v7659
        %v8373 = vunpack.c.l.b16 %v7660
        %v8374 = vunpack.c.l.b16 %v7661
        %v8375 = vunpack.c.h.b16 %v7661
        %v8376 = vunpack.c.l.b16 %v7662
        %v8377 = vunpack.c.l.b16 %v7663
        %v8378 = vunpack.c.h.b16 %v7663
        %v8379 = vunpack.c.l.b16 %v7664
        %v8380 = vunpack.c.l.b16 %v7665
        %v8381 = vunpack.c.h.b16 %v7665
        %v8382 = vunpack.c.l.b16 %v7666
        %v8383 = vunpack.c.l.b16 %v7667
        %v8384 = vunpack.c.h.b16 %v7667
        %v8385 = vunpack.c.l.b16 %v7668
        %v8386 = vunpack.c.l.b16 %v7669
        %v8387 = vunpack.c.h.b16 %v7669
        %v8388 = vunpack.c.l.b16 %v7670
        %v8389 = vunpack.c.l.b16 %v7671
        %v8390 = vunpack.c.h.b16 %v7671
        %v8391 = vunpack.c.l.b16 %v7672
        %v8392 = vunpack.c.l.b16 %v7673
        %v8393 = vunpack.c.h.b16 %v7673
        %v8394 = vunpack.c.l.b16 %v7674
        %v8395 = vunpack.c.l.b16 %v7675
        %v8396 = vunpack.c.h.b16 %v7675
        %v8397 = vunpack.c.l.b16 %v7676
        %v8398 = vunpack.c.l.b16 %v7677
        %v8399 = vunpack.c.h.b16 %v7677
        %v8400 = vunpack.c.l.b16 %v7678
        %v8401 = vunpack.c.l.b16 %v7679
        %v8402 = vunpack.c.h.b16 %v7679
        %v8403 = vunpack.c.l.b16 %v7680
        %v8404 = vunpack.c.l.b16 %v7681
        %v8405 = vunpack.c.h.b16 %v7681
        %v8406 = vunpack.c.l.b16 %v7682
        %v8407 = vunpack.c.l.b16 %v7683
        %v8408 = vunpack.c.h.b16 %v7683
        %v8409 = vunpack.c.l.b16 %v7684
        %v8410 = vunpack.c.l.b16 %v7685
        %v8411 = vunpack.c.h.b16 %v7685
        %v8412 = vunpack.c.l.b16 %v7686
        %v8413 = vunpack.c.l.b16 %v7687
        %v8414 = vunpack.c.h.b16 %v7687
        %v8415 = vunpack.c.l.b16 %v7688
        %v8416 = vunpack.c.l.b16 %v7689
        %v8417 = vunpack.c.h.b16 %v7689
        %v8418 = vunpack.c.l.b16 %v7690
        %v8419 = vunpack.c.l.b16 %v7691
        %v8420 = vunpack.c.h.b16 %v7691
        %v8421 = vunpack.c.l.b16 %v7692
        %v8422 = vunpack.c.l.b16 %v7693
        %v8423 = vunpack.c.h.b16 %v7693
        %v8424 = vunpack.c.l.b16 %v7694
        %v8425 = vunpack.c.l.b16 %v7695
        %v8426 = vunpack.c.h.b16 %v7695
        %v8427 = vunpack.c.l.b16 %v7696
        %v8428 = vunpack.c.l.b16 %v7697
        %v8429 = vunpack.c.h.b16 %v7697
        %v8430 = vunpack.c.l.b16 %v7698
        %v8431 = vunpack.c.l.b16 %v7699
        %v8432 = vunpack.c.h.b16 %v7699
        %v8433 = vunpack.c.l.b16 %v7700
        %v8434 = vunpack.c.l.b16 %v7701
        %v8435 = vunpack.c.h.b16 %v7701
        %v8436 = vunpack.c.l.b16 %v7702
        %v8437 = vunpack.c.l.b16 %v7703
        %v8438 = vunpack.c.h.b16 %v7703
        %v8439 = vunpack.c.l.b16 %v7704
        %v8440 = vunpack.c.l.b16 %v7705
        %v8441 = vunpack.c.h.b16 %v7705
        %v8442 = vunpack.c.l.b16 %v7706
        %v8443 = vunpack.c.l.b16 %v7707
        %v8444 = vunpack.c.h.b16 %v7707
        %v8445 = vunpack.c.l.b16 %v7708
        %v8446 = vunpack.c.l.b16 %v7709
        %v8447 = vunpack.c.h.b16 %v7709
        %v8448 = vunpack.c.l.b16 %v7710
        %v8449 = vunpack.c.l.b16 %v7711
        %v8450 = vunpack.c.h.b16 %v7711
        %v8451 = vunpack.c.l.b16 %v7712
        %v8452 = vunpack.c.l.b16 %v7713
        %v8453 = vunpack.c.h.b16 %v7713
        %v8454 = vunpack.c.l.b16 %v7714
        %v8455 = vunpack.c.l.b16 %v7715
        %v8456 = vunpack.c.h.b16 %v7715
        %v8457 = vunpack.c.l.b16 %v7716
        %v8458 = vunpack.c.l.b16 %v7717
        %v8459 = vunpack.c.h.b16 %v7717
        %v8460 = vunpack.c.l.b16 %v7718
        %v8461 = vunpack.c.l.b16 %v7719
        %v8462 = vunpack.c.h.b16 %v7719
        %v8463 = vunpack.c.l.b16 %v7720
        %v8464 = vunpack.c.l.b16 %v7721
        %v8465 = vunpack.c.h.b16 %v7721
        %v8466 = vunpack.c.l.b16 %v7722
        %v8467 = vunpack.c.l.b16 %v7723
        %v8468 = vunpack.c.h.b16 %v7723
        %v8469 = vunpack.c.l.b16 %v7724
        %v8470 = vunpack.c.l.b16 %v7725
        %v8471 = vunpack.c.h.b16 %v7725
        %v8472 = vunpack.c.l.b16 %v7726
        %v8473 = vunpack.c.l.b16 %v7727
        %v8474 = vunpack.c.h.b16 %v7727
        %v8475 = vunpack.c.l.b16 %v7728
        %v8476 = vunpack.c.l.b16 %v7729
        %v8477 = vunpack.c.h.b16 %v7729
        %v8478 = vunpack.c.l.b16 %v7730
        %v8479 = vunpack.c.l.b16 %v7731
        %v8480 = vunpack.c.h.b16 %v7731
        %v8481 = vunpack.c.l.b16 %v7732
        %v8482 = vunpack.c.l.b16 %v7733
        %v8483 = vunpack.c.h.b16 %v7733
        %v8484 = vunpack.c.l.b16 %v7734
        %v8485 = vunpack.c.l.b16 %v7735
        %v8486 = vunpack.c.h.b16 %v7735
        %v8487 = vunpack.c.l.b16 %v7736
        %v8488 = vunpack.c.l.b16 %v7737
        %v8489 = vunpack.c.h.b16 %v7737
        %v8490 = vunpack.c.l.b16 %v7738
        %v8491 = vunpack.c.l.b16 %v7739
        %v8492 = vunpack.c.h.b16 %v7739
        %v8493 = vunpack.c.l.b16 %v7740
        %v8494 = vunpack.c.l.b16 %v7741
        %v8495 = vunpack.c.h.b16 %v7741
        %v8496 = vunpack.c.l.b16 %v7742
        %v8497 = vunpack.c.l.b16 %v7743
        %v8498 = vunpack.c.h.b16 %v7743
        %v8499 = vunpack.c.l.b16 %v7744
        %v8500 = vunpack.c.l.b16 %v7745
        %v8501 = vunpack.c.h.b16 %v7745
        %v8502 = vunpack.c.l.b16 %v7746
        %v8503 = vunpack.c.l.b16 %v7747
        %v8504 = vunpack.c.h.b16 %v7747
        %v8505 = vunpack.c.l.b16 %v7748
        %v8506 = vunpack.c.l.b16 %v7749
        %v8507 = vunpack.c.h.b16 %v7749
        %v8508 = vunpack.c.l.b16 %v7750
        %v8509 = vunpack.c.l.b16 %v7751
        %v8510 = vunpack.c.h.b16 %v7751
        %v8511 = vunpack.c.l.b16 %v7752
        %v8512 = vunpack.c.l.b16 %v7753
        %v8513 = vunpack.c.h.b16 %v7753
        %v8514 = vunpack.c.l.b16 %v7754
        %v8515 = vunpack.c.l.b16 %v7755
        %v8516 = vunpack.c.h.b16 %v7755
        %v8517 = vunpack.c.l.b16 %v7756
        %v8518 = vunpack.c.l.b16 %v7757
        %v8519 = vunpack.c.h.b16 %v7757
        %v8520 = vunpack.c.l.b16 %v7758
        %v8521 = vunpack.c.l.b16 %v7759
        %v8522 = vunpack.c.h.b16 %v7759
        %v8523 = vunpack.c.l.b16 %v7760
        %v8524 = vunpack.c.l.b16 %v7761
        %v8525 = vunpack.c.h.b16 %v7761
        %v8526 = vunpack.c.l.b16 %v7762
        %v8527 = vunpack.c.l.b16 %v7763
        %v8528 = vunpack.c.h.b16 %v7763
        %v8529 = vunpack.c.l.b16 %v7764
        %v8530 = vunpack.c.l.b16 %v7765
        %v8531 = vunpack.c.h.b16 %v7765
        %v8532 = vunpack.c.l.b16 %v7766
        %v8533 = vunpack.c.l.b16 %v7767
        %v8534 = vunpack.c.h.b16 %v7767
        %v8535 = vunpack.c.l.b16 %v7768
        %v8536 = vunpack.c.l.b16 %v7769
        %v8537 = vunpack.c.h.b16 %v7769
        %v8538 = vunpack.c.l.b16 %v7770
        %v8539 = vunpack.c.l.b16 %v7771
        %v8540 = vunpack.c.h.b16 %v7771
        %v8541 = vunpack.c.l.b16 %v7772
        %v8542 = vunpack.c.l.b16 %v7773
        %v8543 = vunpack.c.h.b16 %v7773
        %v8544 = vunpack.c.l.b16 %v7774
        %v8545 = vunpack.c.l.b16 %v7775
        %v8546 = vunpack.c.h.b16 %v7775
        %v8547 = vunpack.c.l.b16 %v7776
        %v8548 = vunpack.c.l.b16 %v7777
        %v8549 = vunpack.c.h.b16 %v7777
        %v8550 = vunpack.c.l.b16 %v7778
        %v8551 = vunpack.c.l.b16 %v7779
        %v8552 = vunpack.c.h.b16 %v7779
        %v8553 = vunpack.c.l.b16 %v7780
        %v8554 = vunpack.c.l.b16 %v7781
        %v8555 = vunpack.c.h.b16 %v7781
        %v8556 = vunpack.c.l.b16 %v7782
        %v8557 = vunpack.c.l.b16 %v7783
        %v8558 = vunpack.c.h.b16 %v7783
        %v8559 = vunpack.c.l.b16 %v7784
        %v8560 = vunpack.c.l.b16 %v7785
        %v8561 = vunpack.c.h.b16 %v7785
        %v8562 = vunpack.c.l.b16 %v7786
        %v8563 = vunpack.c.l.b16 %v7787
        %v8564 = vunpack.c.h.b16 %v7787
        %v8565 = vunpack.c.l.b16 %v7788
        %v8566 = vunpack.c.l.b16 %v7789
        %v8567 = vunpack.c.h.b16 %v7789
        %v8568 = vunpack.c.l.b16 %v7790
        %v8569 = vunpack.c.l.b16 %v7791
        %v8570 = vunpack.c.h.b16 %v7791
        %v8571 = vunpack.c.l.b16 %v7792
        %v8572 = vunpack.c.l.b16 %v7793
        %v8573 = vunpack.c.h.b16 %v7793
        %v8574 = vunpack.c.l.b16 %v7794
        %v8575 = vunpack.c.l.b16 %v7795
        %v8576 = vunpack.c.h.b16 %v7795
        %v8577 = vunpack.c.l.b16 %v7796
        %v8578 = vunpack.c.l.b16 %v7797
        %v8579 = vunpack.c.h.b16 %v7797
        %v8580 = vunpack.c.l.b16 %v7798
        %v8581 = vunpack.c.l.b16 %v7799
        %v8582 = vunpack.c.h.b16 %v7799
        %v8583 = vunpack.c.l.b16 %v7800
        %v8584 = vunpack.c.l.b16 %v7801
        %v8585 = vunpack.c.h.b16 %v7801
        %v8586 = vunpack.c.l.b16 %v7802
        %v8587 = vunpack.c.l.b16 %v7803
        %v8588 = vunpack.c.h.b16 %v7803
        %v8589 = vunpack.c.l.b16 %v7804
        %v8590 = vunpack.c.l.b16 %v7805
        %v8591 = vunpack.c.h.b16 %v7805
        %v8592 = vunpack.c.l.b16 %v7806
        %v8593 = vunpack.c.l.b16 %v7807
        %v8594 = vunpack.c.h.b16 %v7807
        %v8595 = vunpack.c.l.b16 %v7808
        %v8596 = vunpack.c.l.b16 %v7809
        %v8597 = vunpack.c.h.b16 %v7809
        %v8598 = vunpack.c.l.b16 %v7810
        %v8599 = vunpack.c.l.b16 %v7811
        %v8600 = vunpack.c.h.b16 %v7811
        %v8601 = vunpack.c.l.b16 %v7812
        %v8602 = vunpack.c.l.b16 %v7813
        %v8603 = vunpack.c.h.b16 %v7813
        %v8604 = vunpack.c.l.b16 %v7814
        %v8605 = vunpack.c.l.b16 %v7815
        %v8606 = vunpack.c.h.b16 %v7815
        %v8607 = vunpack.c.l.b16 %v7816
        %v8608 = vunpack.c.l.b16 %v7817
        %v8609 = vunpack.c.h.b16 %v7817
        %v8610 = vunpack.c.l.b16 %v7818
        %v8611 = vunpack.c.l.b16 %v7819
        %v8612 = vunpack.c.h.b16 %v7819
        %v8613 = vunpack.c.l.b16 %v7820
        %v8614 = vunpack.c.l.b16 %v7821
        %v8615 = vunpack.c.h.b16 %v7821
        %v8616 = vunpack.c.l.b16 %v7822
        %v8617 = vunpack.c.l.b16 %v7823
        %v8618 = vunpack.c.h.b16 %v7823
        %v8619 = vunpack.c.l.b16 %v7824
        %v8620 = vunpack.c.l.b16 %v7825
        %v8621 = vunpack.c.h.b16 %v7825
        %v8622 = vunpack.c.l.b16 %v7826
        %v8623 = vunpack.c.l.b16 %v7827
        %v8624 = vunpack.c.h.b16 %v7827
        %v8625 = vunpack.c.l.b16 %v7828
        %v8626 = vunpack.c.l.b16 %v7829
        %v8627 = vunpack.c.h.b16 %v7829
        %v8628 = vunpack.c.l.b16 %v7830
        %v8629 = vunpack.c.l.b16 %v7831
        %v8630 = vunpack.c.h.b16 %v7831
        %v8631 = vunpack.c.l.b16 %v7832
        %v8632 = vunpack.c.l.b16 %v7833
        %v8633 = vunpack.c.h.b16 %v7833
        %v8634 = vunpack.c.l.b16 %v7834
        %v8635 = vunpack.c.l.b16 %v7835
        %v8636 = vunpack.c.h.b16 %v7835
        %v8637 = vunpack.c.l.b16 %v7836
        %v8638 = vunpack.c.l.b16 %v7837
        %v8639 = vunpack.c.h.b16 %v7837
        %v8640 = vunpack.c.l.b16 %v7838
        %v8641 = vunpack.c.l.b16 %v7839
        %v8642 = vunpack.c.h.b16 %v7839
        %v8643 = vunpack.c.l.b16 %v7840
        %v8644 = vunpack.c.l.b16 %v7841
        %v8645 = vunpack.c.h.b16 %v7841
        %v8646 = vunpack.c.l.b16 %v7842
        %v8647 = vunpack.c.l.b16 %v7843
        %v8648 = vunpack.c.h.b16 %v7843
        %v8649 = vunpack.c.l.b16 %v7844
        %v8650 = vunpack.c.l.b16 %v7845
        %v8651 = vunpack.c.h.b16 %v7845
        %v8652 = vunpack.c.l.b16 %v7846
        %v8653 = vunpack.c.l.b16 %v7847
        %v8654 = vunpack.c.h.b16 %v7847
        %v8655 = vunpack.c.l.b16 %v7848
        %v8656 = vunpack.c.l.b16 %v7849
        %v8657 = vunpack.c.h.b16 %v7849
        %v8658 = vunpack.c.l.b16 %v7850
        %v8659 = vunpack.c.l.b16 %v7851
        %v8660 = vunpack.c.h.b16 %v7851
        %v8661 = vunpack.c.l.b16 %v7852
        %v8662 = vunpack.c.l.b16 %v7853
        %v8663 = vunpack.c.h.b16 %v7853
        %v8664 = vunpack.c.l.b16 %v7854
        %v8665 = vunpack.c.l.b16 %v7855
        %v8666 = vunpack.c.h.b16 %v7855
        %v8667 = vunpack.c.l.b16 %v7856
        %v8668 = vunpack.c.l.b16 %v7857
        %v8669 = vunpack.c.h.b16 %v7857
        %v8670 = vunpack.c.l.b16 %v7858
        %v8671 = vunpack.c.l.b16 %v7859
        %v8672 = vunpack.c.h.b16 %v7859
        %v8673 = vunpack.c.l.b16 %v7860
        %v8674 = vunpack.c.l.b16 %v7861
        %v8675 = vunpack.c.h.b16 %v7861
        %v8676 = vunpack.c.l.b16 %v7862
        %v8677 = vunpack.c.l.b16 %v7863
        %v8678 = vunpack.c.h.b16 %v7863
        %v8679 = vunpack.c.l.b16 %v7864
        %v8680 = vunpack.c.l.b16 %v7865
        %v8681 = vunpack.c.h.b16 %v7865
        %v8682 = vunpack.c.l.b16 %v7866
        %v8683 = vunpack.c.l.b16 %v7867
        %v8684 = vunpack.c.h.b16 %v7867
        %v8685 = vunpack.c.l.b16 %v7868
        %v8686 = vpack.c.b16 %v8209, %v8206
        %v8687 = vpack.c.b16 %v8210, %v8207
        %v8688 = vpack.c.b16 %v8211, %v8208
        %v8689 = vpack.c.b16 %v8215, %v8212
        %v8690 = vpack.c.b16 %v8216, %v8213
        %v8691 = vpack.c.b16 %v8217, %v8214
        %v8692 = vpack.c.b16 %v8221, %v8218
        %v8693 = vpack.c.b16 %v8222, %v8219
        %v8694 = vpack.c.b16 %v8223, %v8220
        %v8695 = vpack.c.b16 %v8227, %v8224
        %v8696 = vpack.c.b16 %v8228, %v8225
        %v8697 = vpack.c.b16 %v8229, %v8226
        %v8698 = vpack.c.b16 %v8233, %v8230
        %v8699 = vpack.c.b16 %v8234, %v8231
        %v8700 = vpack.c.b16 %v8235, %v8232
        %v8701 = vpack.c.b16 %v8239, %v8236
        %v8702 = vpack.c.b16 %v8240, %v8237
        %v8703 = vpack.c.b16 %v8241, %v8238
        %v8704 = vpack.c.b16 %v8245, %v8242
        %v8705 = vpack.c.b16 %v8246, %v8243
        %v8706 = vpack.c.b16 %v8247, %v8244
        %v8707 = vpack.c.b16 %v8251, %v8248
        %v8708 = vpack.c.b16 %v8252, %v8249
        %v8709 = vpack.c.b16 %v8253, %v8250
        %v8710 = vpack.c.b16 %v8257, %v8254
        %v8711 = vpack.c.b16 %v8258, %v8255
        %v8712 = vpack.c.b16 %v8259, %v8256
        %v8713 = vpack.c.b16 %v8263, %v8260
        %v8714 = vpack.c.b16 %v8264, %v8261
        %v8715 = vpack.c.b16 %v8265, %v8262
        %v8716 = vpack.c.b16 %v8269, %v8266
        %v8717 = vpack.c.b16 %v8270, %v8267
        %v8718 = vpack.c.b16 %v8271, %v8268
        %v8719 = vpack.c.b16 %v8275, %v8272
        %v8720 = vpack.c.b16 %v8276, %v8273
        %v8721 = vpack.c.b16 %v8277, %v8274
        %v8722 = vpack.c.b16 %v8281, %v8278
        %v8723 = vpack.c.b16 %v8282, %v8279
        %v8724 = vpack.c.b16 %v8283, %v8280
        %v8725 = vpack.c.b16 %v8287, %v8284
        %v8726 = vpack.c.b16 %v8288, %v8285
        %v8727 = vpack.c.b16 %v8289, %v8286
        %v8728 = vpack.c.b16 %v8293, %v8290
        %v8729 = vpack.c.b16 %v8294, %v8291
        %v8730 = vpack.c.b16 %v8295, %v8292
        %v8731 = vpack.c.b16 %v8299, %v8296
        %v8732 = vpack.c.b16 %v8300, %v8297
        %v8733 = vpack.c.b16 %v8301, %v8298
        %v8734 = vpack.c.b16 %v8305, %v8302
        %v8735 = vpack.c.b16 %v8306, %v8303
        %v8736 = vpack.c.b16 %v8307, %v8304
        %v8737 = vpack.c.b16 %v8311, %v8308
        %v8738 = vpack.c.b16 %v8312, %v8309
        %v8739 = vpack.c.b16 %v8313, %v8310
        %v8740 = vpack.c.b16 %v8317, %v8314
        %v8741 = vpack.c.b16 %v8318, %v8315
        %v8742 = vpack.c.b16 %v8319, %v8316
        %v8743 = vpack.c.b16 %v8323, %v8320
        %v8744 = vpack.c.b16 %v8324, %v8321
        %v8745 = vpack.c.b16 %v8325, %v8322
        %v8746 = vpack.c.b16 %v8329, %v8326
        %v8747 = vpack.c.b16 %v8330, %v8327
        %v8748 = vpack.c.b16 %v8331, %v8328
        %v8749 = vpack.c.b16 %v8335, %v8332
        %v8750 = vpack.c.b16 %v8336, %v8333
        %v8751 = vpack.c.b16 %v8337, %v8334
        %v8752 = vpack.c.b16 %v8341, %v8338
        %v8753 = vpack.c.b16 %v8342, %v8339
        %v8754 = vpack.c.b16 %v8343, %v8340
        %v8755 = vpack.c.b16 %v8347, %v8344
        %v8756 = vpack.c.b16 %v8348, %v8345
        %v8757 = vpack.c.b16 %v8349, %v8346
        %v8758 = vpack.c.b16 %v8353, %v8350
        %v8759 = vpack.c.b16 %v8354, %v8351
        %v8760 = vpack.c.b16 %v8355, %v8352
        %v8761 = vpack.c.b16 %v8359, %v8356
        %v8762 = vpack.c.b16 %v8360, %v8357
        %v8763 = vpack.c.b16 %v8361, %v8358
        %v8764 = vpack.c.b16 %v8365, %v8362
        %v8765 = vpack.c.b16 %v8366, %v8363
        %v8766 = vpack.c.b16 %v8367, %v8364
        %v8767 = vpack.c.b16 %v8371, %v8368
        %v8768 = vpack.c.b16 %v8372, %v8369
        %v8769 = vpack.c.b16 %v8373, %v8370
        %v8770 = vpack.c.b16 %v8377, %v8374
        %v8771 = vpack.c.b16 %v8378, %v8375
        %v8772 = vpack.c.b16 %v8379, %v8376
        %v8773 = vpack.c.b16 %v8383, %v8380
        %v8774 = vpack.c.b16 %v8384, %v8381
        %v8775 = vpack.c.b16 %v8385, %v8382
        %v8776 = vpack.c.b16 %v8389, %v8386
        %v8777 = vpack.c.b16 %v8390, %v8387
        %v8778 = vpack.c.b16 %v8391, %v8388
        %v8779 = vpack.c.b16 %v8395, %v8392
        %v8780 = vpack.c.b16 %v8396, %v8393
        %v8781 = vpack.c.b16 %v8397, %v8394
        %v8782 = vpack.c.b16 %v8401, %v8398
        %v8783 = vpack.c.b16 %v8402, %v8399
        %v8784 = vpack.c.b16 %v8403, %v8400
        %v8785 = vpack.c.b16 %v8407, %v8404
        %v8786 = vpack.c.b16 %v8408, %v8405
        %v8787 = vpack.c.b16 %v8409, %v8406
        %v8788 = vpack.c.b16 %v8413, %v8410
        %v8789 = vpack.c.b16 %v8414, %v8411
        %v8790 = vpack.c.b16 %v8415, %v8412
        %v8791 = vpack.c.b16 %v8419, %v8416
        %v8792 = vpack.c.b16 %v8420, %v8417
        %v8793 = vpack.c.b16 %v8421, %v8418
        %v8794 = vpack.c.b16 %v8425, %v8422
        %v8795 = vpack.c.b16 %v8426, %v8423
        %v8796 = vpack.c.b16 %v8427, %v8424
        %v8797 = vpack.c.b16 %v8431, %v8428
        %v8798 = vpack.c.b16 %v8432, %v8429
        %v8799 = vpack.c.b16 %v8433, %v8430
        %v8800 = vpack.c.b16 %v8437, %v8434
        %v8801 = vpack.c.b16 %v8438, %v8435
        %v8802 = vpack.c.b16 %v8439, %v8436
        %v8803 = vpack.c.b16 %v8443, %v8440
        %v8804 = vpack.c.b16 %v8444, %v8441
        %v8805 = vpack.c.b16 %v8445, %v8442
        %v8806 = vpack.c.b16 %v8449, %v8446
        %v8807 = vpack.c.b16 %v8450, %v8447
        %v8808 = vpack.c.b16 %v8451, %v8448
        %v8809 = vpack.c.b16 %v8455, %v8452
        %v8810 = vpack.c.b16 %v8456, %v8453
        %v8811 = vpack.c.b16 %v8457, %v8454
        %v8812 = vpack.c.b16 %v8461, %v8458
        %v8813 = vpack.c.b16 %v8462, %v8459
        %v8814 = vpack.c.b16 %v8463, %v8460
        %v8815 = vpack.c.b16 %v8467, %v8464
        %v8816 = vpack.c.b16 %v8468, %v8465
        %v8817 = vpack.c.b16 %v8469, %v8466
        %v8818 = vpack.c.b16 %v8473, %v8470
        %v8819 = vpack.c.b16 %v8474, %v8471
        %v8820 = vpack.c.b16 %v8475, %v8472
        %v8821 = vpack.c.b16 %v8479, %v8476
        %v8822 = vpack.c.b16 %v8480, %v8477
        %v8823 = vpack.c.b16 %v8481, %v8478
        %v8824 = vpack.c.b16 %v8485, %v8482
        %v8825 = vpack.c.b16 %v8486, %v8483
        %v8826 = vpack.c.b16 %v8487, %v8484
        %v8827 = vpack.c.b16 %v8491, %v8488
        %v8828 = vpack.c.b16 %v8492, %v8489
        %v8829 = vpack.c.b16 %v8493, %v8490
        %v8830 = vpack.c.b16 %v8497, %v8494
        %v8831 = vpack.c.b16 %v8498, %v8495
        %v8832 = vpack.c.b16 %v8499, %v8496
        %v8833 = vpack.c.b16 %v8503, %v8500
        %v8834 = vpack.c.b16 %v8504, %v8501
        %v8835 = vpack.c.b16 %v8505, %v8502
        %v8836 = vpack.c.b16 %v8509, %v8506
        %v8837 = vpack.c.b16 %v8510, %v8507
        %v8838 = vpack.c.b16 %v8511, %v8508
        %v8839 = vpack.c.b16 %v8515, %v8512
        %v8840 = vpack.c.b16 %v8516, %v8513
        %v8841 = vpack.c.b16 %v8517, %v8514
        %v8842 = vpack.c.b16 %v8521, %v8518
        %v8843 = vpack.c.b16 %v8522, %v8519
        %v8844 = vpack.c.b16 %v8523, %v8520
        %v8845 = vpack.c.b16 %v8527, %v8524
        %v8846 = vpack.c.b16 %v8528, %v8525
        %v8847 = vpack.c.b16 %v8529, %v8526
        %v8848 = vpack.c.b16 %v8533, %v8530
        %v8849 = vpack.c.b16 %v8534, %v8531
        %v8850 = vpack.c.b16 %v8535, %v8532
        %v8851 = vpack.c.b16 %v8539, %v8536
        %v8852 = vpack.c.b16 %v8540, %v8537
        %v8853 = vpack.c.b16 %v8541, %v8538
        %v8854 = vpack.c.b16 %v8545, %v8542
        %v8855 = vpack.c.b16 %v8546, %v8543
        %v8856 = vpack.c.b16 %v8547, %v8544
        %v8857 = vpack.c.b16 %v8551, %v8548
        %v8858 = vpack.c.b16 %v8552, %v8549
        %v8859 = vpack.c.b16 %v8553, %v8550
        %v8860 = vpack.c.b16 %v8557, %v8554
        %v8861 = vpack.c.b16 %v8558, %v8555
        %v8862 = vpack.c.b16 %v8559, %v8556
        %v8863 = vpack.c.b16 %v8563, %v8560
        %v8864 = vpack.c.b16 %v8564, %v8561
        %v8865 = vpack.c.b16 %v8565, %v8562
        %v8866 = vpack.c.b16 %v8569, %v8566
        %v8867 = vpack.c.b16 %v8570, %v8567
        %v8868 = vpack.c.b16 %v8571, %v8568
        %v8869 = vpack.c.b16 %v8575, %v8572
        %v8870 = vpack.c.b16 %v8576, %v8573
        %v8871 = vpack.c.b16 %v8577, %v8574
        %v8872 = vpack.c.b16 %v8581, %v8578
        %v8873 = vpack.c.b16 %v8582, %v8579
        %v8874 = vpack.c.b16 %v8583, %v8580
        %v8875 = vpack.c.b16 %v8587, %v8584
        %v8876 = vpack.c.b16 %v8588, %v8585
        %v8877 = vpack.c.b16 %v8589, %v8586
        %v8878 = vpack.c.b16 %v8593, %v8590
        %v8879 = vpack.c.b16 %v8594, %v8591
        %v8880 = vpack.c.b16 %v8595, %v8592
        %v8881 = vpack.c.b16 %v8599, %v8596
        %v8882 = vpack.c.b16 %v8600, %v8597
        %v8883 = vpack.c.b16 %v8601, %v8598
        %v8884 = vpack.c.b16 %v8605, %v8602
        %v8885 = vpack.c.b16 %v8606, %v8603
        %v8886 = vpack.c.b16 %v8607, %v8604
        %v8887 = vpack.c.b16 %v8611, %v8608
        %v8888 = vpack.c.b16 %v8612, %v8609
        %v8889 = vpack.c.b16 %v8613, %v8610
        %v8890 = vpack.c.b16 %v8617, %v8614
        %v8891 = vpack.c.b16 %v8618, %v8615
        %v8892 = vpack.c.b16 %v8619, %v8616
        %v8893 = vpack.c.b16 %v8623, %v8620
        %v8894 = vpack.c.b16 %v8624, %v8621
        %v8895 = vpack.c.b16 %v8625, %v8622
        %v8896 = vpack.c.b16 %v8629, %v8626
        %v8897 = vpack.c.b16 %v8630, %v8627
        %v8898 = vpack.c.b16 %v8631, %v8628
        %v8899 = vpack.c.b16 %v8635, %v8632
        %v8900 = vpack.c.b16 %v8636, %v8633
        %v8901 = vpack.c.b16 %v8637, %v8634
        %v8902 = vpack.c.b16 %v8641, %v8638
        %v8903 = vpack.c.b16 %v8642, %v8639
        %v8904 = vpack.c.b16 %v8643, %v8640
        %v8905 = vpack.c.b16 %v8647, %v8644
        %v8906 = vpack.c.b16 %v8648, %v8645
        %v8907 = vpack.c.b16 %v8649, %v8646
        %v8908 = vpack.c.b16 %v8653, %v8650
        %v8909 = vpack.c.b16 %v8654, %v8651
        %v8910 = vpack.c.b16 %v8655, %v8652
        %v8911 = vpack.c.b16 %v8659, %v8656
        %v8912 = vpack.c.b16 %v8660, %v8657
        %v8913 = vpack.c.b16 %v8661, %v8658
        %v8914 = vpack.c.b16 %v8665, %v8662
        %v8915 = vpack.c.b16 %v8666, %v8663
        %v8916 = vpack.c.b16 %v8667, %v8664
        %v8917 = vpack.c.b16 %v8671, %v8668
        %v8918 = vpack.c.b16 %v8672, %v8669
        %v8919 = vpack.c.b16 %v8673, %v8670
        %v8920 = vpack.c.b16 %v8677, %v8674
        %v8921 = vpack.c.b16 %v8678, %v8675
        %v8922 = vpack.c.b16 %v8679, %v8676
        %v8923 = vpack.c.b16 %v8683, %v8680
        %v8924 = vpack.c.b16 %v8684, %v8681
        %v8925 = vpack.c.b16 %v8685, %v8682
        %9166 = vmatprep.subr.bf16.mxu0 %v8687
        %9167 = vmatpush1.bf16.msra.mxu0 %v8686
        %9168 = vmatprep.subr.bf16.mxu0 %v8690
        %9169 = vmatpush1.bf16.msra.mxu0 %v8689
        %9170 = vmatprep.subr.bf16.mxu0 %v8693
        %9171 = vmatpush1.bf16.msra.mxu0 %v8692
        %9172 = vmatprep.subr.bf16.mxu0 %v8696
        %9173 = vmatpush1.bf16.msra.mxu0 %v8695
        %9174 = vmatprep.subr.bf16.mxu0 %v8699
        %9175 = vmatpush1.bf16.msra.mxu0 %v8698
        %9176 = vmatprep.subr.bf16.mxu0 %v8702
        %9177 = vmatpush1.bf16.msra.mxu0 %v8701
        %9178 = vmatprep.subr.bf16.mxu0 %v8705
        %9179 = vmatpush1.bf16.msra.mxu0 %v8704
        %9180 = vmatprep.subr.bf16.mxu0 %v8708
        %9181 = vmatpush1.bf16.msra.mxu0 %v8707
        %9182 = vmatprep.subr.bf16.mxu0 %v8711
        %9183 = vmatpush1.bf16.msra.mxu0 %v8710
        %9184 = vmatprep.subr.bf16.mxu0 %v8714
        %9185 = vmatpush1.bf16.msra.mxu0 %v8713
        %9186 = vmatprep.subr.bf16.mxu0 %v8717
        %9187 = vmatpush1.bf16.msra.mxu0 %v8716
        %9188 = vmatprep.subr.bf16.mxu0 %v8720
        %9189 = vmatpush1.bf16.msra.mxu0 %v8719
        %9190 = vmatprep.subr.bf16.mxu0 %v8723
        %9191 = vmatpush1.bf16.msra.mxu0 %v8722
        %9192 = vmatprep.subr.bf16.mxu0 %v8726
        %9193 = vmatpush1.bf16.msra.mxu0 %v8725
        %9194 = vmatprep.subr.bf16.mxu0 %v8729
        %9195 = vmatpush1.bf16.msra.mxu0 %v8728
        %9196 = vmatprep.subr.bf16.mxu0 %v8732
        %9197 = vmatpush1.bf16.msra.mxu0 %v8731
        %9198 = vmatprep.mubr.bf16.mxu0 %v7540
        %9199 = vmatmul.mubr.bf16.gmra.mrb[0].mxu0 %v7539
        %v9200 = vpop.f32.mrb[0].mxu0
        %v9201 = vadd.f32 %v7874, %v9200
        %v9202 = vpop.f32.mrb[0].mxu0
        %v9203 = vadd.f32 %v7878, %v9202
        %v9204 = vpop.f32.mrb[0].mxu0
        %v9205 = vadd.f32 %v7874, %v9204
        %v9206 = vpop.f32.mrb[0].mxu0
        %v9207 = vadd.f32 %v7878, %v9206
        %9208 = vdwg.mxu0
        %9209 = vmatprep.subr.bf16.mxu0 %v8735
        %9210 = vmatpush1.bf16.msra.mxu0 %v8734
        %9211 = vmatprep.subr.bf16.mxu0 %v8738
        %9212 = vmatpush1.bf16.msra.mxu0 %v8737
        %9213 = vmatprep.subr.bf16.mxu0 %v8741
        %9214 = vmatpush1.bf16.msra.mxu0 %v8740
        %9215 = vmatprep.subr.bf16.mxu0 %v8744
        %9216 = vmatpush1.bf16.msra.mxu0 %v8743
        %9217 = vmatprep.subr.bf16.mxu0 %v8747
        %9218 = vmatpush1.bf16.msra.mxu0 %v8746
        %9219 = vmatprep.subr.bf16.mxu0 %v8750
        %9220 = vmatpush1.bf16.msra.mxu0 %v8749
        %9221 = vmatprep.subr.bf16.mxu0 %v8753
        %9222 = vmatpush1.bf16.msra.mxu0 %v8752
        %9223 = vmatprep.subr.bf16.mxu0 %v8756
        %9224 = vmatpush1.bf16.msra.mxu0 %v8755
        %9225 = vmatprep.subr.bf16.mxu0 %v8759
        %9226 = vmatpush1.bf16.msra.mxu0 %v8758
        %9227 = vmatprep.subr.bf16.mxu0 %v8762
        %9228 = vmatpush1.bf16.msra.mxu0 %v8761
        %9229 = vmatprep.subr.bf16.mxu0 %v8765
        %9230 = vmatpush1.bf16.msra.mxu0 %v8764
        %9231 = vmatprep.subr.bf16.mxu0 %v8768
        %9232 = vmatpush1.bf16.msra.mxu0 %v8767
        %9233 = vmatprep.subr.bf16.mxu0 %v8771
        %9234 = vmatpush1.bf16.msra.mxu0 %v8770
        %9235 = vmatprep.subr.bf16.mxu0 %v8774
        %9236 = vmatpush1.bf16.msra.mxu0 %v8773
        %9237 = vmatprep.subr.bf16.mxu0 %v8777
        %9238 = vmatpush1.bf16.msra.mxu0 %v8776
        %9239 = vmatprep.subr.bf16.mxu0 %v8780
        %9240 = vmatpush1.bf16.msra.mxu0 %v8779
        %9241 = vmatprep.mubr.bf16.mxu0 %v7542
        %9242 = vmatmul.mubr.bf16.gmra.mrb[0].mxu0 %v7541
        %v9243 = vpop.f32.mrb[0].mxu0
        %v9244 = vadd.f32 %v9201, %v9243
        %v9245 = vpop.f32.mrb[0].mxu0
        %v9246 = vadd.f32 %v9203, %v9245
        %v9247 = vpop.f32.mrb[0].mxu0
        %v9248 = vadd.f32 %v9205, %v9247
        %v9249 = vpop.f32.mrb[0].mxu0
        %v9250 = vadd.f32 %v9207, %v9249
        %9251 = vdwg.mxu0
        %9252 = vmatprep.subr.bf16.mxu0 %v8783
        %9253 = vmatpush1.bf16.msra.mxu0 %v8782
        %9254 = vmatprep.subr.bf16.mxu0 %v8786
        %9255 = vmatpush1.bf16.msra.mxu0 %v8785
        %9256 = vmatprep.subr.bf16.mxu0 %v8789
        %9257 = vmatpush1.bf16.msra.mxu0 %v8788
        %9258 = vmatprep.subr.bf16.mxu0 %v8792
        %9259 = vmatpush1.bf16.msra.mxu0 %v8791
        %9260 = vmatprep.subr.bf16.mxu0 %v8795
        %9261 = vmatpush1.bf16.msra.mxu0 %v8794
        %9262 = vmatprep.subr.bf16.mxu0 %v8798
        %9263 = vmatpush1.bf16.msra.mxu0 %v8797
        %9264 = vmatprep.subr.bf16.mxu0 %v8801
        %9265 = vmatpush1.bf16.msra.mxu0 %v8800
        %9266 = vmatprep.subr.bf16.mxu0 %v8804
        %9267 = vmatpush1.bf16.msra.mxu0 %v8803
        %9268 = vmatprep.subr.bf16.mxu0 %v8807
        %9269 = vmatpush1.bf16.msra.mxu0 %v8806
        %9270 = vmatprep.subr.bf16.mxu0 %v8810
        %9271 = vmatpush1.bf16.msra.mxu0 %v8809
        %9272 = vmatprep.subr.bf16.mxu0 %v8813
        %9273 = vmatpush1.bf16.msra.mxu0 %v8812
        %9274 = vmatprep.subr.bf16.mxu0 %v8816
        %9275 = vmatpush1.bf16.msra.mxu0 %v8815
        %9276 = vmatprep.subr.bf16.mxu0 %v8819
        %9277 = vmatpush1.bf16.msra.mxu0 %v8818
        %9278 = vmatprep.subr.bf16.mxu0 %v8822
        %9279 = vmatpush1.bf16.msra.mxu0 %v8821
        %9280 = vmatprep.subr.bf16.mxu0 %v8825
        %9281 = vmatpush1.bf16.msra.mxu0 %v8824
        %9282 = vmatprep.subr.bf16.mxu0 %v8828
        %9283 = vmatpush1.bf16.msra.mxu0 %v8827
        %9284 = vmatprep.mubr.bf16.mxu0 %v7544
        %9285 = vmatmul.mubr.bf16.gmra.mrb[0].mxu0 %v7543
        %v9286 = vpop.f32.mrb[0].mxu0
        %v9287 = vadd.f32 %v9244, %v9286
        %v9288 = vpop.f32.mrb[0].mxu0
        %v9289 = vadd.f32 %v9246, %v9288
        %v9290 = vpop.f32.mrb[0].mxu0
        %v9291 = vadd.f32 %v9248, %v9290
        %v9292 = vpop.f32.mrb[0].mxu0
        %v9293 = vadd.f32 %v9250, %v9292
        %9294 = vdwg.mxu0
        %9295 = vmatprep.subr.bf16.mxu0 %v8831
        %9296 = vmatpush1.bf16.msra.mxu0 %v8830
        %9297 = vmatprep.subr.bf16.mxu0 %v8834
        %9298 = vmatpush1.bf16.msra.mxu0 %v8833
        %9299 = vmatprep.subr.bf16.mxu0 %v8837
        %9300 = vmatpush1.bf16.msra.mxu0 %v8836
        %9301 = vmatprep.subr.bf16.mxu0 %v8840
        %9302 = vmatpush1.bf16.msra.mxu0 %v8839
        %9303 = vmatprep.subr.bf16.mxu0 %v8843
        %9304 = vmatpush1.bf16.msra.mxu0 %v8842
        %9305 = vmatprep.subr.bf16.mxu0 %v8846
        %9306 = vmatpush1.bf16.msra.mxu0 %v8845
        %9307 = vmatprep.subr.bf16.mxu0 %v8849
        %9308 = vmatpush1.bf16.msra.mxu0 %v8848
        %9309 = vmatprep.subr.bf16.mxu0 %v8852
        %9310 = vmatpush1.bf16.msra.mxu0 %v8851
        %9311 = vmatprep.subr.bf16.mxu0 %v8855
        %9312 = vmatpush1.bf16.msra.mxu0 %v8854
        %9313 = vmatprep.subr.bf16.mxu0 %v8858
        %9314 = vmatpush1.bf16.msra.mxu0 %v8857
        %9315 = vmatprep.subr.bf16.mxu0 %v8861
        %9316 = vmatpush1.bf16.msra.mxu0 %v8860
        %9317 = vmatprep.subr.bf16.mxu0 %v8864
        %9318 = vmatpush1.bf16.msra.mxu0 %v8863
        %9319 = vmatprep.subr.bf16.mxu0 %v8867
        %9320 = vmatpush1.bf16.msra.mxu0 %v8866
        %9321 = vmatprep.subr.bf16.mxu0 %v8870
        %9322 = vmatpush1.bf16.msra.mxu0 %v8869
        %9323 = vmatprep.subr.bf16.mxu0 %v8873
        %9324 = vmatpush1.bf16.msra.mxu0 %v8872
        %9325 = vmatprep.subr.bf16.mxu0 %v8876
        %9326 = vmatpush1.bf16.msra.mxu0 %v8875
        %9327 = vmatprep.mubr.bf16.mxu0 %v7546
        %9328 = vmatmul.mubr.bf16.gmra.mrb[0].mxu0 %v7545
        %v9329 = vpop.f32.mrb[0].mxu0
        %v9330 = vadd.f32 %v9287, %v9329
        %v9331 = vpop.f32.mrb[0].mxu0
        %v9332 = vadd.f32 %v9289, %v9331
        %v9333 = vpop.f32.mrb[0].mxu0
        %v9334 = vadd.f32 %v9291, %v9333
        %v9335 = vpop.f32.mrb[0].mxu0
        %v9336 = vadd.f32 %v9293, %v9335
        %9337 = vdwg.mxu0
        %9338 = vmatprep.subr.bf16.mxu0 %v8879
        %9339 = vmatpush1.bf16.msra.mxu0 %v8878
        %9340 = vmatprep.subr.bf16.mxu0 %v8882
        %9341 = vmatpush1.bf16.msra.mxu0 %v8881
        %9342 = vmatprep.subr.bf16.mxu0 %v8885
        %9343 = vmatpush1.bf16.msra.mxu0 %v8884
        %9344 = vmatprep.subr.bf16.mxu0 %v8888
        %9345 = vmatpush1.bf16.msra.mxu0 %v8887
        %9346 = vmatprep.subr.bf16.mxu0 %v8891
        %9347 = vmatpush1.bf16.msra.mxu0 %v8890
        %9348 = vmatprep.subr.bf16.mxu0 %v8894
        %9349 = vmatpush1.bf16.msra.mxu0 %v8893
        %9350 = vmatprep.subr.bf16.mxu0 %v8897
        %9351 = vmatpush1.bf16.msra.mxu0 %v8896
        %9352 = vmatprep.subr.bf16.mxu0 %v8900
        %9353 = vmatpush1.bf16.msra.mxu0 %v8899
        %9354 = vmatprep.subr.bf16.mxu0 %v8903
        %9355 = vmatpush1.bf16.msra.mxu0 %v8902
        %9356 = vmatprep.subr.bf16.mxu0 %v8906
        %9357 = vmatpush1.bf16.msra.mxu0 %v8905
        %9358 = vmatprep.subr.bf16.mxu0 %v8909
        %9359 = vmatpush1.bf16.msra.mxu0 %v8908
        %9360 = vmatprep.subr.bf16.mxu0 %v8912
        %9361 = vmatpush1.bf16.msra.mxu0 %v8911
        %9362 = vmatprep.subr.bf16.mxu0 %v8915
        %9363 = vmatpush1.bf16.msra.mxu0 %v8914
        %9364 = vmatprep.subr.bf16.mxu0 %v8918
        %9365 = vmatpush1.bf16.msra.mxu0 %v8917
        %9366 = vmatprep.subr.bf16.mxu0 %v8921
        %9367 = vmatpush1.bf16.msra.mxu0 %v8920
        %9368 = vmatprep.subr.bf16.mxu0 %v8924
        %9369 = vmatpush1.bf16.msra.mxu0 %v8923
        %9370 = vmatprep.mubr.bf16.mxu0 %v7548
        %9371 = vmatmul.mubr.bf16.gmra.mrb[0].mxu0 %v7547
        %v9372 = vpop.f32.mrb[0].mxu0
        %v9373 = vadd.f32 %v9330, %v9372
        %v9374 = vpop.f32.mrb[0].mxu0
        %v9375 = vadd.f32 %v9332, %v9374
        %v9376 = vpop.f32.mrb[0].mxu0
        %v9377 = vadd.f32 %v9334, %v9376
        %v9378 = vpop.f32.mrb[0].mxu0
        %v9379 = vadd.f32 %v9336, %v9378
        %9380 = vdwg.mxu0
        %9381 = vmatprep.subr.bf16.mxu0 0
        %9382 = vmatpush1.bf16.msra.mxu0 %v8688
        %9383 = vmatprep.subr.bf16.mxu0 0
        %9384 = vmatpush1.bf16.msra.mxu0 %v8691
        %9385 = vmatprep.subr.bf16.mxu0 0
        %9386 = vmatpush1.bf16.msra.mxu0 %v8694
        %9387 = vmatprep.subr.bf16.mxu0 0
        %9388 = vmatpush1.bf16.msra.mxu0 %v8697
        %9389 = vmatprep.subr.bf16.mxu0 0
        %9390 = vmatpush1.bf16.msra.mxu0 %v8700
        %9391 = vmatprep.subr.bf16.mxu0 0
        %9392 = vmatpush1.bf16.msra.mxu0 %v8703
        %9393 = vmatprep.subr.bf16.mxu0 0
        %9394 = vmatpush1.bf16.msra.mxu0 %v8706
        %9395 = vmatprep.subr.bf16.mxu0 0
        %9396 = vmatpush1.bf16.msra.mxu0 %v8709
        %9397 = vmatprep.subr.bf16.mxu0 0
        %9398 = vmatpush1.bf16.msra.mxu0 %v8712
        %9399 = vmatprep.subr.bf16.mxu0 0
        %9400 = vmatpush1.bf16.msra.mxu0 %v8715
        %9401 = vmatprep.subr.bf16.mxu0 0
        %9402 = vmatpush1.bf16.msra.mxu0 %v8718
        %9403 = vmatprep.subr.bf16.mxu0 0
        %9404 = vmatpush1.bf16.msra.mxu0 %v8721
        %9405 = vmatprep.subr.bf16.mxu0 0
        %9406 = vmatpush1.bf16.msra.mxu0 %v8724
        %9407 = vmatprep.subr.bf16.mxu0 0
        %9408 = vmatpush1.bf16.msra.mxu0 %v8727
        %9409 = vmatprep.subr.bf16.mxu0 0
        %9410 = vmatpush1.bf16.msra.mxu0 %v8730
        %9411 = vmatprep.subr.bf16.mxu0 0
        %9412 = vmatpush1.bf16.msra.mxu0 %v8733
        %9413 = vmatprep.mubr.bf16.mxu0 %v7540
        %9414 = vmatmul.mubr.bf16.gmra.mrb[0].mxu0 %v7539
        %v9415 = vpop.f32.mrb[0].mxu0
        %v9416 = vadd.f32 %v7882, %v9415
        %v9417 = vpop.f32.mrb[0].mxu0
        %v9418 = vpop.f32.mrb[0].mxu0
        %v9419 = vadd.f32 %v7882, %v9418
        %v9420 = vpop.f32.mrb[0].mxu0
        %9421 = vdwg.mxu0
        %9422 = vmatprep.subr.bf16.mxu0 0
        %9423 = vmatpush1.bf16.msra.mxu0 %v8736
        %9424 = vmatprep.subr.bf16.mxu0 0
        %9425 = vmatpush1.bf16.msra.mxu0 %v8739
        %9426 = vmatprep.subr.bf16.mxu0 0
        %9427 = vmatpush1.bf16.msra.mxu0 %v8742
        %9428 = vmatprep.subr.bf16.mxu0 0
        %9429 = vmatpush1.bf16.msra.mxu0 %v8745
        %9430 = vmatprep.subr.bf16.mxu0 0
        %9431 = vmatpush1.bf16.msra.mxu0 %v8748
        %9432 = vmatprep.subr.bf16.mxu0 0
        %9433 = vmatpush1.bf16.msra.mxu0 %v8751
        %9434 = vmatprep.subr.bf16.mxu0 0
        %9435 = vmatpush1.bf16.msra.mxu0 %v8754
        %9436 = vmatprep.subr.bf16.mxu0 0
        %9437 = vmatpush1.bf16.msra.mxu0 %v8757
        %9438 = vmatprep.subr.bf16.mxu0 0
        %9439 = vmatpush1.bf16.msra.mxu0 %v8760
        %9440 = vmatprep.subr.bf16.mxu0 0
        %9441 = vmatpush1.bf16.msra.mxu0 %v8763
        %9442 = vmatprep.subr.bf16.mxu0 0
        %9443 = vmatpush1.bf16.msra.mxu0 %v8766
        %9444 = vmatprep.subr.bf16.mxu0 0
        %9445 = vmatpush1.bf16.msra.mxu0 %v8769
        %9446 = vmatprep.subr.bf16.mxu0 0
        %9447 = vmatpush1.bf16.msra.mxu0 %v8772
        %9448 = vmatprep.subr.bf16.mxu0 0
        %9449 = vmatpush1.bf16.msra.mxu0 %v8775
        %9450 = vmatprep.subr.bf16.mxu0 0
        %9451 = vmatpush1.bf16.msra.mxu0 %v8778
        %9452 = vmatprep.subr.bf16.mxu0 0
        %9453 = vmatpush1.bf16.msra.mxu0 %v8781
        %9454 = vmatprep.mubr.bf16.mxu0 %v7542
        %9455 = vmatmul.mubr.bf16.gmra.mrb[0].mxu0 %v7541
        %v9456 = vpop.f32.mrb[0].mxu0
        %v9457 = vadd.f32 %v9416, %v9456
        %v9458 = vpop.f32.mrb[0].mxu0
        %v9459 = vpop.f32.mrb[0].mxu0
        %v9460 = vadd.f32 %v9419, %v9459
        %v9461 = vpop.f32.mrb[0].mxu0
        %9462 = vdwg.mxu0
        %9463 = vmatprep.subr.bf16.mxu0 0
        %9464 = vmatpush1.bf16.msra.mxu0 %v8784
        %9465 = vmatprep.subr.bf16.mxu0 0
        %9466 = vmatpush1.bf16.msra.mxu0 %v8787
        %9467 = vmatprep.subr.bf16.mxu0 0
        %9468 = vmatpush1.bf16.msra.mxu0 %v8790
        %9469 = vmatprep.subr.bf16.mxu0 0
        %9470 = vmatpush1.bf16.msra.mxu0 %v8793
        %9471 = vmatprep.subr.bf16.mxu0 0
        %9472 = vmatpush1.bf16.msra.mxu0 %v8796
        %9473 = vmatprep.subr.bf16.mxu0 0
        %9474 = vmatpush1.bf16.msra.mxu0 %v8799
        %9475 = vmatprep.subr.bf16.mxu0 0
        %9476 = vmatpush1.bf16.msra.mxu0 %v8802
        %9477 = vmatprep.subr.bf16.mxu0 0
        %9478 = vmatpush1.bf16.msra.mxu0 %v8805
        %9479 = vmatprep.subr.bf16.mxu0 0
        %9480 = vmatpush1.bf16.msra.mxu0 %v8808
        %9481 = vmatprep.subr.bf16.mxu0 0
        %9482 = vmatpush1.bf16.msra.mxu0 %v8811
        %9483 = vmatprep.subr.bf16.mxu0 0
        %9484 = vmatpush1.bf16.msra.mxu0 %v8814
        %9485 = vmatprep.subr.bf16.mxu0 0
        %9486 = vmatpush1.bf16.msra.mxu0 %v8817
        %9487 = vmatprep.subr.bf16.mxu0 0
        %9488 = vmatpush1.bf16.msra.mxu0 %v8820
        %9489 = vmatprep.subr.bf16.mxu0 0
        %9490 = vmatpush1.bf16.msra.mxu0 %v8823
        %9491 = vmatprep.subr.bf16.mxu0 0
        %9492 = vmatpush1.bf16.msra.mxu0 %v8826
        %9493 = vmatprep.subr.bf16.mxu0 0
        %9494 = vmatpush1.bf16.msra.mxu0 %v8829
        %9495 = vmatprep.mubr.bf16.mxu0 %v7544
        %9496 = vmatmul.mubr.bf16.gmra.mrb[0].mxu0 %v7543
        %v9497 = vpop.f32.mrb[0].mxu0
        %v9498 = vadd.f32 %v9457, %v9497
        %v9499 = vpop.f32.mrb[0].mxu0
        %v9500 = vpop.f32.mrb[0].mxu0
        %v9501 = vadd.f32 %v9460, %v9500
        %v9502 = vpop.f32.mrb[0].mxu0
        %9503 = vdwg.mxu0
        %9504 = vmatprep.subr.bf16.mxu0 0
        %9505 = vmatpush1.bf16.msra.mxu0 %v8832
        %9506 = vmatprep.subr.bf16.mxu0 0
        %9507 = vmatpush1.bf16.msra.mxu0 %v8835
        %9508 = vmatprep.subr.bf16.mxu0 0
        %9509 = vmatpush1.bf16.msra.mxu0 %v8838
        %9510 = vmatprep.subr.bf16.mxu0 0
        %9511 = vmatpush1.bf16.msra.mxu0 %v8841
        %9512 = vmatprep.subr.bf16.mxu0 0
        %9513 = vmatpush1.bf16.msra.mxu0 %v8844
        %9514 = vmatprep.subr.bf16.mxu0 0
        %9515 = vmatpush1.bf16.msra.mxu0 %v8847
        %9516 = vmatprep.subr.bf16.mxu0 0
        %9517 = vmatpush1.bf16.msra.mxu0 %v8850
        %9518 = vmatprep.subr.bf16.mxu0 0
        %9519 = vmatpush1.bf16.msra.mxu0 %v8853
        %9520 = vmatprep.subr.bf16.mxu0 0
        %9521 = vmatpush1.bf16.msra.mxu0 %v8856
        %9522 = vmatprep.subr.bf16.mxu0 0
        %9523 = vmatpush1.bf16.msra.mxu0 %v8859
        %9524 = vmatprep.subr.bf16.mxu0 0
        %9525 = vmatpush1.bf16.msra.mxu0 %v8862
        %9526 = vmatprep.subr.bf16.mxu0 0
        %9527 = vmatpush1.bf16.msra.mxu0 %v8865
        %9528 = vmatprep.subr.bf16.mxu0 0
        %9529 = vmatpush1.bf16.msra.mxu0 %v8868
        %9530 = vmatprep.subr.bf16.mxu0 0
        %9531 = vmatpush1.bf16.msra.mxu0 %v8871
        %9532 = vmatprep.subr.bf16.mxu0 0
        %9533 = vmatpush1.bf16.msra.mxu0 %v8874
        %9534 = vmatprep.subr.bf16.mxu0 0
        %9535 = vmatpush1.bf16.msra.mxu0 %v8877
        %9536 = vmatprep.mubr.bf16.mxu0 %v7546
        %9537 = vmatmul.mubr.bf16.gmra.mrb[0].mxu0 %v7545
        %v9538 = vpop.f32.mrb[0].mxu0
        %v9539 = vadd.f32 %v9498, %v9538
        %v9540 = vpop.f32.mrb[0].mxu0
        %v9541 = vpop.f32.mrb[0].mxu0
        %v9542 = vadd.f32 %v9501, %v9541
        %v9543 = vpop.f32.mrb[0].mxu0
        %9544 = vdwg.mxu0
        %9545 = vmatprep.subr.bf16.mxu0 0
        %9546 = vmatpush1.bf16.msra.mxu0 %v8880
        %9547 = vmatprep.subr.bf16.mxu0 0
        %9548 = vmatpush1.bf16.msra.mxu0 %v8883
        %9549 = vmatprep.subr.bf16.mxu0 0
        %9550 = vmatpush1.bf16.msra.mxu0 %v8886
        %9551 = vmatprep.subr.bf16.mxu0 0
        %9552 = vmatpush1.bf16.msra.mxu0 %v8889
        %9553 = vmatprep.subr.bf16.mxu0 0
        %9554 = vmatpush1.bf16.msra.mxu0 %v8892
        %9555 = vmatprep.subr.bf16.mxu0 0
        %9556 = vmatpush1.bf16.msra.mxu0 %v8895
        %9557 = vmatprep.subr.bf16.mxu0 0
        %9558 = vmatpush1.bf16.msra.mxu0 %v8898
        %9559 = vmatprep.subr.bf16.mxu0 0
        %9560 = vmatpush1.bf16.msra.mxu0 %v8901
        %9561 = vmatprep.subr.bf16.mxu0 0
        %9562 = vmatpush1.bf16.msra.mxu0 %v8904
        %9563 = vmatprep.subr.bf16.mxu0 0
        %9564 = vmatpush1.bf16.msra.mxu0 %v8907
        %9565 = vmatprep.subr.bf16.mxu0 0
        %9566 = vmatpush1.bf16.msra.mxu0 %v8910
        %9567 = vmatprep.subr.bf16.mxu0 0
        %9568 = vmatpush1.bf16.msra.mxu0 %v8913
        %9569 = vmatprep.subr.bf16.mxu0 0
        %9570 = vmatpush1.bf16.msra.mxu0 %v8916
        %9571 = vmatprep.subr.bf16.mxu0 0
        %9572 = vmatpush1.bf16.msra.mxu0 %v8919
        %9573 = vmatprep.subr.bf16.mxu0 0
        %9574 = vmatpush1.bf16.msra.mxu0 %v8922
        %9575 = vmatprep.subr.bf16.mxu0 0
        %9576 = vmatpush1.bf16.msra.mxu0 %v8925
        %9577 = vmatprep.mubr.bf16.mxu0 %v7548
        %9578 = vmatmul.mubr.bf16.gmra.mrb[0].mxu0 %v7547
        %v9579 = vpop.f32.mrb[0].mxu0
        %v9580 = vadd.f32 %v9539, %v9579
        %v9581 = vpop.f32.mrb[0].mxu0
        %v9582 = vpop.f32.mrb[0].mxu0
        %v9583 = vadd.f32 %v9542, %v9582
        %v9584 = vpop.f32.mrb[0].mxu0
        %9585 = vdwg.mxu0
        %v9586 = vmax.f32 %v9373, 0.0
        %v9587 = vmax.f32 %v9375, 0.0
        %v9588 = vmax.f32 %v9580, 0.0
        %v9589 = vmax.f32 %v9377, 0.0
        %v9590 = vmax.f32 %v9379, 0.0
        %v9591 = vmax.f32 %v9583, 0.0
        %v9592 = vpack.c.bf16 %v7529, %v7519
        %v9593 = vpack.c.bf16 %v7530, %v7520
        %v9594 = vpack.c.bf16 %v7531, %v7521
        %v9595 = vpack.c.bf16 %v7532, %v7522
        %v9596 = vpack.c.bf16 %v7533, %v7523
        %v9597 = vpack.c.bf16 %v7534, %v7524
        %v9598 = vpack.c.bf16 %v7535, %v7525
        %v9599 = vpack.c.bf16 %v7536, %v7526
        %v9600 = vpack.c.bf16 %v7537, %v7527
        %v9601 = vpack.c.bf16 %v7538, %v7528
        %9602 = vmatprep.subr.bf16.mxu0 %v8687
        %9603 = vmatpush1.bf16.msra.mxu0 %v8686
        %9604 = vmatprep.subr.bf16.mxu0 %v8690
        %9605 = vmatpush1.bf16.msra.mxu0 %v8689
        %9606 = vmatprep.subr.bf16.mxu0 %v8693
        %9607 = vmatpush1.bf16.msra.mxu0 %v8692
        %9608 = vmatprep.subr.bf16.mxu0 %v8696
        %9609 = vmatpush1.bf16.msra.mxu0 %v8695
        %9610 = vmatprep.subr.bf16.mxu0 %v8699
        %9611 = vmatpush1.bf16.msra.mxu0 %v8698
        %9612 = vmatprep.subr.bf16.mxu0 %v8702
        %9613 = vmatpush1.bf16.msra.mxu0 %v8701
        %9614 = vmatprep.subr.bf16.mxu0 %v8705
        %9615 = vmatpush1.bf16.msra.mxu0 %v8704
        %9616 = vmatprep.subr.bf16.mxu0 %v8708
        %9617 = vmatpush1.bf16.msra.mxu0 %v8707
        %9618 = vmatprep.subr.bf16.mxu0 %v8711
        %9619 = vmatpush1.bf16.msra.mxu0 %v8710
        %9620 = vmatprep.subr.bf16.mxu0 %v8714
        %9621 = vmatpush1.bf16.msra.mxu0 %v8713
        %9622 = vmatprep.subr.bf16.mxu0 %v8717
        %9623 = vmatpush1.bf16.msra.mxu0 %v8716
        %9624 = vmatprep.subr.bf16.mxu0 %v8720
        %9625 = vmatpush1.bf16.msra.mxu0 %v8719
        %9626 = vmatprep.subr.bf16.mxu0 %v8723
        %9627 = vmatpush1.bf16.msra.mxu0 %v8722
        %9628 = vmatprep.subr.bf16.mxu0 %v8726
        %9629 = vmatpush1.bf16.msra.mxu0 %v8725
        %9630 = vmatprep.subr.bf16.mxu0 %v8729
        %9631 = vmatpush1.bf16.msra.mxu0 %v8728
        %9632 = vmatprep.subr.bf16.mxu0 %v8732
        %9633 = vmatpush1.bf16.msra.mxu0 %v8731
        %9634 = vmatprep.mubr.bf16.mxu0 %v9593
        %9635 = vmatmul.mubr.bf16.gmra.mrb[0].mxu0 %v9592
        %v9636 = vpop.f32.mrb[0].mxu0
        %v9637 = vadd.f32 %v7874, %v9636
        %v9638 = vpop.f32.mrb[0].mxu0
        %v9639 = vadd.f32 %v7878, %v9638
        %v9640 = vpop.f32.mrb[0].mxu0
        %v9641 = vadd.f32 %v7874, %v9640
        %v9642 = vpop.f32.mrb[0].mxu0
        %v9643 = vadd.f32 %v7878, %v9642
        %9644 = vdwg.mxu0
        %9645 = vmatprep.subr.bf16.mxu0 %v8735
        %9646 = vmatpush1.bf16.msra.mxu0 %v8734
        %9647 = vmatprep.subr.bf16.mxu0 %v8738
        %9648 = vmatpush1.bf16.msra.mxu0 %v8737
        %9649 = vmatprep.subr.bf16.mxu0 %v8741
        %9650 = vmatpush1.bf16.msra.mxu0 %v8740
        %9651 = vmatprep.subr.bf16.mxu0 %v8744
        %9652 = vmatpush1.bf16.msra.mxu0 %v8743
        %9653 = vmatprep.subr.bf16.mxu0 %v8747
        %9654 = vmatpush1.bf16.msra.mxu0 %v8746
        %9655 = vmatprep.subr.bf16.mxu0 %v8750
        %9656 = vmatpush1.bf16.msra.mxu0 %v8749
        %9657 = vmatprep.subr.bf16.mxu0 %v8753
        %9658 = vmatpush1.bf16.msra.mxu0 %v8752
        %9659 = vmatprep.subr.bf16.mxu0 %v8756
        %9660 = vmatpush1.bf16.msra.mxu0 %v8755
        %9661 = vmatprep.subr.bf16.mxu0 %v8759
        %9662 = vmatpush1.bf16.msra.mxu0 %v8758
        %9663 = vmatprep.subr.bf16.mxu0 %v8762
        %9664 = vmatpush1.bf16.msra.mxu0 %v8761
        %9665 = vmatprep.subr.bf16.mxu0 %v8765
        %9666 = vmatpush1.bf16.msra.mxu0 %v8764
        %9667 = vmatprep.subr.bf16.mxu0 %v8768
        %9668 = vmatpush1.bf16.msra.mxu0 %v8767
        %9669 = vmatprep.subr.bf16.mxu0 %v8771
        %9670 = vmatpush1.bf16.msra.mxu0 %v8770
        %9671 = vmatprep.subr.bf16.mxu0 %v8774
        %9672 = vmatpush1.bf16.msra.mxu0 %v8773
        %9673 = vmatprep.subr.bf16.mxu0 %v8777
        %9674 = vmatpush1.bf16.msra.mxu0 %v8776
        %9675 = vmatprep.subr.bf16.mxu0 %v8780
        %9676 = vmatpush1.bf16.msra.mxu0 %v8779
        %9677 = vmatprep.mubr.bf16.mxu0 %v9595
        %9678 = vmatmul.mubr.bf16.gmra.mrb[0].mxu0 %v9594
        %v9679 = vpop.f32.mrb[0].mxu0
        %v9680 = vadd.f32 %v9637, %v9679
        %v9681 = vpop.f32.mrb[0].mxu0
        %v9682 = vadd.f32 %v9639, %v9681
        %v9683 = vpop.f32.mrb[0].mxu0
        %v9684 = vadd.f32 %v9641, %v9683
        %v9685 = vpop.f32.mrb[0].mxu0
        %v9686 = vadd.f32 %v9643, %v9685
        %9687 = vdwg.mxu0
        %9688 = vmatprep.subr.bf16.mxu0 %v8783
        %9689 = vmatpush1.bf16.msra.mxu0 %v8782
        %9690 = vmatprep.subr.bf16.mxu0 %v8786
        %9691 = vmatpush1.bf16.msra.mxu0 %v8785
        %9692 = vmatprep.subr.bf16.mxu0 %v8789
        %9693 = vmatpush1.bf16.msra.mxu0 %v8788
        %9694 = vmatprep.subr.bf16.mxu0 %v8792
        %9695 = vmatpush1.bf16.msra.mxu0 %v8791
        %9696 = vmatprep.subr.bf16.mxu0 %v8795
        %9697 = vmatpush1.bf16.msra.mxu0 %v8794
        %9698 = vmatprep.subr.bf16.mxu0 %v8798
        %9699 = vmatpush1.bf16.msra.mxu0 %v8797
        %9700 = vmatprep.subr.bf16.mxu0 %v8801
        %9701 = vmatpush1.bf16.msra.mxu0 %v8800
        %9702 = vmatprep.subr.bf16.mxu0 %v8804
        %9703 = vmatpush1.bf16.msra.mxu0 %v8803
        %9704 = vmatprep.subr.bf16.mxu0 %v8807
        %9705 = vmatpush1.bf16.msra.mxu0 %v8806
        %9706 = vmatprep.subr.bf16.mxu0 %v8810
        %9707 = vmatpush1.bf16.msra.mxu0 %v8809
        %9708 = vmatprep.subr.bf16.mxu0 %v8813
        %9709 = vmatpush1.bf16.msra.mxu0 %v8812
        %9710 = vmatprep.subr.bf16.mxu0 %v8816
        %9711 = vmatpush1.bf16.msra.mxu0 %v8815
        %9712 = vmatprep.subr.bf16.mxu0 %v8819
        %9713 = vmatpush1.bf16.msra.mxu0 %v8818
        %9714 = vmatprep.subr.bf16.mxu0 %v8822
        %9715 = vmatpush1.bf16.msra.mxu0 %v8821
        %9716 = vmatprep.subr.bf16.mxu0 %v8825
        %9717 = vmatpush1.bf16.msra.mxu0 %v8824
        %9718 = vmatprep.subr.bf16.mxu0 %v8828
        %9719 = vmatpush1.bf16.msra.mxu0 %v8827
        %9720 = vmatprep.mubr.bf16.mxu0 %v9597
        %9721 = vmatmul.mubr.bf16.gmra.mrb[0].mxu0 %v9596
        %v9722 = vpop.f32.mrb[0].mxu0
        %v9723 = vadd.f32 %v9680, %v9722
        %v9724 = vpop.f32.mrb[0].mxu0
        %v9725 = vadd.f32 %v9682, %v9724
        %v9726 = vpop.f32.mrb[0].mxu0
        %v9727 = vadd.f32 %v9684, %v9726
        %v9728 = vpop.f32.mrb[0].mxu0
        %v9729 = vadd.f32 %v9686, %v9728
        %9730 = vdwg.mxu0
        %9731 = vmatprep.subr.bf16.mxu0 %v8831
        %9732 = vmatpush1.bf16.msra.mxu0 %v8830
        %9733 = vmatprep.subr.bf16.mxu0 %v8834
        %9734 = vmatpush1.bf16.msra.mxu0 %v8833
        %9735 = vmatprep.subr.bf16.mxu0 %v8837
        %9736 = vmatpush1.bf16.msra.mxu0 %v8836
        %9737 = vmatprep.subr.bf16.mxu0 %v8840
        %9738 = vmatpush1.bf16.msra.mxu0 %v8839
        %9739 = vmatprep.subr.bf16.mxu0 %v8843
        %9740 = vmatpush1.bf16.msra.mxu0 %v8842
        %9741 = vmatprep.subr.bf16.mxu0 %v8846
        %9742 = vmatpush1.bf16.msra.mxu0 %v8845
        %9743 = vmatprep.subr.bf16.mxu0 %v8849
        %9744 = vmatpush1.bf16.msra.mxu0 %v8848
        %9745 = vmatprep.subr.bf16.mxu0 %v8852
        %9746 = vmatpush1.bf16.msra.mxu0 %v8851
        %9747 = vmatprep.subr.bf16.mxu0 %v8855
        %9748 = vmatpush1.bf16.msra.mxu0 %v8854
        %9749 = vmatprep.subr.bf16.mxu0 %v8858
        %9750 = vmatpush1.bf16.msra.mxu0 %v8857
        %9751 = vmatprep.subr.bf16.mxu0 %v8861
        %9752 = vmatpush1.bf16.msra.mxu0 %v8860
        %9753 = vmatprep.subr.bf16.mxu0 %v8864
        %9754 = vmatpush1.bf16.msra.mxu0 %v8863
        %9755 = vmatprep.subr.bf16.mxu0 %v8867
        %9756 = vmatpush1.bf16.msra.mxu0 %v8866
        %9757 = vmatprep.subr.bf16.mxu0 %v8870
        %9758 = vmatpush1.bf16.msra.mxu0 %v8869
        %9759 = vmatprep.subr.bf16.mxu0 %v8873
        %9760 = vmatpush1.bf16.msra.mxu0 %v8872
        %9761 = vmatprep.subr.bf16.mxu0 %v8876
        %9762 = vmatpush1.bf16.msra.mxu0 %v8875
        %9763 = vmatprep.mubr.bf16.mxu0 %v9599
        %9764 = vmatmul.mubr.bf16.gmra.mrb[0].mxu0 %v9598
        %v9765 = vpop.f32.mrb[0].mxu0
        %v9766 = vadd.f32 %v9723, %v9765
        %v9767 = vpop.f32.mrb[0].mxu0
        %v9768 = vadd.f32 %v9725, %v9767
        %v9769 = vpop.f32.mrb[0].mxu0
        %v9770 = vadd.f32 %v9727, %v9769
        %v9771 = vpop.f32.mrb[0].mxu0
        %v9772 = vadd.f32 %v9729, %v9771
        %9773 = vdwg.mxu0
        %9774 = vmatprep.subr.bf16.mxu0 %v8879
        %9775 = vmatpush1.bf16.msra.mxu0 %v8878
        %9776 = vmatprep.subr.bf16.mxu0 %v8882
        %9777 = vmatpush1.bf16.msra.mxu0 %v8881
        %9778 = vmatprep.subr.bf16.mxu0 %v8885
        %9779 = vmatpush1.bf16.msra.mxu0 %v8884
        %9780 = vmatprep.subr.bf16.mxu0 %v8888
        %9781 = vmatpush1.bf16.msra.mxu0 %v8887
        %9782 = vmatprep.subr.bf16.mxu0 %v8891
        %9783 = vmatpush1.bf16.msra.mxu0 %v8890
        %9784 = vmatprep.subr.bf16.mxu0 %v8894
        %9785 = vmatpush1.bf16.msra.mxu0 %v8893
        %9786 = vmatprep.subr.bf16.mxu0 %v8897
        %9787 = vmatpush1.bf16.msra.mxu0 %v8896
        %9788 = vmatprep.subr.bf16.mxu0 %v8900
        %9789 = vmatpush1.bf16.msra.mxu0 %v8899
        %9790 = vmatprep.subr.bf16.mxu0 %v8903
        %9791 = vmatpush1.bf16.msra.mxu0 %v8902
        %9792 = vmatprep.subr.bf16.mxu0 %v8906
        %9793 = vmatpush1.bf16.msra.mxu0 %v8905
        %9794 = vmatprep.subr.bf16.mxu0 %v8909
        %9795 = vmatpush1.bf16.msra.mxu0 %v8908
        %9796 = vmatprep.subr.bf16.mxu0 %v8912
        %9797 = vmatpush1.bf16.msra.mxu0 %v8911
        %9798 = vmatprep.subr.bf16.mxu0 %v8915
        %9799 = vmatpush1.bf16.msra.mxu0 %v8914
        %9800 = vmatprep.subr.bf16.mxu0 %v8918
        %9801 = vmatpush1.bf16.msra.mxu0 %v8917
        %9802 = vmatprep.subr.bf16.mxu0 %v8921
        %9803 = vmatpush1.bf16.msra.mxu0 %v8920
        %9804 = vmatprep.subr.bf16.mxu0 %v8924
        %9805 = vmatpush1.bf16.msra.mxu0 %v8923
        %9806 = vmatprep.mubr.bf16.mxu0 %v9601
        %9807 = vmatmul.mubr.bf16.gmra.mrb[0].mxu0 %v9600
        %v9808 = vpop.f32.mrb[0].mxu0
        %v9809 = vadd.f32 %v9766, %v9808
        %v9810 = vpop.f32.mrb[0].mxu0
        %v9811 = vadd.f32 %v9768, %v9810
        %v9812 = vpop.f32.mrb[0].mxu0
        %v9813 = vadd.f32 %v9770, %v9812
        %v9814 = vpop.f32.mrb[0].mxu0
        %v9815 = vadd.f32 %v9772, %v9814
        %9816 = vdwg.mxu0
        %9817 = vmatprep.subr.bf16.mxu0 0
        %9818 = vmatpush1.bf16.msra.mxu0 %v8688
        %9819 = vmatprep.subr.bf16.mxu0 0
        %9820 = vmatpush1.bf16.msra.mxu0 %v8691
        %9821 = vmatprep.subr.bf16.mxu0 0
        %9822 = vmatpush1.bf16.msra.mxu0 %v8694
        %9823 = vmatprep.subr.bf16.mxu0 0
        %9824 = vmatpush1.bf16.msra.mxu0 %v8697
        %9825 = vmatprep.subr.bf16.mxu0 0
        %9826 = vmatpush1.bf16.msra.mxu0 %v8700
        %9827 = vmatprep.subr.bf16.mxu0 0
        %9828 = vmatpush1.bf16.msra.mxu0 %v8703
        %9829 = vmatprep.subr.bf16.mxu0 0
        %9830 = vmatpush1.bf16.msra.mxu0 %v8706
        %9831 = vmatprep.subr.bf16.mxu0 0
        %9832 = vmatpush1.bf16.msra.mxu0 %v8709
        %9833 = vmatprep.subr.bf16.mxu0 0
        %9834 = vmatpush1.bf16.msra.mxu0 %v8712
        %9835 = vmatprep.subr.bf16.mxu0 0
        %9836 = vmatpush1.bf16.msra.mxu0 %v8715
        %9837 = vmatprep.subr.bf16.mxu0 0
        %9838 = vmatpush1.bf16.msra.mxu0 %v8718
        %9839 = vmatprep.subr.bf16.mxu0 0
        %9840 = vmatpush1.bf16.msra.mxu0 %v8721
        %9841 = vmatprep.subr.bf16.mxu0 0
        %9842 = vmatpush1.bf16.msra.mxu0 %v8724
        %9843 = vmatprep.subr.bf16.mxu0 0
        %9844 = vmatpush1.bf16.msra.mxu0 %v8727
        %9845 = vmatprep.subr.bf16.mxu0 0
        %9846 = vmatpush1.bf16.msra.mxu0 %v8730
        %9847 = vmatprep.subr.bf16.mxu0 0
        %9848 = vmatpush1.bf16.msra.mxu0 %v8733
        %9849 = vmatprep.mubr.bf16.mxu0 %v9593
        %9850 = vmatmul.mubr.bf16.gmra.mrb[0].mxu0 %v9592
        %v9851 = vpop.f32.mrb[0].mxu0
        %v9852 = vadd.f32 %v7882, %v9851
        %v9853 = vpop.f32.mrb[0].mxu0
        %v9854 = vpop.f32.mrb[0].mxu0
        %v9855 = vadd.f32 %v7882, %v9854
        %v9856 = vpop.f32.mrb[0].mxu0
        %9857 = vdwg.mxu0
        %9858 = vmatprep.subr.bf16.mxu0 0
        %9859 = vmatpush1.bf16.msra.mxu0 %v8736
        %9860 = vmatprep.subr.bf16.mxu0 0
        %9861 = vmatpush1.bf16.msra.mxu0 %v8739
        %9862 = vmatprep.subr.bf16.mxu0 0
        %9863 = vmatpush1.bf16.msra.mxu0 %v8742
        %9864 = vmatprep.subr.bf16.mxu0 0
        %9865 = vmatpush1.bf16.msra.mxu0 %v8745
        %9866 = vmatprep.subr.bf16.mxu0 0
        %9867 = vmatpush1.bf16.msra.mxu0 %v8748
        %9868 = vmatprep.subr.bf16.mxu0 0
        %9869 = vmatpush1.bf16.msra.mxu0 %v8751
        %9870 = vmatprep.subr.bf16.mxu0 0
        %9871 = vmatpush1.bf16.msra.mxu0 %v8754
        %9872 = vmatprep.subr.bf16.mxu0 0
        %9873 = vmatpush1.bf16.msra.mxu0 %v8757
        %9874 = vmatprep.subr.bf16.mxu0 0
        %9875 = vmatpush1.bf16.msra.mxu0 %v8760
        %9876 = vmatprep.subr.bf16.mxu0 0
        %9877 = vmatpush1.bf16.msra.mxu0 %v8763
        %9878 = vmatprep.subr.bf16.mxu0 0
        %9879 = vmatpush1.bf16.msra.mxu0 %v8766
        %9880 = vmatprep.subr.bf16.mxu0 0
        %9881 = vmatpush1.bf16.msra.mxu0 %v8769
        %9882 = vmatprep.subr.bf16.mxu0 0
        %9883 = vmatpush1.bf16.msra.mxu0 %v8772
        %9884 = vmatprep.subr.bf16.mxu0 0
        %9885 = vmatpush1.bf16.msra.mxu0 %v8775
        %9886 = vmatprep.subr.bf16.mxu0 0
        %9887 = vmatpush1.bf16.msra.mxu0 %v8778
        %9888 = vmatprep.subr.bf16.mxu0 0
        %9889 = vmatpush1.bf16.msra.mxu0 %v8781
        %9890 = vmatprep.mubr.bf16.mxu0 %v9595
        %9891 = vmatmul.mubr.bf16.gmra.mrb[0].mxu0 %v9594
        %v9892 = vpop.f32.mrb[0].mxu0
        %v9893 = vadd.f32 %v9852, %v9892
        %v9894 = vpop.f32.mrb[0].mxu0
        %v9895 = vpop.f32.mrb[0].mxu0
        %v9896 = vadd.f32 %v9855, %v9895
        %v9897 = vpop.f32.mrb[0].mxu0
        %9898 = vdwg.mxu0
        %9899 = vmatprep.subr.bf16.mxu0 0
        %9900 = vmatpush1.bf16.msra.mxu0 %v8784
        %9901 = vmatprep.subr.bf16.mxu0 0
        %9902 = vmatpush1.bf16.msra.mxu0 %v8787
        %9903 = vmatprep.subr.bf16.mxu0 0
        %9904 = vmatpush1.bf16.msra.mxu0 %v8790
        %9905 = vmatprep.subr.bf16.mxu0 0
        %9906 = vmatpush1.bf16.msra.mxu0 %v8793
        %9907 = vmatprep.subr.bf16.mxu0 0
        %9908 = vmatpush1.bf16.msra.mxu0 %v8796
        %9909 = vmatprep.subr.bf16.mxu0 0
        %9910 = vmatpush1.bf16.msra.mxu0 %v8799
        %9911 = vmatprep.subr.bf16.mxu0 0
        %9912 = vmatpush1.bf16.msra.mxu0 %v8802
        %9913 = vmatprep.subr.bf16.mxu0 0
        %9914 = vmatpush1.bf16.msra.mxu0 %v8805
        %9915 = vmatprep.subr.bf16.mxu0 0
        %9916 = vmatpush1.bf16.msra.mxu0 %v8808
        %9917 = vmatprep.subr.bf16.mxu0 0
        %9918 = vmatpush1.bf16.msra.mxu0 %v8811
        %9919 = vmatprep.subr.bf16.mxu0 0
        %9920 = vmatpush1.bf16.msra.mxu0 %v8814
        %9921 = vmatprep.subr.bf16.mxu0 0
        %9922 = vmatpush1.bf16.msra.mxu0 %v8817
        %9923 = vmatprep.subr.bf16.mxu0 0
        %9924 = vmatpush1.bf16.msra.mxu0 %v8820
        %9925 = vmatprep.subr.bf16.mxu0 0
        %9926 = vmatpush1.bf16.msra.mxu0 %v8823
        %9927 = vmatprep.subr.bf16.mxu0 0
        %9928 = vmatpush1.bf16.msra.mxu0 %v8826
        %9929 = vmatprep.subr.bf16.mxu0 0
        %9930 = vmatpush1.bf16.msra.mxu0 %v8829
        %9931 = vmatprep.mubr.bf16.mxu0 %v9597
        %9932 = vmatmul.mubr.bf16.gmra.mrb[0].mxu0 %v9596
        %v9933 = vpop.f32.mrb[0].mxu0
        %v9934 = vadd.f32 %v9893, %v9933
        %v9935 = vpop.f32.mrb[0].mxu0
        %v9936 = vpop.f32.mrb[0].mxu0
        %v9937 = vadd.f32 %v9896, %v9936
        %v9938 = vpop.f32.mrb[0].mxu0
        %9939 = vdwg.mxu0
        %9940 = vmatprep.subr.bf16.mxu0 0
        %9941 = vmatpush1.bf16.msra.mxu0 %v8832
        %9942 = vmatprep.subr.bf16.mxu0 0
        %9943 = vmatpush1.bf16.msra.mxu0 %v8835
        %9944 = vmatprep.subr.bf16.mxu0 0
        %9945 = vmatpush1.bf16.msra.mxu0 %v8838
        %9946 = vmatprep.subr.bf16.mxu0 0
        %9947 = vmatpush1.bf16.msra.mxu0 %v8841
        %9948 = vmatprep.subr.bf16.mxu0 0
        %9949 = vmatpush1.bf16.msra.mxu0 %v8844
        %9950 = vmatprep.subr.bf16.mxu0 0
        %9951 = vmatpush1.bf16.msra.mxu0 %v8847
        %9952 = vmatprep.subr.bf16.mxu0 0
        %9953 = vmatpush1.bf16.msra.mxu0 %v8850
        %9954 = vmatprep.subr.bf16.mxu0 0
        %9955 = vmatpush1.bf16.msra.mxu0 %v8853
        %9956 = vmatprep.subr.bf16.mxu0 0
        %9957 = vmatpush1.bf16.msra.mxu0 %v8856
        %9958 = vmatprep.subr.bf16.mxu0 0
        %9959 = vmatpush1.bf16.msra.mxu0 %v8859
        %9960 = vmatprep.subr.bf16.mxu0 0
        %9961 = vmatpush1.bf16.msra.mxu0 %v8862
        %9962 = vmatprep.subr.bf16.mxu0 0
        %9963 = vmatpush1.bf16.msra.mxu0 %v8865
        %9964 = vmatprep.subr.bf16.mxu0 0
        %9965 = vmatpush1.bf16.msra.mxu0 %v8868
        %9966 = vmatprep.subr.bf16.mxu0 0
        %9967 = vmatpush1.bf16.msra.mxu0 %v8871
        %9968 = vmatprep.subr.bf16.mxu0 0
        %9969 = vmatpush1.bf16.msra.mxu0 %v8874
        %9970 = vmatprep.subr.bf16.mxu0 0
        %9971 = vmatpush1.bf16.msra.mxu0 %v8877
        %9972 = vmatprep.mubr.bf16.mxu0 %v9599
        %9973 = vmatmul.mubr.bf16.gmra.mrb[0].mxu0 %v9598
        %v9974 = vpop.f32.mrb[0].mxu0
        %v9975 = vadd.f32 %v9934, %v9974
        %v9976 = vpop.f32.mrb[0].mxu0
        %v9977 = vpop.f32.mrb[0].mxu0
        %v9978 = vadd.f32 %v9937, %v9977
        %v9979 = vpop.f32.mrb[0].mxu0
        %9980 = vdwg.mxu0
        %9981 = vmatprep.subr.bf16.mxu0 0
        %9982 = vmatpush1.bf16.msra.mxu0 %v8880
        %9983 = vmatprep.subr.bf16.mxu0 0
        %9984 = vmatpush1.bf16.msra.mxu0 %v8883
        %9985 = vmatprep.subr.bf16.mxu0 0
        %9986 = vmatpush1.bf16.msra.mxu0 %v8886
        %9987 = vmatprep.subr.bf16.mxu0 0
        %9988 = vmatpush1.bf16.msra.mxu0 %v8889
        %9989 = vmatprep.subr.bf16.mxu0 0
        %9990 = vmatpush1.bf16.msra.mxu0 %v8892
        %9991 = vmatprep.subr.bf16.mxu0 0
        %9992 = vmatpush1.bf16.msra.mxu0 %v8895
        %9993 = vmatprep.subr.bf16.mxu0 0
        %9994 = vmatpush1.bf16.msra.mxu0 %v8898
        %9995 = vmatprep.subr.bf16.mxu0 0
        %9996 = vmatpush1.bf16.msra.mxu0 %v8901
        %9997 = vmatprep.subr.bf16.mxu0 0
        %9998 = vmatpush1.bf16.msra.mxu0 %v8904
        %9999 = vmatprep.subr.bf16.mxu0 0
        %10000 = vmatpush1.bf16.msra.mxu0 %v8907
        %10001 = vmatprep.subr.bf16.mxu0 0
        %10002 = vmatpush1.bf16.msra.mxu0 %v8910
        %10003 = vmatprep.subr.bf16.mxu0 0
        %10004 = vmatpush1.bf16.msra.mxu0 %v8913
        %10005 = vmatprep.subr.bf16.mxu0 0
        %10006 = vmatpush1.bf16.msra.mxu0 %v8916
        %10007 = vmatprep.subr.bf16.mxu0 0
        %10008 = vmatpush1.bf16.msra.mxu0 %v8919
        %10009 = vmatprep.subr.bf16.mxu0 0
        %10010 = vmatpush1.bf16.msra.mxu0 %v8922
        %10011 = vmatprep.subr.bf16.mxu0 0
        %10012 = vmatpush1.bf16.msra.mxu0 %v8925
        %10013 = vmatprep.mubr.bf16.mxu0 %v9601
        %10014 = vmatmul.mubr.bf16.gmra.mrb[0].mxu0 %v9600
        %v10015 = vpop.f32.mrb[0].mxu0
        %v10016 = vadd.f32 %v9975, %v10015
        %v10017 = vpop.f32.mrb[0].mxu0
        %v10018 = vpop.f32.mrb[0].mxu0
        %v10019 = vadd.f32 %v9978, %v10018
        %v10020 = vpop.f32.mrb[0].mxu0
        %10021 = vdwg.mxu0
        %v10022 = vmax.f32 %v9809, 0.0
        %v10023 = vmax.f32 %v9811, 0.0
        %v10024 = vmax.f32 %v10016, 0.0
        %v10025 = vmax.f32 %v9813, 0.0
        %v10026 = vmax.f32 %v9815, 0.0
        %v10027 = vmax.f32 %v10019, 0.0
        %v10028 = vpack.c.bf16 %v9589, %v9586
        %v10029 = vpack.c.bf16 %v9590, %v9587
        %v10030 = vpack.c.bf16 %v9591, %v9588
        %v10031 = vld [vmem:[#allocation15] sm:$0xff]
        %v10032 = vld [vmem:[#allocation15 + $0x8] sm:$0xff]
        %v10033 = vld [vmem:[#allocation15 + $0x10] sm:$0xff]
        %v10034 = vld [vmem:[#allocation15 + $0x18] sm:$0xff]
        %v10035 = vld [vmem:[#allocation15 + $0x20] sm:$0xff]
        %v10036 = vld [vmem:[#allocation15 + $0x28] sm:$0xff]
        %v10037 = vld [vmem:[#allocation15 + $0x30] sm:$0xff]
        %v10038 = vld [vmem:[#allocation15 + $0x38] sm:$0xff]
        %v10039 = vld [vmem:[#allocation15 + $0x40] sm:$0xff]
        %v10040 = vld [vmem:[#allocation15 + $0x48] sm:$0xff]
        %v10041 = vld [vmem:[#allocation15 + $0x50] sm:$0xff]
        %v10042 = vld [vmem:[#allocation15 + $0x58] sm:$0xff]
        %v10043 = vld [vmem:[#allocation15 + $0x60] sm:$0xff]
        %v10044 = vld [vmem:[#allocation15 + $0x68] sm:$0xff]
        %v10045 = vld [vmem:[#allocation15 + $0x70] sm:$0xff]
        %v10046 = vld [vmem:[#allocation15 + $0x78] sm:$0xff]
        %v10047 = vld [vmem:[#allocation15 + $0x80] sm:$0xff]
        %v10048 = vld [vmem:[#allocation15 + $0x88] sm:$0xff]
        %v10049 = vld [vmem:[#allocation15 + $0x90] sm:$0xff]
        %v10050 = vld [vmem:[#allocation15 + $0x98] sm:$0xff]
        %v10051 = vld [vmem:[#allocation15 + $0xa0] sm:$0xff]
        %v10052 = vld [vmem:[#allocation15 + $0xa8] sm:$0xff]
        %v10053 = vld [vmem:[#allocation15 + $0xb0] sm:$0xff]
        %v10054 = vld [vmem:[#allocation15 + $0xb8] sm:$0xff]
        %v10055 = vld [vmem:[#allocation15 + $0xc0] sm:$0xff]
        %v10056 = vld [vmem:[#allocation15 + $0xc8] sm:$0xff]
        %v10057 = vld [vmem:[#allocation15 + $0xd0] sm:$0xff]
        %v10058 = vld [vmem:[#allocation15 + $0xd8] sm:$0xff]
        %v10059 = vld [vmem:[#allocation15 + $0xe0] sm:$0xff]
        %v10060 = vld [vmem:[#allocation15 + $0xe8] sm:$0xff]
        %v10061 = vld [vmem:[#allocation15 + $0xf0] sm:$0xff]
        %v10062 = vld [vmem:[#allocation15 + $0xf8] sm:$0xff]
        %v10063 = vld [vmem:[#allocation15 + $0x100] sm:$0xff]
        %v10064 = vld [vmem:[#allocation15 + $0x108] sm:$0xff]
        %v10065 = vld [vmem:[#allocation15 + $0x110] sm:$0xff]
        %v10066 = vld [vmem:[#allocation15 + $0x118] sm:$0xff]
        %v10067 = vld [vmem:[#allocation15 + $0x120] sm:$0xff]
        %v10068 = vld [vmem:[#allocation15 + $0x128] sm:$0xff]
        %v10069 = vld [vmem:[#allocation15 + $0x130] sm:$0xff]
        %v10070 = vld [vmem:[#allocation15 + $0x138] sm:$0xff]
        %v10071 = vld [vmem:[#allocation15 + $0x140] sm:$0xff]
        %v10072 = vld [vmem:[#allocation15 + $0x148] sm:$0xff]
        %v10073 = vld [vmem:[#allocation15 + $0x150] sm:$0xff]
        %v10074 = vld [vmem:[#allocation15 + $0x158] sm:$0xff]
        %v10075 = vld [vmem:[#allocation15 + $0x160] sm:$0xff]
        %v10076 = vld [vmem:[#allocation15 + $0x168] sm:$0xff]
        %v10077 = vld [vmem:[#allocation15 + $0x170] sm:$0xff]
        %v10078 = vld [vmem:[#allocation15 + $0x178] sm:$0xff]
        %v10079 = vld [vmem:[#allocation16] sm:$0x3]
        %v10081 = vlaneseq
        %v10082 = vshrl.u32 %v10081, 7
        %v10083 = vsub.s32 0, %v10082
        %v10084 = vrot.slane %v10079, %v10083
        %v10085 = vlaneseq
        %v10086 = vshrl.u32 %v10085, 7
        %v10087 = vsub.s32 1, %v10086
        %v10088 = vrot.slane %v10079, %v10087
        %v10139 = vunpack.c.l.b16 %v10031
        %v10140 = vunpack.c.h.b16 %v10031
        %v10141 = vunpack.c.l.b16 %v10032
        %v10142 = vunpack.c.h.b16 %v10032
        %v10143 = vunpack.c.l.b16 %v10033
        %v10144 = vunpack.c.h.b16 %v10033
        %v10145 = vunpack.c.l.b16 %v10034
        %v10146 = vunpack.c.h.b16 %v10034
        %v10147 = vunpack.c.l.b16 %v10035
        %v10148 = vunpack.c.h.b16 %v10035
        %v10149 = vunpack.c.l.b16 %v10036
        %v10150 = vunpack.c.h.b16 %v10036
        %v10151 = vunpack.c.l.b16 %v10037
        %v10152 = vunpack.c.h.b16 %v10037
        %v10153 = vunpack.c.l.b16 %v10038
        %v10154 = vunpack.c.h.b16 %v10038
        %v10155 = vunpack.c.l.b16 %v10039
        %v10156 = vunpack.c.h.b16 %v10039
        %v10157 = vunpack.c.l.b16 %v10040
        %v10158 = vunpack.c.h.b16 %v10040
        %v10159 = vunpack.c.l.b16 %v10041
        %v10160 = vunpack.c.h.b16 %v10041
        %v10161 = vunpack.c.l.b16 %v10042
        %v10162 = vunpack.c.h.b16 %v10042
        %v10163 = vunpack.c.l.b16 %v10043
        %v10164 = vunpack.c.h.b16 %v10043
        %v10165 = vunpack.c.l.b16 %v10044
        %v10166 = vunpack.c.h.b16 %v10044
        %v10167 = vunpack.c.l.b16 %v10045
        %v10168 = vunpack.c.h.b16 %v10045
        %v10169 = vunpack.c.l.b16 %v10046
        %v10170 = vunpack.c.h.b16 %v10046
        %v10171 = vunpack.c.l.b16 %v10047
        %v10172 = vunpack.c.h.b16 %v10047
        %v10173 = vunpack.c.l.b16 %v10048
        %v10174 = vunpack.c.h.b16 %v10048
        %v10175 = vunpack.c.l.b16 %v10049
        %v10176 = vunpack.c.h.b16 %v10049
        %v10177 = vunpack.c.l.b16 %v10050
        %v10178 = vunpack.c.h.b16 %v10050
        %v10179 = vunpack.c.l.b16 %v10051
        %v10180 = vunpack.c.h.b16 %v10051
        %v10181 = vunpack.c.l.b16 %v10052
        %v10182 = vunpack.c.h.b16 %v10052
        %v10183 = vunpack.c.l.b16 %v10053
        %v10184 = vunpack.c.h.b16 %v10053
        %v10185 = vunpack.c.l.b16 %v10054
        %v10186 = vunpack.c.h.b16 %v10054
        %v10187 = vunpack.c.l.b16 %v10055
        %v10188 = vunpack.c.h.b16 %v10055
        %v10189 = vunpack.c.l.b16 %v10056
        %v10190 = vunpack.c.h.b16 %v10056
        %v10191 = vunpack.c.l.b16 %v10057
        %v10192 = vunpack.c.h.b16 %v10057
        %v10193 = vunpack.c.l.b16 %v10058
        %v10194 = vunpack.c.h.b16 %v10058
        %v10195 = vunpack.c.l.b16 %v10059
        %v10196 = vunpack.c.h.b16 %v10059
        %v10197 = vunpack.c.l.b16 %v10060
        %v10198 = vunpack.c.h.b16 %v10060
        %v10199 = vunpack.c.l.b16 %v10061
        %v10200 = vunpack.c.h.b16 %v10061
        %v10201 = vunpack.c.l.b16 %v10062
        %v10202 = vunpack.c.h.b16 %v10062
        %v10203 = vunpack.c.l.b16 %v10063
        %v10204 = vunpack.c.h.b16 %v10063
        %v10205 = vunpack.c.l.b16 %v10064
        %v10206 = vunpack.c.h.b16 %v10064
        %v10207 = vunpack.c.l.b16 %v10065
        %v10208 = vunpack.c.h.b16 %v10065
        %v10209 = vunpack.c.l.b16 %v10066
        %v10210 = vunpack.c.h.b16 %v10066
        %v10211 = vunpack.c.l.b16 %v10067
        %v10212 = vunpack.c.h.b16 %v10067
        %v10213 = vunpack.c.l.b16 %v10068
        %v10214 = vunpack.c.h.b16 %v10068
        %v10215 = vunpack.c.l.b16 %v10069
        %v10216 = vunpack.c.h.b16 %v10069
        %v10217 = vunpack.c.l.b16 %v10070
        %v10218 = vunpack.c.h.b16 %v10070
        %v10219 = vunpack.c.l.b16 %v10071
        %v10220 = vunpack.c.h.b16 %v10071
        %v10221 = vunpack.c.l.b16 %v10072
        %v10222 = vunpack.c.h.b16 %v10072
        %v10223 = vunpack.c.l.b16 %v10073
        %v10224 = vunpack.c.h.b16 %v10073
        %v10225 = vunpack.c.l.b16 %v10074
        %v10226 = vunpack.c.h.b16 %v10074
        %v10227 = vunpack.c.l.b16 %v10075
        %v10228 = vunpack.c.h.b16 %v10075
        %v10229 = vunpack.c.l.b16 %v10076
        %v10230 = vunpack.c.h.b16 %v10076
        %v10231 = vunpack.c.l.b16 %v10077
        %v10232 = vunpack.c.h.b16 %v10077
        %v10233 = vunpack.c.l.b16 %v10078
        %v10234 = vunpack.c.h.b16 %v10078
        %v10235 = vpack.c.b16 %v10141, %v10139
        %v10236 = vpack.c.b16 %v10142, %v10140
        %v10237 = vpack.c.b16 %v10145, %v10143
        %v10238 = vpack.c.b16 %v10146, %v10144
        %v10239 = vpack.c.b16 %v10149, %v10147
        %v10240 = vpack.c.b16 %v10150, %v10148
        %v10241 = vpack.c.b16 %v10153, %v10151
        %v10242 = vpack.c.b16 %v10154, %v10152
        %v10243 = vpack.c.b16 %v10157, %v10155
        %v10244 = vpack.c.b16 %v10158, %v10156
        %v10245 = vpack.c.b16 %v10161, %v10159
        %v10246 = vpack.c.b16 %v10162, %v10160
        %v10247 = vpack.c.b16 %v10165, %v10163
        %v10248 = vpack.c.b16 %v10166, %v10164
        %v10249 = vpack.c.b16 %v10169, %v10167
        %v10250 = vpack.c.b16 %v10170, %v10168
        %v10251 = vpack.c.b16 %v10173, %v10171
        %v10252 = vpack.c.b16 %v10174, %v10172
        %v10253 = vpack.c.b16 %v10177, %v10175
        %v10254 = vpack.c.b16 %v10178, %v10176
        %v10255 = vpack.c.b16 %v10181, %v10179
        %v10256 = vpack.c.b16 %v10182, %v10180
        %v10257 = vpack.c.b16 %v10185, %v10183
        %v10258 = vpack.c.b16 %v10186, %v10184
        %v10259 = vpack.c.b16 %v10189, %v10187
        %v10260 = vpack.c.b16 %v10190, %v10188
        %v10261 = vpack.c.b16 %v10193, %v10191
        %v10262 = vpack.c.b16 %v10194, %v10192
        %v10263 = vpack.c.b16 %v10197, %v10195
        %v10264 = vpack.c.b16 %v10198, %v10196
        %v10265 = vpack.c.b16 %v10201, %v10199
        %v10266 = vpack.c.b16 %v10202, %v10200
        %v10267 = vpack.c.b16 %v10205, %v10203
        %v10268 = vpack.c.b16 %v10206, %v10204
        %v10269 = vpack.c.b16 %v10209, %v10207
        %v10270 = vpack.c.b16 %v10210, %v10208
        %v10271 = vpack.c.b16 %v10213, %v10211
        %v10272 = vpack.c.b16 %v10214, %v10212
        %v10273 = vpack.c.b16 %v10217, %v10215
        %v10274 = vpack.c.b16 %v10218, %v10216
        %v10275 = vpack.c.b16 %v10221, %v10219
        %v10276 = vpack.c.b16 %v10222, %v10220
        %v10277 = vpack.c.b16 %v10225, %v10223
        %v10278 = vpack.c.b16 %v10226, %v10224
        %v10279 = vpack.c.b16 %v10229, %v10227
        %v10280 = vpack.c.b16 %v10230, %v10228
        %v10281 = vpack.c.b16 %v10233, %v10231
        %v10282 = vpack.c.b16 %v10234, %v10232
        %10331 = vmatprep.subr.bf16.mxu0 %v10236
        %10332 = vmatpush1.bf16.msra.mxu0 %v10235
        %10333 = vmatprep.subr.bf16.mxu0 %v10238
        %10334 = vmatpush1.bf16.msra.mxu0 %v10237
        %10335 = vmatprep.subr.bf16.mxu0 %v10240
        %10336 = vmatpush1.bf16.msra.mxu0 %v10239
        %10337 = vmatprep.subr.bf16.mxu0 %v10242
        %10338 = vmatpush1.bf16.msra.mxu0 %v10241
        %10339 = vmatprep.subr.bf16.mxu0 %v10244
        %10340 = vmatpush1.bf16.msra.mxu0 %v10243
        %10341 = vmatprep.subr.bf16.mxu0 %v10246
        %10342 = vmatpush1.bf16.msra.mxu0 %v10245
        %10343 = vmatprep.subr.bf16.mxu0 %v10248
        %10344 = vmatpush1.bf16.msra.mxu0 %v10247
        %10345 = vmatprep.subr.bf16.mxu0 %v10250
        %10346 = vmatpush1.bf16.msra.mxu0 %v10249
        %10347 = vmatprep.subr.bf16.mxu0 %v10252
        %10348 = vmatpush1.bf16.msra.mxu0 %v10251
        %10349 = vmatprep.subr.bf16.mxu0 %v10254
        %10350 = vmatpush1.bf16.msra.mxu0 %v10253
        %10351 = vmatprep.subr.bf16.mxu0 %v10256
        %10352 = vmatpush1.bf16.msra.mxu0 %v10255
        %10353 = vmatprep.subr.bf16.mxu0 %v10258
        %10354 = vmatpush1.bf16.msra.mxu0 %v10257
        %10355 = vmatprep.subr.bf16.mxu0 %v10260
        %10356 = vmatpush1.bf16.msra.mxu0 %v10259
        %10357 = vmatprep.subr.bf16.mxu0 %v10262
        %10358 = vmatpush1.bf16.msra.mxu0 %v10261
        %10359 = vmatprep.subr.bf16.mxu0 %v10264
        %10360 = vmatpush1.bf16.msra.mxu0 %v10263
        %10361 = vmatprep.subr.bf16.mxu0 %v10266
        %10362 = vmatpush1.bf16.msra.mxu0 %v10265
        %10363 = vmatprep.mubr.bf16.mxu0 %v10029
        %10364 = vmatmul.mubr.bf16.gmra.mrb[0].mxu0 %v10028
        %v10365 = vpop.f32.mrb[0].mxu0
        %v10366 = vadd.f32 %v10084, %v10365
        %v10367 = vpop.f32.mrb[0].mxu0
        %v10368 = vadd.f32 %v10088, %v10367
        %v10369 = vpop.f32.mrb[0].mxu0
        %v10370 = vadd.f32 %v10084, %v10369
        %v10371 = vpop.f32.mrb[0].mxu0
        %v10372 = vadd.f32 %v10088, %v10371
        %10373 = vdwg.mxu0
        %10374 = vmatprep.subr.bf16.mxu0 %v10268
        %10375 = vmatpush1.bf16.msra.mxu0 %v10267
        %10376 = vmatprep.subr.bf16.mxu0 %v10270
        %10377 = vmatpush1.bf16.msra.mxu0 %v10269
        %10378 = vmatprep.subr.bf16.mxu0 %v10272
        %10379 = vmatpush1.bf16.msra.mxu0 %v10271
        %10380 = vmatprep.subr.bf16.mxu0 %v10274
        %10381 = vmatpush1.bf16.msra.mxu0 %v10273
        %10382 = vmatprep.subr.bf16.mxu0 %v10276
        %10383 = vmatpush1.bf16.msra.mxu0 %v10275
        %10384 = vmatprep.subr.bf16.mxu0 %v10278
        %10385 = vmatpush1.bf16.msra.mxu0 %v10277
        %10386 = vmatprep.subr.bf16.mxu0 %v10280
        %10387 = vmatpush1.bf16.msra.mxu0 %v10279
        %10388 = vmatprep.subr.bf16.mxu0 %v10282
        %10389 = vmatpush1.bf16.msra.mxu0 %v10281
        %10390 = vmatprep.subr.bf16.mxu0 0
        %10391 = vmatpush1.bf16.msra.mxu0 0
        %10392 = vmatprep.subr.bf16.mxu0 0
        %10393 = vmatpush1.bf16.msra.mxu0 0
        %10394 = vmatprep.subr.bf16.mxu0 0
        %10395 = vmatpush1.bf16.msra.mxu0 0
        %10396 = vmatprep.subr.bf16.mxu0 0
        %10397 = vmatpush1.bf16.msra.mxu0 0
        %10398 = vmatprep.subr.bf16.mxu0 0
        %10399 = vmatpush1.bf16.msra.mxu0 0
        %10400 = vmatprep.subr.bf16.mxu0 0
        %10401 = vmatpush1.bf16.msra.mxu0 0
        %10402 = vmatprep.subr.bf16.mxu0 0
        %10403 = vmatpush1.bf16.msra.mxu0 0
        %10404 = vmatprep.subr.bf16.mxu0 0
        %10405 = vmatpush1.bf16.msra.mxu0 0
        %10406 = vmatprep.mubr.bf16.mxu0 0
        %10407 = vmatmul.mubr.bf16.gmra.mrb[0].mxu0 %v10030
        %v10408 = vpop.f32.mrb[0].mxu0
        %v10409 = vadd.f32 %v10366, %v10408
        %v10410 = vpop.f32.mrb[0].mxu0
        %v10411 = vadd.f32 %v10368, %v10410
        %v10412 = vpop.f32.mrb[0].mxu0
        %v10413 = vadd.f32 %v10370, %v10412
        %v10414 = vpop.f32.mrb[0].mxu0
        %v10415 = vadd.f32 %v10372, %v10414
        %10416 = vdwg.mxu0
        %v10417 = vmax.f32 %v10409, 0.0
        %v10418 = vmax.f32 %v10411, 0.0
        %v10419 = vmax.f32 %v10413, 0.0
        %v10420 = vmax.f32 %v10415, 0.0
        %v10421 = vpack.c.bf16 %v10025, %v10022
        %v10422 = vpack.c.bf16 %v10026, %v10023
        %v10423 = vpack.c.bf16 %v10027, %v10024
        %10424 = vmatprep.subr.bf16.mxu0 %v10236
        %10425 = vmatpush1.bf16.msra.mxu0 %v10235
        %10426 = vmatprep.subr.bf16.mxu0 %v10238
        %10427 = vmatpush1.bf16.msra.mxu0 %v10237
        %10428 = vmatprep.subr.bf16.mxu0 %v10240
        %10429 = vmatpush1.bf16.msra.mxu0 %v10239
        %10430 = vmatprep.subr.bf16.mxu0 %v10242
        %10431 = vmatpush1.bf16.msra.mxu0 %v10241
        %10432 = vmatprep.subr.bf16.mxu0 %v10244
        %10433 = vmatpush1.bf16.msra.mxu0 %v10243
        %10434 = vmatprep.subr.bf16.mxu0 %v10246
        %10435 = vmatpush1.bf16.msra.mxu0 %v10245
        %10436 = vmatprep.subr.bf16.mxu0 %v10248
        %10437 = vmatpush1.bf16.msra.mxu0 %v10247
        %10438 = vmatprep.subr.bf16.mxu0 %v10250
        %10439 = vmatpush1.bf16.msra.mxu0 %v10249
        %10440 = vmatprep.subr.bf16.mxu0 %v10252
        %10441 = vmatpush1.bf16.msra.mxu0 %v10251
        %10442 = vmatprep.subr.bf16.mxu0 %v10254
        %10443 = vmatpush1.bf16.msra.mxu0 %v10253
        %10444 = vmatprep.subr.bf16.mxu0 %v10256
        %10445 = vmatpush1.bf16.msra.mxu0 %v10255
        %10446 = vmatprep.subr.bf16.mxu0 %v10258
        %10447 = vmatpush1.bf16.msra.mxu0 %v10257
        %10448 = vmatprep.subr.bf16.mxu0 %v10260
        %10449 = vmatpush1.bf16.msra.mxu0 %v10259
        %10450 = vmatprep.subr.bf16.mxu0 %v10262
        %10451 = vmatpush1.bf16.msra.mxu0 %v10261
        %10452 = vmatprep.subr.bf16.mxu0 %v10264
        %10453 = vmatpush1.bf16.msra.mxu0 %v10263
        %10454 = vmatprep.subr.bf16.mxu0 %v10266
        %10455 = vmatpush1.bf16.msra.mxu0 %v10265
        %10456 = vmatprep.mubr.bf16.mxu0 %v10422
        %10457 = vmatmul.mubr.bf16.gmra.mrb[0].mxu0 %v10421
        %v10458 = vpop.f32.mrb[0].mxu0
        %v10459 = vadd.f32 %v10084, %v10458
        %v10460 = vpop.f32.mrb[0].mxu0
        %v10461 = vadd.f32 %v10088, %v10460
        %v10462 = vpop.f32.mrb[0].mxu0
        %v10463 = vadd.f32 %v10084, %v10462
        %v10464 = vpop.f32.mrb[0].mxu0
        %v10465 = vadd.f32 %v10088, %v10464
        %10466 = vdwg.mxu0
        %10467 = vmatprep.subr.bf16.mxu0 %v10268
        %10468 = vmatpush1.bf16.msra.mxu0 %v10267
        %10469 = vmatprep.subr.bf16.mxu0 %v10270
        %10470 = vmatpush1.bf16.msra.mxu0 %v10269
        %10471 = vmatprep.subr.bf16.mxu0 %v10272
        %10472 = vmatpush1.bf16.msra.mxu0 %v10271
        %10473 = vmatprep.subr.bf16.mxu0 %v10274
        %10474 = vmatpush1.bf16.msra.mxu0 %v10273
        %10475 = vmatprep.subr.bf16.mxu0 %v10276
        %10476 = vmatpush1.bf16.msra.mxu0 %v10275
        %10477 = vmatprep.subr.bf16.mxu0 %v10278
        %10478 = vmatpush1.bf16.msra.mxu0 %v10277
        %10479 = vmatprep.subr.bf16.mxu0 %v10280
        %10480 = vmatpush1.bf16.msra.mxu0 %v10279
        %10481 = vmatprep.subr.bf16.mxu0 %v10282
        %10482 = vmatpush1.bf16.msra.mxu0 %v10281
        %10483 = vmatprep.subr.bf16.mxu0 0
        %10484 = vmatpush1.bf16.msra.mxu0 0
        %10485 = vmatprep.subr.bf16.mxu0 0
        %10486 = vmatpush1.bf16.msra.mxu0 0
        %10487 = vmatprep.subr.bf16.mxu0 0
        %10488 = vmatpush1.bf16.msra.mxu0 0
        %10489 = vmatprep.subr.bf16.mxu0 0
        %10490 = vmatpush1.bf16.msra.mxu0 0
        %10491 = vmatprep.subr.bf16.mxu0 0
        %10492 = vmatpush1.bf16.msra.mxu0 0
        %10493 = vmatprep.subr.bf16.mxu0 0
        %10494 = vmatpush1.bf16.msra.mxu0 0
        %10495 = vmatprep.subr.bf16.mxu0 0
        %10496 = vmatpush1.bf16.msra.mxu0 0
        %10497 = vmatprep.subr.bf16.mxu0 0
        %10498 = vmatpush1.bf16.msra.mxu0 0
        %10499 = vmatprep.mubr.bf16.mxu0 0
        %10500 = vmatmul.mubr.bf16.gmra.mrb[0].mxu0 %v10423
        %v10501 = vpop.f32.mrb[0].mxu0
        %v10502 = vadd.f32 %v10459, %v10501
        %v10503 = vpop.f32.mrb[0].mxu0
        %v10504 = vadd.f32 %v10461, %v10503
        %v10505 = vpop.f32.mrb[0].mxu0
        %v10506 = vadd.f32 %v10463, %v10505
        %v10507 = vpop.f32.mrb[0].mxu0
        %v10508 = vadd.f32 %v10465, %v10507
        %10509 = vdwg.mxu0
        %v10510 = vmax.f32 %v10502, 0.0
        %v10511 = vmax.f32 %v10504, 0.0
        %v10512 = vmax.f32 %v10506, 0.0
        %v10513 = vmax.f32 %v10508, 0.0
        %v10514 = vpack.c.bf16 %v10419, %v10417
        %v10515 = vpack.c.bf16 %v10420, %v10418
        %v10516 = vld [vmem:[#allocation18] sm:$0xff]
        %v10517 = vld [vmem:[#allocation18 + $0x8] sm:$0xff]
        %v10518 = vld [vmem:[#allocation18 + $0x10] sm:$0xff]
        %v10519 = vld [vmem:[#allocation18 + $0x18] sm:$0xff]
        %v10520 = vld [vmem:[#allocation18 + $0x20] sm:$0xff]
        %v10521 = vld [vmem:[#allocation18 + $0x28] sm:$0xff]
        %v10522 = vld [vmem:[#allocation18 + $0x30] sm:$0xff]
        %v10523 = vld [vmem:[#allocation18 + $0x38] sm:$0xff]
        %v10524 = vld [vmem:[#allocation18 + $0x40] sm:$0xff]
        %v10525 = vld [vmem:[#allocation18 + $0x48] sm:$0xff]
        %v10526 = vld [vmem:[#allocation18 + $0x50] sm:$0xff]
        %v10527 = vld [vmem:[#allocation18 + $0x58] sm:$0xff]
        %v10528 = vld [vmem:[#allocation18 + $0x60] sm:$0xff]
        %v10529 = vld [vmem:[#allocation18 + $0x68] sm:$0xff]
        %v10530 = vld [vmem:[#allocation18 + $0x70] sm:$0xff]
        %v10531 = vld [vmem:[#allocation18 + $0x78] sm:$0xff]
        %v10532 = vld [vmem:[#allocation18 + $0x80] sm:$0xff]
        %v10533 = vld [vmem:[#allocation18 + $0x88] sm:$0xff]
        %v10534 = vld [vmem:[#allocation18 + $0x90] sm:$0xff]
        %v10535 = vld [vmem:[#allocation18 + $0x98] sm:$0xff]
        %v10536 = vld [vmem:[#allocation18 + $0xa0] sm:$0xff]
        %v10537 = vld [vmem:[#allocation18 + $0xa8] sm:$0xff]
        %v10538 = vld [vmem:[#allocation18 + $0xb0] sm:$0xff]
        %v10539 = vld [vmem:[#allocation18 + $0xb8] sm:$0xff]
        %v10540 = vld [vmem:[#allocation18 + $0xc0] sm:$0xff]
        %v10541 = vld [vmem:[#allocation18 + $0xc8] sm:$0xff]
        %v10542 = vld [vmem:[#allocation18 + $0xd0] sm:$0xff]
        %v10543 = vld [vmem:[#allocation18 + $0xd8] sm:$0xff]
        %v10544 = vld [vmem:[#allocation18 + $0xe0] sm:$0xff]
        %v10545 = vld [vmem:[#allocation18 + $0xe8] sm:$0xff]
        %v10546 = vld [vmem:[#allocation18 + $0xf0] sm:$0xff]
        %v10547 = vld [vmem:[#allocation18 + $0xf8] sm:$0xff]
        %v10548 = vld [vmem:[#allocation19] sm:$0x3]
        %v10550 = vlaneseq
        %v10551 = vshrl.u32 %v10550, 7
        %v10552 = vsub.s32 0, %v10551
        %v10553 = vrot.slane %v10548, %v10552
        %v10554 = vlaneseq
        %v10555 = vshrl.u32 %v10554, 7
        %v10556 = vsub.s32 1, %v10555
        %v10557 = vrot.slane %v10548, %v10556
        %v10592 = vunpack.c.l.b16 %v10516
        %v10593 = vunpack.c.h.b16 %v10516
        %v10594 = vunpack.c.l.b16 %v10517
        %v10595 = vunpack.c.h.b16 %v10517
        %v10596 = vunpack.c.l.b16 %v10518
        %v10597 = vunpack.c.h.b16 %v10518
        %v10598 = vunpack.c.l.b16 %v10519
        %v10599 = vunpack.c.h.b16 %v10519
        %v10600 = vunpack.c.l.b16 %v10520
        %v10601 = vunpack.c.h.b16 %v10520
        %v10602 = vunpack.c.l.b16 %v10521
        %v10603 = vunpack.c.h.b16 %v10521
        %v10604 = vunpack.c.l.b16 %v10522
        %v10605 = vunpack.c.h.b16 %v10522
        %v10606 = vunpack.c.l.b16 %v10523
        %v10607 = vunpack.c.h.b16 %v10523
        %v10608 = vunpack.c.l.b16 %v10524
        %v10609 = vunpack.c.h.b16 %v10524
        %v10610 = vunpack.c.l.b16 %v10525
        %v10611 = vunpack.c.h.b16 %v10525
        %v10612 = vunpack.c.l.b16 %v10526
        %v10613 = vunpack.c.h.b16 %v10526
        %v10614 = vunpack.c.l.b16 %v10527
        %v10615 = vunpack.c.h.b16 %v10527
        %v10616 = vunpack.c.l.b16 %v10528
        %v10617 = vunpack.c.h.b16 %v10528
        %v10618 = vunpack.c.l.b16 %v10529
        %v10619 = vunpack.c.h.b16 %v10529
        %v10620 = vunpack.c.l.b16 %v10530
        %v10621 = vunpack.c.h.b16 %v10530
        %v10622 = vunpack.c.l.b16 %v10531
        %v10623 = vunpack.c.h.b16 %v10531
        %v10624 = vunpack.c.l.b16 %v10532
        %v10625 = vunpack.c.h.b16 %v10532
        %v10626 = vunpack.c.l.b16 %v10533
        %v10627 = vunpack.c.h.b16 %v10533
        %v10628 = vunpack.c.l.b16 %v10534
        %v10629 = vunpack.c.h.b16 %v10534
        %v10630 = vunpack.c.l.b16 %v10535
        %v10631 = vunpack.c.h.b16 %v10535
        %v10632 = vunpack.c.l.b16 %v10536
        %v10633 = vunpack.c.h.b16 %v10536
        %v10634 = vunpack.c.l.b16 %v10537
        %v10635 = vunpack.c.h.b16 %v10537
        %v10636 = vunpack.c.l.b16 %v10538
        %v10637 = vunpack.c.h.b16 %v10538
        %v10638 = vunpack.c.l.b16 %v10539
        %v10639 = vunpack.c.h.b16 %v10539
        %v10640 = vunpack.c.l.b16 %v10540
        %v10641 = vunpack.c.h.b16 %v10540
        %v10642 = vunpack.c.l.b16 %v10541
        %v10643 = vunpack.c.h.b16 %v10541
        %v10644 = vunpack.c.l.b16 %v10542
        %v10645 = vunpack.c.h.b16 %v10542
        %v10646 = vunpack.c.l.b16 %v10543
        %v10647 = vunpack.c.h.b16 %v10543
        %v10648 = vunpack.c.l.b16 %v10544
        %v10649 = vunpack.c.h.b16 %v10544
        %v10650 = vunpack.c.l.b16 %v10545
        %v10651 = vunpack.c.h.b16 %v10545
        %v10652 = vunpack.c.l.b16 %v10546
        %v10653 = vunpack.c.h.b16 %v10546
        %v10654 = vunpack.c.l.b16 %v10547
        %v10655 = vunpack.c.h.b16 %v10547
        %v10656 = vpack.c.b16 %v10594, %v10592
        %v10657 = vpack.c.b16 %v10595, %v10593
        %v10658 = vpack.c.b16 %v10598, %v10596
        %v10659 = vpack.c.b16 %v10599, %v10597
        %v10660 = vpack.c.b16 %v10602, %v10600
        %v10661 = vpack.c.b16 %v10603, %v10601
        %v10662 = vpack.c.b16 %v10606, %v10604
        %v10663 = vpack.c.b16 %v10607, %v10605
        %v10664 = vpack.c.b16 %v10610, %v10608
        %v10665 = vpack.c.b16 %v10611, %v10609
        %v10666 = vpack.c.b16 %v10614, %v10612
        %v10667 = vpack.c.b16 %v10615, %v10613
        %v10668 = vpack.c.b16 %v10618, %v10616
        %v10669 = vpack.c.b16 %v10619, %v10617
        %v10670 = vpack.c.b16 %v10622, %v10620
        %v10671 = vpack.c.b16 %v10623, %v10621
        %v10672 = vpack.c.b16 %v10626, %v10624
        %v10673 = vpack.c.b16 %v10627, %v10625
        %v10674 = vpack.c.b16 %v10630, %v10628
        %v10675 = vpack.c.b16 %v10631, %v10629
        %v10676 = vpack.c.b16 %v10634, %v10632
        %v10677 = vpack.c.b16 %v10635, %v10633
        %v10678 = vpack.c.b16 %v10638, %v10636
        %v10679 = vpack.c.b16 %v10639, %v10637
        %v10680 = vpack.c.b16 %v10642, %v10640
        %v10681 = vpack.c.b16 %v10643, %v10641
        %v10682 = vpack.c.b16 %v10646, %v10644
        %v10683 = vpack.c.b16 %v10647, %v10645
        %v10684 = vpack.c.b16 %v10650, %v10648
        %v10685 = vpack.c.b16 %v10651, %v10649
        %v10686 = vpack.c.b16 %v10654, %v10652
        %v10687 = vpack.c.b16 %v10655, %v10653
        %10720 = vmatprep.subr.bf16.mxu0 %v10657
        %10721 = vmatpush1.bf16.msra.mxu0 %v10656
        %10722 = vmatprep.subr.bf16.mxu0 %v10659
        %10723 = vmatpush1.bf16.msra.mxu0 %v10658
        %10724 = vmatprep.subr.bf16.mxu0 %v10661
        %10725 = vmatpush1.bf16.msra.mxu0 %v10660
        %10726 = vmatprep.subr.bf16.mxu0 %v10663
        %10727 = vmatpush1.bf16.msra.mxu0 %v10662
        %10728 = vmatprep.subr.bf16.mxu0 %v10665
        %10729 = vmatpush1.bf16.msra.mxu0 %v10664
        %10730 = vmatprep.subr.bf16.mxu0 %v10667
        %10731 = vmatpush1.bf16.msra.mxu0 %v10666
        %10732 = vmatprep.subr.bf16.mxu0 %v10669
        %10733 = vmatpush1.bf16.msra.mxu0 %v10668
        %10734 = vmatprep.subr.bf16.mxu0 %v10671
        %10735 = vmatpush1.bf16.msra.mxu0 %v10670
        %10736 = vmatprep.subr.bf16.mxu0 %v10673
        %10737 = vmatpush1.bf16.msra.mxu0 %v10672
        %10738 = vmatprep.subr.bf16.mxu0 %v10675
        %10739 = vmatpush1.bf16.msra.mxu0 %v10674
        %10740 = vmatprep.subr.bf16.mxu0 %v10677
        %10741 = vmatpush1.bf16.msra.mxu0 %v10676
        %10742 = vmatprep.subr.bf16.mxu0 %v10679
        %10743 = vmatpush1.bf16.msra.mxu0 %v10678
        %10744 = vmatprep.subr.bf16.mxu0 %v10681
        %10745 = vmatpush1.bf16.msra.mxu0 %v10680
        %10746 = vmatprep.subr.bf16.mxu0 %v10683
        %10747 = vmatpush1.bf16.msra.mxu0 %v10682
        %10748 = vmatprep.subr.bf16.mxu0 %v10685
        %10749 = vmatpush1.bf16.msra.mxu0 %v10684
        %10750 = vmatprep.subr.bf16.mxu0 %v10687
        %10751 = vmatpush1.bf16.msra.mxu0 %v10686
        %10752 = vmatprep.mubr.bf16.mxu0 %v10515
        %10753 = vmatmul.mubr.bf16.gmra.mrb[0].mxu0 %v10514
        %v10754 = vpop.f32.mrb[0].mxu0
        %v10755 = vadd.f32 %v10553, %v10754
        %v10756 = vpop.f32.mrb[0].mxu0
        %v10757 = vadd.f32 %v10557, %v10756
        %v10758 = vpop.f32.mrb[0].mxu0
        %v10759 = vadd.f32 %v10553, %v10758
        %v10760 = vpop.f32.mrb[0].mxu0
        %v10761 = vadd.f32 %v10557, %v10760
        %10762 = vdwg.mxu0
        %v10763 = vmax.f32 %v10755, 0.0
        %v10764 = vmax.f32 %v10757, 0.0
        %v10765 = vmax.f32 %v10759, 0.0
        %v10766 = vmax.f32 %v10761, 0.0
        %v10767 = vpack.c.bf16 %v10512, %v10510
        %v10768 = vpack.c.bf16 %v10513, %v10511
        %10769 = vmatprep.subr.bf16.mxu0 %v10657
        %10770 = vmatpush1.bf16.msra.mxu0 %v10656
        %10771 = vmatprep.subr.bf16.mxu0 %v10659
        %10772 = vmatpush1.bf16.msra.mxu0 %v10658
        %10773 = vmatprep.subr.bf16.mxu0 %v10661
        %10774 = vmatpush1.bf16.msra.mxu0 %v10660
        %10775 = vmatprep.subr.bf16.mxu0 %v10663
        %10776 = vmatpush1.bf16.msra.mxu0 %v10662
        %10777 = vmatprep.subr.bf16.mxu0 %v10665
        %10778 = vmatpush1.bf16.msra.mxu0 %v10664
        %10779 = vmatprep.subr.bf16.mxu0 %v10667
        %10780 = vmatpush1.bf16.msra.mxu0 %v10666
        %10781 = vmatprep.subr.bf16.mxu0 %v10669
        %10782 = vmatpush1.bf16.msra.mxu0 %v10668
        %10783 = vmatprep.subr.bf16.mxu0 %v10671
        %10784 = vmatpush1.bf16.msra.mxu0 %v10670
        %10785 = vmatprep.subr.bf16.mxu0 %v10673
        %10786 = vmatpush1.bf16.msra.mxu0 %v10672
        %10787 = vmatprep.subr.bf16.mxu0 %v10675
        %10788 = vmatpush1.bf16.msra.mxu0 %v10674
        %10789 = vmatprep.subr.bf16.mxu0 %v10677
        %10790 = vmatpush1.bf16.msra.mxu0 %v10676
        %10791 = vmatprep.subr.bf16.mxu0 %v10679
        %10792 = vmatpush1.bf16.msra.mxu0 %v10678
        %10793 = vmatprep.subr.bf16.mxu0 %v10681
        %10794 = vmatpush1.bf16.msra.mxu0 %v10680
        %10795 = vmatprep.subr.bf16.mxu0 %v10683
        %10796 = vmatpush1.bf16.msra.mxu0 %v10682
        %10797 = vmatprep.subr.bf16.mxu0 %v10685
        %10798 = vmatpush1.bf16.msra.mxu0 %v10684
        %10799 = vmatprep.subr.bf16.mxu0 %v10687
        %10800 = vmatpush1.bf16.msra.mxu0 %v10686
        %10801 = vmatprep.mubr.bf16.mxu0 %v10768
        %10802 = vmatmul.mubr.bf16.gmra.mrb[0].mxu0 %v10767
        %v10803 = vpop.f32.mrb[0].mxu0
        %v10804 = vadd.f32 %v10553, %v10803
        %v10805 = vpop.f32.mrb[0].mxu0
        %v10806 = vadd.f32 %v10557, %v10805
        %v10807 = vpop.f32.mrb[0].mxu0
        %v10808 = vadd.f32 %v10553, %v10807
        %v10809 = vpop.f32.mrb[0].mxu0
        %v10810 = vadd.f32 %v10557, %v10809
        %10811 = vdwg.mxu0
        %v10812 = vmax.f32 %v10804, 0.0
        %v10813 = vmax.f32 %v10806, 0.0
        %v10814 = vmax.f32 %v10808, 0.0
        %v10815 = vmax.f32 %v10810, 0.0
        %v10816 = vpack.c.bf16 %v10765, %v10763
        %v10817 = vpack.c.bf16 %v10766, %v10764
        %v10818 = vld [vmem:[#allocation21] sm:$0xf]
        %v10819 = vld [vmem:[#allocation21 + $0x4] sm:$0xf]
        %v10820 = vld [vmem:[#allocation21 + $0x8] sm:$0xf]
        %v10821 = vld [vmem:[#allocation21 + $0xc] sm:$0xf]
        %v10822 = vld [vmem:[#allocation21 + $0x10] sm:$0xf]
        %v10823 = vld [vmem:[#allocation21 + $0x14] sm:$0xf]
        %v10824 = vld [vmem:[#allocation21 + $0x18] sm:$0xf]
        %v10825 = vld [vmem:[#allocation21 + $0x1c] sm:$0xf]
        %v10826 = vld [vmem:[#allocation21 + $0x20] sm:$0xf]
        %v10827 = vld [vmem:[#allocation21 + $0x24] sm:$0xf]
        %v10828 = vld [vmem:[#allocation21 + $0x28] sm:$0xf]
        %v10829 = vld [vmem:[#allocation21 + $0x2c] sm:$0xf]
        %v10830 = vld [vmem:[#allocation21 + $0x30] sm:$0xf]
        %v10831 = vld [vmem:[#allocation21 + $0x34] sm:$0xf]
        %v10832 = vld [vmem:[#allocation21 + $0x38] sm:$0xf]
        %v10833 = vld [vmem:[#allocation21 + $0x3c] sm:$0xf]
        %v10834 = vld [vmem:[#allocation21 + $0x40] sm:$0xf]
        %v10835 = vld [vmem:[#allocation21 + $0x44] sm:$0xf]
        %v10836 = vld [vmem:[#allocation21 + $0x48] sm:$0xf]
        %v10837 = vld [vmem:[#allocation21 + $0x4c] sm:$0xf]
        %v10838 = vld [vmem:[#allocation21 + $0x50] sm:$0xf]
        %v10839 = vld [vmem:[#allocation21 + $0x54] sm:$0xf]
        %v10840 = vld [vmem:[#allocation21 + $0x58] sm:$0xf]
        %v10841 = vld [vmem:[#allocation21 + $0x5c] sm:$0xf]
        %v10842 = vld [vmem:[#allocation21 + $0x60] sm:$0xf]
        %v10843 = vld [vmem:[#allocation21 + $0x64] sm:$0xf]
        %v10844 = vld [vmem:[#allocation21 + $0x68] sm:$0xf]
        %v10845 = vld [vmem:[#allocation21 + $0x6c] sm:$0xf]
        %v10846 = vld [vmem:[#allocation21 + $0x70] sm:$0xf]
        %v10847 = vld [vmem:[#allocation21 + $0x74] sm:$0xf]
        %v10848 = vld [vmem:[#allocation21 + $0x78] sm:$0xf]
        %v10849 = vld [vmem:[#allocation21 + $0x7c] sm:$0xf]
        %v10850 = vld [vmem:[#allocation22] sm:$0x1]
        %v10852 = vlaneseq
        %v10853 = vshrl.u32 %v10852, 7
        %v10854 = vsub.s32 0, %v10853
        %v10855 = vrot.slane %v10850, %v10854
        %v10889 = vunpack.c.l.b16 %v10818
        %v10890 = vunpack.c.l.b16 %v10819
        %v10891 = vunpack.c.l.b16 %v10820
        %v10892 = vunpack.c.l.b16 %v10821
        %v10893 = vunpack.c.l.b16 %v10822
        %v10894 = vunpack.c.l.b16 %v10823
        %v10895 = vunpack.c.l.b16 %v10824
        %v10896 = vunpack.c.l.b16 %v10825
        %v10897 = vunpack.c.l.b16 %v10826
        %v10898 = vunpack.c.l.b16 %v10827
        %v10899 = vunpack.c.l.b16 %v10828
        %v10900 = vunpack.c.l.b16 %v10829
        %v10901 = vunpack.c.l.b16 %v10830
        %v10902 = vunpack.c.l.b16 %v10831
        %v10903 = vunpack.c.l.b16 %v10832
        %v10904 = vunpack.c.l.b16 %v10833
        %v10905 = vunpack.c.l.b16 %v10834
        %v10906 = vunpack.c.l.b16 %v10835
        %v10907 = vunpack.c.l.b16 %v10836
        %v10908 = vunpack.c.l.b16 %v10837
        %v10909 = vunpack.c.l.b16 %v10838
        %v10910 = vunpack.c.l.b16 %v10839
        %v10911 = vunpack.c.l.b16 %v10840
        %v10912 = vunpack.c.l.b16 %v10841
        %v10913 = vunpack.c.l.b16 %v10842
        %v10914 = vunpack.c.l.b16 %v10843
        %v10915 = vunpack.c.l.b16 %v10844
        %v10916 = vunpack.c.l.b16 %v10845
        %v10917 = vunpack.c.l.b16 %v10846
        %v10918 = vunpack.c.l.b16 %v10847
        %v10919 = vunpack.c.l.b16 %v10848
        %v10920 = vunpack.c.l.b16 %v10849
        %v10921 = vpack.c.b16 %v10890, %v10889
        %v10922 = vpack.c.b16 %v10892, %v10891
        %v10923 = vpack.c.b16 %v10894, %v10893
        %v10924 = vpack.c.b16 %v10896, %v10895
        %v10925 = vpack.c.b16 %v10898, %v10897
        %v10926 = vpack.c.b16 %v10900, %v10899
        %v10927 = vpack.c.b16 %v10902, %v10901
        %v10928 = vpack.c.b16 %v10904, %v10903
        %v10929 = vpack.c.b16 %v10906, %v10905
        %v10930 = vpack.c.b16 %v10908, %v10907
        %v10931 = vpack.c.b16 %v10910, %v10909
        %v10932 = vpack.c.b16 %v10912, %v10911
        %v10933 = vpack.c.b16 %v10914, %v10913
        %v10934 = vpack.c.b16 %v10916, %v10915
        %v10935 = vpack.c.b16 %v10918, %v10917
        %v10936 = vpack.c.b16 %v10920, %v10919
        %10953 = vmatprep.subr.bf16.mxu0 0
        %10954 = vmatpush1.bf16.msra.mxu0 %v10921
        %10955 = vmatprep.subr.bf16.mxu0 0
        %10956 = vmatpush1.bf16.msra.mxu0 %v10922
        %10957 = vmatprep.subr.bf16.mxu0 0
        %10958 = vmatpush1.bf16.msra.mxu0 %v10923
        %10959 = vmatprep.subr.bf16.mxu0 0
        %10960 = vmatpush1.bf16.msra.mxu0 %v10924
        %10961 = vmatprep.subr.bf16.mxu0 0
        %10962 = vmatpush1.bf16.msra.mxu0 %v10925
        %10963 = vmatprep.subr.bf16.mxu0 0
        %10964 = vmatpush1.bf16.msra.mxu0 %v10926
        %10965 = vmatprep.subr.bf16.mxu0 0
        %10966 = vmatpush1.bf16.msra.mxu0 %v10927
        %10967 = vmatprep.subr.bf16.mxu0 0
        %10968 = vmatpush1.bf16.msra.mxu0 %v10928
        %10969 = vmatprep.subr.bf16.mxu0 0
        %10970 = vmatpush1.bf16.msra.mxu0 %v10929
        %10971 = vmatprep.subr.bf16.mxu0 0
        %10972 = vmatpush1.bf16.msra.mxu0 %v10930
        %10973 = vmatprep.subr.bf16.mxu0 0
        %10974 = vmatpush1.bf16.msra.mxu0 %v10931
        %10975 = vmatprep.subr.bf16.mxu0 0
        %10976 = vmatpush1.bf16.msra.mxu0 %v10932
        %10977 = vmatprep.subr.bf16.mxu0 0
        %10978 = vmatpush1.bf16.msra.mxu0 %v10933
        %10979 = vmatprep.subr.bf16.mxu0 0
        %10980 = vmatpush1.bf16.msra.mxu0 %v10934
        %10981 = vmatprep.subr.bf16.mxu0 0
        %10982 = vmatpush1.bf16.msra.mxu0 %v10935
        %10983 = vmatprep.subr.bf16.mxu0 0
        %10984 = vmatpush1.bf16.msra.mxu0 %v10936
        %10985 = vmatprep.mubr.bf16.mxu0 %v10817
        %10986 = vmatmul.mubr.bf16.gmra.mrb[0].mxu0 %v10816
        %v10987 = vpop.f32.mrb[0].mxu0
        %v10988 = vadd.f32 %v10855, %v10987
        %v10989 = vpop.f32.mrb[0].mxu0
        %v10990 = vpop.f32.mrb[0].mxu0
        %v10991 = vadd.f32 %v10855, %v10990
        %v10992 = vpop.f32.mrb[0].mxu0
        %10993 = vdwg.mxu0
        %v10994 = vmax.f32 %v10988, 0.0
        %v10995 = vmax.f32 %v10991, 0.0
        %v10996 = vpack.c.bf16 %v10814, %v10812
        %v10997 = vpack.c.bf16 %v10815, %v10813
        %10998 = vmatprep.subr.bf16.mxu0 0
        %10999 = vmatpush1.bf16.msra.mxu0 %v10921
        %11000 = vmatprep.subr.bf16.mxu0 0
        %11001 = vmatpush1.bf16.msra.mxu0 %v10922
        %11002 = vmatprep.subr.bf16.mxu0 0
        %11003 = vmatpush1.bf16.msra.mxu0 %v10923
        %11004 = vmatprep.subr.bf16.mxu0 0
        %11005 = vmatpush1.bf16.msra.mxu0 %v10924
        %11006 = vmatprep.subr.bf16.mxu0 0
        %11007 = vmatpush1.bf16.msra.mxu0 %v10925
        %11008 = vmatprep.subr.bf16.mxu0 0
        %11009 = vmatpush1.bf16.msra.mxu0 %v10926
        %11010 = vmatprep.subr.bf16.mxu0 0
        %11011 = vmatpush1.bf16.msra.mxu0 %v10927
        %11012 = vmatprep.subr.bf16.mxu0 0
        %11013 = vmatpush1.bf16.msra.mxu0 %v10928
        %11014 = vmatprep.subr.bf16.mxu0 0
        %11015 = vmatpush1.bf16.msra.mxu0 %v10929
        %11016 = vmatprep.subr.bf16.mxu0 0
        %11017 = vmatpush1.bf16.msra.mxu0 %v10930
        %11018 = vmatprep.subr.bf16.mxu0 0
        %11019 = vmatpush1.bf16.msra.mxu0 %v10931
        %11020 = vmatprep.subr.bf16.mxu0 0
        %11021 = vmatpush1.bf16.msra.mxu0 %v10932
        %11022 = vmatprep.subr.bf16.mxu0 0
        %11023 = vmatpush1.bf16.msra.mxu0 %v10933
        %11024 = vmatprep.subr.bf16.mxu0 0
        %11025 = vmatpush1.bf16.msra.mxu0 %v10934
        %11026 = vmatprep.subr.bf16.mxu0 0
        %11027 = vmatpush1.bf16.msra.mxu0 %v10935
        %11028 = vmatprep.subr.bf16.mxu0 0
        %11029 = vmatpush1.bf16.msra.mxu0 %v10936
        %11030 = vmatprep.mubr.bf16.mxu0 %v10997
        %11031 = vmatmul.mubr.bf16.gmra.mrb[0].mxu0 %v10996
        %v11032 = vpop.f32.mrb[0].mxu0
        %v11033 = vadd.f32 %v10855, %v11032
        %v11034 = vpop.f32.mrb[0].mxu0
        %v11035 = vpop.f32.mrb[0].mxu0
        %v11036 = vadd.f32 %v10855, %v11035
        %v11037 = vpop.f32.mrb[0].mxu0
        %11038 = vdwg.mxu0
        %v11039 = vmax.f32 %v11033, 0.0
        %v11040 = vmax.f32 %v11036, 0.0
        %v11041 = vpack.c.bf16 %v10995, %v10994
        %v11042 = vld [vmem:[#allocation24] sm:$0xf]
        %v11043 = vld [vmem:[#allocation24 + $0x4] sm:$0xf]
        %v11044 = vld [vmem:[#allocation24 + $0x8] sm:$0xf]
        %v11045 = vld [vmem:[#allocation24 + $0xc] sm:$0xf]
        %v11046 = vld [vmem:[#allocation24 + $0x10] sm:$0xf]
        %v11047 = vld [vmem:[#allocation24 + $0x14] sm:$0xf]
        %v11048 = vld [vmem:[#allocation24 + $0x18] sm:$0xf]
        %v11049 = vld [vmem:[#allocation24 + $0x1c] sm:$0xf]
        %v11050 = vld [vmem:[#allocation24 + $0x20] sm:$0xf]
        %v11051 = vld [vmem:[#allocation24 + $0x24] sm:$0xf]
        %v11052 = vld [vmem:[#allocation24 + $0x28] sm:$0xf]
        %v11053 = vld [vmem:[#allocation24 + $0x2c] sm:$0xf]
        %v11054 = vld [vmem:[#allocation24 + $0x30] sm:$0xf]
        %v11055 = vld [vmem:[#allocation24 + $0x34] sm:$0xf]
        %v11056 = vld [vmem:[#allocation24 + $0x38] sm:$0xf]
        %v11057 = vld [vmem:[#allocation24 + $0x3c] sm:$0xf]
        %v11058 = vld [vmem:[#allocation25] sm:$0x1]
        %v11060 = vlaneseq
        %v11061 = vshrl.u32 %v11060, 7
        %v11062 = vsub.s32 0, %v11061
        %v11063 = vrot.slane %v11058, %v11062
        %v11081 = vunpack.c.l.b16 %v11042
        %v11082 = vunpack.c.l.b16 %v11043
        %v11083 = vunpack.c.l.b16 %v11044
        %v11084 = vunpack.c.l.b16 %v11045
        %v11085 = vunpack.c.l.b16 %v11046
        %v11086 = vunpack.c.l.b16 %v11047
        %v11087 = vunpack.c.l.b16 %v11048
        %v11088 = vunpack.c.l.b16 %v11049
        %v11089 = vunpack.c.l.b16 %v11050
        %v11090 = vunpack.c.l.b16 %v11051
        %v11091 = vunpack.c.l.b16 %v11052
        %v11092 = vunpack.c.l.b16 %v11053
        %v11093 = vunpack.c.l.b16 %v11054
        %v11094 = vunpack.c.l.b16 %v11055
        %v11095 = vunpack.c.l.b16 %v11056
        %v11096 = vunpack.c.l.b16 %v11057
        %v11097 = vpack.c.b16 %v11082, %v11081
        %v11098 = vpack.c.b16 %v11084, %v11083
        %v11099 = vpack.c.b16 %v11086, %v11085
        %v11100 = vpack.c.b16 %v11088, %v11087
        %v11101 = vpack.c.b16 %v11090, %v11089
        %v11102 = vpack.c.b16 %v11092, %v11091
        %v11103 = vpack.c.b16 %v11094, %v11093
        %v11104 = vpack.c.b16 %v11096, %v11095
        %11113 = vmatprep.subr.bf16.mxu0 0
        %11114 = vmatpush1.bf16.msra.mxu0 %v11097
        %11115 = vmatprep.subr.bf16.mxu0 0
        %11116 = vmatpush1.bf16.msra.mxu0 %v11098
        %11117 = vmatprep.subr.bf16.mxu0 0
        %11118 = vmatpush1.bf16.msra.mxu0 %v11099
        %11119 = vmatprep.subr.bf16.mxu0 0
        %11120 = vmatpush1.bf16.msra.mxu0 %v11100
        %11121 = vmatprep.subr.bf16.mxu0 0
        %11122 = vmatpush1.bf16.msra.mxu0 %v11101
        %11123 = vmatprep.subr.bf16.mxu0 0
        %11124 = vmatpush1.bf16.msra.mxu0 %v11102
        %11125 = vmatprep.subr.bf16.mxu0 0
        %11126 = vmatpush1.bf16.msra.mxu0 %v11103
        %11127 = vmatprep.subr.bf16.mxu0 0
        %11128 = vmatpush1.bf16.msra.mxu0 %v11104
        %11129 = vmatprep.subr.bf16.mxu0 0
        %11130 = vmatpush1.bf16.msra.mxu0 0
        %11131 = vmatprep.subr.bf16.mxu0 0
        %11132 = vmatpush1.bf16.msra.mxu0 0
        %11133 = vmatprep.subr.bf16.mxu0 0
        %11134 = vmatpush1.bf16.msra.mxu0 0
        %11135 = vmatprep.subr.bf16.mxu0 0
        %11136 = vmatpush1.bf16.msra.mxu0 0
        %11137 = vmatprep.subr.bf16.mxu0 0
        %11138 = vmatpush1.bf16.msra.mxu0 0
        %11139 = vmatprep.subr.bf16.mxu0 0
        %11140 = vmatpush1.bf16.msra.mxu0 0
        %11141 = vmatprep.subr.bf16.mxu0 0
        %11142 = vmatpush1.bf16.msra.mxu0 0
        %11143 = vmatprep.subr.bf16.mxu0 0
        %11144 = vmatpush1.bf16.msra.mxu0 0
        %11145 = vmatprep.mubr.bf16.mxu0 0
        %11146 = vmatmul.mubr.bf16.gmra.mrb[0].mxu0 %v11041
        %v11147 = vpop.f32.mrb[0].mxu0
        %v11148 = vadd.f32 %v11063, %v11147
        %v11149 = vpop.f32.mrb[0].mxu0
        %v11150 = vpop.f32.mrb[0].mxu0
        %v11151 = vadd.f32 %v11063, %v11150
        %v11152 = vpop.f32.mrb[0].mxu0
        %11153 = vdwg.mxu0
        %v11154 = vlaneseq
        %v11155 = vand.u32 %v11154, 127
        %vm11156 = vcmp.lt.s32.totalorder %v11155, 7
        %v11157 = vsel %vm11156, %v11148, -1e+30
        %v11158 = vsel %vm11156, %v11151, -1e+30
        %11159 = vmax.xlane.f32.xlu0 %v11157
        %v11160 = vpop.xlane.xlu0 %11159
        %11161 = vmax.xlane.f32.xlu0 %v11158
        %v11162 = vpop.xlane.xlu0 %11161
        %v11163 = vsub.f32 %v11157, %v11160
        %v11164 = vsub.f32 %v11158, %v11162
        %v11165 = vmul.f32 %v11163, 1.442695
        %v11166 = vpow.pop %v11165
        %v11167 = vmul.f32 %v11164, 1.442695
        %v11168 = vpow.pop %v11167
        %v11169 = vsel %vm11156, %v11166, 0.0
        %v11170 = vsel %vm11156, %v11168, 0.0
        %11171 = vadd.xlane.f32.xlu0 %v11169
        %v11172 = vpop.xlane.xlu0 %11171
        %11173 = vadd.xlane.f32.xlu0 %v11170
        %v11174 = vpop.xlane.xlu0 %11173
        %v11175 = vrcp.pop %v11172
        %v11176 = vrcp.pop %v11174
        %v11177 = vmul.f32 %v11169, %v11175
        %v11178 = vmul.f32 %v11170, %v11176
        %v11179 = vtanh.pop %v11148
        %v11180 = vtanh.pop %v11151
        %v11181 = vsel %vm11156, %v11177, %v11179
        %v11182 = vsel %vm11156, %v11178, %v11180
        %11183 = vst [vmem:[%s767] sm:$0xff] %v11181
        %11184 = vst [vmem:[%s767 + $0x8] sm:$0xff] %v11182
        %v11185 = vpack.c.bf16 %v11040, %v11039
        %v11186 = vld [vmem:[#allocation24] sm:$0xf]
        %v11187 = vld [vmem:[#allocation24 + $0x4] sm:$0xf]
        %v11188 = vld [vmem:[#allocation24 + $0x8] sm:$0xf]
        %v11189 = vld [vmem:[#allocation24 + $0xc] sm:$0xf]
        %v11190 = vld [vmem:[#allocation24 + $0x10] sm:$0xf]
        %v11191 = vld [vmem:[#allocation24 + $0x14] sm:$0xf]
        %v11192 = vld [vmem:[#allocation24 + $0x18] sm:$0xf]
        %v11193 = vld [vmem:[#allocation24 + $0x1c] sm:$0xf]
        %v11194 = vld [vmem:[#allocation24 + $0x20] sm:$0xf]
        %v11195 = vld [vmem:[#allocation24 + $0x24] sm:$0xf]
        %v11196 = vld [vmem:[#allocation24 + $0x28] sm:$0xf]
        %v11197 = vld [vmem:[#allocation24 + $0x2c] sm:$0xf]
        %v11198 = vld [vmem:[#allocation24 + $0x30] sm:$0xf]
        %v11199 = vld [vmem:[#allocation24 + $0x34] sm:$0xf]
        %v11200 = vld [vmem:[#allocation24 + $0x38] sm:$0xf]
        %v11201 = vld [vmem:[#allocation24 + $0x3c] sm:$0xf]
        %v11202 = vld [vmem:[#allocation25] sm:$0x1]
        %v11204 = vlaneseq
        %v11205 = vshrl.u32 %v11204, 7
        %v11206 = vsub.s32 0, %v11205
        %v11207 = vrot.slane %v11202, %v11206
        %v11225 = vunpack.c.l.b16 %v11186
        %v11226 = vunpack.c.l.b16 %v11187
        %v11227 = vunpack.c.l.b16 %v11188
        %v11228 = vunpack.c.l.b16 %v11189
        %v11229 = vunpack.c.l.b16 %v11190
        %v11230 = vunpack.c.l.b16 %v11191
        %v11231 = vunpack.c.l.b16 %v11192
        %v11232 = vunpack.c.l.b16 %v11193
        %v11233 = vunpack.c.l.b16 %v11194
        %v11234 = vunpack.c.l.b16 %v11195
        %v11235 = vunpack.c.l.b16 %v11196
        %v11236 = vunpack.c.l.b16 %v11197
        %v11237 = vunpack.c.l.b16 %v11198
        %v11238 = vunpack.c.l.b16 %v11199
        %v11239 = vunpack.c.l.b16 %v11200
        %v11240 = vunpack.c.l.b16 %v11201
        %v11241 = vpack.c.b16 %v11226, %v11225
        %v11242 = vpack.c.b16 %v11228, %v11227
        %v11243 = vpack.c.b16 %v11230, %v11229
        %v11244 = vpack.c.b16 %v11232, %v11231
        %v11245 = vpack.c.b16 %v11234, %v11233
        %v11246 = vpack.c.b16 %v11236, %v11235
        %v11247 = vpack.c.b16 %v11238, %v11237
        %v11248 = vpack.c.b16 %v11240, %v11239
        %11257 = vmatprep.subr.bf16.mxu0 0
        %11258 = vmatpush1.bf16.msra.mxu0 %v11241
        %11259 = vmatprep.subr.bf16.mxu0 0
        %11260 = vmatpush1.bf16.msra.mxu0 %v11242
        %11261 = vmatprep.subr.bf16.mxu0 0
        %11262 = vmatpush1.bf16.msra.mxu0 %v11243
        %11263 = vmatprep.subr.bf16.mxu0 0
        %11264 = vmatpush1.bf16.msra.mxu0 %v11244
        %11265 = vmatprep.subr.bf16.mxu0 0
        %11266 = vmatpush1.bf16.msra.mxu0 %v11245
        %11267 = vmatprep.subr.bf16.mxu0 0
        %11268 = vmatpush1.bf16.msra.mxu0 %v11246
        %11269 = vmatprep.subr.bf16.mxu0 0
        %11270 = vmatpush1.bf16.msra.mxu0 %v11247
        %11271 = vmatprep.subr.bf16.mxu0 0
        %11272 = vmatpush1.bf16.msra.mxu0 %v11248
        %11273 = vmatprep.subr.bf16.mxu0 0
        %11274 = vmatpush1.bf16.msra.mxu0 0
        %11275 = vmatprep.subr.bf16.mxu0 0
        %11276 = vmatpush1.bf16.msra.mxu0 0
        %11277 = vmatprep.subr.bf16.mxu0 0
        %11278 = vmatpush1.bf16.msra.mxu0 0
        %11279 = vmatprep.subr.bf16.mxu0 0
        %11280 = vmatpush1.bf16.msra.mxu0 0
        %11281 = vmatprep.subr.bf16.mxu0 0
        %11282 = vmatpush1.bf16.msra.mxu0 0
        %11283 = vmatprep.subr.bf16.mxu0 0
        %11284 = vmatpush1.bf16.msra.mxu0 0
        %11285 = vmatprep.subr.bf16.mxu0 0
        %11286 = vmatpush1.bf16.msra.mxu0 0
        %11287 = vmatprep.subr.bf16.mxu0 0
        %11288 = vmatpush1.bf16.msra.mxu0 0
        %11289 = vmatprep.mubr.bf16.mxu0 0
        %11290 = vmatmul.mubr.bf16.gmra.mrb[0].mxu0 %v11185
        %v11291 = vpop.f32.mrb[0].mxu0
        %v11292 = vadd.f32 %v11207, %v11291
        %v11293 = vpop.f32.mrb[0].mxu0
        %v11294 = vpop.f32.mrb[0].mxu0
        %v11295 = vadd.f32 %v11207, %v11294
        %v11296 = vpop.f32.mrb[0].mxu0
        %11297 = vdwg.mxu0
        %v11298 = vsel %vm11156, %v11292, -1e+30
        %v11299 = vsel %vm11156, %v11295, -1e+30
        %11300 = vmax.xlane.f32.xlu0 %v11298
        %v11301 = vpop.xlane.xlu0 %11300
        %11302 = vmax.xlane.f32.xlu0 %v11299
        %v11303 = vpop.xlane.xlu0 %11302
        %v11304 = vsub.f32 %v11298, %v11301
        %v11305 = vsub.f32 %v11299, %v11303
        %v11306 = vmul.f32 %v11304, 1.442695
        %v11307 = vpow.pop %v11306
        %v11308 = vmul.f32 %v11305, 1.442695
        %v11309 = vpow.pop %v11308
        %v11310 = vsel %vm11156, %v11307, 0.0
        %v11311 = vsel %vm11156, %v11309, 0.0
        %11312 = vadd.xlane.f32.xlu0 %v11310
        %v11313 = vpop.xlane.xlu0 %11312
        %11314 = vadd.xlane.f32.xlu0 %v11311
        %v11315 = vpop.xlane.xlu0 %11314
        %v11316 = vrcp.pop %v11313
        %v11317 = vrcp.pop %v11315
        %v11318 = vmul.f32 %v11310, %v11316
        %v11319 = vmul.f32 %v11311, %v11317
        %v11320 = vtanh.pop %v11292
        %v11321 = vtanh.pop %v11295
        %v11322 = vsel %vm11156, %v11318, %v11320
        %v11323 = vsel %vm11156, %v11319, %v11321
        %11324 = vst [vmem:[%s767 + $0x10] sm:$0xff] %v11322
        %11325 = vst [vmem:[%s767 + $0x18] sm:$0xff] %v11323
        %s11326 = smul.u32 4, %s37
        %p11327 = scmp.lt.s32.totalorder %s11326, 7
        %s11328 = scalar_select %p11327, %s11326, 7
        %s11329 = smul.addr %s11328, 8
        %s11330 = scalar_lea.vmem %s17, %s11329
        // Predicated region
        $region153: #{conv_model_forward.1} parent=87 // pred_check
          %p11331 = pneg %p417
        $region154: #{conv_model_forward.1} parent=87 // pred_check_branch
          %11333 = sbr.rel (%p11331) target = $region156
        $region155: #{conv_model_forward.1} parent=87 // pred_region
          %s11334 = smul.u32 4, %s37
        $region156: #{conv_model_forward.1} parent=87 // pred_fallthru
          _
      $region88: #{conv_model_forward.1} parent=5 // pred_fallthru
        _
      %p11335 = scmp.le.s32.totalorder 2, %s32
      // Predicated region
      $region157: #{conv_model_forward.1} parent=5 // pred_check
        %p11336 = pneg %p11335
      $region158: #{conv_model_forward.1} parent=5 // pred_check_branch
        %11338 = sbr.rel (%p11336) target = $region160
      $region159: #{conv_model_forward.1} parent=5 // pred_region
        %s11339 = ssub.s32 %s32, 2
        // Predicated region
        $region161: #{conv_model_forward.1} parent=159 // pred_check
          %p11340 = pneg %p423
        $region162: #{conv_model_forward.1} parent=159 // pred_check_branch
          %11342 = sbr.rel (%p11340) target = $region164
        $region163: #{conv_model_forward.1} parent=159 // pred_region
          %s11343 = smul.u32 4, %s38
          %p11344 = scmp.lt.s32.totalorder %s11343, 7
          %s11345 = scalar_select %p11344, %s11343, 7
          %s11346 = smul.addr %s11345, 8
          %s11347 = scalar_lea.vmem %s17, %s11346
        $region164: #{conv_model_forward.1} parent=159 // pred_fallthru
          _
      $region160: #{conv_model_forward.1} parent=5 // pred_fallthru
        _
    $region6: #{conv_model_forward.1} parent=1 // loop_footer
      %s36 = sadd.s32 1, %s32
    $region7: #{conv_model_forward.1} parent=1 // loop_footer_branch
      %31 = sbr.rel target = $region3
    $region8: #{conv_model_forward.1} parent=1 // loop_exit
      _
    %11348 = vsyncpa [#allocation3], 1
    %s11349 = scalar_lea.sflag [#allocation3], 1
    %11350 = vsyncpa %s11349, 1
    %11351 = vsyncpa [#allocation5], 1
    %11352 = vsyncpa [#allocation8], 1
    %11353 = vsyncpa [#allocation11], 1
    %11354 = vsyncpa [#allocation14], 1
    %11355 = vsyncpa [#allocation17], 1
    %11356 = vsyncpa [#allocation20], 1
    %11357 = vsyncpa [#allocation23], 1
    %11358 = vsyncpa [#allocation26], 1

</llo_original>
